<compile_context>
chip_gen: v5e
topology: v5e:2x2
jax: 0.10.0
libtpu: 0.0.40
codegen_flags: <defaults>
</compile_context>

<pallas_src>
import functools

import jax
import jax.numpy as jnp
from jax.experimental import pallas as pl
from jax.experimental.pallas import tpu as pltpu

# Model hyper-parameters (from the PyTorch module).
NUM_CHARS = 26
CHAR_EMBEDDING_DIM = 10
HIDDEN_DIM = 20
NUM_TAGS = 3

# Padded / tile-aligned sizes used by the kernel.
GATE_PAD = 128     # lanes per (gate, direction) slot
HIDDEN_PAD = 128   # lanes per direction of the hidden/cell state
CHAR_PAD = 128     # padded vocabulary per direction (one-hot lane width)
OUT_PAD = 128      # lane-dense output width (real tags live in [:NUM_TAGS])
N_SLOTS = 8        # 4 gates x 2 directions


def _char_ner_kernel(ids_f_ref,   # (T*BP, 1) int32: char id at time t       (row t*BP+b)
                     ids_r_ref,   # (T*BP, 1) int32: char id at time T-1-t   (row t*BP+b)
                     xt_ref,      # (2*CHAR_PAD, 8*GATE_PAD) fused emb/W_ih/bias table
                     wcomb_ref,   # (2*HIDDEN_PAD, 8*GATE_PAD) block-diag W_hh (both dirs)
                     wout_ref,    # (2*HIDDEN_PAD, OUT_PAD) stacked hidden2tag weights
                     bo_ref,      # (1, OUT_PAD) hidden2tag bias (padded)
                     out_ref,     # (T*BP, OUT_PAD) f32
                     xpre_scr,    # VMEM (T*BP, 8*GATE_PAD) f32
                     h_scr,       # VMEM (T*BP, 2*HIDDEN_PAD) f32
                     *, seq_len, bp):
    tb = seq_len * bp
    gp = GATE_PAD
    hp = HIDDEN_PAD
    cp = CHAR_PAD

    # ---- Embedding lookup + input projections for BOTH directions and every
    # timestep, with one 256-deep MXU matmul.  Row block s of xpre_scr holds
    # forward-gate preactivations for time s in slots {0,2,4,6} and
    # backward-gate preactivations for time T-1-s in slots {1,3,5,7}, so the
    # fused recurrence below reads one contiguous row block per step.
    iota = jax.lax.broadcasted_iota(jnp.int32, (tb, cp), 1)
    oh_f = (ids_f_ref[...] == iota).astype(jnp.float32)      # (T*BP, 128)
    oh_b = (ids_r_ref[...] == iota).astype(jnp.float32)      # (T*BP, 128)
    onehot = jnp.concatenate([oh_f, oh_b], axis=-1)          # (T*BP, 256)
    xpre_scr[...] = jnp.dot(onehot, xt_ref[...],
                            preferred_element_type=jnp.float32)

    # ---- Fused bidirectional recurrence: one (BP, 256) @ (256, 1024) matmul
    # per step.  Fully unrolled (seq_len small & static).  W_comb is re-read
    # from its VMEM ref each step (never hoisted as a live value).
    h = jnp.zeros((bp, 2 * hp), jnp.float32)   # [ h_f | h_b ]
    c = jnp.zeros((bp, 2 * hp), jnp.float32)   # [ c_f | c_b ]
    for s in range(seq_len):
        rf = s * bp                     # forward timestep row block
        rb = (seq_len - 1 - s) * bp     # backward timestep row block
        x_pre = xpre_scr[rf:rf + bp, :]
        gates = x_pre + jnp.dot(h, wcomb_ref[...],
                                preferred_element_type=jnp.float32)
        # slot layout: [ i_f | i_b | f_f | f_b | o_f | o_b | g_f | g_b ]
        sfo = jax.nn.sigmoid(gates[:, 0:6 * gp])   # one contiguous slab
        g = jnp.tanh(gates[:, 6 * gp:8 * gp])
        i = sfo[:, 0:2 * gp]
        f = sfo[:, 2 * gp:4 * gp]
        o = sfo[:, 4 * gp:6 * gp]
        c = f * c + i * g
        h = o * jnp.tanh(c)
        # Invariant: padded lanes stay exactly 0 (preactivation 0 -> g = 0,
        # c = 0, h = 0.5 * tanh(0) = 0), so nothing leaks through W_comb.
        h_scr[rf:rf + bp, 0:hp] = h[:, 0:hp]             # h_f(time s)
        h_scr[rb:rb + bp, hp:2 * hp] = h[:, hp:2 * hp]   # h_b(time T-1-s)

    # ---- Single fused hidden2tag projection + one lane-dense output store.
    out_ref[...] = (jnp.dot(h_scr[...], wout_ref[...],
                            preferred_element_type=jnp.float32)
                    + bo_ref[...])


def _reorder_gates(m):
    """Reorder PyTorch gate blocks (i, f, g, o) -> (i, f, o, g) along axis 0."""
    H = HIDDEN_DIM
    return jnp.concatenate([m[0:H], m[H:2 * H], m[3 * H:4 * H], m[2 * H:3 * H]],
                           axis=0)


def _place_slots(m, dir_idx):
    """(rows, 4H) gate-ordered (i,f,o,g) -> (rows, 8*GATE_PAD) interleaved slots.

    Gate k of direction `dir_idx` lands in slot 2*k + dir_idx, lanes [0:H];
    every other lane is zero.
    """
    H = HIDDEN_DIM
    out = jnp.zeros((m.shape[0], N_SLOTS * GATE_PAD), jnp.float32)
    for k in range(4):
        s = (2 * k + dir_idx) * GATE_PAD
        out = out.at[:, s:s + H].set(m[:, k * H:(k + 1) * H])
    return out


def _dir_tables(emb, w_ih, w_hh, b_ih, b_hh):
    """Fold emb @ W_ih^T + bias into a per-char table; transpose/reorder W_hh."""
    w_ih_r = _reorder_gates(w_ih)              # (4H, E)
    w_hh_r = _reorder_gates(w_hh)              # (4H, H)
    b_r = _reorder_gates(b_ih + b_hh)          # (4H,)
    x_table = emb @ w_ih_r.T + b_r[None, :]    # (NUM_CHARS, 4H)
    return x_table, w_hh_r.T                   # (NUM_CHARS, 4H), (H, 4H)


def char_ner_forward_pallas(char_ids, params):
    """char_ids: (B, T) int32 -> tag_space: (B, T, NUM_TAGS) float32."""
    B, T = char_ids.shape
    H = HIDDEN_DIM
    BP = max(8, ((B + 7) // 8) * 8)   # pad batch to a sublane multiple

    # ---- parameter prep (plain JAX glue, runs once under jit) --------------
    xtab_f, whh_f = _dir_tables(params["emb"], params["w_ih_f"],
                                params["w_hh_f"], params["b_ih_f"],
                                params["b_hh_f"])
    xtab_b, whh_b = _dir_tables(params["emb"], params["w_ih_b"],
                                params["w_hh_b"], params["b_ih_b"],
                                params["b_hh_b"])

    # Fused per-char table: rows [0:128) = forward chars (forward slots),
    # rows [128:256) = backward chars (backward slots).
    xt = jnp.zeros((2 * CHAR_PAD, N_SLOTS * GATE_PAD), jnp.float32)
    xt = xt.at[:NUM_CHARS].set(_place_slots(xtab_f, 0))
    xt = xt.at[CHAR_PAD:CHAR_PAD + NUM_CHARS].set(_place_slots(xtab_b, 1))

    # Block-diagonal recurrence weight: h_f rows feed forward slots only,
    # h_b rows feed backward slots only.
    wcomb = jnp.zeros((2 * HIDDEN_PAD, N_SLOTS * GATE_PAD), jnp.float32)
    wcomb = wcomb.at[:H].set(_place_slots(whh_f, 0))
    wcomb = wcomb.at[HIDDEN_PAD:HIDDEN_PAD + H].set(_place_slots(whh_b, 1))

    # Stacked, lane-dense hidden2tag projection.
    wout = jnp.zeros((2 * HIDDEN_PAD, OUT_PAD), jnp.float32)
    wout = wout.at[:H, :NUM_TAGS].set(params["w_out"][:, :H].T)
    wout = wout.at[HIDDEN_PAD:HIDDEN_PAD + H, :NUM_TAGS].set(params["w_out"][:, H:].T)
    bo = jnp.zeros((1, OUT_PAD), jnp.float32).at[0, :NUM_TAGS].set(params["b_out"])

    # Pad batch, time-major flatten: row index = t*BP + b.  Second id column
    # is the time-reversed sequence (feeds the backward half of the table).
    ids_pad = jnp.zeros((BP, T), jnp.int32).at[:B].set(char_ids.astype(jnp.int32))
    ids_f = jnp.transpose(ids_pad, (1, 0)).reshape(T * BP, 1)
    ids_r = jnp.transpose(ids_pad[:, ::-1], (1, 0)).reshape(T * BP, 1)

    vmem = pl.BlockSpec(memory_space=pltpu.MemorySpace.VMEM)
    kernel = functools.partial(_char_ner_kernel, seq_len=T, bp=BP)

    out_flat = pl.pallas_call(
        kernel,
        out_shape=jax.ShapeDtypeStruct((T * BP, OUT_PAD), jnp.float32),
        in_specs=[vmem] * 6,
        out_specs=vmem,
        scratch_shapes=[
            pltpu.VMEM((T * BP, N_SLOTS * GATE_PAD), jnp.float32),  # x preacts
            pltpu.VMEM((T * BP, 2 * HIDDEN_PAD), jnp.float32),      # [h_f | h_b]
        ],
    )(ids_f, ids_r, xt, wcomb, wout, bo)

    out = out_flat[:, :NUM_TAGS].reshape(T, BP, NUM_TAGS)
    return jnp.transpose(out, (1, 0, 2))[:B]                 # (B, T, NUM_TAGS)


def char_ner_forward_ref(char_ids, params):
    """Pure-JAX reference matching PyTorch semantics (for validation)."""
    H = HIDDEN_DIM
    emb = jnp.take(params["emb"], char_ids, axis=0)          # (B, T, E)
    x_tbe = jnp.transpose(emb, (1, 0, 2))                    # (T, B, E)

    def run_dir(x_seq, w_ih, w_hh, b_ih, b_hh):
        B = x_seq.shape[1]

        def step(carry, x_t):
            h, c = carry
            gates = x_t @ w_ih.T + h @ w_hh.T + b_ih + b_hh
            i, f, g, o = jnp.split(gates, 4, axis=-1)
            i = jax.nn.sigmoid(i)
            f = jax.nn.sigmoid(f)
            g = jnp.tanh(g)
            o = jax.nn.sigmoid(o)
            c = f * c + i * g
            h = o * jnp.tanh(c)
            return (h, c), h

        h0 = jnp.zeros((B, H), jnp.float32)
        c0 = jnp.zeros((B, H), jnp.float32)
        _, hs = jax.lax.scan(step, (h0, c0), x_seq)
        return hs  # (T, B, H)

    hf = run_dir(x_tbe, params["w_ih_f"], params["w_hh_f"],
                 params["b_ih_f"], params["b_hh_f"])
    hb = run_dir(x_tbe[::-1], params["w_ih_b"], params["w_hh_b"],
                 params["b_ih_b"], params["b_hh_b"])[::-1]
    hcat = jnp.concatenate([hf, hb], axis=-1)                # (T, B, 2H)
    tags = hcat @ params["w_out"].T + params["b_out"]        # (T, B, NUM_TAGS)
    return jnp.transpose(tags, (1, 0, 2))                    # (B, T, NUM_TAGS)


def init_params(key):
    E, H = CHAR_EMBEDDING_DIM, HIDDEN_DIM
    ks = jax.random.split(key, 12)
    s = 1.0 / jnp.sqrt(jnp.float32(H))
    u = lambda k, shape: jax.random.uniform(k, shape, jnp.float32, -s, s)
    return {
        "emb": jax.random.normal(ks[0], (NUM_CHARS, E), jnp.float32),
        # Forward-direction LSTM (PyTorch shapes: W_ih (4H,E), W_hh (4H,H)).
        "w_ih_f": u(ks[1], (4 * H, E)),
        "w_hh_f": u(ks[2], (4 * H, H)),
        "b_ih_f": u(ks[3], (4 * H,)),
        "b_hh_f": u(ks[4], (4 * H,)),
        # Reverse-direction LSTM.
        "w_ih_b": u(ks[5], (4 * H, E)),
        "w_hh_b": u(ks[6], (4 * H, H)),
        "b_ih_b": u(ks[7], (4 * H,)),
        "b_hh_b": u(ks[8], (4 * H,)),
        # hidden2tag: Linear(2H -> NUM_TAGS).
        "w_out": u(ks[9], (NUM_TAGS, 2 * H)),
        "b_out": u(ks[10], (NUM_TAGS,)),
    }
    # TODO(synk): the CRF submodule is constructed in __init__ but never used in
    # forward() (which returns tag_space), so it is intentionally not implemented.


if __name__ == "__main__":
    key = jax.random.PRNGKey(0)
    pkey, dkey = jax.random.split(key)
    params = init_params(pkey)

    B, T = 2, 8  # batch=2, sequence length=8
    char_ids = jax.random.randint(dkey, (B, T), 0, NUM_CHARS, dtype=jnp.int32)

    tag_space = jax.jit(char_ner_forward_pallas)(char_ids, params)
    tag_space = jax.block_until_ready(tag_space)

    ref = char_ner_forward_ref(char_ids, params)
    assert tag_space.shape == (B, T, NUM_TAGS)
    assert jnp.allclose(tag_space, ref, atol=1e-4, rtol=1e-4), (
        "Pallas kernel output does not match reference"
    )
    print("KERNEL_OK")
</pallas_src>

<mosaic_0001>
module attributes {stable_mosaic.version = 11 : i64} {
  func.func @_char_ner_kernel(%arg0: memref<64x1xi32, #tpu.memory_space<vmem>>, %arg1: memref<64x1xi32, #tpu.memory_space<vmem>>, %arg2: memref<256x1024xf32, #tpu.memory_space<vmem>>, %arg3: memref<256x1024xf32, #tpu.memory_space<vmem>>, %arg4: memref<256x128xf32, #tpu.memory_space<vmem>>, %arg5: memref<1x128xf32, #tpu.memory_space<vmem>>, %arg6: memref<64x128xf32, #tpu.memory_space<vmem>>, %arg7: memref<64x1024xf32, #tpu.memory_space<vmem>>, %arg8: memref<64x256xf32, #tpu.memory_space<vmem>>) attributes {dimension_semantics = [], scalar_prefetch = 0 : i64, scratch_operands = 2 : i64, tpu.core_type = #tpu.core_type<tc>} {
    %0 = tpu.iota {dimensions = array<i32: 1>} : vector<64x128xi32>
    %c0 = arith.constant 0 : index
    %c0_0 = arith.constant 0 : index
    %1 = vector.load %arg0[%c0, %c0_0] : memref<64x1xi32, #tpu.memory_space<vmem>>, vector<64x1xi32>
    %2 = vector.broadcast %1 : vector<64x1xi32> to vector<64x128xi32>
    %3 = arith.cmpi eq, %2, %0 : vector<64x128xi32>
    %4 = arith.extui %3 : vector<64x128xi1> to vector<64x128xi32>
    %5 = arith.sitofp %4 : vector<64x128xi32> to vector<64x128xf32>
    %c0_1 = arith.constant 0 : index
    %c0_2 = arith.constant 0 : index
    %6 = vector.load %arg1[%c0_1, %c0_2] : memref<64x1xi32, #tpu.memory_space<vmem>>, vector<64x1xi32>
    %7 = vector.broadcast %6 : vector<64x1xi32> to vector<64x128xi32>
    %8 = arith.cmpi eq, %7, %0 : vector<64x128xi32>
    %9 = arith.extui %8 : vector<64x128xi1> to vector<64x128xi32>
    %10 = arith.sitofp %9 : vector<64x128xi32> to vector<64x128xf32>
    %11 = tpu.concatenate %5, %10 in 1 : vector<64x128xf32>, vector<64x128xf32> -> vector<64x256xf32>
    %c0_3 = arith.constant 0 : index
    %c0_4 = arith.constant 0 : index
    %12 = vector.load %arg2[%c0_3, %c0_4] : memref<256x1024xf32, #tpu.memory_space<vmem>>, vector<256x1024xf32>
    %cst = arith.constant dense<0.000000e+00> : vector<64x1024xf32>
    %13 = tpu.matmul %11, %12, %cst {dimension_numbers = #tpu.dot_dimension_numbers<[1], [0], [0], [1], [0, 0, 1, 1], [], []>} : vector<64x256xf32>, vector<256x1024xf32>, vector<64x1024xf32> -> vector<64x1024xf32>
    %c0_5 = arith.constant 0 : index
    %c0_6 = arith.constant 0 : index
    %14 = vector.load %arg7[%c0_5, %c0_6] : memref<64x1024xf32, #tpu.memory_space<vmem>>, vector<64x1024xf32>
    tpu.vector_store %arg7[%c0_5, %c0_6], %13 {strides = array<i32>} : memref<64x1024xf32, #tpu.memory_space<vmem>>, vector<64x1024xf32>,
    %cst_7 = arith.constant 0.000000e+00 : f32
    %15 = vector.broadcast %cst_7 : f32 to vector<8x256xf32>
    %cst_8 = arith.constant 0.000000e+00 : f32
    %16 = vector.broadcast %cst_8 : f32 to vector<8x256xf32>
    %c0_9 = arith.constant 0 : index
    %c0_10 = arith.constant 0 : index
    %17 = vector.load %arg7[%c0_9, %c0_10] : memref<64x1024xf32, #tpu.memory_space<vmem>>, vector<8x1024xf32>
    %c0_11 = arith.constant 0 : index
    %c0_12 = arith.constant 0 : index
    %18 = vector.load %arg3[%c0_11, %c0_12] : memref<256x1024xf32, #tpu.memory_space<vmem>>, vector<256x1024xf32>
    %cst_13 = arith.constant dense<0.000000e+00> : vector<8x1024xf32>
    %19 = tpu.matmul %15, %18, %cst_13 {dimension_numbers = #tpu.dot_dimension_numbers<[1], [0], [0], [1], [0, 0, 1, 1], [], []>} : vector<8x256xf32>, vector<256x1024xf32>, vector<8x1024xf32> -> vector<8x1024xf32>
    %20 = arith.addf %17, %19 : vector<8x1024xf32>
    %21 = vector.extract_strided_slice %20 {offsets = [0, 0], sizes = [8, 768], strides = [1, 1]} : vector<8x1024xf32> to vector<8x768xf32>
    %22 = arith.negf %21 : vector<8x768xf32>
    %23 = math.exp %22 : vector<8x768xf32>
    %cst_14 = arith.constant 1.000000e+00 : f32
    %24 = vector.broadcast %cst_14 : f32 to vector<8x768xf32>
    %25 = arith.addf %24, %23 : vector<8x768xf32>
    %26 = arith.divf %24, %25 : vector<8x768xf32>
    %27 = vector.extract_strided_slice %20 {offsets = [0, 768], sizes = [8, 256], strides = [1, 1]} : vector<8x1024xf32> to vector<8x256xf32>
    %28 = math.tanh %27 : vector<8x256xf32>
    %29 = vector.extract_strided_slice %26 {offsets = [0, 0], sizes = [8, 256], strides = [1, 1]} : vector<8x768xf32> to vector<8x256xf32>
    %30 = vector.extract_strided_slice %26 {offsets = [0, 256], sizes = [8, 256], strides = [1, 1]} : vector<8x768xf32> to vector<8x256xf32>
    %31 = vector.extract_strided_slice %26 {offsets = [0, 512], sizes = [8, 256], strides = [1, 1]} : vector<8x768xf32> to vector<8x256xf32>
    %32 = arith.mulf %30, %16 : vector<8x256xf32>
    %33 = arith.mulf %29, %28 : vector<8x256xf32>
    %34 = arith.addf %32, %33 : vector<8x256xf32>
    %35 = math.tanh %34 : vector<8x256xf32>
    %36 = arith.mulf %31, %35 : vector<8x256xf32>
    %37 = vector.extract_strided_slice %36 {offsets = [0, 0], sizes = [8, 128], strides = [1, 1]} : vector<8x256xf32> to vector<8x128xf32>
    %c0_15 = arith.constant 0 : index
    %c0_16 = arith.constant 0 : index
    %38 = vector.load %arg8[%c0_15, %c0_16] : memref<64x256xf32, #tpu.memory_space<vmem>>, vector<8x128xf32>
    tpu.vector_store %arg8[%c0_15, %c0_16], %37 {strides = array<i32>} : memref<64x256xf32, #tpu.memory_space<vmem>>, vector<8x128xf32>,
    %39 = vector.extract_strided_slice %36 {offsets = [0, 128], sizes = [8, 128], strides = [1, 1]} : vector<8x256xf32> to vector<8x128xf32>
    %c56 = arith.constant 56 : index
    %c128 = arith.constant 128 : index
    %40 = vector.load %arg8[%c56, %c128] : memref<64x256xf32, #tpu.memory_space<vmem>>, vector<8x128xf32>
    tpu.vector_store %arg8[%c56, %c128], %39 {strides = array<i32>} : memref<64x256xf32, #tpu.memory_space<vmem>>, vector<8x128xf32>,
    %c8 = arith.constant 8 : index
    %c0_17 = arith.constant 0 : index
    %41 = vector.load %arg7[%c8, %c0_17] : memref<64x1024xf32, #tpu.memory_space<vmem>>, vector<8x1024xf32>
    %c0_18 = arith.constant 0 : index
    %c0_19 = arith.constant 0 : index
    %42 = vector.load %arg3[%c0_18, %c0_19] : memref<256x1024xf32, #tpu.memory_space<vmem>>, vector<256x1024xf32>
    %cst_20 = arith.constant dense<0.000000e+00> : vector<8x1024xf32>
    %43 = tpu.matmul %36, %42, %cst_20 {dimension_numbers = #tpu.dot_dimension_numbers<[1], [0], [0], [1], [0, 0, 1, 1], [], []>} : vector<8x256xf32>, vector<256x1024xf32>, vector<8x1024xf32> -> vector<8x1024xf32>
    %44 = arith.addf %41, %43 : vector<8x1024xf32>
    %45 = vector.extract_strided_slice %44 {offsets = [0, 0], sizes = [8, 768], strides = [1, 1]} : vector<8x1024xf32> to vector<8x768xf32>
    %46 = arith.negf %45 : vector<8x768xf32>
    %47 = math.exp %46 : vector<8x768xf32>
    %cst_21 = arith.constant 1.000000e+00 : f32
    %48 = vector.broadcast %cst_21 : f32 to vector<8x768xf32>
    %49 = arith.addf %48, %47 : vector<8x768xf32>
    %50 = arith.divf %48, %49 : vector<8x768xf32>
    %51 = vector.extract_strided_slice %44 {offsets = [0, 768], sizes = [8, 256], strides = [1, 1]} : vector<8x1024xf32> to vector<8x256xf32>
    %52 = math.tanh %51 : vector<8x256xf32>
    %53 = vector.extract_strided_slice %50 {offsets = [0, 0], sizes = [8, 256], strides = [1, 1]} : vector<8x768xf32> to vector<8x256xf32>
    %54 = vector.extract_strided_slice %50 {offsets = [0, 256], sizes = [8, 256], strides = [1, 1]} : vector<8x768xf32> to vector<8x256xf32>
    %55 = vector.extract_strided_slice %50 {offsets = [0, 512], sizes = [8, 256], strides = [1, 1]} : vector<8x768xf32> to vector<8x256xf32>
    %56 = arith.mulf %54, %34 : vector<8x256xf32>
    %57 = arith.mulf %53, %52 : vector<8x256xf32>
    %58 = arith.addf %56, %57 : vector<8x256xf32>
    %59 = math.tanh %58 : vector<8x256xf32>
    %60 = arith.mulf %55, %59 : vector<8x256xf32>
    %61 = vector.extract_strided_slice %60 {offsets = [0, 0], sizes = [8, 128], strides = [1, 1]} : vector<8x256xf32> to vector<8x128xf32>
    %c8_22 = arith.constant 8 : index
    %c0_23 = arith.constant 0 : index
    %62 = vector.load %arg8[%c8_22, %c0_23] : memref<64x256xf32, #tpu.memory_space<vmem>>, vector<8x128xf32>
    tpu.vector_store %arg8[%c8_22, %c0_23], %61 {strides = array<i32>} : memref<64x256xf32, #tpu.memory_space<vmem>>, vector<8x128xf32>,
    %63 = vector.extract_strided_slice %60 {offsets = [0, 128], sizes = [8, 128], strides = [1, 1]} : vector<8x256xf32> to vector<8x128xf32>
    %c48 = arith.constant 48 : index
    %c128_24 = arith.constant 128 : index
    %64 = vector.load %arg8[%c48, %c128_24] : memref<64x256xf32, #tpu.memory_space<vmem>>, vector<8x128xf32>
    tpu.vector_store %arg8[%c48, %c128_24], %63 {strides = array<i32>} : memref<64x256xf32, #tpu.memory_space<vmem>>, vector<8x128xf32>,
    %c16 = arith.constant 16 : index
    %c0_25 = arith.constant 0 : index
    %65 = vector.load %arg7[%c16, %c0_25] : memref<64x1024xf32, #tpu.memory_space<vmem>>, vector<8x1024xf32>
    %c0_26 = arith.constant 0 : index
    %c0_27 = arith.constant 0 : index
    %66 = vector.load %arg3[%c0_26, %c0_27] : memref<256x1024xf32, #tpu.memory_space<vmem>>, vector<256x1024xf32>
    %cst_28 = arith.constant dense<0.000000e+00> : vector<8x1024xf32>
    %67 = tpu.matmul %60, %66, %cst_28 {dimension_numbers = #tpu.dot_dimension_numbers<[1], [0], [0], [1], [0, 0, 1, 1], [], []>} : vector<8x256xf32>, vector<256x1024xf32>, vector<8x1024xf32> -> vector<8x1024xf32>
    %68 = arith.addf %65, %67 : vector<8x1024xf32>
    %69 = vector.extract_strided_slice %68 {offsets = [0, 0], sizes = [8, 768], strides = [1, 1]} : vector<8x1024xf32> to vector<8x768xf32>
    %70 = arith.negf %69 : vector<8x768xf32>
    %71 = math.exp %70 : vector<8x768xf32>
    %cst_29 = arith.constant 1.000000e+00 : f32
    %72 = vector.broadcast %cst_29 : f32 to vector<8x768xf32>
    %73 = arith.addf %72, %71 : vector<8x768xf32>
    %74 = arith.divf %72, %73 : vector<8x768xf32>
    %75 = vector.extract_strided_slice %68 {offsets = [0, 768], sizes = [8, 256], strides = [1, 1]} : vector<8x1024xf32> to vector<8x256xf32>
    %76 = math.tanh %75 : vector<8x256xf32>
    %77 = vector.extract_strided_slice %74 {offsets = [0, 0], sizes = [8, 256], strides = [1, 1]} : vector<8x768xf32> to vector<8x256xf32>
    %78 = vector.extract_strided_slice %74 {offsets = [0, 256], sizes = [8, 256], strides = [1, 1]} : vector<8x768xf32> to vector<8x256xf32>
    %79 = vector.extract_strided_slice %74 {offsets = [0, 512], sizes = [8, 256], strides = [1, 1]} : vector<8x768xf32> to vector<8x256xf32>
    %80 = arith.mulf %78, %58 : vector<8x256xf32>
    %81 = arith.mulf %77, %76 : vector<8x256xf32>
    %82 = arith.addf %80, %81 : vector<8x256xf32>
    %83 = math.tanh %82 : vector<8x256xf32>
    %84 = arith.mulf %79, %83 : vector<8x256xf32>
    %85 = vector.extract_strided_slice %84 {offsets = [0, 0], sizes = [8, 128], strides = [1, 1]} : vector<8x256xf32> to vector<8x128xf32>
    %c16_30 = arith.constant 16 : index
    %c0_31 = arith.constant 0 : index
    %86 = vector.load %arg8[%c16_30, %c0_31] : memref<64x256xf32, #tpu.memory_space<vmem>>, vector<8x128xf32>
    tpu.vector_store %arg8[%c16_30, %c0_31], %85 {strides = array<i32>} : memref<64x256xf32, #tpu.memory_space<vmem>>, vector<8x128xf32>,
    %87 = vector.extract_strided_slice %84 {offsets = [0, 128], sizes = [8, 128], strides = [1, 1]} : vector<8x256xf32> to vector<8x128xf32>
    %c40 = arith.constant 40 : index
    %c128_32 = arith.constant 128 : index
    %88 = vector.load %arg8[%c40, %c128_32] : memref<64x256xf32, #tpu.memory_space<vmem>>, vector<8x128xf32>
    tpu.vector_store %arg8[%c40, %c128_32], %87 {strides = array<i32>} : memref<64x256xf32, #tpu.memory_space<vmem>>, vector<8x128xf32>,
    %c24 = arith.constant 24 : index
    %c0_33 = arith.constant 0 : index
    %89 = vector.load %arg7[%c24, %c0_33] : memref<64x1024xf32, #tpu.memory_space<vmem>>, vector<8x1024xf32>
    %c0_34 = arith.constant 0 : index
    %c0_35 = arith.constant 0 : index
    %90 = vector.load %arg3[%c0_34, %c0_35] : memref<256x1024xf32, #tpu.memory_space<vmem>>, vector<256x1024xf32>
    %cst_36 = arith.constant dense<0.000000e+00> : vector<8x1024xf32>
    %91 = tpu.matmul %84, %90, %cst_36 {dimension_numbers = #tpu.dot_dimension_numbers<[1], [0], [0], [1], [0, 0, 1, 1], [], []>} : vector<8x256xf32>, vector<256x1024xf32>, vector<8x1024xf32> -> vector<8x1024xf32>
    %92 = arith.addf %89, %91 : vector<8x1024xf32>
    %93 = vector.extract_strided_slice %92 {offsets = [0, 0], sizes = [8, 768], strides = [1, 1]} : vector<8x1024xf32> to vector<8x768xf32>
    %94 = arith.negf %93 : vector<8x768xf32>
    %95 = math.exp %94 : vector<8x768xf32>
    %cst_37 = arith.constant 1.000000e+00 : f32
    %96 = vector.broadcast %cst_37 : f32 to vector<8x768xf32>
    %97 = arith.addf %96, %95 : vector<8x768xf32>
    %98 = arith.divf %96, %97 : vector<8x768xf32>
    %99 = vector.extract_strided_slice %92 {offsets = [0, 768], sizes = [8, 256], strides = [1, 1]} : vector<8x1024xf32> to vector<8x256xf32>
    %100 = math.tanh %99 : vector<8x256xf32>
    %101 = vector.extract_strided_slice %98 {offsets = [0, 0], sizes = [8, 256], strides = [1, 1]} : vector<8x768xf32> to vector<8x256xf32>
    %102 = vector.extract_strided_slice %98 {offsets = [0, 256], sizes = [8, 256], strides = [1, 1]} : vector<8x768xf32> to vector<8x256xf32>
    %103 = vector.extract_strided_slice %98 {offsets = [0, 512], sizes = [8, 256], strides = [1, 1]} : vector<8x768xf32> to vector<8x256xf32>
    %104 = arith.mulf %102, %82 : vector<8x256xf32>
    %105 = arith.mulf %101, %100 : vector<8x256xf32>
    %106 = arith.addf %104, %105 : vector<8x256xf32>
    %107 = math.tanh %106 : vector<8x256xf32>
    %108 = arith.mulf %103, %107 : vector<8x256xf32>
    %109 = vector.extract_strided_slice %108 {offsets = [0, 0], sizes = [8, 128], strides = [1, 1]} : vector<8x256xf32> to vector<8x128xf32>
    %c24_38 = arith.constant 24 : index
    %c0_39 = arith.constant 0 : index
    %110 = vector.load %arg8[%c24_38, %c0_39] : memref<64x256xf32, #tpu.memory_space<vmem>>, vector<8x128xf32>
    tpu.vector_store %arg8[%c24_38, %c0_39], %109 {strides = array<i32>} : memref<64x256xf32, #tpu.memory_space<vmem>>, vector<8x128xf32>,
    %111 = vector.extract_strided_slice %108 {offsets = [0, 128], sizes = [8, 128], strides = [1, 1]} : vector<8x256xf32> to vector<8x128xf32>
    %c32 = arith.constant 32 : index
    %c128_40 = arith.constant 128 : index
    %112 = vector.load %arg8[%c32, %c128_40] : memref<64x256xf32, #tpu.memory_space<vmem>>, vector<8x128xf32>
    tpu.vector_store %arg8[%c32, %c128_40], %111 {strides = array<i32>} : memref<64x256xf32, #tpu.memory_space<vmem>>, vector<8x128xf32>,
    %c32_41 = arith.constant 32 : index
    %c0_42 = arith.constant 0 : index
    %113 = vector.load %arg7[%c32_41, %c0_42] : memref<64x1024xf32, #tpu.memory_space<vmem>>, vector<8x1024xf32>
    %c0_43 = arith.constant 0 : index
    %c0_44 = arith.constant 0 : index
    %114 = vector.load %arg3[%c0_43, %c0_44] : memref<256x1024xf32, #tpu.memory_space<vmem>>, vector<256x1024xf32>
    %cst_45 = arith.constant dense<0.000000e+00> : vector<8x1024xf32>
    %115 = tpu.matmul %108, %114, %cst_45 {dimension_numbers = #tpu.dot_dimension_numbers<[1], [0], [0], [1], [0, 0, 1, 1], [], []>} : vector<8x256xf32>, vector<256x1024xf32>, vector<8x1024xf32> -> vector<8x1024xf32>
    %116 = arith.addf %113, %115 : vector<8x1024xf32>
    %117 = vector.extract_strided_slice %116 {offsets = [0, 0], sizes = [8, 768], strides = [1, 1]} : vector<8x1024xf32> to vector<8x768xf32>
    %118 = arith.negf %117 : vector<8x768xf32>
    %119 = math.exp %118 : vector<8x768xf32>
    %cst_46 = arith.constant 1.000000e+00 : f32
    %120 = vector.broadcast %cst_46 : f32 to vector<8x768xf32>
    %121 = arith.addf %120, %119 : vector<8x768xf32>
    %122 = arith.divf %120, %121 : vector<8x768xf32>
    %123 = vector.extract_strided_slice %116 {offsets = [0, 768], sizes = [8, 256], strides = [1, 1]} : vector<8x1024xf32> to vector<8x256xf32>
    %124 = math.tanh %123 : vector<8x256xf32>
    %125 = vector.extract_strided_slice %122 {offsets = [0, 0], sizes = [8, 256], strides = [1, 1]} : vector<8x768xf32> to vector<8x256xf32>
    %126 = vector.extract_strided_slice %122 {offsets = [0, 256], sizes = [8, 256], strides = [1, 1]} : vector<8x768xf32> to vector<8x256xf32>
    %127 = vector.extract_strided_slice %122 {offsets = [0, 512], sizes = [8, 256], strides = [1, 1]} : vector<8x768xf32> to vector<8x256xf32>
    %128 = arith.mulf %126, %106 : vector<8x256xf32>
    %129 = arith.mulf %125, %124 : vector<8x256xf32>
    %130 = arith.addf %128, %129 : vector<8x256xf32>
    %131 = math.tanh %130 : vector<8x256xf32>
    %132 = arith.mulf %127, %131 : vector<8x256xf32>
    %133 = vector.extract_strided_slice %132 {offsets = [0, 0], sizes = [8, 128], strides = [1, 1]} : vector<8x256xf32> to vector<8x128xf32>
    %c32_47 = arith.constant 32 : index
    %c0_48 = arith.constant 0 : index
    %134 = vector.load %arg8[%c32_47, %c0_48] : memref<64x256xf32, #tpu.memory_space<vmem>>, vector<8x128xf32>
    tpu.vector_store %arg8[%c32_47, %c0_48], %133 {strides = array<i32>} : memref<64x256xf32, #tpu.memory_space<vmem>>, vector<8x128xf32>,
    %135 = vector.extract_strided_slice %132 {offsets = [0, 128], sizes = [8, 128], strides = [1, 1]} : vector<8x256xf32> to vector<8x128xf32>
    %c24_49 = arith.constant 24 : index
    %c128_50 = arith.constant 128 : index
    %136 = vector.load %arg8[%c24_49, %c128_50] : memref<64x256xf32, #tpu.memory_space<vmem>>, vector<8x128xf32>
    tpu.vector_store %arg8[%c24_49, %c128_50], %135 {strides = array<i32>} : memref<64x256xf32, #tpu.memory_space<vmem>>, vector<8x128xf32>,
    %c40_51 = arith.constant 40 : index
    %c0_52 = arith.constant 0 : index
    %137 = vector.load %arg7[%c40_51, %c0_52] : memref<64x1024xf32, #tpu.memory_space<vmem>>, vector<8x1024xf32>
    %c0_53 = arith.constant 0 : index
    %c0_54 = arith.constant 0 : index
    %138 = vector.load %arg3[%c0_53, %c0_54] : memref<256x1024xf32, #tpu.memory_space<vmem>>, vector<256x1024xf32>
    %cst_55 = arith.constant dense<0.000000e+00> : vector<8x1024xf32>
    %139 = tpu.matmul %132, %138, %cst_55 {dimension_numbers = #tpu.dot_dimension_numbers<[1], [0], [0], [1], [0, 0, 1, 1], [], []>} : vector<8x256xf32>, vector<256x1024xf32>, vector<8x1024xf32> -> vector<8x1024xf32>
    %140 = arith.addf %137, %139 : vector<8x1024xf32>
    %141 = vector.extract_strided_slice %140 {offsets = [0, 0], sizes = [8, 768], strides = [1, 1]} : vector<8x1024xf32> to vector<8x768xf32>
    %142 = arith.negf %141 : vector<8x768xf32>
    %143 = math.exp %142 : vector<8x768xf32>
    %cst_56 = arith.constant 1.000000e+00 : f32
    %144 = vector.broadcast %cst_56 : f32 to vector<8x768xf32>
    %145 = arith.addf %144, %143 : vector<8x768xf32>
    %146 = arith.divf %144, %145 : vector<8x768xf32>
    %147 = vector.extract_strided_slice %140 {offsets = [0, 768], sizes = [8, 256], strides = [1, 1]} : vector<8x1024xf32> to vector<8x256xf32>
    %148 = math.tanh %147 : vector<8x256xf32>
    %149 = vector.extract_strided_slice %146 {offsets = [0, 0], sizes = [8, 256], strides = [1, 1]} : vector<8x768xf32> to vector<8x256xf32>
    %150 = vector.extract_strided_slice %146 {offsets = [0, 256], sizes = [8, 256], strides = [1, 1]} : vector<8x768xf32> to vector<8x256xf32>
    %151 = vector.extract_strided_slice %146 {offsets = [0, 512], sizes = [8, 256], strides = [1, 1]} : vector<8x768xf32> to vector<8x256xf32>
    %152 = arith.mulf %150, %130 : vector<8x256xf32>
    %153 = arith.mulf %149, %148 : vector<8x256xf32>
    %154 = arith.addf %152, %153 : vector<8x256xf32>
    %155 = math.tanh %154 : vector<8x256xf32>
    %156 = arith.mulf %151, %155 : vector<8x256xf32>
    %157 = vector.extract_strided_slice %156 {offsets = [0, 0], sizes = [8, 128], strides = [1, 1]} : vector<8x256xf32> to vector<8x128xf32>
    %c40_57 = arith.constant 40 : index
    %c0_58 = arith.constant 0 : index
    %158 = vector.load %arg8[%c40_57, %c0_58] : memref<64x256xf32, #tpu.memory_space<vmem>>, vector<8x128xf32>
    tpu.vector_store %arg8[%c40_57, %c0_58], %157 {strides = array<i32>} : memref<64x256xf32, #tpu.memory_space<vmem>>, vector<8x128xf32>,
    %159 = vector.extract_strided_slice %156 {offsets = [0, 128], sizes = [8, 128], strides = [1, 1]} : vector<8x256xf32> to vector<8x128xf32>
    %c16_59 = arith.constant 16 : index
    %c128_60 = arith.constant 128 : index
    %160 = vector.load %arg8[%c16_59, %c128_60] : memref<64x256xf32, #tpu.memory_space<vmem>>, vector<8x128xf32>
    tpu.vector_store %arg8[%c16_59, %c128_60], %159 {strides = array<i32>} : memref<64x256xf32, #tpu.memory_space<vmem>>, vector<8x128xf32>,
    %c48_61 = arith.constant 48 : index
    %c0_62 = arith.constant 0 : index
    %161 = vector.load %arg7[%c48_61, %c0_62] : memref<64x1024xf32, #tpu.memory_space<vmem>>, vector<8x1024xf32>
    %c0_63 = arith.constant 0 : index
    %c0_64 = arith.constant 0 : index
    %162 = vector.load %arg3[%c0_63, %c0_64] : memref<256x1024xf32, #tpu.memory_space<vmem>>, vector<256x1024xf32>
    %cst_65 = arith.constant dense<0.000000e+00> : vector<8x1024xf32>
    %163 = tpu.matmul %156, %162, %cst_65 {dimension_numbers = #tpu.dot_dimension_numbers<[1], [0], [0], [1], [0, 0, 1, 1], [], []>} : vector<8x256xf32>, vector<256x1024xf32>, vector<8x1024xf32> -> vector<8x1024xf32>
    %164 = arith.addf %161, %163 : vector<8x1024xf32>
    %165 = vector.extract_strided_slice %164 {offsets = [0, 0], sizes = [8, 768], strides = [1, 1]} : vector<8x1024xf32> to vector<8x768xf32>
    %166 = arith.negf %165 : vector<8x768xf32>
    %167 = math.exp %166 : vector<8x768xf32>
    %cst_66 = arith.constant 1.000000e+00 : f32
    %168 = vector.broadcast %cst_66 : f32 to vector<8x768xf32>
    %169 = arith.addf %168, %167 : vector<8x768xf32>
    %170 = arith.divf %168, %169 : vector<8x768xf32>
    %171 = vector.extract_strided_slice %164 {offsets = [0, 768], sizes = [8, 256], strides = [1, 1]} : vector<8x1024xf32> to vector<8x256xf32>
    %172 = math.tanh %171 : vector<8x256xf32>
    %173 = vector.extract_strided_slice %170 {offsets = [0, 0], sizes = [8, 256], strides = [1, 1]} : vector<8x768xf32> to vector<8x256xf32>
    %174 = vector.extract_strided_slice %170 {offsets = [0, 256], sizes = [8, 256], strides = [1, 1]} : vector<8x768xf32> to vector<8x256xf32>
    %175 = vector.extract_strided_slice %170 {offsets = [0, 512], sizes = [8, 256], strides = [1, 1]} : vector<8x768xf32> to vector<8x256xf32>
    %176 = arith.mulf %174, %154 : vector<8x256xf32>
    %177 = arith.mulf %173, %172 : vector<8x256xf32>
    %178 = arith.addf %176, %177 : vector<8x256xf32>
    %179 = math.tanh %178 : vector<8x256xf32>
    %180 = arith.mulf %175, %179 : vector<8x256xf32>
    %181 = vector.extract_strided_slice %180 {offsets = [0, 0], sizes = [8, 128], strides = [1, 1]} : vector<8x256xf32> to vector<8x128xf32>
    %c48_67 = arith.constant 48 : index
    %c0_68 = arith.constant 0 : index
    %182 = vector.load %arg8[%c48_67, %c0_68] : memref<64x256xf32, #tpu.memory_space<vmem>>, vector<8x128xf32>
    tpu.vector_store %arg8[%c48_67, %c0_68], %181 {strides = array<i32>} : memref<64x256xf32, #tpu.memory_space<vmem>>, vector<8x128xf32>,
    %183 = vector.extract_strided_slice %180 {offsets = [0, 128], sizes = [8, 128], strides = [1, 1]} : vector<8x256xf32> to vector<8x128xf32>
    %c8_69 = arith.constant 8 : index
    %c128_70 = arith.constant 128 : index
    %184 = vector.load %arg8[%c8_69, %c128_70] : memref<64x256xf32, #tpu.memory_space<vmem>>, vector<8x128xf32>
    tpu.vector_store %arg8[%c8_69, %c128_70], %183 {strides = array<i32>} : memref<64x256xf32, #tpu.memory_space<vmem>>, vector<8x128xf32>,
    %c56_71 = arith.constant 56 : index
    %c0_72 = arith.constant 0 : index
    %185 = vector.load %arg7[%c56_71, %c0_72] : memref<64x1024xf32, #tpu.memory_space<vmem>>, vector<8x1024xf32>
    %c0_73 = arith.constant 0 : index
    %c0_74 = arith.constant 0 : index
    %186 = vector.load %arg3[%c0_73, %c0_74] : memref<256x1024xf32, #tpu.memory_space<vmem>>, vector<256x1024xf32>
    %cst_75 = arith.constant dense<0.000000e+00> : vector<8x1024xf32>
    %187 = tpu.matmul %180, %186, %cst_75 {dimension_numbers = #tpu.dot_dimension_numbers<[1], [0], [0], [1], [0, 0, 1, 1], [], []>} : vector<8x256xf32>, vector<256x1024xf32>, vector<8x1024xf32> -> vector<8x1024xf32>
    %188 = arith.addf %185, %187 : vector<8x1024xf32>
    %189 = vector.extract_strided_slice %188 {offsets = [0, 0], sizes = [8, 768], strides = [1, 1]} : vector<8x1024xf32> to vector<8x768xf32>
    %190 = arith.negf %189 : vector<8x768xf32>
    %191 = math.exp %190 : vector<8x768xf32>
    %cst_76 = arith.constant 1.000000e+00 : f32
    %192 = vector.broadcast %cst_76 : f32 to vector<8x768xf32>
    %193 = arith.addf %192, %191 : vector<8x768xf32>
    %194 = arith.divf %192, %193 : vector<8x768xf32>
    %195 = vector.extract_strided_slice %188 {offsets = [0, 768], sizes = [8, 256], strides = [1, 1]} : vector<8x1024xf32> to vector<8x256xf32>
    %196 = math.tanh %195 : vector<8x256xf32>
    %197 = vector.extract_strided_slice %194 {offsets = [0, 0], sizes = [8, 256], strides = [1, 1]} : vector<8x768xf32> to vector<8x256xf32>
    %198 = vector.extract_strided_slice %194 {offsets = [0, 256], sizes = [8, 256], strides = [1, 1]} : vector<8x768xf32> to vector<8x256xf32>
    %199 = vector.extract_strided_slice %194 {offsets = [0, 512], sizes = [8, 256], strides = [1, 1]} : vector<8x768xf32> to vector<8x256xf32>
    %200 = arith.mulf %198, %178 : vector<8x256xf32>
    %201 = arith.mulf %197, %196 : vector<8x256xf32>
    %202 = arith.addf %200, %201 : vector<8x256xf32>
    %203 = math.tanh %202 : vector<8x256xf32>
    %204 = arith.mulf %199, %203 : vector<8x256xf32>
    %205 = vector.extract_strided_slice %204 {offsets = [0, 0], sizes = [8, 128], strides = [1, 1]} : vector<8x256xf32> to vector<8x128xf32>
    %c56_77 = arith.constant 56 : index
    %c0_78 = arith.constant 0 : index
    %206 = vector.load %arg8[%c56_77, %c0_78] : memref<64x256xf32, #tpu.memory_space<vmem>>, vector<8x128xf32>
    tpu.vector_store %arg8[%c56_77, %c0_78], %205 {strides = array<i32>} : memref<64x256xf32, #tpu.memory_space<vmem>>, vector<8x128xf32>,
    %207 = vector.extract_strided_slice %204 {offsets = [0, 128], sizes = [8, 128], strides = [1, 1]} : vector<8x256xf32> to vector<8x128xf32>
    %c0_79 = arith.constant 0 : index
    %c128_80 = arith.constant 128 : index
    %208 = vector.load %arg8[%c0_79, %c128_80] : memref<64x256xf32, #tpu.memory_space<vmem>>, vector<8x128xf32>
    tpu.vector_store %arg8[%c0_79, %c128_80], %207 {strides = array<i32>} : memref<64x256xf32, #tpu.memory_space<vmem>>, vector<8x128xf32>,
    %c0_81 = arith.constant 0 : index
    %c0_82 = arith.constant 0 : index
    %209 = vector.load %arg8[%c0_81, %c0_82] : memref<64x256xf32, #tpu.memory_space<vmem>>, vector<64x256xf32>
    %c0_83 = arith.constant 0 : index
    %c0_84 = arith.constant 0 : index
    %210 = vector.load %arg4[%c0_83, %c0_84] : memref<256x128xf32, #tpu.memory_space<vmem>>, vector<256x128xf32>
    %cst_85 = arith.constant dense<0.000000e+00> : vector<64x128xf32>
    %211 = tpu.matmul %209, %210, %cst_85 {dimension_numbers = #tpu.dot_dimension_numbers<[1], [0], [0], [1], [0, 0, 1, 1], [], []>} : vector<64x256xf32>, vector<256x128xf32>, vector<64x128xf32> -> vector<64x128xf32>
    %c0_86 = arith.constant 0 : index
    %c0_87 = arith.constant 0 : index
    %212 = vector.load %arg5[%c0_86, %c0_87] : memref<1x128xf32, #tpu.memory_space<vmem>>, vector<1x128xf32>
    %213 = vector.broadcast %212 : vector<1x128xf32> to vector<64x128xf32>
    %214 = arith.addf %211, %213 : vector<64x128xf32>
    %c0_88 = arith.constant 0 : index
    %c0_89 = arith.constant 0 : index
    %215 = vector.load %arg6[%c0_88, %c0_89] : memref<64x128xf32, #tpu.memory_space<vmem>>, vector<64x128xf32>
    tpu.vector_store %arg6[%c0_88, %c0_89], %214 {strides = array<i32>} : memref<64x128xf32, #tpu.memory_space<vmem>>, vector<64x128xf32>,
    return
  }
}

</mosaic_0001>

<llo_original>
// kernel: char_ner_forward_pallas.1
$region0: #{char_ner_forward_pallas.1}
  #allocation0 [shape = 'u32[]', space=smem, size = 0x4, offset = 0x4, fixed_abs, tag = 'smem constant byte address 0x4 - core index']
  #allocation1 [shape = 'u32[72,128]{1,0:T(1,128)}', space=vmem, size = 0x9000, scoped, tag = 'internal scratch']
  #allocation2 [shape = 'f32[64,1024]{1,0:T(8,128)}', space=vmem, size = 0x40000, scoped, tag = 'scratch operand']
  #allocation3 [shape = 'f32[64,256]{1,0:T(8,128)}', space=vmem, size = 0x10000, scoped, tag = 'scratch operand']
  %s0 = inlined_call_operand.vmem [shape: s32[64,1], index: 0, kind: input, shape index: {}]
  %s1 = inlined_call_operand.vmem [shape: s32[64,1], index: 1, kind: input, shape index: {}]
  %s2 = inlined_call_operand.vmem [shape: f32[256,1024], index: 2, kind: input, shape index: {}]
  %s3 = inlined_call_operand.vmem [shape: f32[256,1024], index: 3, kind: input, shape index: {}]
  %s4 = inlined_call_operand.vmem [shape: f32[256,128], index: 4, kind: input, shape index: {}]
  %s5 = inlined_call_operand.vmem [shape: f32[1,128], index: 5, kind: input, shape index: {}]
  %s6 = inlined_call_operand.vmem [shape: f32[64,128], index: 6, kind: output, shape index: {}]
  %s7 = sld [smem:[#allocation0]]
  $region34: #{char_ner_forward_pallas.1} parent=0
    _
  %s9 = ssub.s32 1, %s7
  %s10 = scalar_select 0, %s9, %s7
  // Predicated region
  $region2: #{char_ner_forward_pallas.1} parent=0 // pred_check
    _
  $region3: #{char_ner_forward_pallas.1} parent=0 // pred_check_branch
    %12 = sbr.rel (0) target = $region5
  $region4: #{char_ner_forward_pallas.1} parent=0 // pred_region
    _
  $region5: #{char_ner_forward_pallas.1} parent=0 // pred_fallthru
    _
  // Predicated region
  $region6: #{char_ner_forward_pallas.1} parent=0 // pred_check
    _
  $region7: #{char_ner_forward_pallas.1} parent=0 // pred_check_branch
    %14 = sbr.rel (0) target = $region9
  $region8: #{char_ner_forward_pallas.1} parent=0 // pred_region
    _
  $region9: #{char_ner_forward_pallas.1} parent=0 // pred_fallthru
    _
  // Predicated region
  $region10: #{char_ner_forward_pallas.1} parent=0 // pred_check
    _
  $region11: #{char_ner_forward_pallas.1} parent=0 // pred_check_branch
    %16 = sbr.rel (0) target = $region13
  $region12: #{char_ner_forward_pallas.1} parent=0 // pred_region
    _
  $region13: #{char_ner_forward_pallas.1} parent=0 // pred_fallthru
    _
  // Predicated region
  $region14: #{char_ner_forward_pallas.1} parent=0 // pred_check
    _
  $region15: #{char_ner_forward_pallas.1} parent=0 // pred_check_branch
    %18 = sbr.rel (0) target = $region17
  $region16: #{char_ner_forward_pallas.1} parent=0 // pred_region
    _
  $region17: #{char_ner_forward_pallas.1} parent=0 // pred_fallthru
    _
  // Predicated region
  $region18: #{char_ner_forward_pallas.1} parent=0 // pred_check
    _
  $region19: #{char_ner_forward_pallas.1} parent=0 // pred_check_branch
    %20 = sbr.rel (0) target = $region21
  $region20: #{char_ner_forward_pallas.1} parent=0 // pred_region
    _
  $region21: #{char_ner_forward_pallas.1} parent=0 // pred_fallthru
    _
  // Predicated region
  $region22: #{char_ner_forward_pallas.1} parent=0 // pred_check
    _
  $region23: #{char_ner_forward_pallas.1} parent=0 // pred_check_branch
    %22 = sbr.rel (0) target = $region25
  $region24: #{char_ner_forward_pallas.1} parent=0 // pred_region
    _
  $region25: #{char_ner_forward_pallas.1} parent=0 // pred_fallthru
    _
  %v23 = vlaneseq
  %v24 = vand.u32 %v23, 127
  %v25 = vld [vmem:[%s0] sm:$0xff]
  %v26 = vld [vmem:[%s0 + $0x8] sm:$0xff]
  %v27 = vld [vmem:[%s0 + $0x10] sm:$0xff]
  %v28 = vld [vmem:[%s0 + $0x18] sm:$0xff]
  %v29 = vld [vmem:[%s0 + $0x20] sm:$0xff]
  %v30 = vld [vmem:[%s0 + $0x28] sm:$0xff]
  %v31 = vld [vmem:[%s0 + $0x30] sm:$0xff]
  %v32 = vld [vmem:[%s0 + $0x38] sm:$0xff]
  %33 = vset.pattern.permute.xlu0 0
  %34 = vperm.xlu0 %33, %v25
  %v35 = vpop.permute.xlu0 %34
  %36 = vset.pattern.permute.xlu0 0
  %37 = vperm.xlu0 %36, %v26
  %v38 = vpop.permute.xlu0 %37
  %39 = vset.pattern.permute.xlu0 0
  %40 = vperm.xlu0 %39, %v27
  %v41 = vpop.permute.xlu0 %40
  %42 = vset.pattern.permute.xlu0 0
  %43 = vperm.xlu0 %42, %v28
  %v44 = vpop.permute.xlu0 %43
  %45 = vset.pattern.permute.xlu0 0
  %46 = vperm.xlu0 %45, %v29
  %v47 = vpop.permute.xlu0 %46
  %48 = vset.pattern.permute.xlu0 0
  %49 = vperm.xlu0 %48, %v30
  %v50 = vpop.permute.xlu0 %49
  %51 = vset.pattern.permute.xlu0 0
  %52 = vperm.xlu0 %51, %v31
  %v53 = vpop.permute.xlu0 %52
  %54 = vset.pattern.permute.xlu0 0
  %55 = vperm.xlu0 %54, %v32
  %v56 = vpop.permute.xlu0 %55
  %vm57 = vcmp.eq.s32.totalorder %v35, %v24
  %vm58 = vcmp.eq.s32.totalorder %v38, %v24
  %vm59 = vcmp.eq.s32.totalorder %v41, %v24
  %vm60 = vcmp.eq.s32.totalorder %v44, %v24
  %vm61 = vcmp.eq.s32.totalorder %v47, %v24
  %vm62 = vcmp.eq.s32.totalorder %v50, %v24
  %vm63 = vcmp.eq.s32.totalorder %v53, %v24
  %vm64 = vcmp.eq.s32.totalorder %v56, %v24
  %v65 = vsel %vm57, 1, 0
  %v66 = vsel %vm58, 1, 0
  %v67 = vsel %vm59, 1, 0
  %v68 = vsel %vm60, 1, 0
  %v69 = vsel %vm61, 1, 0
  %v70 = vsel %vm62, 1, 0
  %v71 = vsel %vm63, 1, 0
  %v72 = vsel %vm64, 1, 0
  %v73 = vcvt.s32.f32 %v65
  %v74 = vcvt.s32.f32 %v66
  %v75 = vcvt.s32.f32 %v67
  %v76 = vcvt.s32.f32 %v68
  %v77 = vcvt.s32.f32 %v69
  %v78 = vcvt.s32.f32 %v70
  %v79 = vcvt.s32.f32 %v71
  %v80 = vcvt.s32.f32 %v72
  %v81 = vld [vmem:[%s1] sm:$0xff]
  %v82 = vld [vmem:[%s1 + $0x8] sm:$0xff]
  %v83 = vld [vmem:[%s1 + $0x10] sm:$0xff]
  %v84 = vld [vmem:[%s1 + $0x18] sm:$0xff]
  %v85 = vld [vmem:[%s1 + $0x20] sm:$0xff]
  %v86 = vld [vmem:[%s1 + $0x28] sm:$0xff]
  %v87 = vld [vmem:[%s1 + $0x30] sm:$0xff]
  %v88 = vld [vmem:[%s1 + $0x38] sm:$0xff]
  %89 = vset.pattern.permute.xlu0 0
  %90 = vperm.xlu0 %89, %v81
  %v91 = vpop.permute.xlu0 %90
  %92 = vset.pattern.permute.xlu0 0
  %93 = vperm.xlu0 %92, %v82
  %v94 = vpop.permute.xlu0 %93
  %95 = vset.pattern.permute.xlu0 0
  %96 = vperm.xlu0 %95, %v83
  %v97 = vpop.permute.xlu0 %96
  %98 = vset.pattern.permute.xlu0 0
  %99 = vperm.xlu0 %98, %v84
  %v100 = vpop.permute.xlu0 %99
  %101 = vset.pattern.permute.xlu0 0
  %102 = vperm.xlu0 %101, %v85
  %v103 = vpop.permute.xlu0 %102
  %104 = vset.pattern.permute.xlu0 0
  %105 = vperm.xlu0 %104, %v86
  %v106 = vpop.permute.xlu0 %105
  %107 = vset.pattern.permute.xlu0 0
  %108 = vperm.xlu0 %107, %v87
  %v109 = vpop.permute.xlu0 %108
  %110 = vset.pattern.permute.xlu0 0
  %111 = vperm.xlu0 %110, %v88
  %v112 = vpop.permute.xlu0 %111
  %vm113 = vcmp.eq.s32.totalorder %v91, %v24
  %vm114 = vcmp.eq.s32.totalorder %v94, %v24
  %vm115 = vcmp.eq.s32.totalorder %v97, %v24
  %vm116 = vcmp.eq.s32.totalorder %v100, %v24
  %vm117 = vcmp.eq.s32.totalorder %v103, %v24
  %vm118 = vcmp.eq.s32.totalorder %v106, %v24
  %vm119 = vcmp.eq.s32.totalorder %v109, %v24
  %vm120 = vcmp.eq.s32.totalorder %v112, %v24
  %v121 = vsel %vm113, 1, 0
  %v122 = vsel %vm114, 1, 0
  %v123 = vsel %vm115, 1, 0
  %v124 = vsel %vm116, 1, 0
  %v125 = vsel %vm117, 1, 0
  %v126 = vsel %vm118, 1, 0
  %v127 = vsel %vm119, 1, 0
  %v128 = vsel %vm120, 1, 0
  %v129 = vcvt.s32.f32 %v121
  %v130 = vcvt.s32.f32 %v122
  %v131 = vcvt.s32.f32 %v123
  %v132 = vcvt.s32.f32 %v124
  %v133 = vcvt.s32.f32 %v125
  %v134 = vcvt.s32.f32 %v126
  %v135 = vcvt.s32.f32 %v127
  %v136 = vcvt.s32.f32 %v128
  %v137 = vld [vmem:[%s2] sm:$0xff]
  %v138 = vld [vmem:[%s2 + $0x8] sm:$0xff]
  %v139 = vld [vmem:[%s2 + $0x10] sm:$0xff]
  %v140 = vld [vmem:[%s2 + $0x18] sm:$0xff]
  %v141 = vld [vmem:[%s2 + $0x20] sm:$0xff]
  %v142 = vld [vmem:[%s2 + $0x28] sm:$0xff]
  %v143 = vld [vmem:[%s2 + $0x30] sm:$0xff]
  %v144 = vld [vmem:[%s2 + $0x38] sm:$0xff]
  %v145 = vld [vmem:[%s2 + $0x40] sm:$0xff]
  %v146 = vld [vmem:[%s2 + $0x48] sm:$0xff]
  %v147 = vld [vmem:[%s2 + $0x50] sm:$0xff]
  %v148 = vld [vmem:[%s2 + $0x58] sm:$0xff]
  %v149 = vld [vmem:[%s2 + $0x60] sm:$0xff]
  %v150 = vld [vmem:[%s2 + $0x68] sm:$0xff]
  %v151 = vld [vmem:[%s2 + $0x70] sm:$0xff]
  %v152 = vld [vmem:[%s2 + $0x78] sm:$0xff]
  %v153 = vld [vmem:[%s2 + $0x80] sm:$0xff]
  %v154 = vld [vmem:[%s2 + $0x88] sm:$0xff]
  %v155 = vld [vmem:[%s2 + $0x90] sm:$0xff]
  %v156 = vld [vmem:[%s2 + $0x98] sm:$0xff]
  %v157 = vld [vmem:[%s2 + $0xa0] sm:$0xff]
  %v158 = vld [vmem:[%s2 + $0xa8] sm:$0xff]
  %v159 = vld [vmem:[%s2 + $0xb0] sm:$0xff]
  %v160 = vld [vmem:[%s2 + $0xb8] sm:$0xff]
  %v161 = vld [vmem:[%s2 + $0xc0] sm:$0xff]
  %v162 = vld [vmem:[%s2 + $0xc8] sm:$0xff]
  %v163 = vld [vmem:[%s2 + $0xd0] sm:$0xff]
  %v164 = vld [vmem:[%s2 + $0xd8] sm:$0xff]
  %v165 = vld [vmem:[%s2 + $0xe0] sm:$0xff]
  %v166 = vld [vmem:[%s2 + $0xe8] sm:$0xff]
  %v167 = vld [vmem:[%s2 + $0xf0] sm:$0xff]
  %v168 = vld [vmem:[%s2 + $0xf8] sm:$0xff]
  %v169 = vld [vmem:[%s2 + $0x100] sm:$0xff]
  %v170 = vld [vmem:[%s2 + $0x108] sm:$0xff]
  %v171 = vld [vmem:[%s2 + $0x110] sm:$0xff]
  %v172 = vld [vmem:[%s2 + $0x118] sm:$0xff]
  %v173 = vld [vmem:[%s2 + $0x120] sm:$0xff]
  %v174 = vld [vmem:[%s2 + $0x128] sm:$0xff]
  %v175 = vld [vmem:[%s2 + $0x130] sm:$0xff]
  %v176 = vld [vmem:[%s2 + $0x138] sm:$0xff]
  %v177 = vld [vmem:[%s2 + $0x140] sm:$0xff]
  %v178 = vld [vmem:[%s2 + $0x148] sm:$0xff]
  %v179 = vld [vmem:[%s2 + $0x150] sm:$0xff]
  %v180 = vld [vmem:[%s2 + $0x158] sm:$0xff]
  %v181 = vld [vmem:[%s2 + $0x160] sm:$0xff]
  %v182 = vld [vmem:[%s2 + $0x168] sm:$0xff]
  %v183 = vld [vmem:[%s2 + $0x170] sm:$0xff]
  %v184 = vld [vmem:[%s2 + $0x178] sm:$0xff]
  %v185 = vld [vmem:[%s2 + $0x180] sm:$0xff]
  %v186 = vld [vmem:[%s2 + $0x188] sm:$0xff]
  %v187 = vld [vmem:[%s2 + $0x190] sm:$0xff]
  %v188 = vld [vmem:[%s2 + $0x198] sm:$0xff]
  %v189 = vld [vmem:[%s2 + $0x1a0] sm:$0xff]
  %v190 = vld [vmem:[%s2 + $0x1a8] sm:$0xff]
  %v191 = vld [vmem:[%s2 + $0x1b0] sm:$0xff]
  %v192 = vld [vmem:[%s2 + $0x1b8] sm:$0xff]
  %v193 = vld [vmem:[%s2 + $0x1c0] sm:$0xff]
  %v194 = vld [vmem:[%s2 + $0x1c8] sm:$0xff]
  %v195 = vld [vmem:[%s2 + $0x1d0] sm:$0xff]
  %v196 = vld [vmem:[%s2 + $0x1d8] sm:$0xff]
  %v197 = vld [vmem:[%s2 + $0x1e0] sm:$0xff]
  %v198 = vld [vmem:[%s2 + $0x1e8] sm:$0xff]
  %v199 = vld [vmem:[%s2 + $0x1f0] sm:$0xff]
  %v200 = vld [vmem:[%s2 + $0x1f8] sm:$0xff]
  %v201 = vld [vmem:[%s2 + $0x200] sm:$0xff]
  %v202 = vld [vmem:[%s2 + $0x208] sm:$0xff]
  %v203 = vld [vmem:[%s2 + $0x210] sm:$0xff]
  %v204 = vld [vmem:[%s2 + $0x218] sm:$0xff]
  %v205 = vld [vmem:[%s2 + $0x220] sm:$0xff]
  %v206 = vld [vmem:[%s2 + $0x228] sm:$0xff]
  %v207 = vld [vmem:[%s2 + $0x230] sm:$0xff]
  %v208 = vld [vmem:[%s2 + $0x238] sm:$0xff]
  %v209 = vld [vmem:[%s2 + $0x240] sm:$0xff]
  %v210 = vld [vmem:[%s2 + $0x248] sm:$0xff]
  %v211 = vld [vmem:[%s2 + $0x250] sm:$0xff]
  %v212 = vld [vmem:[%s2 + $0x258] sm:$0xff]
  %v213 = vld [vmem:[%s2 + $0x260] sm:$0xff]
  %v214 = vld [vmem:[%s2 + $0x268] sm:$0xff]
  %v215 = vld [vmem:[%s2 + $0x270] sm:$0xff]
  %v216 = vld [vmem:[%s2 + $0x278] sm:$0xff]
  %v217 = vld [vmem:[%s2 + $0x280] sm:$0xff]
  %v218 = vld [vmem:[%s2 + $0x288] sm:$0xff]
  %v219 = vld [vmem:[%s2 + $0x290] sm:$0xff]
  %v220 = vld [vmem:[%s2 + $0x298] sm:$0xff]
  %v221 = vld [vmem:[%s2 + $0x2a0] sm:$0xff]
  %v222 = vld [vmem:[%s2 + $0x2a8] sm:$0xff]
  %v223 = vld [vmem:[%s2 + $0x2b0] sm:$0xff]
  %v224 = vld [vmem:[%s2 + $0x2b8] sm:$0xff]
  %v225 = vld [vmem:[%s2 + $0x2c0] sm:$0xff]
  %v226 = vld [vmem:[%s2 + $0x2c8] sm:$0xff]
  %v227 = vld [vmem:[%s2 + $0x2d0] sm:$0xff]
  %v228 = vld [vmem:[%s2 + $0x2d8] sm:$0xff]
  %v229 = vld [vmem:[%s2 + $0x2e0] sm:$0xff]
  %v230 = vld [vmem:[%s2 + $0x2e8] sm:$0xff]
  %v231 = vld [vmem:[%s2 + $0x2f0] sm:$0xff]
  %v232 = vld [vmem:[%s2 + $0x2f8] sm:$0xff]
  %v233 = vld [vmem:[%s2 + $0x300] sm:$0xff]
  %v234 = vld [vmem:[%s2 + $0x308] sm:$0xff]
  %v235 = vld [vmem:[%s2 + $0x310] sm:$0xff]
  %v236 = vld [vmem:[%s2 + $0x318] sm:$0xff]
  %v237 = vld [vmem:[%s2 + $0x320] sm:$0xff]
  %v238 = vld [vmem:[%s2 + $0x328] sm:$0xff]
  %v239 = vld [vmem:[%s2 + $0x330] sm:$0xff]
  %v240 = vld [vmem:[%s2 + $0x338] sm:$0xff]
  %v241 = vld [vmem:[%s2 + $0x340] sm:$0xff]
  %v242 = vld [vmem:[%s2 + $0x348] sm:$0xff]
  %v243 = vld [vmem:[%s2 + $0x350] sm:$0xff]
  %v244 = vld [vmem:[%s2 + $0x358] sm:$0xff]
  %v245 = vld [vmem:[%s2 + $0x360] sm:$0xff]
  %v246 = vld [vmem:[%s2 + $0x368] sm:$0xff]
  %v247 = vld [vmem:[%s2 + $0x370] sm:$0xff]
  %v248 = vld [vmem:[%s2 + $0x378] sm:$0xff]
  %v249 = vld [vmem:[%s2 + $0x380] sm:$0xff]
  %v250 = vld [vmem:[%s2 + $0x388] sm:$0xff]
  %v251 = vld [vmem:[%s2 + $0x390] sm:$0xff]
  %v252 = vld [vmem:[%s2 + $0x398] sm:$0xff]
  %v253 = vld [vmem:[%s2 + $0x3a0] sm:$0xff]
  %v254 = vld [vmem:[%s2 + $0x3a8] sm:$0xff]
  %v255 = vld [vmem:[%s2 + $0x3b0] sm:$0xff]
  %v256 = vld [vmem:[%s2 + $0x3b8] sm:$0xff]
  %v257 = vld [vmem:[%s2 + $0x3c0] sm:$0xff]
  %v258 = vld [vmem:[%s2 + $0x3c8] sm:$0xff]
  %v259 = vld [vmem:[%s2 + $0x3d0] sm:$0xff]
  %v260 = vld [vmem:[%s2 + $0x3d8] sm:$0xff]
  %v261 = vld [vmem:[%s2 + $0x3e0] sm:$0xff]
  %v262 = vld [vmem:[%s2 + $0x3e8] sm:$0xff]
  %v263 = vld [vmem:[%s2 + $0x3f0] sm:$0xff]
  %v264 = vld [vmem:[%s2 + $0x3f8] sm:$0xff]
  %v265 = vld [vmem:[%s2 + $0x400] sm:$0xff]
  %v266 = vld [vmem:[%s2 + $0x408] sm:$0xff]
  %v267 = vld [vmem:[%s2 + $0x410] sm:$0xff]
  %v268 = vld [vmem:[%s2 + $0x418] sm:$0xff]
  %v269 = vld [vmem:[%s2 + $0x420] sm:$0xff]
  %v270 = vld [vmem:[%s2 + $0x428] sm:$0xff]
  %v271 = vld [vmem:[%s2 + $0x430] sm:$0xff]
  %v272 = vld [vmem:[%s2 + $0x438] sm:$0xff]
  %v273 = vld [vmem:[%s2 + $0x440] sm:$0xff]
  %v274 = vld [vmem:[%s2 + $0x448] sm:$0xff]
  %v275 = vld [vmem:[%s2 + $0x450] sm:$0xff]
  %v276 = vld [vmem:[%s2 + $0x458] sm:$0xff]
  %v277 = vld [vmem:[%s2 + $0x460] sm:$0xff]
  %v278 = vld [vmem:[%s2 + $0x468] sm:$0xff]
  %v279 = vld [vmem:[%s2 + $0x470] sm:$0xff]
  %v280 = vld [vmem:[%s2 + $0x478] sm:$0xff]
  %v281 = vld [vmem:[%s2 + $0x480] sm:$0xff]
  %v282 = vld [vmem:[%s2 + $0x488] sm:$0xff]
  %v283 = vld [vmem:[%s2 + $0x490] sm:$0xff]
  %v284 = vld [vmem:[%s2 + $0x498] sm:$0xff]
  %v285 = vld [vmem:[%s2 + $0x4a0] sm:$0xff]
  %v286 = vld [vmem:[%s2 + $0x4a8] sm:$0xff]
  %v287 = vld [vmem:[%s2 + $0x4b0] sm:$0xff]
  %v288 = vld [vmem:[%s2 + $0x4b8] sm:$0xff]
  %v289 = vld [vmem:[%s2 + $0x4c0] sm:$0xff]
  %v290 = vld [vmem:[%s2 + $0x4c8] sm:$0xff]
  %v291 = vld [vmem:[%s2 + $0x4d0] sm:$0xff]
  %v292 = vld [vmem:[%s2 + $0x4d8] sm:$0xff]
  %v293 = vld [vmem:[%s2 + $0x4e0] sm:$0xff]
  %v294 = vld [vmem:[%s2 + $0x4e8] sm:$0xff]
  %v295 = vld [vmem:[%s2 + $0x4f0] sm:$0xff]
  %v296 = vld [vmem:[%s2 + $0x4f8] sm:$0xff]
  %v297 = vld [vmem:[%s2 + $0x500] sm:$0xff]
  %v298 = vld [vmem:[%s2 + $0x508] sm:$0xff]
  %v299 = vld [vmem:[%s2 + $0x510] sm:$0xff]
  %v300 = vld [vmem:[%s2 + $0x518] sm:$0xff]
  %v301 = vld [vmem:[%s2 + $0x520] sm:$0xff]
  %v302 = vld [vmem:[%s2 + $0x528] sm:$0xff]
  %v303 = vld [vmem:[%s2 + $0x530] sm:$0xff]
  %v304 = vld [vmem:[%s2 + $0x538] sm:$0xff]
  %v305 = vld [vmem:[%s2 + $0x540] sm:$0xff]
  %v306 = vld [vmem:[%s2 + $0x548] sm:$0xff]
  %v307 = vld [vmem:[%s2 + $0x550] sm:$0xff]
  %v308 = vld [vmem:[%s2 + $0x558] sm:$0xff]
  %v309 = vld [vmem:[%s2 + $0x560] sm:$0xff]
  %v310 = vld [vmem:[%s2 + $0x568] sm:$0xff]
  %v311 = vld [vmem:[%s2 + $0x570] sm:$0xff]
  %v312 = vld [vmem:[%s2 + $0x578] sm:$0xff]
  %v313 = vld [vmem:[%s2 + $0x580] sm:$0xff]
  %v314 = vld [vmem:[%s2 + $0x588] sm:$0xff]
  %v315 = vld [vmem:[%s2 + $0x590] sm:$0xff]
  %v316 = vld [vmem:[%s2 + $0x598] sm:$0xff]
  %v317 = vld [vmem:[%s2 + $0x5a0] sm:$0xff]
  %v318 = vld [vmem:[%s2 + $0x5a8] sm:$0xff]
  %v319 = vld [vmem:[%s2 + $0x5b0] sm:$0xff]
  %v320 = vld [vmem:[%s2 + $0x5b8] sm:$0xff]
  %v321 = vld [vmem:[%s2 + $0x5c0] sm:$0xff]
  %v322 = vld [vmem:[%s2 + $0x5c8] sm:$0xff]
  %v323 = vld [vmem:[%s2 + $0x5d0] sm:$0xff]
  %v324 = vld [vmem:[%s2 + $0x5d8] sm:$0xff]
  %v325 = vld [vmem:[%s2 + $0x5e0] sm:$0xff]
  %v326 = vld [vmem:[%s2 + $0x5e8] sm:$0xff]
  %v327 = vld [vmem:[%s2 + $0x5f0] sm:$0xff]
  %v328 = vld [vmem:[%s2 + $0x5f8] sm:$0xff]
  %v329 = vld [vmem:[%s2 + $0x600] sm:$0xff]
  %v330 = vld [vmem:[%s2 + $0x608] sm:$0xff]
  %v331 = vld [vmem:[%s2 + $0x610] sm:$0xff]
  %v332 = vld [vmem:[%s2 + $0x618] sm:$0xff]
  %v333 = vld [vmem:[%s2 + $0x620] sm:$0xff]
  %v334 = vld [vmem:[%s2 + $0x628] sm:$0xff]
  %v335 = vld [vmem:[%s2 + $0x630] sm:$0xff]
  %v336 = vld [vmem:[%s2 + $0x638] sm:$0xff]
  %v337 = vld [vmem:[%s2 + $0x640] sm:$0xff]
  %v338 = vld [vmem:[%s2 + $0x648] sm:$0xff]
  %v339 = vld [vmem:[%s2 + $0x650] sm:$0xff]
  %v340 = vld [vmem:[%s2 + $0x658] sm:$0xff]
  %v341 = vld [vmem:[%s2 + $0x660] sm:$0xff]
  %v342 = vld [vmem:[%s2 + $0x668] sm:$0xff]
  %v343 = vld [vmem:[%s2 + $0x670] sm:$0xff]
  %v344 = vld [vmem:[%s2 + $0x678] sm:$0xff]
  %v345 = vld [vmem:[%s2 + $0x680] sm:$0xff]
  %v346 = vld [vmem:[%s2 + $0x688] sm:$0xff]
  %v347 = vld [vmem:[%s2 + $0x690] sm:$0xff]
  %v348 = vld [vmem:[%s2 + $0x698] sm:$0xff]
  %v349 = vld [vmem:[%s2 + $0x6a0] sm:$0xff]
  %v350 = vld [vmem:[%s2 + $0x6a8] sm:$0xff]
  %v351 = vld [vmem:[%s2 + $0x6b0] sm:$0xff]
  %v352 = vld [vmem:[%s2 + $0x6b8] sm:$0xff]
  %v353 = vld [vmem:[%s2 + $0x6c0] sm:$0xff]
  %v354 = vld [vmem:[%s2 + $0x6c8] sm:$0xff]
  %v355 = vld [vmem:[%s2 + $0x6d0] sm:$0xff]
  %v356 = vld [vmem:[%s2 + $0x6d8] sm:$0xff]
  %v357 = vld [vmem:[%s2 + $0x6e0] sm:$0xff]
  %v358 = vld [vmem:[%s2 + $0x6e8] sm:$0xff]
  %v359 = vld [vmem:[%s2 + $0x6f0] sm:$0xff]
  %v360 = vld [vmem:[%s2 + $0x6f8] sm:$0xff]
  %v361 = vld [vmem:[%s2 + $0x700] sm:$0xff]
  %v362 = vld [vmem:[%s2 + $0x708] sm:$0xff]
  %v363 = vld [vmem:[%s2 + $0x710] sm:$0xff]
  %v364 = vld [vmem:[%s2 + $0x718] sm:$0xff]
  %v365 = vld [vmem:[%s2 + $0x720] sm:$0xff]
  %v366 = vld [vmem:[%s2 + $0x728] sm:$0xff]
  %v367 = vld [vmem:[%s2 + $0x730] sm:$0xff]
  %v368 = vld [vmem:[%s2 + $0x738] sm:$0xff]
  %v369 = vld [vmem:[%s2 + $0x740] sm:$0xff]
  %v370 = vld [vmem:[%s2 + $0x748] sm:$0xff]
  %v371 = vld [vmem:[%s2 + $0x750] sm:$0xff]
  %v372 = vld [vmem:[%s2 + $0x758] sm:$0xff]
  %v373 = vld [vmem:[%s2 + $0x760] sm:$0xff]
  %v374 = vld [vmem:[%s2 + $0x768] sm:$0xff]
  %v375 = vld [vmem:[%s2 + $0x770] sm:$0xff]
  %v376 = vld [vmem:[%s2 + $0x778] sm:$0xff]
  %v377 = vld [vmem:[%s2 + $0x780] sm:$0xff]
  %v378 = vld [vmem:[%s2 + $0x788] sm:$0xff]
  %v379 = vld [vmem:[%s2 + $0x790] sm:$0xff]
  %v380 = vld [vmem:[%s2 + $0x798] sm:$0xff]
  %v381 = vld [vmem:[%s2 + $0x7a0] sm:$0xff]
  %v382 = vld [vmem:[%s2 + $0x7a8] sm:$0xff]
  %v383 = vld [vmem:[%s2 + $0x7b0] sm:$0xff]
  %v384 = vld [vmem:[%s2 + $0x7b8] sm:$0xff]
  %v385 = vld [vmem:[%s2 + $0x7c0] sm:$0xff]
  %v386 = vld [vmem:[%s2 + $0x7c8] sm:$0xff]
  %v387 = vld [vmem:[%s2 + $0x7d0] sm:$0xff]
  %v388 = vld [vmem:[%s2 + $0x7d8] sm:$0xff]
  %v389 = vld [vmem:[%s2 + $0x7e0] sm:$0xff]
  %v390 = vld [vmem:[%s2 + $0x7e8] sm:$0xff]
  %v391 = vld [vmem:[%s2 + $0x7f0] sm:$0xff]
  %v392 = vld [vmem:[%s2 + $0x7f8] sm:$0xff]
  %393 = vmatpush.msra.mxu0 %v257
  %394 = vmatpush.msra.mxu0 %v249
  %395 = vmatpush.msra.mxu0 %v241
  %396 = vmatpush.msra.mxu0 %v233
  %397 = vmatpush.msra.mxu0 %v225
  %398 = vmatpush.msra.mxu0 %v217
  %399 = vmatpush.msra.mxu0 %v209
  %400 = vmatpush.msra.mxu0 %v201
  %401 = vmatpush.msra.mxu0 %v193
  %402 = vmatpush.msra.mxu0 %v185
  %403 = vmatpush.msra.mxu0 %v177
  %404 = vmatpush.msra.mxu0 %v169
  %405 = vmatpush.msra.mxu0 %v161
  %406 = vmatpush.msra.mxu0 %v153
  %407 = vmatpush.msra.mxu0 %v145
  %408 = vmatpush.msra.mxu0 %v137
  %409 = vmatmul.f32.gmra.mxu0 %v73
  %v410 = vpop.f32.mrf.mxu0
  %v411 = vadd.f32 0.0, %v410
  %412 = vmatmul.f32.gmra.mxu0 %v74
  %v413 = vpop.f32.mrf.mxu0
  %v414 = vadd.f32 0.0, %v413
  %415 = vmatmul.f32.gmra.mxu0 %v75
  %v416 = vpop.f32.mrf.mxu0
  %v417 = vadd.f32 0.0, %v416
  %418 = vmatmul.f32.gmra.mxu0 %v76
  %v419 = vpop.f32.mrf.mxu0
  %v420 = vadd.f32 0.0, %v419
  %421 = vmatmul.f32.gmra.mxu0 %v77
  %v422 = vpop.f32.mrf.mxu0
  %v423 = vadd.f32 0.0, %v422
  %424 = vmatmul.f32.gmra.mxu0 %v78
  %v425 = vpop.f32.mrf.mxu0
  %v426 = vadd.f32 0.0, %v425
  %427 = vmatmul.f32.gmra.mxu0 %v79
  %v428 = vpop.f32.mrf.mxu0
  %v429 = vadd.f32 0.0, %v428
  %430 = vmatmul.f32.gmra.mxu0 %v80
  %v431 = vpop.f32.mrf.mxu0
  %v432 = vadd.f32 0.0, %v431
  %433 = vdwg.mxu0
  %434 = vmatpush.msra.mxu0 %v385
  %435 = vmatpush.msra.mxu0 %v377
  %436 = vmatpush.msra.mxu0 %v369
  %437 = vmatpush.msra.mxu0 %v361
  %438 = vmatpush.msra.mxu0 %v353
  %439 = vmatpush.msra.mxu0 %v345
  %440 = vmatpush.msra.mxu0 %v337
  %441 = vmatpush.msra.mxu0 %v329
  %442 = vmatpush.msra.mxu0 %v321
  %443 = vmatpush.msra.mxu0 %v313
  %444 = vmatpush.msra.mxu0 %v305
  %445 = vmatpush.msra.mxu0 %v297
  %446 = vmatpush.msra.mxu0 %v289
  %447 = vmatpush.msra.mxu0 %v281
  %448 = vmatpush.msra.mxu0 %v273
  %449 = vmatpush.msra.mxu0 %v265
  %450 = vmatmul.f32.gmra.mxu0 %v129
  %v451 = vpop.f32.mrf.mxu0
  %v452 = vadd.f32 %v411, %v451
  %453 = vmatmul.f32.gmra.mxu0 %v130
  %v454 = vpop.f32.mrf.mxu0
  %v455 = vadd.f32 %v414, %v454
  %456 = vmatmul.f32.gmra.mxu0 %v131
  %v457 = vpop.f32.mrf.mxu0
  %v458 = vadd.f32 %v417, %v457
  %459 = vmatmul.f32.gmra.mxu0 %v132
  %v460 = vpop.f32.mrf.mxu0
  %v461 = vadd.f32 %v420, %v460
  %462 = vmatmul.f32.gmra.mxu0 %v133
  %v463 = vpop.f32.mrf.mxu0
  %v464 = vadd.f32 %v423, %v463
  %465 = vmatmul.f32.gmra.mxu0 %v134
  %v466 = vpop.f32.mrf.mxu0
  %v467 = vadd.f32 %v426, %v466
  %468 = vmatmul.f32.gmra.mxu0 %v135
  %v469 = vpop.f32.mrf.mxu0
  %v470 = vadd.f32 %v429, %v469
  %471 = vmatmul.f32.gmra.mxu0 %v136
  %v472 = vpop.f32.mrf.mxu0
  %v473 = vadd.f32 %v432, %v472
  %474 = vdwg.mxu0
  %475 = vmatpush.msra.mxu0 %v258
  %476 = vmatpush.msra.mxu0 %v250
  %477 = vmatpush.msra.mxu0 %v242
  %478 = vmatpush.msra.mxu0 %v234
  %479 = vmatpush.msra.mxu0 %v226
  %480 = vmatpush.msra.mxu0 %v218
  %481 = vmatpush.msra.mxu0 %v210
  %482 = vmatpush.msra.mxu0 %v202
  %483 = vmatpush.msra.mxu0 %v194
  %484 = vmatpush.msra.mxu0 %v186
  %485 = vmatpush.msra.mxu0 %v178
  %486 = vmatpush.msra.mxu0 %v170
  %487 = vmatpush.msra.mxu0 %v162
  %488 = vmatpush.msra.mxu0 %v154
  %489 = vmatpush.msra.mxu0 %v146
  %490 = vmatpush.msra.mxu0 %v138
  %491 = vmatmul.f32.gmra.mxu0 %v73
  %v492 = vpop.f32.mrf.mxu0
  %v493 = vadd.f32 0.0, %v492
  %494 = vmatmul.f32.gmra.mxu0 %v74
  %v495 = vpop.f32.mrf.mxu0
  %v496 = vadd.f32 0.0, %v495
  %497 = vmatmul.f32.gmra.mxu0 %v75
  %v498 = vpop.f32.mrf.mxu0
  %v499 = vadd.f32 0.0, %v498
  %500 = vmatmul.f32.gmra.mxu0 %v76
  %v501 = vpop.f32.mrf.mxu0
  %v502 = vadd.f32 0.0, %v501
  %503 = vmatmul.f32.gmra.mxu0 %v77
  %v504 = vpop.f32.mrf.mxu0
  %v505 = vadd.f32 0.0, %v504
  %506 = vmatmul.f32.gmra.mxu0 %v78
  %v507 = vpop.f32.mrf.mxu0
  %v508 = vadd.f32 0.0, %v507
  %509 = vmatmul.f32.gmra.mxu0 %v79
  %v510 = vpop.f32.mrf.mxu0
  %v511 = vadd.f32 0.0, %v510
  %512 = vmatmul.f32.gmra.mxu0 %v80
  %v513 = vpop.f32.mrf.mxu0
  %v514 = vadd.f32 0.0, %v513
  %515 = vdwg.mxu0
  %516 = vmatpush.msra.mxu0 %v386
  %517 = vmatpush.msra.mxu0 %v378
  %518 = vmatpush.msra.mxu0 %v370
  %519 = vmatpush.msra.mxu0 %v362
  %520 = vmatpush.msra.mxu0 %v354
  %521 = vmatpush.msra.mxu0 %v346
  %522 = vmatpush.msra.mxu0 %v338
  %523 = vmatpush.msra.mxu0 %v330
  %524 = vmatpush.msra.mxu0 %v322
  %525 = vmatpush.msra.mxu0 %v314
  %526 = vmatpush.msra.mxu0 %v306
  %527 = vmatpush.msra.mxu0 %v298
  %528 = vmatpush.msra.mxu0 %v290
  %529 = vmatpush.msra.mxu0 %v282
  %530 = vmatpush.msra.mxu0 %v274
  %531 = vmatpush.msra.mxu0 %v266
  %532 = vmatmul.f32.gmra.mxu0 %v129
  %v533 = vpop.f32.mrf.mxu0
  %v534 = vadd.f32 %v493, %v533
  %535 = vmatmul.f32.gmra.mxu0 %v130
  %v536 = vpop.f32.mrf.mxu0
  %v537 = vadd.f32 %v496, %v536
  %538 = vmatmul.f32.gmra.mxu0 %v131
  %v539 = vpop.f32.mrf.mxu0
  %v540 = vadd.f32 %v499, %v539
  %541 = vmatmul.f32.gmra.mxu0 %v132
  %v542 = vpop.f32.mrf.mxu0
  %v543 = vadd.f32 %v502, %v542
  %544 = vmatmul.f32.gmra.mxu0 %v133
  %v545 = vpop.f32.mrf.mxu0
  %v546 = vadd.f32 %v505, %v545
  %547 = vmatmul.f32.gmra.mxu0 %v134
  %v548 = vpop.f32.mrf.mxu0
  %v549 = vadd.f32 %v508, %v548
  %550 = vmatmul.f32.gmra.mxu0 %v135
  %v551 = vpop.f32.mrf.mxu0
  %v552 = vadd.f32 %v511, %v551
  %553 = vmatmul.f32.gmra.mxu0 %v136
  %v554 = vpop.f32.mrf.mxu0
  %v555 = vadd.f32 %v514, %v554
  %556 = vdwg.mxu0
  %557 = vmatpush.msra.mxu0 %v259
  %558 = vmatpush.msra.mxu0 %v251
  %559 = vmatpush.msra.mxu0 %v243
  %560 = vmatpush.msra.mxu0 %v235
  %561 = vmatpush.msra.mxu0 %v227
  %562 = vmatpush.msra.mxu0 %v219
  %563 = vmatpush.msra.mxu0 %v211
  %564 = vmatpush.msra.mxu0 %v203
  %565 = vmatpush.msra.mxu0 %v195
  %566 = vmatpush.msra.mxu0 %v187
  %567 = vmatpush.msra.mxu0 %v179
  %568 = vmatpush.msra.mxu0 %v171
  %569 = vmatpush.msra.mxu0 %v163
  %570 = vmatpush.msra.mxu0 %v155
  %571 = vmatpush.msra.mxu0 %v147
  %572 = vmatpush.msra.mxu0 %v139
  %573 = vmatmul.f32.gmra.mxu0 %v73
  %v574 = vpop.f32.mrf.mxu0
  %v575 = vadd.f32 0.0, %v574
  %576 = vmatmul.f32.gmra.mxu0 %v74
  %v577 = vpop.f32.mrf.mxu0
  %v578 = vadd.f32 0.0, %v577
  %579 = vmatmul.f32.gmra.mxu0 %v75
  %v580 = vpop.f32.mrf.mxu0
  %v581 = vadd.f32 0.0, %v580
  %582 = vmatmul.f32.gmra.mxu0 %v76
  %v583 = vpop.f32.mrf.mxu0
  %v584 = vadd.f32 0.0, %v583
  %585 = vmatmul.f32.gmra.mxu0 %v77
  %v586 = vpop.f32.mrf.mxu0
  %v587 = vadd.f32 0.0, %v586
  %588 = vmatmul.f32.gmra.mxu0 %v78
  %v589 = vpop.f32.mrf.mxu0
  %v590 = vadd.f32 0.0, %v589
  %591 = vmatmul.f32.gmra.mxu0 %v79
  %v592 = vpop.f32.mrf.mxu0
  %v593 = vadd.f32 0.0, %v592
  %594 = vmatmul.f32.gmra.mxu0 %v80
  %v595 = vpop.f32.mrf.mxu0
  %v596 = vadd.f32 0.0, %v595
  %597 = vdwg.mxu0
  %598 = vmatpush.msra.mxu0 %v387
  %599 = vmatpush.msra.mxu0 %v379
  %600 = vmatpush.msra.mxu0 %v371
  %601 = vmatpush.msra.mxu0 %v363
  %602 = vmatpush.msra.mxu0 %v355
  %603 = vmatpush.msra.mxu0 %v347
  %604 = vmatpush.msra.mxu0 %v339
  %605 = vmatpush.msra.mxu0 %v331
  %606 = vmatpush.msra.mxu0 %v323
  %607 = vmatpush.msra.mxu0 %v315
  %608 = vmatpush.msra.mxu0 %v307
  %609 = vmatpush.msra.mxu0 %v299
  %610 = vmatpush.msra.mxu0 %v291
  %611 = vmatpush.msra.mxu0 %v283
  %612 = vmatpush.msra.mxu0 %v275
  %613 = vmatpush.msra.mxu0 %v267
  %614 = vmatmul.f32.gmra.mxu0 %v129
  %v615 = vpop.f32.mrf.mxu0
  %v616 = vadd.f32 %v575, %v615
  %617 = vmatmul.f32.gmra.mxu0 %v130
  %v618 = vpop.f32.mrf.mxu0
  %v619 = vadd.f32 %v578, %v618
  %620 = vmatmul.f32.gmra.mxu0 %v131
  %v621 = vpop.f32.mrf.mxu0
  %v622 = vadd.f32 %v581, %v621
  %623 = vmatmul.f32.gmra.mxu0 %v132
  %v624 = vpop.f32.mrf.mxu0
  %v625 = vadd.f32 %v584, %v624
  %626 = vmatmul.f32.gmra.mxu0 %v133
  %v627 = vpop.f32.mrf.mxu0
  %v628 = vadd.f32 %v587, %v627
  %629 = vmatmul.f32.gmra.mxu0 %v134
  %v630 = vpop.f32.mrf.mxu0
  %v631 = vadd.f32 %v590, %v630
  %632 = vmatmul.f32.gmra.mxu0 %v135
  %v633 = vpop.f32.mrf.mxu0
  %v634 = vadd.f32 %v593, %v633
  %635 = vmatmul.f32.gmra.mxu0 %v136
  %v636 = vpop.f32.mrf.mxu0
  %v637 = vadd.f32 %v596, %v636
  %638 = vdwg.mxu0
  %639 = vmatpush.msra.mxu0 %v260
  %640 = vmatpush.msra.mxu0 %v252
  %641 = vmatpush.msra.mxu0 %v244
  %642 = vmatpush.msra.mxu0 %v236
  %643 = vmatpush.msra.mxu0 %v228
  %644 = vmatpush.msra.mxu0 %v220
  %645 = vmatpush.msra.mxu0 %v212
  %646 = vmatpush.msra.mxu0 %v204
  %647 = vmatpush.msra.mxu0 %v196
  %648 = vmatpush.msra.mxu0 %v188
  %649 = vmatpush.msra.mxu0 %v180
  %650 = vmatpush.msra.mxu0 %v172
  %651 = vmatpush.msra.mxu0 %v164
  %652 = vmatpush.msra.mxu0 %v156
  %653 = vmatpush.msra.mxu0 %v148
  %654 = vmatpush.msra.mxu0 %v140
  %655 = vmatmul.f32.gmra.mxu0 %v73
  %v656 = vpop.f32.mrf.mxu0
  %v657 = vadd.f32 0.0, %v656
  %658 = vmatmul.f32.gmra.mxu0 %v74
  %v659 = vpop.f32.mrf.mxu0
  %v660 = vadd.f32 0.0, %v659
  %661 = vmatmul.f32.gmra.mxu0 %v75
  %v662 = vpop.f32.mrf.mxu0
  %v663 = vadd.f32 0.0, %v662
  %664 = vmatmul.f32.gmra.mxu0 %v76
  %v665 = vpop.f32.mrf.mxu0
  %v666 = vadd.f32 0.0, %v665
  %667 = vmatmul.f32.gmra.mxu0 %v77
  %v668 = vpop.f32.mrf.mxu0
  %v669 = vadd.f32 0.0, %v668
  %670 = vmatmul.f32.gmra.mxu0 %v78
  %v671 = vpop.f32.mrf.mxu0
  %v672 = vadd.f32 0.0, %v671
  %673 = vmatmul.f32.gmra.mxu0 %v79
  %v674 = vpop.f32.mrf.mxu0
  %v675 = vadd.f32 0.0, %v674
  %676 = vmatmul.f32.gmra.mxu0 %v80
  %v677 = vpop.f32.mrf.mxu0
  %v678 = vadd.f32 0.0, %v677
  %679 = vdwg.mxu0
  %680 = vmatpush.msra.mxu0 %v388
  %681 = vmatpush.msra.mxu0 %v380
  %682 = vmatpush.msra.mxu0 %v372
  %683 = vmatpush.msra.mxu0 %v364
  %684 = vmatpush.msra.mxu0 %v356
  %685 = vmatpush.msra.mxu0 %v348
  %686 = vmatpush.msra.mxu0 %v340
  %687 = vmatpush.msra.mxu0 %v332
  %688 = vmatpush.msra.mxu0 %v324
  %689 = vmatpush.msra.mxu0 %v316
  %690 = vmatpush.msra.mxu0 %v308
  %691 = vmatpush.msra.mxu0 %v300
  %692 = vmatpush.msra.mxu0 %v292
  %693 = vmatpush.msra.mxu0 %v284
  %694 = vmatpush.msra.mxu0 %v276
  %695 = vmatpush.msra.mxu0 %v268
  %696 = vmatmul.f32.gmra.mxu0 %v129
  %v697 = vpop.f32.mrf.mxu0
  %v698 = vadd.f32 %v657, %v697
  %699 = vmatmul.f32.gmra.mxu0 %v130
  %v700 = vpop.f32.mrf.mxu0
  %v701 = vadd.f32 %v660, %v700
  %702 = vmatmul.f32.gmra.mxu0 %v131
  %v703 = vpop.f32.mrf.mxu0
  %v704 = vadd.f32 %v663, %v703
  %705 = vmatmul.f32.gmra.mxu0 %v132
  %v706 = vpop.f32.mrf.mxu0
  %v707 = vadd.f32 %v666, %v706
  %708 = vmatmul.f32.gmra.mxu0 %v133
  %v709 = vpop.f32.mrf.mxu0
  %v710 = vadd.f32 %v669, %v709
  %711 = vmatmul.f32.gmra.mxu0 %v134
  %v712 = vpop.f32.mrf.mxu0
  %v713 = vadd.f32 %v672, %v712
  %714 = vmatmul.f32.gmra.mxu0 %v135
  %v715 = vpop.f32.mrf.mxu0
  %v716 = vadd.f32 %v675, %v715
  %717 = vmatmul.f32.gmra.mxu0 %v136
  %v718 = vpop.f32.mrf.mxu0
  %v719 = vadd.f32 %v678, %v718
  %720 = vdwg.mxu0
  %721 = vmatpush.msra.mxu0 %v261
  %722 = vmatpush.msra.mxu0 %v253
  %723 = vmatpush.msra.mxu0 %v245
  %724 = vmatpush.msra.mxu0 %v237
  %725 = vmatpush.msra.mxu0 %v229
  %726 = vmatpush.msra.mxu0 %v221
  %727 = vmatpush.msra.mxu0 %v213
  %728 = vmatpush.msra.mxu0 %v205
  %729 = vmatpush.msra.mxu0 %v197
  %730 = vmatpush.msra.mxu0 %v189
  %731 = vmatpush.msra.mxu0 %v181
  %732 = vmatpush.msra.mxu0 %v173
  %733 = vmatpush.msra.mxu0 %v165
  %734 = vmatpush.msra.mxu0 %v157
  %735 = vmatpush.msra.mxu0 %v149
  %736 = vmatpush.msra.mxu0 %v141
  %737 = vmatmul.f32.gmra.mxu0 %v73
  %v738 = vpop.f32.mrf.mxu0
  %v739 = vadd.f32 0.0, %v738
  %740 = vmatmul.f32.gmra.mxu0 %v74
  %v741 = vpop.f32.mrf.mxu0
  %v742 = vadd.f32 0.0, %v741
  %743 = vmatmul.f32.gmra.mxu0 %v75
  %v744 = vpop.f32.mrf.mxu0
  %v745 = vadd.f32 0.0, %v744
  %746 = vmatmul.f32.gmra.mxu0 %v76
  %v747 = vpop.f32.mrf.mxu0
  %v748 = vadd.f32 0.0, %v747
  %749 = vmatmul.f32.gmra.mxu0 %v77
  %v750 = vpop.f32.mrf.mxu0
  %v751 = vadd.f32 0.0, %v750
  %752 = vmatmul.f32.gmra.mxu0 %v78
  %v753 = vpop.f32.mrf.mxu0
  %v754 = vadd.f32 0.0, %v753
  %755 = vmatmul.f32.gmra.mxu0 %v79
  %v756 = vpop.f32.mrf.mxu0
  %v757 = vadd.f32 0.0, %v756
  %758 = vmatmul.f32.gmra.mxu0 %v80
  %v759 = vpop.f32.mrf.mxu0
  %v760 = vadd.f32 0.0, %v759
  %761 = vdwg.mxu0
  %762 = vmatpush.msra.mxu0 %v389
  %763 = vmatpush.msra.mxu0 %v381
  %764 = vmatpush.msra.mxu0 %v373
  %765 = vmatpush.msra.mxu0 %v365
  %766 = vmatpush.msra.mxu0 %v357
  %767 = vmatpush.msra.mxu0 %v349
  %768 = vmatpush.msra.mxu0 %v341
  %769 = vmatpush.msra.mxu0 %v333
  %770 = vmatpush.msra.mxu0 %v325
  %771 = vmatpush.msra.mxu0 %v317
  %772 = vmatpush.msra.mxu0 %v309
  %773 = vmatpush.msra.mxu0 %v301
  %774 = vmatpush.msra.mxu0 %v293
  %775 = vmatpush.msra.mxu0 %v285
  %776 = vmatpush.msra.mxu0 %v277
  %777 = vmatpush.msra.mxu0 %v269
  %778 = vmatmul.f32.gmra.mxu0 %v129
  %v779 = vpop.f32.mrf.mxu0
  %v780 = vadd.f32 %v739, %v779
  %781 = vmatmul.f32.gmra.mxu0 %v130
  %v782 = vpop.f32.mrf.mxu0
  %v783 = vadd.f32 %v742, %v782
  %784 = vmatmul.f32.gmra.mxu0 %v131
  %v785 = vpop.f32.mrf.mxu0
  %v786 = vadd.f32 %v745, %v785
  %787 = vmatmul.f32.gmra.mxu0 %v132
  %v788 = vpop.f32.mrf.mxu0
  %v789 = vadd.f32 %v748, %v788
  %790 = vmatmul.f32.gmra.mxu0 %v133
  %v791 = vpop.f32.mrf.mxu0
  %v792 = vadd.f32 %v751, %v791
  %793 = vmatmul.f32.gmra.mxu0 %v134
  %v794 = vpop.f32.mrf.mxu0
  %v795 = vadd.f32 %v754, %v794
  %796 = vmatmul.f32.gmra.mxu0 %v135
  %v797 = vpop.f32.mrf.mxu0
  %v798 = vadd.f32 %v757, %v797
  %799 = vmatmul.f32.gmra.mxu0 %v136
  %v800 = vpop.f32.mrf.mxu0
  %v801 = vadd.f32 %v760, %v800
  %802 = vdwg.mxu0
  %803 = vmatpush.msra.mxu0 %v262
  %804 = vmatpush.msra.mxu0 %v254
  %805 = vmatpush.msra.mxu0 %v246
  %806 = vmatpush.msra.mxu0 %v238
  %807 = vmatpush.msra.mxu0 %v230
  %808 = vmatpush.msra.mxu0 %v222
  %809 = vmatpush.msra.mxu0 %v214
  %810 = vmatpush.msra.mxu0 %v206
  %811 = vmatpush.msra.mxu0 %v198
  %812 = vmatpush.msra.mxu0 %v190
  %813 = vmatpush.msra.mxu0 %v182
  %814 = vmatpush.msra.mxu0 %v174
  %815 = vmatpush.msra.mxu0 %v166
  %816 = vmatpush.msra.mxu0 %v158
  %817 = vmatpush.msra.mxu0 %v150
  %818 = vmatpush.msra.mxu0 %v142
  %819 = vmatmul.f32.gmra.mxu0 %v73
  %v820 = vpop.f32.mrf.mxu0
  %v821 = vadd.f32 0.0, %v820
  %822 = vmatmul.f32.gmra.mxu0 %v74
  %v823 = vpop.f32.mrf.mxu0
  %v824 = vadd.f32 0.0, %v823
  %825 = vmatmul.f32.gmra.mxu0 %v75
  %v826 = vpop.f32.mrf.mxu0
  %v827 = vadd.f32 0.0, %v826
  %828 = vmatmul.f32.gmra.mxu0 %v76
  %v829 = vpop.f32.mrf.mxu0
  %v830 = vadd.f32 0.0, %v829
  %831 = vmatmul.f32.gmra.mxu0 %v77
  %v832 = vpop.f32.mrf.mxu0
  %v833 = vadd.f32 0.0, %v832
  %834 = vmatmul.f32.gmra.mxu0 %v78
  %v835 = vpop.f32.mrf.mxu0
  %v836 = vadd.f32 0.0, %v835
  %837 = vmatmul.f32.gmra.mxu0 %v79
  %v838 = vpop.f32.mrf.mxu0
  %v839 = vadd.f32 0.0, %v838
  %840 = vmatmul.f32.gmra.mxu0 %v80
  %v841 = vpop.f32.mrf.mxu0
  %v842 = vadd.f32 0.0, %v841
  %843 = vdwg.mxu0
  %844 = vmatpush.msra.mxu0 %v390
  %845 = vmatpush.msra.mxu0 %v382
  %846 = vmatpush.msra.mxu0 %v374
  %847 = vmatpush.msra.mxu0 %v366
  %848 = vmatpush.msra.mxu0 %v358
  %849 = vmatpush.msra.mxu0 %v350
  %850 = vmatpush.msra.mxu0 %v342
  %851 = vmatpush.msra.mxu0 %v334
  %852 = vmatpush.msra.mxu0 %v326
  %853 = vmatpush.msra.mxu0 %v318
  %854 = vmatpush.msra.mxu0 %v310
  %855 = vmatpush.msra.mxu0 %v302
  %856 = vmatpush.msra.mxu0 %v294
  %857 = vmatpush.msra.mxu0 %v286
  %858 = vmatpush.msra.mxu0 %v278
  %859 = vmatpush.msra.mxu0 %v270
  %860 = vmatmul.f32.gmra.mxu0 %v129
  %v861 = vpop.f32.mrf.mxu0
  %v862 = vadd.f32 %v821, %v861
  %863 = vmatmul.f32.gmra.mxu0 %v130
  %v864 = vpop.f32.mrf.mxu0
  %v865 = vadd.f32 %v824, %v864
  %866 = vmatmul.f32.gmra.mxu0 %v131
  %v867 = vpop.f32.mrf.mxu0
  %v868 = vadd.f32 %v827, %v867
  %869 = vmatmul.f32.gmra.mxu0 %v132
  %v870 = vpop.f32.mrf.mxu0
  %v871 = vadd.f32 %v830, %v870
  %872 = vmatmul.f32.gmra.mxu0 %v133
  %v873 = vpop.f32.mrf.mxu0
  %v874 = vadd.f32 %v833, %v873
  %875 = vmatmul.f32.gmra.mxu0 %v134
  %v876 = vpop.f32.mrf.mxu0
  %v877 = vadd.f32 %v836, %v876
  %878 = vmatmul.f32.gmra.mxu0 %v135
  %v879 = vpop.f32.mrf.mxu0
  %v880 = vadd.f32 %v839, %v879
  %881 = vmatmul.f32.gmra.mxu0 %v136
  %v882 = vpop.f32.mrf.mxu0
  %v883 = vadd.f32 %v842, %v882
  %884 = vdwg.mxu0
  %885 = vmatpush.msra.mxu0 %v263
  %886 = vmatpush.msra.mxu0 %v255
  %887 = vmatpush.msra.mxu0 %v247
  %888 = vmatpush.msra.mxu0 %v239
  %889 = vmatpush.msra.mxu0 %v231
  %890 = vmatpush.msra.mxu0 %v223
  %891 = vmatpush.msra.mxu0 %v215
  %892 = vmatpush.msra.mxu0 %v207
  %893 = vmatpush.msra.mxu0 %v199
  %894 = vmatpush.msra.mxu0 %v191
  %895 = vmatpush.msra.mxu0 %v183
  %896 = vmatpush.msra.mxu0 %v175
  %897 = vmatpush.msra.mxu0 %v167
  %898 = vmatpush.msra.mxu0 %v159
  %899 = vmatpush.msra.mxu0 %v151
  %900 = vmatpush.msra.mxu0 %v143
  %901 = vmatmul.f32.gmra.mxu0 %v73
  %v902 = vpop.f32.mrf.mxu0
  %v903 = vadd.f32 0.0, %v902
  %904 = vmatmul.f32.gmra.mxu0 %v74
  %v905 = vpop.f32.mrf.mxu0
  %v906 = vadd.f32 0.0, %v905
  %907 = vmatmul.f32.gmra.mxu0 %v75
  %v908 = vpop.f32.mrf.mxu0
  %v909 = vadd.f32 0.0, %v908
  %910 = vmatmul.f32.gmra.mxu0 %v76
  %v911 = vpop.f32.mrf.mxu0
  %v912 = vadd.f32 0.0, %v911
  %913 = vmatmul.f32.gmra.mxu0 %v77
  %v914 = vpop.f32.mrf.mxu0
  %v915 = vadd.f32 0.0, %v914
  %916 = vmatmul.f32.gmra.mxu0 %v78
  %v917 = vpop.f32.mrf.mxu0
  %v918 = vadd.f32 0.0, %v917
  %919 = vmatmul.f32.gmra.mxu0 %v79
  %v920 = vpop.f32.mrf.mxu0
  %v921 = vadd.f32 0.0, %v920
  %922 = vmatmul.f32.gmra.mxu0 %v80
  %v923 = vpop.f32.mrf.mxu0
  %v924 = vadd.f32 0.0, %v923
  %925 = vdwg.mxu0
  %926 = vmatpush.msra.mxu0 %v391
  %927 = vmatpush.msra.mxu0 %v383
  %928 = vmatpush.msra.mxu0 %v375
  %929 = vmatpush.msra.mxu0 %v367
  %930 = vmatpush.msra.mxu0 %v359
  %931 = vmatpush.msra.mxu0 %v351
  %932 = vmatpush.msra.mxu0 %v343
  %933 = vmatpush.msra.mxu0 %v335
  %934 = vmatpush.msra.mxu0 %v327
  %935 = vmatpush.msra.mxu0 %v319
  %936 = vmatpush.msra.mxu0 %v311
  %937 = vmatpush.msra.mxu0 %v303
  %938 = vmatpush.msra.mxu0 %v295
  %939 = vmatpush.msra.mxu0 %v287
  %940 = vmatpush.msra.mxu0 %v279
  %941 = vmatpush.msra.mxu0 %v271
  %942 = vmatmul.f32.gmra.mxu0 %v129
  %v943 = vpop.f32.mrf.mxu0
  %v944 = vadd.f32 %v903, %v943
  %945 = vmatmul.f32.gmra.mxu0 %v130
  %v946 = vpop.f32.mrf.mxu0
  %v947 = vadd.f32 %v906, %v946
  %948 = vmatmul.f32.gmra.mxu0 %v131
  %v949 = vpop.f32.mrf.mxu0
  %v950 = vadd.f32 %v909, %v949
  %951 = vmatmul.f32.gmra.mxu0 %v132
  %v952 = vpop.f32.mrf.mxu0
  %v953 = vadd.f32 %v912, %v952
  %954 = vmatmul.f32.gmra.mxu0 %v133
  %v955 = vpop.f32.mrf.mxu0
  %v956 = vadd.f32 %v915, %v955
  %957 = vmatmul.f32.gmra.mxu0 %v134
  %v958 = vpop.f32.mrf.mxu0
  %v959 = vadd.f32 %v918, %v958
  %960 = vmatmul.f32.gmra.mxu0 %v135
  %v961 = vpop.f32.mrf.mxu0
  %v962 = vadd.f32 %v921, %v961
  %963 = vmatmul.f32.gmra.mxu0 %v136
  %v964 = vpop.f32.mrf.mxu0
  %v965 = vadd.f32 %v924, %v964
  %966 = vdwg.mxu0
  %967 = vmatpush.msra.mxu0 %v264
  %968 = vmatpush.msra.mxu0 %v256
  %969 = vmatpush.msra.mxu0 %v248
  %970 = vmatpush.msra.mxu0 %v240
  %971 = vmatpush.msra.mxu0 %v232
  %972 = vmatpush.msra.mxu0 %v224
  %973 = vmatpush.msra.mxu0 %v216
  %974 = vmatpush.msra.mxu0 %v208
  %975 = vmatpush.msra.mxu0 %v200
  %976 = vmatpush.msra.mxu0 %v192
  %977 = vmatpush.msra.mxu0 %v184
  %978 = vmatpush.msra.mxu0 %v176
  %979 = vmatpush.msra.mxu0 %v168
  %980 = vmatpush.msra.mxu0 %v160
  %981 = vmatpush.msra.mxu0 %v152
  %982 = vmatpush.msra.mxu0 %v144
  %983 = vmatmul.f32.gmra.mxu0 %v73
  %v984 = vpop.f32.mrf.mxu0
  %v985 = vadd.f32 0.0, %v984
  %986 = vmatmul.f32.gmra.mxu0 %v74
  %v987 = vpop.f32.mrf.mxu0
  %v988 = vadd.f32 0.0, %v987
  %989 = vmatmul.f32.gmra.mxu0 %v75
  %v990 = vpop.f32.mrf.mxu0
  %v991 = vadd.f32 0.0, %v990
  %992 = vmatmul.f32.gmra.mxu0 %v76
  %v993 = vpop.f32.mrf.mxu0
  %v994 = vadd.f32 0.0, %v993
  %995 = vmatmul.f32.gmra.mxu0 %v77
  %v996 = vpop.f32.mrf.mxu0
  %v997 = vadd.f32 0.0, %v996
  %998 = vmatmul.f32.gmra.mxu0 %v78
  %v999 = vpop.f32.mrf.mxu0
  %v1000 = vadd.f32 0.0, %v999
  %1001 = vmatmul.f32.gmra.mxu0 %v79
  %v1002 = vpop.f32.mrf.mxu0
  %v1003 = vadd.f32 0.0, %v1002
  %1004 = vmatmul.f32.gmra.mxu0 %v80
  %v1005 = vpop.f32.mrf.mxu0
  %v1006 = vadd.f32 0.0, %v1005
  %1007 = vdwg.mxu0
  %1008 = vmatpush.msra.mxu0 %v392
  %1009 = vmatpush.msra.mxu0 %v384
  %1010 = vmatpush.msra.mxu0 %v376
  %1011 = vmatpush.msra.mxu0 %v368
  %1012 = vmatpush.msra.mxu0 %v360
  %1013 = vmatpush.msra.mxu0 %v352
  %1014 = vmatpush.msra.mxu0 %v344
  %1015 = vmatpush.msra.mxu0 %v336
  %1016 = vmatpush.msra.mxu0 %v328
  %1017 = vmatpush.msra.mxu0 %v320
  %1018 = vmatpush.msra.mxu0 %v312
  %1019 = vmatpush.msra.mxu0 %v304
  %1020 = vmatpush.msra.mxu0 %v296
  %1021 = vmatpush.msra.mxu0 %v288
  %1022 = vmatpush.msra.mxu0 %v280
  %1023 = vmatpush.msra.mxu0 %v272
  %1024 = vmatmul.f32.gmra.mxu0 %v129
  %v1025 = vpop.f32.mrf.mxu0
  %v1026 = vadd.f32 %v985, %v1025
  %1027 = vmatmul.f32.gmra.mxu0 %v130
  %v1028 = vpop.f32.mrf.mxu0
  %v1029 = vadd.f32 %v988, %v1028
  %1030 = vmatmul.f32.gmra.mxu0 %v131
  %v1031 = vpop.f32.mrf.mxu0
  %v1032 = vadd.f32 %v991, %v1031
  %1033 = vmatmul.f32.gmra.mxu0 %v132
  %v1034 = vpop.f32.mrf.mxu0
  %v1035 = vadd.f32 %v994, %v1034
  %1036 = vmatmul.f32.gmra.mxu0 %v133
  %v1037 = vpop.f32.mrf.mxu0
  %v1038 = vadd.f32 %v997, %v1037
  %1039 = vmatmul.f32.gmra.mxu0 %v134
  %v1040 = vpop.f32.mrf.mxu0
  %v1041 = vadd.f32 %v1000, %v1040
  %1042 = vmatmul.f32.gmra.mxu0 %v135
  %v1043 = vpop.f32.mrf.mxu0
  %v1044 = vadd.f32 %v1003, %v1043
  %1045 = vmatmul.f32.gmra.mxu0 %v136
  %v1046 = vpop.f32.mrf.mxu0
  %v1047 = vadd.f32 %v1006, %v1046
  %1048 = vdwg.mxu0
  %1049 = vst [vmem:[#allocation2] sm:$0xff] %v452
  %1050 = vst [vmem:[#allocation2 + $0x8] sm:$0xff] %v534
  %1051 = vst [vmem:[#allocation2 + $0x10] sm:$0xff] %v616
  %1052 = vst [vmem:[#allocation2 + $0x18] sm:$0xff] %v698
  %1053 = vst [vmem:[#allocation2 + $0x20] sm:$0xff] %v780
  %1054 = vst [vmem:[#allocation2 + $0x28] sm:$0xff] %v862
  %1055 = vst [vmem:[#allocation2 + $0x30] sm:$0xff] %v944
  %1056 = vst [vmem:[#allocation2 + $0x38] sm:$0xff] %v1026
  %1057 = vst [vmem:[#allocation2 + $0x40] sm:$0xff] %v455
  %1058 = vst [vmem:[#allocation2 + $0x48] sm:$0xff] %v537
  %1059 = vst [vmem:[#allocation2 + $0x50] sm:$0xff] %v619
  %1060 = vst [vmem:[#allocation2 + $0x58] sm:$0xff] %v701
  %1061 = vst [vmem:[#allocation2 + $0x60] sm:$0xff] %v783
  %1062 = vst [vmem:[#allocation2 + $0x68] sm:$0xff] %v865
  %1063 = vst [vmem:[#allocation2 + $0x70] sm:$0xff] %v947
  %1064 = vst [vmem:[#allocation2 + $0x78] sm:$0xff] %v1029
  %1065 = vst [vmem:[#allocation2 + $0x80] sm:$0xff] %v458
  %1066 = vst [vmem:[#allocation2 + $0x88] sm:$0xff] %v540
  %1067 = vst [vmem:[#allocation2 + $0x90] sm:$0xff] %v622
  %1068 = vst [vmem:[#allocation2 + $0x98] sm:$0xff] %v704
  %1069 = vst [vmem:[#allocation2 + $0xa0] sm:$0xff] %v786
  %1070 = vst [vmem:[#allocation2 + $0xa8] sm:$0xff] %v868
  %1071 = vst [vmem:[#allocation2 + $0xb0] sm:$0xff] %v950
  %1072 = vst [vmem:[#allocation2 + $0xb8] sm:$0xff] %v1032
  %1073 = vst [vmem:[#allocation2 + $0xc0] sm:$0xff] %v461
  %1074 = vst [vmem:[#allocation2 + $0xc8] sm:$0xff] %v543
  %1075 = vst [vmem:[#allocation2 + $0xd0] sm:$0xff] %v625
  %1076 = vst [vmem:[#allocation2 + $0xd8] sm:$0xff] %v707
  %1077 = vst [vmem:[#allocation2 + $0xe0] sm:$0xff] %v789
  %1078 = vst [vmem:[#allocation2 + $0xe8] sm:$0xff] %v871
  %1079 = vst [vmem:[#allocation2 + $0xf0] sm:$0xff] %v953
  %1080 = vst [vmem:[#allocation2 + $0xf8] sm:$0xff] %v1035
  %1081 = vst [vmem:[#allocation2 + $0x100] sm:$0xff] %v464
  %1082 = vst [vmem:[#allocation2 + $0x108] sm:$0xff] %v546
  %1083 = vst [vmem:[#allocation2 + $0x110] sm:$0xff] %v628
  %1084 = vst [vmem:[#allocation2 + $0x118] sm:$0xff] %v710
  %1085 = vst [vmem:[#allocation2 + $0x120] sm:$0xff] %v792
  %1086 = vst [vmem:[#allocation2 + $0x128] sm:$0xff] %v874
  %1087 = vst [vmem:[#allocation2 + $0x130] sm:$0xff] %v956
  %1088 = vst [vmem:[#allocation2 + $0x138] sm:$0xff] %v1038
  %1089 = vst [vmem:[#allocation2 + $0x140] sm:$0xff] %v467
  %1090 = vst [vmem:[#allocation2 + $0x148] sm:$0xff] %v549
  %1091 = vst [vmem:[#allocation2 + $0x150] sm:$0xff] %v631
  %1092 = vst [vmem:[#allocation2 + $0x158] sm:$0xff] %v713
  %1093 = vst [vmem:[#allocation2 + $0x160] sm:$0xff] %v795
  %1094 = vst [vmem:[#allocation2 + $0x168] sm:$0xff] %v877
  %1095 = vst [vmem:[#allocation2 + $0x170] sm:$0xff] %v959
  %1096 = vst [vmem:[#allocation2 + $0x178] sm:$0xff] %v1041
  %1097 = vst [vmem:[#allocation2 + $0x180] sm:$0xff] %v470
  %1098 = vst [vmem:[#allocation2 + $0x188] sm:$0xff] %v552
  %1099 = vst [vmem:[#allocation2 + $0x190] sm:$0xff] %v634
  %1100 = vst [vmem:[#allocation2 + $0x198] sm:$0xff] %v716
  %1101 = vst [vmem:[#allocation2 + $0x1a0] sm:$0xff] %v798
  %1102 = vst [vmem:[#allocation2 + $0x1a8] sm:$0xff] %v880
  %1103 = vst [vmem:[#allocation2 + $0x1b0] sm:$0xff] %v962
  %1104 = vst [vmem:[#allocation2 + $0x1b8] sm:$0xff] %v1044
  %1105 = vst [vmem:[#allocation2 + $0x1c0] sm:$0xff] %v473
  %1106 = vst [vmem:[#allocation2 + $0x1c8] sm:$0xff] %v555
  %1107 = vst [vmem:[#allocation2 + $0x1d0] sm:$0xff] %v637
  %1108 = vst [vmem:[#allocation2 + $0x1d8] sm:$0xff] %v719
  %1109 = vst [vmem:[#allocation2 + $0x1e0] sm:$0xff] %v801
  %1110 = vst [vmem:[#allocation2 + $0x1e8] sm:$0xff] %v883
  %1111 = vst [vmem:[#allocation2 + $0x1f0] sm:$0xff] %v965
  %1112 = vst [vmem:[#allocation2 + $0x1f8] sm:$0xff] %v1047
  %v1113 = vld [vmem:[#allocation2] sm:$0xff]
  %v1114 = vld [vmem:[#allocation2 + $0x8] sm:$0xff]
  %v1115 = vld [vmem:[#allocation2 + $0x10] sm:$0xff]
  %v1116 = vld [vmem:[#allocation2 + $0x18] sm:$0xff]
  %v1117 = vld [vmem:[#allocation2 + $0x20] sm:$0xff]
  %v1118 = vld [vmem:[#allocation2 + $0x28] sm:$0xff]
  %v1119 = vld [vmem:[#allocation2 + $0x30] sm:$0xff]
  %v1120 = vld [vmem:[#allocation2 + $0x38] sm:$0xff]
  %v1121 = vld [vmem:[%s3] sm:$0xff]
  %v1122 = vld [vmem:[%s3 + $0x8] sm:$0xff]
  %v1123 = vld [vmem:[%s3 + $0x10] sm:$0xff]
  %v1124 = vld [vmem:[%s3 + $0x18] sm:$0xff]
  %v1125 = vld [vmem:[%s3 + $0x20] sm:$0xff]
  %v1126 = vld [vmem:[%s3 + $0x28] sm:$0xff]
  %v1127 = vld [vmem:[%s3 + $0x30] sm:$0xff]
  %v1128 = vld [vmem:[%s3 + $0x38] sm:$0xff]
  %v1129 = vld [vmem:[%s3 + $0x40] sm:$0xff]
  %v1130 = vld [vmem:[%s3 + $0x48] sm:$0xff]
  %v1131 = vld [vmem:[%s3 + $0x50] sm:$0xff]
  %v1132 = vld [vmem:[%s3 + $0x58] sm:$0xff]
  %v1133 = vld [vmem:[%s3 + $0x60] sm:$0xff]
  %v1134 = vld [vmem:[%s3 + $0x68] sm:$0xff]
  %v1135 = vld [vmem:[%s3 + $0x70] sm:$0xff]
  %v1136 = vld [vmem:[%s3 + $0x78] sm:$0xff]
  %v1137 = vld [vmem:[%s3 + $0x80] sm:$0xff]
  %v1138 = vld [vmem:[%s3 + $0x88] sm:$0xff]
  %v1139 = vld [vmem:[%s3 + $0x90] sm:$0xff]
  %v1140 = vld [vmem:[%s3 + $0x98] sm:$0xff]
  %v1141 = vld [vmem:[%s3 + $0xa0] sm:$0xff]
  %v1142 = vld [vmem:[%s3 + $0xa8] sm:$0xff]
  %v1143 = vld [vmem:[%s3 + $0xb0] sm:$0xff]
  %v1144 = vld [vmem:[%s3 + $0xb8] sm:$0xff]
  %v1145 = vld [vmem:[%s3 + $0xc0] sm:$0xff]
  %v1146 = vld [vmem:[%s3 + $0xc8] sm:$0xff]
  %v1147 = vld [vmem:[%s3 + $0xd0] sm:$0xff]
  %v1148 = vld [vmem:[%s3 + $0xd8] sm:$0xff]
  %v1149 = vld [vmem:[%s3 + $0xe0] sm:$0xff]
  %v1150 = vld [vmem:[%s3 + $0xe8] sm:$0xff]
  %v1151 = vld [vmem:[%s3 + $0xf0] sm:$0xff]
  %v1152 = vld [vmem:[%s3 + $0xf8] sm:$0xff]
  %v1153 = vld [vmem:[%s3 + $0x100] sm:$0xff]
  %v1154 = vld [vmem:[%s3 + $0x108] sm:$0xff]
  %v1155 = vld [vmem:[%s3 + $0x110] sm:$0xff]
  %v1156 = vld [vmem:[%s3 + $0x118] sm:$0xff]
  %v1157 = vld [vmem:[%s3 + $0x120] sm:$0xff]
  %v1158 = vld [vmem:[%s3 + $0x128] sm:$0xff]
  %v1159 = vld [vmem:[%s3 + $0x130] sm:$0xff]
  %v1160 = vld [vmem:[%s3 + $0x138] sm:$0xff]
  %v1161 = vld [vmem:[%s3 + $0x140] sm:$0xff]
  %v1162 = vld [vmem:[%s3 + $0x148] sm:$0xff]
  %v1163 = vld [vmem:[%s3 + $0x150] sm:$0xff]
  %v1164 = vld [vmem:[%s3 + $0x158] sm:$0xff]
  %v1165 = vld [vmem:[%s3 + $0x160] sm:$0xff]
  %v1166 = vld [vmem:[%s3 + $0x168] sm:$0xff]
  %v1167 = vld [vmem:[%s3 + $0x170] sm:$0xff]
  %v1168 = vld [vmem:[%s3 + $0x178] sm:$0xff]
  %v1169 = vld [vmem:[%s3 + $0x180] sm:$0xff]
  %v1170 = vld [vmem:[%s3 + $0x188] sm:$0xff]
  %v1171 = vld [vmem:[%s3 + $0x190] sm:$0xff]
  %v1172 = vld [vmem:[%s3 + $0x198] sm:$0xff]
  %v1173 = vld [vmem:[%s3 + $0x1a0] sm:$0xff]
  %v1174 = vld [vmem:[%s3 + $0x1a8] sm:$0xff]
  %v1175 = vld [vmem:[%s3 + $0x1b0] sm:$0xff]
  %v1176 = vld [vmem:[%s3 + $0x1b8] sm:$0xff]
  %v1177 = vld [vmem:[%s3 + $0x1c0] sm:$0xff]
  %v1178 = vld [vmem:[%s3 + $0x1c8] sm:$0xff]
  %v1179 = vld [vmem:[%s3 + $0x1d0] sm:$0xff]
  %v1180 = vld [vmem:[%s3 + $0x1d8] sm:$0xff]
  %v1181 = vld [vmem:[%s3 + $0x1e0] sm:$0xff]
  %v1182 = vld [vmem:[%s3 + $0x1e8] sm:$0xff]
  %v1183 = vld [vmem:[%s3 + $0x1f0] sm:$0xff]
  %v1184 = vld [vmem:[%s3 + $0x1f8] sm:$0xff]
  %v1185 = vld [vmem:[%s3 + $0x200] sm:$0xff]
  %v1186 = vld [vmem:[%s3 + $0x208] sm:$0xff]
  %v1187 = vld [vmem:[%s3 + $0x210] sm:$0xff]
  %v1188 = vld [vmem:[%s3 + $0x218] sm:$0xff]
  %v1189 = vld [vmem:[%s3 + $0x220] sm:$0xff]
  %v1190 = vld [vmem:[%s3 + $0x228] sm:$0xff]
  %v1191 = vld [vmem:[%s3 + $0x230] sm:$0xff]
  %v1192 = vld [vmem:[%s3 + $0x238] sm:$0xff]
  %v1193 = vld [vmem:[%s3 + $0x240] sm:$0xff]
  %v1194 = vld [vmem:[%s3 + $0x248] sm:$0xff]
  %v1195 = vld [vmem:[%s3 + $0x250] sm:$0xff]
  %v1196 = vld [vmem:[%s3 + $0x258] sm:$0xff]
  %v1197 = vld [vmem:[%s3 + $0x260] sm:$0xff]
  %v1198 = vld [vmem:[%s3 + $0x268] sm:$0xff]
  %v1199 = vld [vmem:[%s3 + $0x270] sm:$0xff]
  %v1200 = vld [vmem:[%s3 + $0x278] sm:$0xff]
  %v1201 = vld [vmem:[%s3 + $0x280] sm:$0xff]
  %v1202 = vld [vmem:[%s3 + $0x288] sm:$0xff]
  %v1203 = vld [vmem:[%s3 + $0x290] sm:$0xff]
  %v1204 = vld [vmem:[%s3 + $0x298] sm:$0xff]
  %v1205 = vld [vmem:[%s3 + $0x2a0] sm:$0xff]
  %v1206 = vld [vmem:[%s3 + $0x2a8] sm:$0xff]
  %v1207 = vld [vmem:[%s3 + $0x2b0] sm:$0xff]
  %v1208 = vld [vmem:[%s3 + $0x2b8] sm:$0xff]
  %v1209 = vld [vmem:[%s3 + $0x2c0] sm:$0xff]
  %v1210 = vld [vmem:[%s3 + $0x2c8] sm:$0xff]
  %v1211 = vld [vmem:[%s3 + $0x2d0] sm:$0xff]
  %v1212 = vld [vmem:[%s3 + $0x2d8] sm:$0xff]
  %v1213 = vld [vmem:[%s3 + $0x2e0] sm:$0xff]
  %v1214 = vld [vmem:[%s3 + $0x2e8] sm:$0xff]
  %v1215 = vld [vmem:[%s3 + $0x2f0] sm:$0xff]
  %v1216 = vld [vmem:[%s3 + $0x2f8] sm:$0xff]
  %v1217 = vld [vmem:[%s3 + $0x300] sm:$0xff]
  %v1218 = vld [vmem:[%s3 + $0x308] sm:$0xff]
  %v1219 = vld [vmem:[%s3 + $0x310] sm:$0xff]
  %v1220 = vld [vmem:[%s3 + $0x318] sm:$0xff]
  %v1221 = vld [vmem:[%s3 + $0x320] sm:$0xff]
  %v1222 = vld [vmem:[%s3 + $0x328] sm:$0xff]
  %v1223 = vld [vmem:[%s3 + $0x330] sm:$0xff]
  %v1224 = vld [vmem:[%s3 + $0x338] sm:$0xff]
  %v1225 = vld [vmem:[%s3 + $0x340] sm:$0xff]
  %v1226 = vld [vmem:[%s3 + $0x348] sm:$0xff]
  %v1227 = vld [vmem:[%s3 + $0x350] sm:$0xff]
  %v1228 = vld [vmem:[%s3 + $0x358] sm:$0xff]
  %v1229 = vld [vmem:[%s3 + $0x360] sm:$0xff]
  %v1230 = vld [vmem:[%s3 + $0x368] sm:$0xff]
  %v1231 = vld [vmem:[%s3 + $0x370] sm:$0xff]
  %v1232 = vld [vmem:[%s3 + $0x378] sm:$0xff]
  %v1233 = vld [vmem:[%s3 + $0x380] sm:$0xff]
  %v1234 = vld [vmem:[%s3 + $0x388] sm:$0xff]
  %v1235 = vld [vmem:[%s3 + $0x390] sm:$0xff]
  %v1236 = vld [vmem:[%s3 + $0x398] sm:$0xff]
  %v1237 = vld [vmem:[%s3 + $0x3a0] sm:$0xff]
  %v1238 = vld [vmem:[%s3 + $0x3a8] sm:$0xff]
  %v1239 = vld [vmem:[%s3 + $0x3b0] sm:$0xff]
  %v1240 = vld [vmem:[%s3 + $0x3b8] sm:$0xff]
  %v1241 = vld [vmem:[%s3 + $0x3c0] sm:$0xff]
  %v1242 = vld [vmem:[%s3 + $0x3c8] sm:$0xff]
  %v1243 = vld [vmem:[%s3 + $0x3d0] sm:$0xff]
  %v1244 = vld [vmem:[%s3 + $0x3d8] sm:$0xff]
  %v1245 = vld [vmem:[%s3 + $0x3e0] sm:$0xff]
  %v1246 = vld [vmem:[%s3 + $0x3e8] sm:$0xff]
  %v1247 = vld [vmem:[%s3 + $0x3f0] sm:$0xff]
  %v1248 = vld [vmem:[%s3 + $0x3f8] sm:$0xff]
  %v1249 = vld [vmem:[%s3 + $0x400] sm:$0xff]
  %v1250 = vld [vmem:[%s3 + $0x408] sm:$0xff]
  %v1251 = vld [vmem:[%s3 + $0x410] sm:$0xff]
  %v1252 = vld [vmem:[%s3 + $0x418] sm:$0xff]
  %v1253 = vld [vmem:[%s3 + $0x420] sm:$0xff]
  %v1254 = vld [vmem:[%s3 + $0x428] sm:$0xff]
  %v1255 = vld [vmem:[%s3 + $0x430] sm:$0xff]
  %v1256 = vld [vmem:[%s3 + $0x438] sm:$0xff]
  %v1257 = vld [vmem:[%s3 + $0x440] sm:$0xff]
  %v1258 = vld [vmem:[%s3 + $0x448] sm:$0xff]
  %v1259 = vld [vmem:[%s3 + $0x450] sm:$0xff]
  %v1260 = vld [vmem:[%s3 + $0x458] sm:$0xff]
  %v1261 = vld [vmem:[%s3 + $0x460] sm:$0xff]
  %v1262 = vld [vmem:[%s3 + $0x468] sm:$0xff]
  %v1263 = vld [vmem:[%s3 + $0x470] sm:$0xff]
  %v1264 = vld [vmem:[%s3 + $0x478] sm:$0xff]
  %v1265 = vld [vmem:[%s3 + $0x480] sm:$0xff]
  %v1266 = vld [vmem:[%s3 + $0x488] sm:$0xff]
  %v1267 = vld [vmem:[%s3 + $0x490] sm:$0xff]
  %v1268 = vld [vmem:[%s3 + $0x498] sm:$0xff]
  %v1269 = vld [vmem:[%s3 + $0x4a0] sm:$0xff]
  %v1270 = vld [vmem:[%s3 + $0x4a8] sm:$0xff]
  %v1271 = vld [vmem:[%s3 + $0x4b0] sm:$0xff]
  %v1272 = vld [vmem:[%s3 + $0x4b8] sm:$0xff]
  %v1273 = vld [vmem:[%s3 + $0x4c0] sm:$0xff]
  %v1274 = vld [vmem:[%s3 + $0x4c8] sm:$0xff]
  %v1275 = vld [vmem:[%s3 + $0x4d0] sm:$0xff]
  %v1276 = vld [vmem:[%s3 + $0x4d8] sm:$0xff]
  %v1277 = vld [vmem:[%s3 + $0x4e0] sm:$0xff]
  %v1278 = vld [vmem:[%s3 + $0x4e8] sm:$0xff]
  %v1279 = vld [vmem:[%s3 + $0x4f0] sm:$0xff]
  %v1280 = vld [vmem:[%s3 + $0x4f8] sm:$0xff]
  %v1281 = vld [vmem:[%s3 + $0x500] sm:$0xff]
  %v1282 = vld [vmem:[%s3 + $0x508] sm:$0xff]
  %v1283 = vld [vmem:[%s3 + $0x510] sm:$0xff]
  %v1284 = vld [vmem:[%s3 + $0x518] sm:$0xff]
  %v1285 = vld [vmem:[%s3 + $0x520] sm:$0xff]
  %v1286 = vld [vmem:[%s3 + $0x528] sm:$0xff]
  %v1287 = vld [vmem:[%s3 + $0x530] sm:$0xff]
  %v1288 = vld [vmem:[%s3 + $0x538] sm:$0xff]
  %v1289 = vld [vmem:[%s3 + $0x540] sm:$0xff]
  %v1290 = vld [vmem:[%s3 + $0x548] sm:$0xff]
  %v1291 = vld [vmem:[%s3 + $0x550] sm:$0xff]
  %v1292 = vld [vmem:[%s3 + $0x558] sm:$0xff]
  %v1293 = vld [vmem:[%s3 + $0x560] sm:$0xff]
  %v1294 = vld [vmem:[%s3 + $0x568] sm:$0xff]
  %v1295 = vld [vmem:[%s3 + $0x570] sm:$0xff]
  %v1296 = vld [vmem:[%s3 + $0x578] sm:$0xff]
  %v1297 = vld [vmem:[%s3 + $0x580] sm:$0xff]
  %v1298 = vld [vmem:[%s3 + $0x588] sm:$0xff]
  %v1299 = vld [vmem:[%s3 + $0x590] sm:$0xff]
  %v1300 = vld [vmem:[%s3 + $0x598] sm:$0xff]
  %v1301 = vld [vmem:[%s3 + $0x5a0] sm:$0xff]
  %v1302 = vld [vmem:[%s3 + $0x5a8] sm:$0xff]
  %v1303 = vld [vmem:[%s3 + $0x5b0] sm:$0xff]
  %v1304 = vld [vmem:[%s3 + $0x5b8] sm:$0xff]
  %v1305 = vld [vmem:[%s3 + $0x5c0] sm:$0xff]
  %v1306 = vld [vmem:[%s3 + $0x5c8] sm:$0xff]
  %v1307 = vld [vmem:[%s3 + $0x5d0] sm:$0xff]
  %v1308 = vld [vmem:[%s3 + $0x5d8] sm:$0xff]
  %v1309 = vld [vmem:[%s3 + $0x5e0] sm:$0xff]
  %v1310 = vld [vmem:[%s3 + $0x5e8] sm:$0xff]
  %v1311 = vld [vmem:[%s3 + $0x5f0] sm:$0xff]
  %v1312 = vld [vmem:[%s3 + $0x5f8] sm:$0xff]
  %v1313 = vld [vmem:[%s3 + $0x600] sm:$0xff]
  %v1314 = vld [vmem:[%s3 + $0x608] sm:$0xff]
  %v1315 = vld [vmem:[%s3 + $0x610] sm:$0xff]
  %v1316 = vld [vmem:[%s3 + $0x618] sm:$0xff]
  %v1317 = vld [vmem:[%s3 + $0x620] sm:$0xff]
  %v1318 = vld [vmem:[%s3 + $0x628] sm:$0xff]
  %v1319 = vld [vmem:[%s3 + $0x630] sm:$0xff]
  %v1320 = vld [vmem:[%s3 + $0x638] sm:$0xff]
  %v1321 = vld [vmem:[%s3 + $0x640] sm:$0xff]
  %v1322 = vld [vmem:[%s3 + $0x648] sm:$0xff]
  %v1323 = vld [vmem:[%s3 + $0x650] sm:$0xff]
  %v1324 = vld [vmem:[%s3 + $0x658] sm:$0xff]
  %v1325 = vld [vmem:[%s3 + $0x660] sm:$0xff]
  %v1326 = vld [vmem:[%s3 + $0x668] sm:$0xff]
  %v1327 = vld [vmem:[%s3 + $0x670] sm:$0xff]
  %v1328 = vld [vmem:[%s3 + $0x678] sm:$0xff]
  %v1329 = vld [vmem:[%s3 + $0x680] sm:$0xff]
  %v1330 = vld [vmem:[%s3 + $0x688] sm:$0xff]
  %v1331 = vld [vmem:[%s3 + $0x690] sm:$0xff]
  %v1332 = vld [vmem:[%s3 + $0x698] sm:$0xff]
  %v1333 = vld [vmem:[%s3 + $0x6a0] sm:$0xff]
  %v1334 = vld [vmem:[%s3 + $0x6a8] sm:$0xff]
  %v1335 = vld [vmem:[%s3 + $0x6b0] sm:$0xff]
  %v1336 = vld [vmem:[%s3 + $0x6b8] sm:$0xff]
  %v1337 = vld [vmem:[%s3 + $0x6c0] sm:$0xff]
  %v1338 = vld [vmem:[%s3 + $0x6c8] sm:$0xff]
  %v1339 = vld [vmem:[%s3 + $0x6d0] sm:$0xff]
  %v1340 = vld [vmem:[%s3 + $0x6d8] sm:$0xff]
  %v1341 = vld [vmem:[%s3 + $0x6e0] sm:$0xff]
  %v1342 = vld [vmem:[%s3 + $0x6e8] sm:$0xff]
  %v1343 = vld [vmem:[%s3 + $0x6f0] sm:$0xff]
  %v1344 = vld [vmem:[%s3 + $0x6f8] sm:$0xff]
  %v1345 = vld [vmem:[%s3 + $0x700] sm:$0xff]
  %v1346 = vld [vmem:[%s3 + $0x708] sm:$0xff]
  %v1347 = vld [vmem:[%s3 + $0x710] sm:$0xff]
  %v1348 = vld [vmem:[%s3 + $0x718] sm:$0xff]
  %v1349 = vld [vmem:[%s3 + $0x720] sm:$0xff]
  %v1350 = vld [vmem:[%s3 + $0x728] sm:$0xff]
  %v1351 = vld [vmem:[%s3 + $0x730] sm:$0xff]
  %v1352 = vld [vmem:[%s3 + $0x738] sm:$0xff]
  %v1353 = vld [vmem:[%s3 + $0x740] sm:$0xff]
  %v1354 = vld [vmem:[%s3 + $0x748] sm:$0xff]
  %v1355 = vld [vmem:[%s3 + $0x750] sm:$0xff]
  %v1356 = vld [vmem:[%s3 + $0x758] sm:$0xff]
  %v1357 = vld [vmem:[%s3 + $0x760] sm:$0xff]
  %v1358 = vld [vmem:[%s3 + $0x768] sm:$0xff]
  %v1359 = vld [vmem:[%s3 + $0x770] sm:$0xff]
  %v1360 = vld [vmem:[%s3 + $0x778] sm:$0xff]
  %v1361 = vld [vmem:[%s3 + $0x780] sm:$0xff]
  %v1362 = vld [vmem:[%s3 + $0x788] sm:$0xff]
  %v1363 = vld [vmem:[%s3 + $0x790] sm:$0xff]
  %v1364 = vld [vmem:[%s3 + $0x798] sm:$0xff]
  %v1365 = vld [vmem:[%s3 + $0x7a0] sm:$0xff]
  %v1366 = vld [vmem:[%s3 + $0x7a8] sm:$0xff]
  %v1367 = vld [vmem:[%s3 + $0x7b0] sm:$0xff]
  %v1368 = vld [vmem:[%s3 + $0x7b8] sm:$0xff]
  %v1369 = vld [vmem:[%s3 + $0x7c0] sm:$0xff]
  %v1370 = vld [vmem:[%s3 + $0x7c8] sm:$0xff]
  %v1371 = vld [vmem:[%s3 + $0x7d0] sm:$0xff]
  %v1372 = vld [vmem:[%s3 + $0x7d8] sm:$0xff]
  %v1373 = vld [vmem:[%s3 + $0x7e0] sm:$0xff]
  %v1374 = vld [vmem:[%s3 + $0x7e8] sm:$0xff]
  %v1375 = vld [vmem:[%s3 + $0x7f0] sm:$0xff]
  %v1376 = vld [vmem:[%s3 + $0x7f8] sm:$0xff]
  %1377 = vmatpush.msra.mxu0 %v1241
  %1378 = vmatpush.msra.mxu0 %v1233
  %1379 = vmatpush.msra.mxu0 %v1225
  %1380 = vmatpush.msra.mxu0 %v1217
  %1381 = vmatpush.msra.mxu0 %v1209
  %1382 = vmatpush.msra.mxu0 %v1201
  %1383 = vmatpush.msra.mxu0 %v1193
  %1384 = vmatpush.msra.mxu0 %v1185
  %1385 = vmatpush.msra.mxu0 %v1177
  %1386 = vmatpush.msra.mxu0 %v1169
  %1387 = vmatpush.msra.mxu0 %v1161
  %1388 = vmatpush.msra.mxu0 %v1153
  %1389 = vmatpush.msra.mxu0 %v1145
  %1390 = vmatpush.msra.mxu0 %v1137
  %1391 = vmatpush.msra.mxu0 %v1129
  %1392 = vmatpush.msra.mxu0 %v1121
  %1393 = vmatmul.f32.gmra.mxu0 0.0
  %v1394 = vpop.f32.mrf.mxu0
  %v1395 = vadd.f32 0.0, %v1394
  %1396 = vdwg.mxu0
  %1397 = vmatpush.msra.mxu0 %v1369
  %1398 = vmatpush.msra.mxu0 %v1361
  %1399 = vmatpush.msra.mxu0 %v1353
  %1400 = vmatpush.msra.mxu0 %v1345
  %1401 = vmatpush.msra.mxu0 %v1337
  %1402 = vmatpush.msra.mxu0 %v1329
  %1403 = vmatpush.msra.mxu0 %v1321
  %1404 = vmatpush.msra.mxu0 %v1313
  %1405 = vmatpush.msra.mxu0 %v1305
  %1406 = vmatpush.msra.mxu0 %v1297
  %1407 = vmatpush.msra.mxu0 %v1289
  %1408 = vmatpush.msra.mxu0 %v1281
  %1409 = vmatpush.msra.mxu0 %v1273
  %1410 = vmatpush.msra.mxu0 %v1265
  %1411 = vmatpush.msra.mxu0 %v1257
  %1412 = vmatpush.msra.mxu0 %v1249
  %1413 = vmatmul.f32.gmra.mxu0 0.0
  %v1414 = vpop.f32.mrf.mxu0
  %v1415 = vadd.f32 %v1395, %v1414
  %1416 = vdwg.mxu0
  %1417 = vmatpush.msra.mxu0 %v1242
  %1418 = vmatpush.msra.mxu0 %v1234
  %1419 = vmatpush.msra.mxu0 %v1226
  %1420 = vmatpush.msra.mxu0 %v1218
  %1421 = vmatpush.msra.mxu0 %v1210
  %1422 = vmatpush.msra.mxu0 %v1202
  %1423 = vmatpush.msra.mxu0 %v1194
  %1424 = vmatpush.msra.mxu0 %v1186
  %1425 = vmatpush.msra.mxu0 %v1178
  %1426 = vmatpush.msra.mxu0 %v1170
  %1427 = vmatpush.msra.mxu0 %v1162
  %1428 = vmatpush.msra.mxu0 %v1154
  %1429 = vmatpush.msra.mxu0 %v1146
  %1430 = vmatpush.msra.mxu0 %v1138
  %1431 = vmatpush.msra.mxu0 %v1130
  %1432 = vmatpush.msra.mxu0 %v1122
  %1433 = vmatmul.f32.gmra.mxu0 0.0
  %v1434 = vpop.f32.mrf.mxu0
  %v1435 = vadd.f32 0.0, %v1434
  %1436 = vdwg.mxu0
  %1437 = vmatpush.msra.mxu0 %v1370
  %1438 = vmatpush.msra.mxu0 %v1362
  %1439 = vmatpush.msra.mxu0 %v1354
  %1440 = vmatpush.msra.mxu0 %v1346
  %1441 = vmatpush.msra.mxu0 %v1338
  %1442 = vmatpush.msra.mxu0 %v1330
  %1443 = vmatpush.msra.mxu0 %v1322
  %1444 = vmatpush.msra.mxu0 %v1314
  %1445 = vmatpush.msra.mxu0 %v1306
  %1446 = vmatpush.msra.mxu0 %v1298
  %1447 = vmatpush.msra.mxu0 %v1290
  %1448 = vmatpush.msra.mxu0 %v1282
  %1449 = vmatpush.msra.mxu0 %v1274
  %1450 = vmatpush.msra.mxu0 %v1266
  %1451 = vmatpush.msra.mxu0 %v1258
  %1452 = vmatpush.msra.mxu0 %v1250
  %1453 = vmatmul.f32.gmra.mxu0 0.0
  %v1454 = vpop.f32.mrf.mxu0
  %v1455 = vadd.f32 %v1435, %v1454
  %1456 = vdwg.mxu0
  %1457 = vmatpush.msra.mxu0 %v1243
  %1458 = vmatpush.msra.mxu0 %v1235
  %1459 = vmatpush.msra.mxu0 %v1227
  %1460 = vmatpush.msra.mxu0 %v1219
  %1461 = vmatpush.msra.mxu0 %v1211
  %1462 = vmatpush.msra.mxu0 %v1203
  %1463 = vmatpush.msra.mxu0 %v1195
  %1464 = vmatpush.msra.mxu0 %v1187
  %1465 = vmatpush.msra.mxu0 %v1179
  %1466 = vmatpush.msra.mxu0 %v1171
  %1467 = vmatpush.msra.mxu0 %v1163
  %1468 = vmatpush.msra.mxu0 %v1155
  %1469 = vmatpush.msra.mxu0 %v1147
  %1470 = vmatpush.msra.mxu0 %v1139
  %1471 = vmatpush.msra.mxu0 %v1131
  %1472 = vmatpush.msra.mxu0 %v1123
  %1473 = vmatmul.f32.gmra.mxu0 0.0
  %v1474 = vpop.f32.mrf.mxu0
  %v1475 = vadd.f32 0.0, %v1474
  %1476 = vdwg.mxu0
  %1477 = vmatpush.msra.mxu0 %v1371
  %1478 = vmatpush.msra.mxu0 %v1363
  %1479 = vmatpush.msra.mxu0 %v1355
  %1480 = vmatpush.msra.mxu0 %v1347
  %1481 = vmatpush.msra.mxu0 %v1339
  %1482 = vmatpush.msra.mxu0 %v1331
  %1483 = vmatpush.msra.mxu0 %v1323
  %1484 = vmatpush.msra.mxu0 %v1315
  %1485 = vmatpush.msra.mxu0 %v1307
  %1486 = vmatpush.msra.mxu0 %v1299
  %1487 = vmatpush.msra.mxu0 %v1291
  %1488 = vmatpush.msra.mxu0 %v1283
  %1489 = vmatpush.msra.mxu0 %v1275
  %1490 = vmatpush.msra.mxu0 %v1267
  %1491 = vmatpush.msra.mxu0 %v1259
  %1492 = vmatpush.msra.mxu0 %v1251
  %1493 = vmatmul.f32.gmra.mxu0 0.0
  %v1494 = vpop.f32.mrf.mxu0
  %v1495 = vadd.f32 %v1475, %v1494
  %1496 = vdwg.mxu0
  %1497 = vmatpush.msra.mxu0 %v1244
  %1498 = vmatpush.msra.mxu0 %v1236
  %1499 = vmatpush.msra.mxu0 %v1228
  %1500 = vmatpush.msra.mxu0 %v1220
  %1501 = vmatpush.msra.mxu0 %v1212
  %1502 = vmatpush.msra.mxu0 %v1204
  %1503 = vmatpush.msra.mxu0 %v1196
  %1504 = vmatpush.msra.mxu0 %v1188
  %1505 = vmatpush.msra.mxu0 %v1180
  %1506 = vmatpush.msra.mxu0 %v1172
  %1507 = vmatpush.msra.mxu0 %v1164
  %1508 = vmatpush.msra.mxu0 %v1156
  %1509 = vmatpush.msra.mxu0 %v1148
  %1510 = vmatpush.msra.mxu0 %v1140
  %1511 = vmatpush.msra.mxu0 %v1132
  %1512 = vmatpush.msra.mxu0 %v1124
  %1513 = vmatmul.f32.gmra.mxu0 0.0
  %v1514 = vpop.f32.mrf.mxu0
  %v1515 = vadd.f32 0.0, %v1514
  %1516 = vdwg.mxu0
  %1517 = vmatpush.msra.mxu0 %v1372
  %1518 = vmatpush.msra.mxu0 %v1364
  %1519 = vmatpush.msra.mxu0 %v1356
  %1520 = vmatpush.msra.mxu0 %v1348
  %1521 = vmatpush.msra.mxu0 %v1340
  %1522 = vmatpush.msra.mxu0 %v1332
  %1523 = vmatpush.msra.mxu0 %v1324
  %1524 = vmatpush.msra.mxu0 %v1316
  %1525 = vmatpush.msra.mxu0 %v1308
  %1526 = vmatpush.msra.mxu0 %v1300
  %1527 = vmatpush.msra.mxu0 %v1292
  %1528 = vmatpush.msra.mxu0 %v1284
  %1529 = vmatpush.msra.mxu0 %v1276
  %1530 = vmatpush.msra.mxu0 %v1268
  %1531 = vmatpush.msra.mxu0 %v1260
  %1532 = vmatpush.msra.mxu0 %v1252
  %1533 = vmatmul.f32.gmra.mxu0 0.0
  %v1534 = vpop.f32.mrf.mxu0
  %v1535 = vadd.f32 %v1515, %v1534
  %1536 = vdwg.mxu0
  %1537 = vmatpush.msra.mxu0 %v1245
  %1538 = vmatpush.msra.mxu0 %v1237
  %1539 = vmatpush.msra.mxu0 %v1229
  %1540 = vmatpush.msra.mxu0 %v1221
  %1541 = vmatpush.msra.mxu0 %v1213
  %1542 = vmatpush.msra.mxu0 %v1205
  %1543 = vmatpush.msra.mxu0 %v1197
  %1544 = vmatpush.msra.mxu0 %v1189
  %1545 = vmatpush.msra.mxu0 %v1181
  %1546 = vmatpush.msra.mxu0 %v1173
  %1547 = vmatpush.msra.mxu0 %v1165
  %1548 = vmatpush.msra.mxu0 %v1157
  %1549 = vmatpush.msra.mxu0 %v1149
  %1550 = vmatpush.msra.mxu0 %v1141
  %1551 = vmatpush.msra.mxu0 %v1133
  %1552 = vmatpush.msra.mxu0 %v1125
  %1553 = vmatmul.f32.gmra.mxu0 0.0
  %v1554 = vpop.f32.mrf.mxu0
  %v1555 = vadd.f32 0.0, %v1554
  %1556 = vdwg.mxu0
  %1557 = vmatpush.msra.mxu0 %v1373
  %1558 = vmatpush.msra.mxu0 %v1365
  %1559 = vmatpush.msra.mxu0 %v1357
  %1560 = vmatpush.msra.mxu0 %v1349
  %1561 = vmatpush.msra.mxu0 %v1341
  %1562 = vmatpush.msra.mxu0 %v1333
  %1563 = vmatpush.msra.mxu0 %v1325
  %1564 = vmatpush.msra.mxu0 %v1317
  %1565 = vmatpush.msra.mxu0 %v1309
  %1566 = vmatpush.msra.mxu0 %v1301
  %1567 = vmatpush.msra.mxu0 %v1293
  %1568 = vmatpush.msra.mxu0 %v1285
  %1569 = vmatpush.msra.mxu0 %v1277
  %1570 = vmatpush.msra.mxu0 %v1269
  %1571 = vmatpush.msra.mxu0 %v1261
  %1572 = vmatpush.msra.mxu0 %v1253
  %1573 = vmatmul.f32.gmra.mxu0 0.0
  %v1574 = vpop.f32.mrf.mxu0
  %v1575 = vadd.f32 %v1555, %v1574
  %1576 = vdwg.mxu0
  %1577 = vmatpush.msra.mxu0 %v1246
  %1578 = vmatpush.msra.mxu0 %v1238
  %1579 = vmatpush.msra.mxu0 %v1230
  %1580 = vmatpush.msra.mxu0 %v1222
  %1581 = vmatpush.msra.mxu0 %v1214
  %1582 = vmatpush.msra.mxu0 %v1206
  %1583 = vmatpush.msra.mxu0 %v1198
  %1584 = vmatpush.msra.mxu0 %v1190
  %1585 = vmatpush.msra.mxu0 %v1182
  %1586 = vmatpush.msra.mxu0 %v1174
  %1587 = vmatpush.msra.mxu0 %v1166
  %1588 = vmatpush.msra.mxu0 %v1158
  %1589 = vmatpush.msra.mxu0 %v1150
  %1590 = vmatpush.msra.mxu0 %v1142
  %1591 = vmatpush.msra.mxu0 %v1134
  %1592 = vmatpush.msra.mxu0 %v1126
  %1593 = vmatmul.f32.gmra.mxu0 0.0
  %v1594 = vpop.f32.mrf.mxu0
  %v1595 = vadd.f32 0.0, %v1594
  %1596 = vdwg.mxu0
  %1597 = vmatpush.msra.mxu0 %v1374
  %1598 = vmatpush.msra.mxu0 %v1366
  %1599 = vmatpush.msra.mxu0 %v1358
  %1600 = vmatpush.msra.mxu0 %v1350
  %1601 = vmatpush.msra.mxu0 %v1342
  %1602 = vmatpush.msra.mxu0 %v1334
  %1603 = vmatpush.msra.mxu0 %v1326
  %1604 = vmatpush.msra.mxu0 %v1318
  %1605 = vmatpush.msra.mxu0 %v1310
  %1606 = vmatpush.msra.mxu0 %v1302
  %1607 = vmatpush.msra.mxu0 %v1294
  %1608 = vmatpush.msra.mxu0 %v1286
  %1609 = vmatpush.msra.mxu0 %v1278
  %1610 = vmatpush.msra.mxu0 %v1270
  %1611 = vmatpush.msra.mxu0 %v1262
  %1612 = vmatpush.msra.mxu0 %v1254
  %1613 = vmatmul.f32.gmra.mxu0 0.0
  %v1614 = vpop.f32.mrf.mxu0
  %v1615 = vadd.f32 %v1595, %v1614
  %1616 = vdwg.mxu0
  %1617 = vmatpush.msra.mxu0 %v1247
  %1618 = vmatpush.msra.mxu0 %v1239
  %1619 = vmatpush.msra.mxu0 %v1231
  %1620 = vmatpush.msra.mxu0 %v1223
  %1621 = vmatpush.msra.mxu0 %v1215
  %1622 = vmatpush.msra.mxu0 %v1207
  %1623 = vmatpush.msra.mxu0 %v1199
  %1624 = vmatpush.msra.mxu0 %v1191
  %1625 = vmatpush.msra.mxu0 %v1183
  %1626 = vmatpush.msra.mxu0 %v1175
  %1627 = vmatpush.msra.mxu0 %v1167
  %1628 = vmatpush.msra.mxu0 %v1159
  %1629 = vmatpush.msra.mxu0 %v1151
  %1630 = vmatpush.msra.mxu0 %v1143
  %1631 = vmatpush.msra.mxu0 %v1135
  %1632 = vmatpush.msra.mxu0 %v1127
  %1633 = vmatmul.f32.gmra.mxu0 0.0
  %v1634 = vpop.f32.mrf.mxu0
  %v1635 = vadd.f32 0.0, %v1634
  %1636 = vdwg.mxu0
  %1637 = vmatpush.msra.mxu0 %v1375
  %1638 = vmatpush.msra.mxu0 %v1367
  %1639 = vmatpush.msra.mxu0 %v1359
  %1640 = vmatpush.msra.mxu0 %v1351
  %1641 = vmatpush.msra.mxu0 %v1343
  %1642 = vmatpush.msra.mxu0 %v1335
  %1643 = vmatpush.msra.mxu0 %v1327
  %1644 = vmatpush.msra.mxu0 %v1319
  %1645 = vmatpush.msra.mxu0 %v1311
  %1646 = vmatpush.msra.mxu0 %v1303
  %1647 = vmatpush.msra.mxu0 %v1295
  %1648 = vmatpush.msra.mxu0 %v1287
  %1649 = vmatpush.msra.mxu0 %v1279
  %1650 = vmatpush.msra.mxu0 %v1271
  %1651 = vmatpush.msra.mxu0 %v1263
  %1652 = vmatpush.msra.mxu0 %v1255
  %1653 = vmatmul.f32.gmra.mxu0 0.0
  %v1654 = vpop.f32.mrf.mxu0
  %v1655 = vadd.f32 %v1635, %v1654
  %1656 = vdwg.mxu0
  %1657 = vmatpush.msra.mxu0 %v1248
  %1658 = vmatpush.msra.mxu0 %v1240
  %1659 = vmatpush.msra.mxu0 %v1232
  %1660 = vmatpush.msra.mxu0 %v1224
  %1661 = vmatpush.msra.mxu0 %v1216
  %1662 = vmatpush.msra.mxu0 %v1208
  %1663 = vmatpush.msra.mxu0 %v1200
  %1664 = vmatpush.msra.mxu0 %v1192
  %1665 = vmatpush.msra.mxu0 %v1184
  %1666 = vmatpush.msra.mxu0 %v1176
  %1667 = vmatpush.msra.mxu0 %v1168
  %1668 = vmatpush.msra.mxu0 %v1160
  %1669 = vmatpush.msra.mxu0 %v1152
  %1670 = vmatpush.msra.mxu0 %v1144
  %1671 = vmatpush.msra.mxu0 %v1136
  %1672 = vmatpush.msra.mxu0 %v1128
  %1673 = vmatmul.f32.gmra.mxu0 0.0
  %v1674 = vpop.f32.mrf.mxu0
  %v1675 = vadd.f32 0.0, %v1674
  %1676 = vdwg.mxu0
  %1677 = vmatpush.msra.mxu0 %v1376
  %1678 = vmatpush.msra.mxu0 %v1368
  %1679 = vmatpush.msra.mxu0 %v1360
  %1680 = vmatpush.msra.mxu0 %v1352
  %1681 = vmatpush.msra.mxu0 %v1344
  %1682 = vmatpush.msra.mxu0 %v1336
  %1683 = vmatpush.msra.mxu0 %v1328
  %1684 = vmatpush.msra.mxu0 %v1320
  %1685 = vmatpush.msra.mxu0 %v1312
  %1686 = vmatpush.msra.mxu0 %v1304
  %1687 = vmatpush.msra.mxu0 %v1296
  %1688 = vmatpush.msra.mxu0 %v1288
  %1689 = vmatpush.msra.mxu0 %v1280
  %1690 = vmatpush.msra.mxu0 %v1272
  %1691 = vmatpush.msra.mxu0 %v1264
  %1692 = vmatpush.msra.mxu0 %v1256
  %1693 = vmatmul.f32.gmra.mxu0 0.0
  %v1694 = vpop.f32.mrf.mxu0
  %v1695 = vadd.f32 %v1675, %v1694
  %1696 = vdwg.mxu0
  %v1697 = vadd.f32 %v1113, %v1415
  %v1698 = vadd.f32 %v1114, %v1455
  %v1699 = vadd.f32 %v1115, %v1495
  %v1700 = vadd.f32 %v1116, %v1535
  %v1701 = vadd.f32 %v1117, %v1575
  %v1702 = vadd.f32 %v1118, %v1615
  %v1703 = vadd.f32 %v1119, %v1655
  %v1704 = vadd.f32 %v1120, %v1695
  %v1705 = vxor.u32 %v1697, 2147483648
  %v1706 = vxor.u32 %v1698, 2147483648
  %v1707 = vxor.u32 %v1699, 2147483648
  %v1708 = vxor.u32 %v1700, 2147483648
  %v1709 = vxor.u32 %v1701, 2147483648
  %v1710 = vxor.u32 %v1702, 2147483648
  %v1711 = vmul.f32 %v1705, 1.442695
  %v1712 = vpow.pop %v1711
  %v1713 = vmul.f32 %v1706, 1.442695
  %v1714 = vpow.pop %v1713
  %v1715 = vmul.f32 %v1707, 1.442695
  %v1716 = vpow.pop %v1715
  %v1717 = vmul.f32 %v1708, 1.442695
  %v1718 = vpow.pop %v1717
  %v1719 = vmul.f32 %v1709, 1.442695
  %v1720 = vpow.pop %v1719
  %v1721 = vmul.f32 %v1710, 1.442695
  %v1722 = vpow.pop %v1721
  %v1723 = vadd.f32 %v1712, 1.0
  %v1724 = vadd.f32 %v1714, 1.0
  %v1725 = vadd.f32 %v1716, 1.0
  %v1726 = vadd.f32 %v1718, 1.0
  %v1727 = vadd.f32 %v1720, 1.0
  %v1728 = vadd.f32 %v1722, 1.0
  %v1729 = vrcp.pop %v1723
  %v1730 = vmul.f32 %v1723, %v1729
  %v1731 = vsub.f32 1.0, %v1730
  %v1732 = vmul.f32 %v1729, %v1731
  %v1733 = vadd.f32 %v1729, %v1732
  %vm1734 = vweird.f32 %v1723
  %vm1735 = vweird.f32 %v1729
  %vm1736 = vmor %vm1734, %vm1735
  %v1737 = vsel %vm1736, %v1729, %v1733
  %v1738 = vand.u32 2147483647, %v1723
  %vm1739 = vcmp.eq.f32.partialorder %v1738, 8.507059e+37
  %v1740 = vand.u32 %v1723, 2147483648
  %v1741 = vor.u32 1.1754944e-38, %v1740
  %v1742 = vsel %vm1739, %v1741, %v1737
  %v1743 = vmul.f32 1.0, %v1742
  %v1744 = vrcp.pop %v1724
  %v1745 = vmul.f32 %v1724, %v1744
  %v1746 = vsub.f32 1.0, %v1745
  %v1747 = vmul.f32 %v1744, %v1746
  %v1748 = vadd.f32 %v1744, %v1747
  %vm1749 = vweird.f32 %v1724
  %vm1750 = vweird.f32 %v1744
  %vm1751 = vmor %vm1749, %vm1750
  %v1752 = vsel %vm1751, %v1744, %v1748
  %v1753 = vand.u32 2147483647, %v1724
  %vm1754 = vcmp.eq.f32.partialorder %v1753, 8.507059e+37
  %v1755 = vand.u32 %v1724, 2147483648
  %v1756 = vor.u32 1.1754944e-38, %v1755
  %v1757 = vsel %vm1754, %v1756, %v1752
  %v1758 = vmul.f32 1.0, %v1757
  %v1759 = vrcp.pop %v1725
  %v1760 = vmul.f32 %v1725, %v1759
  %v1761 = vsub.f32 1.0, %v1760
  %v1762 = vmul.f32 %v1759, %v1761
  %v1763 = vadd.f32 %v1759, %v1762
  %vm1764 = vweird.f32 %v1725
  %vm1765 = vweird.f32 %v1759
  %vm1766 = vmor %vm1764, %vm1765
  %v1767 = vsel %vm1766, %v1759, %v1763
  %v1768 = vand.u32 2147483647, %v1725
  %vm1769 = vcmp.eq.f32.partialorder %v1768, 8.507059e+37
  %v1770 = vand.u32 %v1725, 2147483648
  %v1771 = vor.u32 1.1754944e-38, %v1770
  %v1772 = vsel %vm1769, %v1771, %v1767
  %v1773 = vmul.f32 1.0, %v1772
  %v1774 = vrcp.pop %v1726
  %v1775 = vmul.f32 %v1726, %v1774
  %v1776 = vsub.f32 1.0, %v1775
  %v1777 = vmul.f32 %v1774, %v1776
  %v1778 = vadd.f32 %v1774, %v1777
  %vm1779 = vweird.f32 %v1726
  %vm1780 = vweird.f32 %v1774
  %vm1781 = vmor %vm1779, %vm1780
  %v1782 = vsel %vm1781, %v1774, %v1778
  %v1783 = vand.u32 2147483647, %v1726
  %vm1784 = vcmp.eq.f32.partialorder %v1783, 8.507059e+37
  %v1785 = vand.u32 %v1726, 2147483648
  %v1786 = vor.u32 1.1754944e-38, %v1785
  %v1787 = vsel %vm1784, %v1786, %v1782
  %v1788 = vmul.f32 1.0, %v1787
  %v1789 = vrcp.pop %v1727
  %v1790 = vmul.f32 %v1727, %v1789
  %v1791 = vsub.f32 1.0, %v1790
  %v1792 = vmul.f32 %v1789, %v1791
  %v1793 = vadd.f32 %v1789, %v1792
  %vm1794 = vweird.f32 %v1727
  %vm1795 = vweird.f32 %v1789
  %vm1796 = vmor %vm1794, %vm1795
  %v1797 = vsel %vm1796, %v1789, %v1793
  %v1798 = vand.u32 2147483647, %v1727
  %vm1799 = vcmp.eq.f32.partialorder %v1798, 8.507059e+37
  %v1800 = vand.u32 %v1727, 2147483648
  %v1801 = vor.u32 1.1754944e-38, %v1800
  %v1802 = vsel %vm1799, %v1801, %v1797
  %v1803 = vmul.f32 1.0, %v1802
  %v1804 = vrcp.pop %v1728
  %v1805 = vmul.f32 %v1728, %v1804
  %v1806 = vsub.f32 1.0, %v1805
  %v1807 = vmul.f32 %v1804, %v1806
  %v1808 = vadd.f32 %v1804, %v1807
  %vm1809 = vweird.f32 %v1728
  %vm1810 = vweird.f32 %v1804
  %vm1811 = vmor %vm1809, %vm1810
  %v1812 = vsel %vm1811, %v1804, %v1808
  %v1813 = vand.u32 2147483647, %v1728
  %vm1814 = vcmp.eq.f32.partialorder %v1813, 8.507059e+37
  %v1815 = vand.u32 %v1728, 2147483648
  %v1816 = vor.u32 1.1754944e-38, %v1815
  %v1817 = vsel %vm1814, %v1816, %v1812
  %v1818 = vmul.f32 1.0, %v1817
  %v1819 = vtanh.pop %v1703
  %v1820 = vtanh.pop %v1704
  %v1821 = vmul.f32 %v1773, 0.0
  %v1822 = vmul.f32 %v1788, 0.0
  %v1823 = vmul.f32 %v1743, %v1819
  %v1824 = vmul.f32 %v1758, %v1820
  %v1825 = vadd.f32 %v1821, %v1823
  %v1826 = vadd.f32 %v1822, %v1824
  %v1827 = vtanh.pop %v1825
  %v1828 = vtanh.pop %v1826
  %v1829 = vmul.f32 %v1803, %v1827
  %v1830 = vmul.f32 %v1818, %v1828
  %1831 = vst [vmem:[#allocation3] sm:$0xff] %v1829
  %1832 = vst [vmem:[#allocation3 + $0x78] sm:$0xff] %v1830
  %v1833 = vld [vmem:[#allocation2 + $0x40] sm:$0xff]
  %v1834 = vld [vmem:[#allocation2 + $0x48] sm:$0xff]
  %v1835 = vld [vmem:[#allocation2 + $0x50] sm:$0xff]
  %v1836 = vld [vmem:[#allocation2 + $0x58] sm:$0xff]
  %v1837 = vld [vmem:[#allocation2 + $0x60] sm:$0xff]
  %v1838 = vld [vmem:[#allocation2 + $0x68] sm:$0xff]
  %v1839 = vld [vmem:[#allocation2 + $0x70] sm:$0xff]
  %v1840 = vld [vmem:[#allocation2 + $0x78] sm:$0xff]
  %v1841 = vld [vmem:[%s3] sm:$0xff]
  %v1842 = vld [vmem:[%s3 + $0x8] sm:$0xff]
  %v1843 = vld [vmem:[%s3 + $0x10] sm:$0xff]
  %v1844 = vld [vmem:[%s3 + $0x18] sm:$0xff]
  %v1845 = vld [vmem:[%s3 + $0x20] sm:$0xff]
  %v1846 = vld [vmem:[%s3 + $0x28] sm:$0xff]
  %v1847 = vld [vmem:[%s3 + $0x30] sm:$0xff]
  %v1848 = vld [vmem:[%s3 + $0x38] sm:$0xff]
  %v1849 = vld [vmem:[%s3 + $0x40] sm:$0xff]
  %v1850 = vld [vmem:[%s3 + $0x48] sm:$0xff]
  %v1851 = vld [vmem:[%s3 + $0x50] sm:$0xff]
  %v1852 = vld [vmem:[%s3 + $0x58] sm:$0xff]
  %v1853 = vld [vmem:[%s3 + $0x60] sm:$0xff]
  %v1854 = vld [vmem:[%s3 + $0x68] sm:$0xff]
  %v1855 = vld [vmem:[%s3 + $0x70] sm:$0xff]
  %v1856 = vld [vmem:[%s3 + $0x78] sm:$0xff]
  %v1857 = vld [vmem:[%s3 + $0x80] sm:$0xff]
  %v1858 = vld [vmem:[%s3 + $0x88] sm:$0xff]
  %v1859 = vld [vmem:[%s3 + $0x90] sm:$0xff]
  %v1860 = vld [vmem:[%s3 + $0x98] sm:$0xff]
  %v1861 = vld [vmem:[%s3 + $0xa0] sm:$0xff]
  %v1862 = vld [vmem:[%s3 + $0xa8] sm:$0xff]
  %v1863 = vld [vmem:[%s3 + $0xb0] sm:$0xff]
  %v1864 = vld [vmem:[%s3 + $0xb8] sm:$0xff]
  %v1865 = vld [vmem:[%s3 + $0xc0] sm:$0xff]
  %v1866 = vld [vmem:[%s3 + $0xc8] sm:$0xff]
  %v1867 = vld [vmem:[%s3 + $0xd0] sm:$0xff]
  %v1868 = vld [vmem:[%s3 + $0xd8] sm:$0xff]
  %v1869 = vld [vmem:[%s3 + $0xe0] sm:$0xff]
  %v1870 = vld [vmem:[%s3 + $0xe8] sm:$0xff]
  %v1871 = vld [vmem:[%s3 + $0xf0] sm:$0xff]
  %v1872 = vld [vmem:[%s3 + $0xf8] sm:$0xff]
  %v1873 = vld [vmem:[%s3 + $0x100] sm:$0xff]
  %v1874 = vld [vmem:[%s3 + $0x108] sm:$0xff]
  %v1875 = vld [vmem:[%s3 + $0x110] sm:$0xff]
  %v1876 = vld [vmem:[%s3 + $0x118] sm:$0xff]
  %v1877 = vld [vmem:[%s3 + $0x120] sm:$0xff]
  %v1878 = vld [vmem:[%s3 + $0x128] sm:$0xff]
  %v1879 = vld [vmem:[%s3 + $0x130] sm:$0xff]
  %v1880 = vld [vmem:[%s3 + $0x138] sm:$0xff]
  %v1881 = vld [vmem:[%s3 + $0x140] sm:$0xff]
  %v1882 = vld [vmem:[%s3 + $0x148] sm:$0xff]
  %v1883 = vld [vmem:[%s3 + $0x150] sm:$0xff]
  %v1884 = vld [vmem:[%s3 + $0x158] sm:$0xff]
  %v1885 = vld [vmem:[%s3 + $0x160] sm:$0xff]
  %v1886 = vld [vmem:[%s3 + $0x168] sm:$0xff]
  %v1887 = vld [vmem:[%s3 + $0x170] sm:$0xff]
  %v1888 = vld [vmem:[%s3 + $0x178] sm:$0xff]
  %v1889 = vld [vmem:[%s3 + $0x180] sm:$0xff]
  %v1890 = vld [vmem:[%s3 + $0x188] sm:$0xff]
  %v1891 = vld [vmem:[%s3 + $0x190] sm:$0xff]
  %v1892 = vld [vmem:[%s3 + $0x198] sm:$0xff]
  %v1893 = vld [vmem:[%s3 + $0x1a0] sm:$0xff]
  %v1894 = vld [vmem:[%s3 + $0x1a8] sm:$0xff]
  %v1895 = vld [vmem:[%s3 + $0x1b0] sm:$0xff]
  %v1896 = vld [vmem:[%s3 + $0x1b8] sm:$0xff]
  %v1897 = vld [vmem:[%s3 + $0x1c0] sm:$0xff]
  %v1898 = vld [vmem:[%s3 + $0x1c8] sm:$0xff]
  %v1899 = vld [vmem:[%s3 + $0x1d0] sm:$0xff]
  %v1900 = vld [vmem:[%s3 + $0x1d8] sm:$0xff]
  %v1901 = vld [vmem:[%s3 + $0x1e0] sm:$0xff]
  %v1902 = vld [vmem:[%s3 + $0x1e8] sm:$0xff]
  %v1903 = vld [vmem:[%s3 + $0x1f0] sm:$0xff]
  %v1904 = vld [vmem:[%s3 + $0x1f8] sm:$0xff]
  %v1905 = vld [vmem:[%s3 + $0x200] sm:$0xff]
  %v1906 = vld [vmem:[%s3 + $0x208] sm:$0xff]
  %v1907 = vld [vmem:[%s3 + $0x210] sm:$0xff]
  %v1908 = vld [vmem:[%s3 + $0x218] sm:$0xff]
  %v1909 = vld [vmem:[%s3 + $0x220] sm:$0xff]
  %v1910 = vld [vmem:[%s3 + $0x228] sm:$0xff]
  %v1911 = vld [vmem:[%s3 + $0x230] sm:$0xff]
  %v1912 = vld [vmem:[%s3 + $0x238] sm:$0xff]
  %v1913 = vld [vmem:[%s3 + $0x240] sm:$0xff]
  %v1914 = vld [vmem:[%s3 + $0x248] sm:$0xff]
  %v1915 = vld [vmem:[%s3 + $0x250] sm:$0xff]
  %v1916 = vld [vmem:[%s3 + $0x258] sm:$0xff]
  %v1917 = vld [vmem:[%s3 + $0x260] sm:$0xff]
  %v1918 = vld [vmem:[%s3 + $0x268] sm:$0xff]
  %v1919 = vld [vmem:[%s3 + $0x270] sm:$0xff]
  %v1920 = vld [vmem:[%s3 + $0x278] sm:$0xff]
  %v1921 = vld [vmem:[%s3 + $0x280] sm:$0xff]
  %v1922 = vld [vmem:[%s3 + $0x288] sm:$0xff]
  %v1923 = vld [vmem:[%s3 + $0x290] sm:$0xff]
  %v1924 = vld [vmem:[%s3 + $0x298] sm:$0xff]
  %v1925 = vld [vmem:[%s3 + $0x2a0] sm:$0xff]
  %v1926 = vld [vmem:[%s3 + $0x2a8] sm:$0xff]
  %v1927 = vld [vmem:[%s3 + $0x2b0] sm:$0xff]
  %v1928 = vld [vmem:[%s3 + $0x2b8] sm:$0xff]
  %v1929 = vld [vmem:[%s3 + $0x2c0] sm:$0xff]
  %v1930 = vld [vmem:[%s3 + $0x2c8] sm:$0xff]
  %v1931 = vld [vmem:[%s3 + $0x2d0] sm:$0xff]
  %v1932 = vld [vmem:[%s3 + $0x2d8] sm:$0xff]
  %v1933 = vld [vmem:[%s3 + $0x2e0] sm:$0xff]
  %v1934 = vld [vmem:[%s3 + $0x2e8] sm:$0xff]
  %v1935 = vld [vmem:[%s3 + $0x2f0] sm:$0xff]
  %v1936 = vld [vmem:[%s3 + $0x2f8] sm:$0xff]
  %v1937 = vld [vmem:[%s3 + $0x300] sm:$0xff]
  %v1938 = vld [vmem:[%s3 + $0x308] sm:$0xff]
  %v1939 = vld [vmem:[%s3 + $0x310] sm:$0xff]
  %v1940 = vld [vmem:[%s3 + $0x318] sm:$0xff]
  %v1941 = vld [vmem:[%s3 + $0x320] sm:$0xff]
  %v1942 = vld [vmem:[%s3 + $0x328] sm:$0xff]
  %v1943 = vld [vmem:[%s3 + $0x330] sm:$0xff]
  %v1944 = vld [vmem:[%s3 + $0x338] sm:$0xff]
  %v1945 = vld [vmem:[%s3 + $0x340] sm:$0xff]
  %v1946 = vld [vmem:[%s3 + $0x348] sm:$0xff]
  %v1947 = vld [vmem:[%s3 + $0x350] sm:$0xff]
  %v1948 = vld [vmem:[%s3 + $0x358] sm:$0xff]
  %v1949 = vld [vmem:[%s3 + $0x360] sm:$0xff]
  %v1950 = vld [vmem:[%s3 + $0x368] sm:$0xff]
  %v1951 = vld [vmem:[%s3 + $0x370] sm:$0xff]
  %v1952 = vld [vmem:[%s3 + $0x378] sm:$0xff]
  %v1953 = vld [vmem:[%s3 + $0x380] sm:$0xff]
  %v1954 = vld [vmem:[%s3 + $0x388] sm:$0xff]
  %v1955 = vld [vmem:[%s3 + $0x390] sm:$0xff]
  %v1956 = vld [vmem:[%s3 + $0x398] sm:$0xff]
  %v1957 = vld [vmem:[%s3 + $0x3a0] sm:$0xff]
  %v1958 = vld [vmem:[%s3 + $0x3a8] sm:$0xff]
  %v1959 = vld [vmem:[%s3 + $0x3b0] sm:$0xff]
  %v1960 = vld [vmem:[%s3 + $0x3b8] sm:$0xff]
  %v1961 = vld [vmem:[%s3 + $0x3c0] sm:$0xff]
  %v1962 = vld [vmem:[%s3 + $0x3c8] sm:$0xff]
  %v1963 = vld [vmem:[%s3 + $0x3d0] sm:$0xff]
  %v1964 = vld [vmem:[%s3 + $0x3d8] sm:$0xff]
  %v1965 = vld [vmem:[%s3 + $0x3e0] sm:$0xff]
  %v1966 = vld [vmem:[%s3 + $0x3e8] sm:$0xff]
  %v1967 = vld [vmem:[%s3 + $0x3f0] sm:$0xff]
  %v1968 = vld [vmem:[%s3 + $0x3f8] sm:$0xff]
  %v1969 = vld [vmem:[%s3 + $0x400] sm:$0xff]
  %v1970 = vld [vmem:[%s3 + $0x408] sm:$0xff]
  %v1971 = vld [vmem:[%s3 + $0x410] sm:$0xff]
  %v1972 = vld [vmem:[%s3 + $0x418] sm:$0xff]
  %v1973 = vld [vmem:[%s3 + $0x420] sm:$0xff]
  %v1974 = vld [vmem:[%s3 + $0x428] sm:$0xff]
  %v1975 = vld [vmem:[%s3 + $0x430] sm:$0xff]
  %v1976 = vld [vmem:[%s3 + $0x438] sm:$0xff]
  %v1977 = vld [vmem:[%s3 + $0x440] sm:$0xff]
  %v1978 = vld [vmem:[%s3 + $0x448] sm:$0xff]
  %v1979 = vld [vmem:[%s3 + $0x450] sm:$0xff]
  %v1980 = vld [vmem:[%s3 + $0x458] sm:$0xff]
  %v1981 = vld [vmem:[%s3 + $0x460] sm:$0xff]
  %v1982 = vld [vmem:[%s3 + $0x468] sm:$0xff]
  %v1983 = vld [vmem:[%s3 + $0x470] sm:$0xff]
  %v1984 = vld [vmem:[%s3 + $0x478] sm:$0xff]
  %v1985 = vld [vmem:[%s3 + $0x480] sm:$0xff]
  %v1986 = vld [vmem:[%s3 + $0x488] sm:$0xff]
  %v1987 = vld [vmem:[%s3 + $0x490] sm:$0xff]
  %v1988 = vld [vmem:[%s3 + $0x498] sm:$0xff]
  %v1989 = vld [vmem:[%s3 + $0x4a0] sm:$0xff]
  %v1990 = vld [vmem:[%s3 + $0x4a8] sm:$0xff]
  %v1991 = vld [vmem:[%s3 + $0x4b0] sm:$0xff]
  %v1992 = vld [vmem:[%s3 + $0x4b8] sm:$0xff]
  %v1993 = vld [vmem:[%s3 + $0x4c0] sm:$0xff]
  %v1994 = vld [vmem:[%s3 + $0x4c8] sm:$0xff]
  %v1995 = vld [vmem:[%s3 + $0x4d0] sm:$0xff]
  %v1996 = vld [vmem:[%s3 + $0x4d8] sm:$0xff]
  %v1997 = vld [vmem:[%s3 + $0x4e0] sm:$0xff]
  %v1998 = vld [vmem:[%s3 + $0x4e8] sm:$0xff]
  %v1999 = vld [vmem:[%s3 + $0x4f0] sm:$0xff]
  %v2000 = vld [vmem:[%s3 + $0x4f8] sm:$0xff]
  %v2001 = vld [vmem:[%s3 + $0x500] sm:$0xff]
  %v2002 = vld [vmem:[%s3 + $0x508] sm:$0xff]
  %v2003 = vld [vmem:[%s3 + $0x510] sm:$0xff]
  %v2004 = vld [vmem:[%s3 + $0x518] sm:$0xff]
  %v2005 = vld [vmem:[%s3 + $0x520] sm:$0xff]
  %v2006 = vld [vmem:[%s3 + $0x528] sm:$0xff]
  %v2007 = vld [vmem:[%s3 + $0x530] sm:$0xff]
  %v2008 = vld [vmem:[%s3 + $0x538] sm:$0xff]
  %v2009 = vld [vmem:[%s3 + $0x540] sm:$0xff]
  %v2010 = vld [vmem:[%s3 + $0x548] sm:$0xff]
  %v2011 = vld [vmem:[%s3 + $0x550] sm:$0xff]
  %v2012 = vld [vmem:[%s3 + $0x558] sm:$0xff]
  %v2013 = vld [vmem:[%s3 + $0x560] sm:$0xff]
  %v2014 = vld [vmem:[%s3 + $0x568] sm:$0xff]
  %v2015 = vld [vmem:[%s3 + $0x570] sm:$0xff]
  %v2016 = vld [vmem:[%s3 + $0x578] sm:$0xff]
  %v2017 = vld [vmem:[%s3 + $0x580] sm:$0xff]
  %v2018 = vld [vmem:[%s3 + $0x588] sm:$0xff]
  %v2019 = vld [vmem:[%s3 + $0x590] sm:$0xff]
  %v2020 = vld [vmem:[%s3 + $0x598] sm:$0xff]
  %v2021 = vld [vmem:[%s3 + $0x5a0] sm:$0xff]
  %v2022 = vld [vmem:[%s3 + $0x5a8] sm:$0xff]
  %v2023 = vld [vmem:[%s3 + $0x5b0] sm:$0xff]
  %v2024 = vld [vmem:[%s3 + $0x5b8] sm:$0xff]
  %v2025 = vld [vmem:[%s3 + $0x5c0] sm:$0xff]
  %v2026 = vld [vmem:[%s3 + $0x5c8] sm:$0xff]
  %v2027 = vld [vmem:[%s3 + $0x5d0] sm:$0xff]
  %v2028 = vld [vmem:[%s3 + $0x5d8] sm:$0xff]
  %v2029 = vld [vmem:[%s3 + $0x5e0] sm:$0xff]
  %v2030 = vld [vmem:[%s3 + $0x5e8] sm:$0xff]
  %v2031 = vld [vmem:[%s3 + $0x5f0] sm:$0xff]
  %v2032 = vld [vmem:[%s3 + $0x5f8] sm:$0xff]
  %v2033 = vld [vmem:[%s3 + $0x600] sm:$0xff]
  %v2034 = vld [vmem:[%s3 + $0x608] sm:$0xff]
  %v2035 = vld [vmem:[%s3 + $0x610] sm:$0xff]
  %v2036 = vld [vmem:[%s3 + $0x618] sm:$0xff]
  %v2037 = vld [vmem:[%s3 + $0x620] sm:$0xff]
  %v2038 = vld [vmem:[%s3 + $0x628] sm:$0xff]
  %v2039 = vld [vmem:[%s3 + $0x630] sm:$0xff]
  %v2040 = vld [vmem:[%s3 + $0x638] sm:$0xff]
  %v2041 = vld [vmem:[%s3 + $0x640] sm:$0xff]
  %v2042 = vld [vmem:[%s3 + $0x648] sm:$0xff]
  %v2043 = vld [vmem:[%s3 + $0x650] sm:$0xff]
  %v2044 = vld [vmem:[%s3 + $0x658] sm:$0xff]
  %v2045 = vld [vmem:[%s3 + $0x660] sm:$0xff]
  %v2046 = vld [vmem:[%s3 + $0x668] sm:$0xff]
  %v2047 = vld [vmem:[%s3 + $0x670] sm:$0xff]
  %v2048 = vld [vmem:[%s3 + $0x678] sm:$0xff]
  %v2049 = vld [vmem:[%s3 + $0x680] sm:$0xff]
  %v2050 = vld [vmem:[%s3 + $0x688] sm:$0xff]
  %v2051 = vld [vmem:[%s3 + $0x690] sm:$0xff]
  %v2052 = vld [vmem:[%s3 + $0x698] sm:$0xff]
  %v2053 = vld [vmem:[%s3 + $0x6a0] sm:$0xff]
  %v2054 = vld [vmem:[%s3 + $0x6a8] sm:$0xff]
  %v2055 = vld [vmem:[%s3 + $0x6b0] sm:$0xff]
  %v2056 = vld [vmem:[%s3 + $0x6b8] sm:$0xff]
  %v2057 = vld [vmem:[%s3 + $0x6c0] sm:$0xff]
  %v2058 = vld [vmem:[%s3 + $0x6c8] sm:$0xff]
  %v2059 = vld [vmem:[%s3 + $0x6d0] sm:$0xff]
  %v2060 = vld [vmem:[%s3 + $0x6d8] sm:$0xff]
  %v2061 = vld [vmem:[%s3 + $0x6e0] sm:$0xff]
  %v2062 = vld [vmem:[%s3 + $0x6e8] sm:$0xff]
  %v2063 = vld [vmem:[%s3 + $0x6f0] sm:$0xff]
  %v2064 = vld [vmem:[%s3 + $0x6f8] sm:$0xff]
  %v2065 = vld [vmem:[%s3 + $0x700] sm:$0xff]
  %v2066 = vld [vmem:[%s3 + $0x708] sm:$0xff]
  %v2067 = vld [vmem:[%s3 + $0x710] sm:$0xff]
  %v2068 = vld [vmem:[%s3 + $0x718] sm:$0xff]
  %v2069 = vld [vmem:[%s3 + $0x720] sm:$0xff]
  %v2070 = vld [vmem:[%s3 + $0x728] sm:$0xff]
  %v2071 = vld [vmem:[%s3 + $0x730] sm:$0xff]
  %v2072 = vld [vmem:[%s3 + $0x738] sm:$0xff]
  %v2073 = vld [vmem:[%s3 + $0x740] sm:$0xff]
  %v2074 = vld [vmem:[%s3 + $0x748] sm:$0xff]
  %v2075 = vld [vmem:[%s3 + $0x750] sm:$0xff]
  %v2076 = vld [vmem:[%s3 + $0x758] sm:$0xff]
  %v2077 = vld [vmem:[%s3 + $0x760] sm:$0xff]
  %v2078 = vld [vmem:[%s3 + $0x768] sm:$0xff]
  %v2079 = vld [vmem:[%s3 + $0x770] sm:$0xff]
  %v2080 = vld [vmem:[%s3 + $0x778] sm:$0xff]
  %v2081 = vld [vmem:[%s3 + $0x780] sm:$0xff]
  %v2082 = vld [vmem:[%s3 + $0x788] sm:$0xff]
  %v2083 = vld [vmem:[%s3 + $0x790] sm:$0xff]
  %v2084 = vld [vmem:[%s3 + $0x798] sm:$0xff]
  %v2085 = vld [vmem:[%s3 + $0x7a0] sm:$0xff]
  %v2086 = vld [vmem:[%s3 + $0x7a8] sm:$0xff]
  %v2087 = vld [vmem:[%s3 + $0x7b0] sm:$0xff]
  %v2088 = vld [vmem:[%s3 + $0x7b8] sm:$0xff]
  %v2089 = vld [vmem:[%s3 + $0x7c0] sm:$0xff]
  %v2090 = vld [vmem:[%s3 + $0x7c8] sm:$0xff]
  %v2091 = vld [vmem:[%s3 + $0x7d0] sm:$0xff]
  %v2092 = vld [vmem:[%s3 + $0x7d8] sm:$0xff]
  %v2093 = vld [vmem:[%s3 + $0x7e0] sm:$0xff]
  %v2094 = vld [vmem:[%s3 + $0x7e8] sm:$0xff]
  %v2095 = vld [vmem:[%s3 + $0x7f0] sm:$0xff]
  %v2096 = vld [vmem:[%s3 + $0x7f8] sm:$0xff]
  %2097 = vmatpush.msra.mxu0 %v1961
  %2098 = vmatpush.msra.mxu0 %v1953
  %2099 = vmatpush.msra.mxu0 %v1945
  %2100 = vmatpush.msra.mxu0 %v1937
  %2101 = vmatpush.msra.mxu0 %v1929
  %2102 = vmatpush.msra.mxu0 %v1921
  %2103 = vmatpush.msra.mxu0 %v1913
  %2104 = vmatpush.msra.mxu0 %v1905
  %2105 = vmatpush.msra.mxu0 %v1897
  %2106 = vmatpush.msra.mxu0 %v1889
  %2107 = vmatpush.msra.mxu0 %v1881
  %2108 = vmatpush.msra.mxu0 %v1873
  %2109 = vmatpush.msra.mxu0 %v1865
  %2110 = vmatpush.msra.mxu0 %v1857
  %2111 = vmatpush.msra.mxu0 %v1849
  %2112 = vmatpush.msra.mxu0 %v1841
  %2113 = vmatmul.f32.gmra.mxu0 %v1829
  %v2114 = vpop.f32.mrf.mxu0
  %v2115 = vadd.f32 0.0, %v2114
  %2116 = vdwg.mxu0
  %2117 = vmatpush.msra.mxu0 %v2089
  %2118 = vmatpush.msra.mxu0 %v2081
  %2119 = vmatpush.msra.mxu0 %v2073
  %2120 = vmatpush.msra.mxu0 %v2065
  %2121 = vmatpush.msra.mxu0 %v2057
  %2122 = vmatpush.msra.mxu0 %v2049
  %2123 = vmatpush.msra.mxu0 %v2041
  %2124 = vmatpush.msra.mxu0 %v2033
  %2125 = vmatpush.msra.mxu0 %v2025
  %2126 = vmatpush.msra.mxu0 %v2017
  %2127 = vmatpush.msra.mxu0 %v2009
  %2128 = vmatpush.msra.mxu0 %v2001
  %2129 = vmatpush.msra.mxu0 %v1993
  %2130 = vmatpush.msra.mxu0 %v1985
  %2131 = vmatpush.msra.mxu0 %v1977
  %2132 = vmatpush.msra.mxu0 %v1969
  %2133 = vmatmul.f32.gmra.mxu0 %v1830
  %v2134 = vpop.f32.mrf.mxu0
  %v2135 = vadd.f32 %v2115, %v2134
  %2136 = vdwg.mxu0
  %2137 = vmatpush.msra.mxu0 %v1962
  %2138 = vmatpush.msra.mxu0 %v1954
  %2139 = vmatpush.msra.mxu0 %v1946
  %2140 = vmatpush.msra.mxu0 %v1938
  %2141 = vmatpush.msra.mxu0 %v1930
  %2142 = vmatpush.msra.mxu0 %v1922
  %2143 = vmatpush.msra.mxu0 %v1914
  %2144 = vmatpush.msra.mxu0 %v1906
  %2145 = vmatpush.msra.mxu0 %v1898
  %2146 = vmatpush.msra.mxu0 %v1890
  %2147 = vmatpush.msra.mxu0 %v1882
  %2148 = vmatpush.msra.mxu0 %v1874
  %2149 = vmatpush.msra.mxu0 %v1866
  %2150 = vmatpush.msra.mxu0 %v1858
  %2151 = vmatpush.msra.mxu0 %v1850
  %2152 = vmatpush.msra.mxu0 %v1842
  %2153 = vmatmul.f32.gmra.mxu0 %v1829
  %v2154 = vpop.f32.mrf.mxu0
  %v2155 = vadd.f32 0.0, %v2154
  %2156 = vdwg.mxu0
  %2157 = vmatpush.msra.mxu0 %v2090
  %2158 = vmatpush.msra.mxu0 %v2082
  %2159 = vmatpush.msra.mxu0 %v2074
  %2160 = vmatpush.msra.mxu0 %v2066
  %2161 = vmatpush.msra.mxu0 %v2058
  %2162 = vmatpush.msra.mxu0 %v2050
  %2163 = vmatpush.msra.mxu0 %v2042
  %2164 = vmatpush.msra.mxu0 %v2034
  %2165 = vmatpush.msra.mxu0 %v2026
  %2166 = vmatpush.msra.mxu0 %v2018
  %2167 = vmatpush.msra.mxu0 %v2010
  %2168 = vmatpush.msra.mxu0 %v2002
  %2169 = vmatpush.msra.mxu0 %v1994
  %2170 = vmatpush.msra.mxu0 %v1986
  %2171 = vmatpush.msra.mxu0 %v1978
  %2172 = vmatpush.msra.mxu0 %v1970
  %2173 = vmatmul.f32.gmra.mxu0 %v1830
  %v2174 = vpop.f32.mrf.mxu0
  %v2175 = vadd.f32 %v2155, %v2174
  %2176 = vdwg.mxu0
  %2177 = vmatpush.msra.mxu0 %v1963
  %2178 = vmatpush.msra.mxu0 %v1955
  %2179 = vmatpush.msra.mxu0 %v1947
  %2180 = vmatpush.msra.mxu0 %v1939
  %2181 = vmatpush.msra.mxu0 %v1931
  %2182 = vmatpush.msra.mxu0 %v1923
  %2183 = vmatpush.msra.mxu0 %v1915
  %2184 = vmatpush.msra.mxu0 %v1907
  %2185 = vmatpush.msra.mxu0 %v1899
  %2186 = vmatpush.msra.mxu0 %v1891
  %2187 = vmatpush.msra.mxu0 %v1883
  %2188 = vmatpush.msra.mxu0 %v1875
  %2189 = vmatpush.msra.mxu0 %v1867
  %2190 = vmatpush.msra.mxu0 %v1859
  %2191 = vmatpush.msra.mxu0 %v1851
  %2192 = vmatpush.msra.mxu0 %v1843
  %2193 = vmatmul.f32.gmra.mxu0 %v1829
  %v2194 = vpop.f32.mrf.mxu0
  %v2195 = vadd.f32 0.0, %v2194
  %2196 = vdwg.mxu0
  %2197 = vmatpush.msra.mxu0 %v2091
  %2198 = vmatpush.msra.mxu0 %v2083
  %2199 = vmatpush.msra.mxu0 %v2075
  %2200 = vmatpush.msra.mxu0 %v2067
  %2201 = vmatpush.msra.mxu0 %v2059
  %2202 = vmatpush.msra.mxu0 %v2051
  %2203 = vmatpush.msra.mxu0 %v2043
  %2204 = vmatpush.msra.mxu0 %v2035
  %2205 = vmatpush.msra.mxu0 %v2027
  %2206 = vmatpush.msra.mxu0 %v2019
  %2207 = vmatpush.msra.mxu0 %v2011
  %2208 = vmatpush.msra.mxu0 %v2003
  %2209 = vmatpush.msra.mxu0 %v1995
  %2210 = vmatpush.msra.mxu0 %v1987
  %2211 = vmatpush.msra.mxu0 %v1979
  %2212 = vmatpush.msra.mxu0 %v1971
  %2213 = vmatmul.f32.gmra.mxu0 %v1830
  %v2214 = vpop.f32.mrf.mxu0
  %v2215 = vadd.f32 %v2195, %v2214
  %2216 = vdwg.mxu0
  %2217 = vmatpush.msra.mxu0 %v1964
  %2218 = vmatpush.msra.mxu0 %v1956
  %2219 = vmatpush.msra.mxu0 %v1948
  %2220 = vmatpush.msra.mxu0 %v1940
  %2221 = vmatpush.msra.mxu0 %v1932
  %2222 = vmatpush.msra.mxu0 %v1924
  %2223 = vmatpush.msra.mxu0 %v1916
  %2224 = vmatpush.msra.mxu0 %v1908
  %2225 = vmatpush.msra.mxu0 %v1900
  %2226 = vmatpush.msra.mxu0 %v1892
  %2227 = vmatpush.msra.mxu0 %v1884
  %2228 = vmatpush.msra.mxu0 %v1876
  %2229 = vmatpush.msra.mxu0 %v1868
  %2230 = vmatpush.msra.mxu0 %v1860
  %2231 = vmatpush.msra.mxu0 %v1852
  %2232 = vmatpush.msra.mxu0 %v1844
  %2233 = vmatmul.f32.gmra.mxu0 %v1829
  %v2234 = vpop.f32.mrf.mxu0
  %v2235 = vadd.f32 0.0, %v2234
  %2236 = vdwg.mxu0
  %2237 = vmatpush.msra.mxu0 %v2092
  %2238 = vmatpush.msra.mxu0 %v2084
  %2239 = vmatpush.msra.mxu0 %v2076
  %2240 = vmatpush.msra.mxu0 %v2068
  %2241 = vmatpush.msra.mxu0 %v2060
  %2242 = vmatpush.msra.mxu0 %v2052
  %2243 = vmatpush.msra.mxu0 %v2044
  %2244 = vmatpush.msra.mxu0 %v2036
  %2245 = vmatpush.msra.mxu0 %v2028
  %2246 = vmatpush.msra.mxu0 %v2020
  %2247 = vmatpush.msra.mxu0 %v2012
  %2248 = vmatpush.msra.mxu0 %v2004
  %2249 = vmatpush.msra.mxu0 %v1996
  %2250 = vmatpush.msra.mxu0 %v1988
  %2251 = vmatpush.msra.mxu0 %v1980
  %2252 = vmatpush.msra.mxu0 %v1972
  %2253 = vmatmul.f32.gmra.mxu0 %v1830
  %v2254 = vpop.f32.mrf.mxu0
  %v2255 = vadd.f32 %v2235, %v2254
  %2256 = vdwg.mxu0
  %2257 = vmatpush.msra.mxu0 %v1965
  %2258 = vmatpush.msra.mxu0 %v1957
  %2259 = vmatpush.msra.mxu0 %v1949
  %2260 = vmatpush.msra.mxu0 %v1941
  %2261 = vmatpush.msra.mxu0 %v1933
  %2262 = vmatpush.msra.mxu0 %v1925
  %2263 = vmatpush.msra.mxu0 %v1917
  %2264 = vmatpush.msra.mxu0 %v1909
  %2265 = vmatpush.msra.mxu0 %v1901
  %2266 = vmatpush.msra.mxu0 %v1893
  %2267 = vmatpush.msra.mxu0 %v1885
  %2268 = vmatpush.msra.mxu0 %v1877
  %2269 = vmatpush.msra.mxu0 %v1869
  %2270 = vmatpush.msra.mxu0 %v1861
  %2271 = vmatpush.msra.mxu0 %v1853
  %2272 = vmatpush.msra.mxu0 %v1845
  %2273 = vmatmul.f32.gmra.mxu0 %v1829
  %v2274 = vpop.f32.mrf.mxu0
  %v2275 = vadd.f32 0.0, %v2274
  %2276 = vdwg.mxu0
  %2277 = vmatpush.msra.mxu0 %v2093
  %2278 = vmatpush.msra.mxu0 %v2085
  %2279 = vmatpush.msra.mxu0 %v2077
  %2280 = vmatpush.msra.mxu0 %v2069
  %2281 = vmatpush.msra.mxu0 %v2061
  %2282 = vmatpush.msra.mxu0 %v2053
  %2283 = vmatpush.msra.mxu0 %v2045
  %2284 = vmatpush.msra.mxu0 %v2037
  %2285 = vmatpush.msra.mxu0 %v2029
  %2286 = vmatpush.msra.mxu0 %v2021
  %2287 = vmatpush.msra.mxu0 %v2013
  %2288 = vmatpush.msra.mxu0 %v2005
  %2289 = vmatpush.msra.mxu0 %v1997
  %2290 = vmatpush.msra.mxu0 %v1989
  %2291 = vmatpush.msra.mxu0 %v1981
  %2292 = vmatpush.msra.mxu0 %v1973
  %2293 = vmatmul.f32.gmra.mxu0 %v1830
  %v2294 = vpop.f32.mrf.mxu0
  %v2295 = vadd.f32 %v2275, %v2294
  %2296 = vdwg.mxu0
  %2297 = vmatpush.msra.mxu0 %v1966
  %2298 = vmatpush.msra.mxu0 %v1958
  %2299 = vmatpush.msra.mxu0 %v1950
  %2300 = vmatpush.msra.mxu0 %v1942
  %2301 = vmatpush.msra.mxu0 %v1934
  %2302 = vmatpush.msra.mxu0 %v1926
  %2303 = vmatpush.msra.mxu0 %v1918
  %2304 = vmatpush.msra.mxu0 %v1910
  %2305 = vmatpush.msra.mxu0 %v1902
  %2306 = vmatpush.msra.mxu0 %v1894
  %2307 = vmatpush.msra.mxu0 %v1886
  %2308 = vmatpush.msra.mxu0 %v1878
  %2309 = vmatpush.msra.mxu0 %v1870
  %2310 = vmatpush.msra.mxu0 %v1862
  %2311 = vmatpush.msra.mxu0 %v1854
  %2312 = vmatpush.msra.mxu0 %v1846
  %2313 = vmatmul.f32.gmra.mxu0 %v1829
  %v2314 = vpop.f32.mrf.mxu0
  %v2315 = vadd.f32 0.0, %v2314
  %2316 = vdwg.mxu0
  %2317 = vmatpush.msra.mxu0 %v2094
  %2318 = vmatpush.msra.mxu0 %v2086
  %2319 = vmatpush.msra.mxu0 %v2078
  %2320 = vmatpush.msra.mxu0 %v2070
  %2321 = vmatpush.msra.mxu0 %v2062
  %2322 = vmatpush.msra.mxu0 %v2054
  %2323 = vmatpush.msra.mxu0 %v2046
  %2324 = vmatpush.msra.mxu0 %v2038
  %2325 = vmatpush.msra.mxu0 %v2030
  %2326 = vmatpush.msra.mxu0 %v2022
  %2327 = vmatpush.msra.mxu0 %v2014
  %2328 = vmatpush.msra.mxu0 %v2006
  %2329 = vmatpush.msra.mxu0 %v1998
  %2330 = vmatpush.msra.mxu0 %v1990
  %2331 = vmatpush.msra.mxu0 %v1982
  %2332 = vmatpush.msra.mxu0 %v1974
  %2333 = vmatmul.f32.gmra.mxu0 %v1830
  %v2334 = vpop.f32.mrf.mxu0
  %v2335 = vadd.f32 %v2315, %v2334
  %2336 = vdwg.mxu0
  %2337 = vmatpush.msra.mxu0 %v1967
  %2338 = vmatpush.msra.mxu0 %v1959
  %2339 = vmatpush.msra.mxu0 %v1951
  %2340 = vmatpush.msra.mxu0 %v1943
  %2341 = vmatpush.msra.mxu0 %v1935
  %2342 = vmatpush.msra.mxu0 %v1927
  %2343 = vmatpush.msra.mxu0 %v1919
  %2344 = vmatpush.msra.mxu0 %v1911
  %2345 = vmatpush.msra.mxu0 %v1903
  %2346 = vmatpush.msra.mxu0 %v1895
  %2347 = vmatpush.msra.mxu0 %v1887
  %2348 = vmatpush.msra.mxu0 %v1879
  %2349 = vmatpush.msra.mxu0 %v1871
  %2350 = vmatpush.msra.mxu0 %v1863
  %2351 = vmatpush.msra.mxu0 %v1855
  %2352 = vmatpush.msra.mxu0 %v1847
  %2353 = vmatmul.f32.gmra.mxu0 %v1829
  %v2354 = vpop.f32.mrf.mxu0
  %v2355 = vadd.f32 0.0, %v2354
  %2356 = vdwg.mxu0
  %2357 = vmatpush.msra.mxu0 %v2095
  %2358 = vmatpush.msra.mxu0 %v2087
  %2359 = vmatpush.msra.mxu0 %v2079
  %2360 = vmatpush.msra.mxu0 %v2071
  %2361 = vmatpush.msra.mxu0 %v2063
  %2362 = vmatpush.msra.mxu0 %v2055
  %2363 = vmatpush.msra.mxu0 %v2047
  %2364 = vmatpush.msra.mxu0 %v2039
  %2365 = vmatpush.msra.mxu0 %v2031
  %2366 = vmatpush.msra.mxu0 %v2023
  %2367 = vmatpush.msra.mxu0 %v2015
  %2368 = vmatpush.msra.mxu0 %v2007
  %2369 = vmatpush.msra.mxu0 %v1999
  %2370 = vmatpush.msra.mxu0 %v1991
  %2371 = vmatpush.msra.mxu0 %v1983
  %2372 = vmatpush.msra.mxu0 %v1975
  %2373 = vmatmul.f32.gmra.mxu0 %v1830
  %v2374 = vpop.f32.mrf.mxu0
  %v2375 = vadd.f32 %v2355, %v2374
  %2376 = vdwg.mxu0
  %2377 = vmatpush.msra.mxu0 %v1968
  %2378 = vmatpush.msra.mxu0 %v1960
  %2379 = vmatpush.msra.mxu0 %v1952
  %2380 = vmatpush.msra.mxu0 %v1944
  %2381 = vmatpush.msra.mxu0 %v1936
  %2382 = vmatpush.msra.mxu0 %v1928
  %2383 = vmatpush.msra.mxu0 %v1920
  %2384 = vmatpush.msra.mxu0 %v1912
  %2385 = vmatpush.msra.mxu0 %v1904
  %2386 = vmatpush.msra.mxu0 %v1896
  %2387 = vmatpush.msra.mxu0 %v1888
  %2388 = vmatpush.msra.mxu0 %v1880
  %2389 = vmatpush.msra.mxu0 %v1872
  %2390 = vmatpush.msra.mxu0 %v1864
  %2391 = vmatpush.msra.mxu0 %v1856
  %2392 = vmatpush.msra.mxu0 %v1848
  %2393 = vmatmul.f32.gmra.mxu0 %v1829
  %v2394 = vpop.f32.mrf.mxu0
  %v2395 = vadd.f32 0.0, %v2394
  %2396 = vdwg.mxu0
  %2397 = vmatpush.msra.mxu0 %v2096
  %2398 = vmatpush.msra.mxu0 %v2088
  %2399 = vmatpush.msra.mxu0 %v2080
  %2400 = vmatpush.msra.mxu0 %v2072
  %2401 = vmatpush.msra.mxu0 %v2064
  %2402 = vmatpush.msra.mxu0 %v2056
  %2403 = vmatpush.msra.mxu0 %v2048
  %2404 = vmatpush.msra.mxu0 %v2040
  %2405 = vmatpush.msra.mxu0 %v2032
  %2406 = vmatpush.msra.mxu0 %v2024
  %2407 = vmatpush.msra.mxu0 %v2016
  %2408 = vmatpush.msra.mxu0 %v2008
  %2409 = vmatpush.msra.mxu0 %v2000
  %2410 = vmatpush.msra.mxu0 %v1992
  %2411 = vmatpush.msra.mxu0 %v1984
  %2412 = vmatpush.msra.mxu0 %v1976
  %2413 = vmatmul.f32.gmra.mxu0 %v1830
  %v2414 = vpop.f32.mrf.mxu0
  %v2415 = vadd.f32 %v2395, %v2414
  %2416 = vdwg.mxu0
  %v2417 = vadd.f32 %v1833, %v2135
  %v2418 = vadd.f32 %v1834, %v2175
  %v2419 = vadd.f32 %v1835, %v2215
  %v2420 = vadd.f32 %v1836, %v2255
  %v2421 = vadd.f32 %v1837, %v2295
  %v2422 = vadd.f32 %v1838, %v2335
  %v2423 = vadd.f32 %v1839, %v2375
  %v2424 = vadd.f32 %v1840, %v2415
  %v2425 = vxor.u32 %v2417, 2147483648
  %v2426 = vxor.u32 %v2418, 2147483648
  %v2427 = vxor.u32 %v2419, 2147483648
  %v2428 = vxor.u32 %v2420, 2147483648
  %v2429 = vxor.u32 %v2421, 2147483648
  %v2430 = vxor.u32 %v2422, 2147483648
  %v2431 = vmul.f32 %v2425, 1.442695
  %v2432 = vpow.pop %v2431
  %v2433 = vmul.f32 %v2426, 1.442695
  %v2434 = vpow.pop %v2433
  %v2435 = vmul.f32 %v2427, 1.442695
  %v2436 = vpow.pop %v2435
  %v2437 = vmul.f32 %v2428, 1.442695
  %v2438 = vpow.pop %v2437
  %v2439 = vmul.f32 %v2429, 1.442695
  %v2440 = vpow.pop %v2439
  %v2441 = vmul.f32 %v2430, 1.442695
  %v2442 = vpow.pop %v2441
  %v2443 = vadd.f32 %v2432, 1.0
  %v2444 = vadd.f32 %v2434, 1.0
  %v2445 = vadd.f32 %v2436, 1.0
  %v2446 = vadd.f32 %v2438, 1.0
  %v2447 = vadd.f32 %v2440, 1.0
  %v2448 = vadd.f32 %v2442, 1.0
  %v2449 = vrcp.pop %v2443
  %v2450 = vmul.f32 %v2443, %v2449
  %v2451 = vsub.f32 1.0, %v2450
  %v2452 = vmul.f32 %v2449, %v2451
  %v2453 = vadd.f32 %v2449, %v2452
  %vm2454 = vweird.f32 %v2443
  %vm2455 = vweird.f32 %v2449
  %vm2456 = vmor %vm2454, %vm2455
  %v2457 = vsel %vm2456, %v2449, %v2453
  %v2458 = vand.u32 2147483647, %v2443
  %vm2459 = vcmp.eq.f32.partialorder %v2458, 8.507059e+37
  %v2460 = vand.u32 %v2443, 2147483648
  %v2461 = vor.u32 1.1754944e-38, %v2460
  %v2462 = vsel %vm2459, %v2461, %v2457
  %v2463 = vmul.f32 1.0, %v2462
  %v2464 = vrcp.pop %v2444
  %v2465 = vmul.f32 %v2444, %v2464
  %v2466 = vsub.f32 1.0, %v2465
  %v2467 = vmul.f32 %v2464, %v2466
  %v2468 = vadd.f32 %v2464, %v2467
  %vm2469 = vweird.f32 %v2444
  %vm2470 = vweird.f32 %v2464
  %vm2471 = vmor %vm2469, %vm2470
  %v2472 = vsel %vm2471, %v2464, %v2468
  %v2473 = vand.u32 2147483647, %v2444
  %vm2474 = vcmp.eq.f32.partialorder %v2473, 8.507059e+37
  %v2475 = vand.u32 %v2444, 2147483648
  %v2476 = vor.u32 1.1754944e-38, %v2475
  %v2477 = vsel %vm2474, %v2476, %v2472
  %v2478 = vmul.f32 1.0, %v2477
  %v2479 = vrcp.pop %v2445
  %v2480 = vmul.f32 %v2445, %v2479
  %v2481 = vsub.f32 1.0, %v2480
  %v2482 = vmul.f32 %v2479, %v2481
  %v2483 = vadd.f32 %v2479, %v2482
  %vm2484 = vweird.f32 %v2445
  %vm2485 = vweird.f32 %v2479
  %vm2486 = vmor %vm2484, %vm2485
  %v2487 = vsel %vm2486, %v2479, %v2483
  %v2488 = vand.u32 2147483647, %v2445
  %vm2489 = vcmp.eq.f32.partialorder %v2488, 8.507059e+37
  %v2490 = vand.u32 %v2445, 2147483648
  %v2491 = vor.u32 1.1754944e-38, %v2490
  %v2492 = vsel %vm2489, %v2491, %v2487
  %v2493 = vmul.f32 1.0, %v2492
  %v2494 = vrcp.pop %v2446
  %v2495 = vmul.f32 %v2446, %v2494
  %v2496 = vsub.f32 1.0, %v2495
  %v2497 = vmul.f32 %v2494, %v2496
  %v2498 = vadd.f32 %v2494, %v2497
  %vm2499 = vweird.f32 %v2446
  %vm2500 = vweird.f32 %v2494
  %vm2501 = vmor %vm2499, %vm2500
  %v2502 = vsel %vm2501, %v2494, %v2498
  %v2503 = vand.u32 2147483647, %v2446
  %vm2504 = vcmp.eq.f32.partialorder %v2503, 8.507059e+37
  %v2505 = vand.u32 %v2446, 2147483648
  %v2506 = vor.u32 1.1754944e-38, %v2505
  %v2507 = vsel %vm2504, %v2506, %v2502
  %v2508 = vmul.f32 1.0, %v2507
  %v2509 = vrcp.pop %v2447
  %v2510 = vmul.f32 %v2447, %v2509
  %v2511 = vsub.f32 1.0, %v2510
  %v2512 = vmul.f32 %v2509, %v2511
  %v2513 = vadd.f32 %v2509, %v2512
  %vm2514 = vweird.f32 %v2447
  %vm2515 = vweird.f32 %v2509
  %vm2516 = vmor %vm2514, %vm2515
  %v2517 = vsel %vm2516, %v2509, %v2513
  %v2518 = vand.u32 2147483647, %v2447
  %vm2519 = vcmp.eq.f32.partialorder %v2518, 8.507059e+37
  %v2520 = vand.u32 %v2447, 2147483648
  %v2521 = vor.u32 1.1754944e-38, %v2520
  %v2522 = vsel %vm2519, %v2521, %v2517
  %v2523 = vmul.f32 1.0, %v2522
  %v2524 = vrcp.pop %v2448
  %v2525 = vmul.f32 %v2448, %v2524
  %v2526 = vsub.f32 1.0, %v2525
  %v2527 = vmul.f32 %v2524, %v2526
  %v2528 = vadd.f32 %v2524, %v2527
  %vm2529 = vweird.f32 %v2448
  %vm2530 = vweird.f32 %v2524
  %vm2531 = vmor %vm2529, %vm2530
  %v2532 = vsel %vm2531, %v2524, %v2528
  %v2533 = vand.u32 2147483647, %v2448
  %vm2534 = vcmp.eq.f32.partialorder %v2533, 8.507059e+37
  %v2535 = vand.u32 %v2448, 2147483648
  %v2536 = vor.u32 1.1754944e-38, %v2535
  %v2537 = vsel %vm2534, %v2536, %v2532
  %v2538 = vmul.f32 1.0, %v2537
  %v2539 = vtanh.pop %v2423
  %v2540 = vtanh.pop %v2424
  %v2541 = vmul.f32 %v2493, %v1825
  %v2542 = vmul.f32 %v2508, %v1826
  %v2543 = vmul.f32 %v2463, %v2539
  %v2544 = vmul.f32 %v2478, %v2540
  %v2545 = vadd.f32 %v2541, %v2543
  %v2546 = vadd.f32 %v2542, %v2544
  %v2547 = vtanh.pop %v2545
  %v2548 = vtanh.pop %v2546
  %v2549 = vmul.f32 %v2523, %v2547
  %v2550 = vmul.f32 %v2538, %v2548
  %2551 = vst [vmem:[#allocation3 + $0x10] sm:$0xff] %v2549
  %2552 = vst [vmem:[#allocation3 + $0x68] sm:$0xff] %v2550
  %v2553 = vld [vmem:[#allocation2 + $0x80] sm:$0xff]
  %v2554 = vld [vmem:[#allocation2 + $0x88] sm:$0xff]
  %v2555 = vld [vmem:[#allocation2 + $0x90] sm:$0xff]
  %v2556 = vld [vmem:[#allocation2 + $0x98] sm:$0xff]
  %v2557 = vld [vmem:[#allocation2 + $0xa0] sm:$0xff]
  %v2558 = vld [vmem:[#allocation2 + $0xa8] sm:$0xff]
  %v2559 = vld [vmem:[#allocation2 + $0xb0] sm:$0xff]
  %v2560 = vld [vmem:[#allocation2 + $0xb8] sm:$0xff]
  %v2561 = vld [vmem:[%s3] sm:$0xff]
  %v2562 = vld [vmem:[%s3 + $0x8] sm:$0xff]
  %v2563 = vld [vmem:[%s3 + $0x10] sm:$0xff]
  %v2564 = vld [vmem:[%s3 + $0x18] sm:$0xff]
  %v2565 = vld [vmem:[%s3 + $0x20] sm:$0xff]
  %v2566 = vld [vmem:[%s3 + $0x28] sm:$0xff]
  %v2567 = vld [vmem:[%s3 + $0x30] sm:$0xff]
  %v2568 = vld [vmem:[%s3 + $0x38] sm:$0xff]
  %v2569 = vld [vmem:[%s3 + $0x40] sm:$0xff]
  %v2570 = vld [vmem:[%s3 + $0x48] sm:$0xff]
  %v2571 = vld [vmem:[%s3 + $0x50] sm:$0xff]
  %v2572 = vld [vmem:[%s3 + $0x58] sm:$0xff]
  %v2573 = vld [vmem:[%s3 + $0x60] sm:$0xff]
  %v2574 = vld [vmem:[%s3 + $0x68] sm:$0xff]
  %v2575 = vld [vmem:[%s3 + $0x70] sm:$0xff]
  %v2576 = vld [vmem:[%s3 + $0x78] sm:$0xff]
  %v2577 = vld [vmem:[%s3 + $0x80] sm:$0xff]
  %v2578 = vld [vmem:[%s3 + $0x88] sm:$0xff]
  %v2579 = vld [vmem:[%s3 + $0x90] sm:$0xff]
  %v2580 = vld [vmem:[%s3 + $0x98] sm:$0xff]
  %v2581 = vld [vmem:[%s3 + $0xa0] sm:$0xff]
  %v2582 = vld [vmem:[%s3 + $0xa8] sm:$0xff]
  %v2583 = vld [vmem:[%s3 + $0xb0] sm:$0xff]
  %v2584 = vld [vmem:[%s3 + $0xb8] sm:$0xff]
  %v2585 = vld [vmem:[%s3 + $0xc0] sm:$0xff]
  %v2586 = vld [vmem:[%s3 + $0xc8] sm:$0xff]
  %v2587 = vld [vmem:[%s3 + $0xd0] sm:$0xff]
  %v2588 = vld [vmem:[%s3 + $0xd8] sm:$0xff]
  %v2589 = vld [vmem:[%s3 + $0xe0] sm:$0xff]
  %v2590 = vld [vmem:[%s3 + $0xe8] sm:$0xff]
  %v2591 = vld [vmem:[%s3 + $0xf0] sm:$0xff]
  %v2592 = vld [vmem:[%s3 + $0xf8] sm:$0xff]
  %v2593 = vld [vmem:[%s3 + $0x100] sm:$0xff]
  %v2594 = vld [vmem:[%s3 + $0x108] sm:$0xff]
  %v2595 = vld [vmem:[%s3 + $0x110] sm:$0xff]
  %v2596 = vld [vmem:[%s3 + $0x118] sm:$0xff]
  %v2597 = vld [vmem:[%s3 + $0x120] sm:$0xff]
  %v2598 = vld [vmem:[%s3 + $0x128] sm:$0xff]
  %v2599 = vld [vmem:[%s3 + $0x130] sm:$0xff]
  %v2600 = vld [vmem:[%s3 + $0x138] sm:$0xff]
  %v2601 = vld [vmem:[%s3 + $0x140] sm:$0xff]
  %v2602 = vld [vmem:[%s3 + $0x148] sm:$0xff]
  %v2603 = vld [vmem:[%s3 + $0x150] sm:$0xff]
  %v2604 = vld [vmem:[%s3 + $0x158] sm:$0xff]
  %v2605 = vld [vmem:[%s3 + $0x160] sm:$0xff]
  %v2606 = vld [vmem:[%s3 + $0x168] sm:$0xff]
  %v2607 = vld [vmem:[%s3 + $0x170] sm:$0xff]
  %v2608 = vld [vmem:[%s3 + $0x178] sm:$0xff]
  %v2609 = vld [vmem:[%s3 + $0x180] sm:$0xff]
  %v2610 = vld [vmem:[%s3 + $0x188] sm:$0xff]
  %v2611 = vld [vmem:[%s3 + $0x190] sm:$0xff]
  %v2612 = vld [vmem:[%s3 + $0x198] sm:$0xff]
  %v2613 = vld [vmem:[%s3 + $0x1a0] sm:$0xff]
  %v2614 = vld [vmem:[%s3 + $0x1a8] sm:$0xff]
  %v2615 = vld [vmem:[%s3 + $0x1b0] sm:$0xff]
  %v2616 = vld [vmem:[%s3 + $0x1b8] sm:$0xff]
  %v2617 = vld [vmem:[%s3 + $0x1c0] sm:$0xff]
  %v2618 = vld [vmem:[%s3 + $0x1c8] sm:$0xff]
  %v2619 = vld [vmem:[%s3 + $0x1d0] sm:$0xff]
  %v2620 = vld [vmem:[%s3 + $0x1d8] sm:$0xff]
  %v2621 = vld [vmem:[%s3 + $0x1e0] sm:$0xff]
  %v2622 = vld [vmem:[%s3 + $0x1e8] sm:$0xff]
  %v2623 = vld [vmem:[%s3 + $0x1f0] sm:$0xff]
  %v2624 = vld [vmem:[%s3 + $0x1f8] sm:$0xff]
  %v2625 = vld [vmem:[%s3 + $0x200] sm:$0xff]
  %v2626 = vld [vmem:[%s3 + $0x208] sm:$0xff]
  %v2627 = vld [vmem:[%s3 + $0x210] sm:$0xff]
  %v2628 = vld [vmem:[%s3 + $0x218] sm:$0xff]
  %v2629 = vld [vmem:[%s3 + $0x220] sm:$0xff]
  %v2630 = vld [vmem:[%s3 + $0x228] sm:$0xff]
  %v2631 = vld [vmem:[%s3 + $0x230] sm:$0xff]
  %v2632 = vld [vmem:[%s3 + $0x238] sm:$0xff]
  %v2633 = vld [vmem:[%s3 + $0x240] sm:$0xff]
  %v2634 = vld [vmem:[%s3 + $0x248] sm:$0xff]
  %v2635 = vld [vmem:[%s3 + $0x250] sm:$0xff]
  %v2636 = vld [vmem:[%s3 + $0x258] sm:$0xff]
  %v2637 = vld [vmem:[%s3 + $0x260] sm:$0xff]
  %v2638 = vld [vmem:[%s3 + $0x268] sm:$0xff]
  %v2639 = vld [vmem:[%s3 + $0x270] sm:$0xff]
  %v2640 = vld [vmem:[%s3 + $0x278] sm:$0xff]
  %v2641 = vld [vmem:[%s3 + $0x280] sm:$0xff]
  %v2642 = vld [vmem:[%s3 + $0x288] sm:$0xff]
  %v2643 = vld [vmem:[%s3 + $0x290] sm:$0xff]
  %v2644 = vld [vmem:[%s3 + $0x298] sm:$0xff]
  %v2645 = vld [vmem:[%s3 + $0x2a0] sm:$0xff]
  %v2646 = vld [vmem:[%s3 + $0x2a8] sm:$0xff]
  %v2647 = vld [vmem:[%s3 + $0x2b0] sm:$0xff]
  %v2648 = vld [vmem:[%s3 + $0x2b8] sm:$0xff]
  %v2649 = vld [vmem:[%s3 + $0x2c0] sm:$0xff]
  %v2650 = vld [vmem:[%s3 + $0x2c8] sm:$0xff]
  %v2651 = vld [vmem:[%s3 + $0x2d0] sm:$0xff]
  %v2652 = vld [vmem:[%s3 + $0x2d8] sm:$0xff]
  %v2653 = vld [vmem:[%s3 + $0x2e0] sm:$0xff]
  %v2654 = vld [vmem:[%s3 + $0x2e8] sm:$0xff]
  %v2655 = vld [vmem:[%s3 + $0x2f0] sm:$0xff]
  %v2656 = vld [vmem:[%s3 + $0x2f8] sm:$0xff]
  %v2657 = vld [vmem:[%s3 + $0x300] sm:$0xff]
  %v2658 = vld [vmem:[%s3 + $0x308] sm:$0xff]
  %v2659 = vld [vmem:[%s3 + $0x310] sm:$0xff]
  %v2660 = vld [vmem:[%s3 + $0x318] sm:$0xff]
  %v2661 = vld [vmem:[%s3 + $0x320] sm:$0xff]
  %v2662 = vld [vmem:[%s3 + $0x328] sm:$0xff]
  %v2663 = vld [vmem:[%s3 + $0x330] sm:$0xff]
  %v2664 = vld [vmem:[%s3 + $0x338] sm:$0xff]
  %v2665 = vld [vmem:[%s3 + $0x340] sm:$0xff]
  %v2666 = vld [vmem:[%s3 + $0x348] sm:$0xff]
  %v2667 = vld [vmem:[%s3 + $0x350] sm:$0xff]
  %v2668 = vld [vmem:[%s3 + $0x358] sm:$0xff]
  %v2669 = vld [vmem:[%s3 + $0x360] sm:$0xff]
  %v2670 = vld [vmem:[%s3 + $0x368] sm:$0xff]
  %v2671 = vld [vmem:[%s3 + $0x370] sm:$0xff]
  %v2672 = vld [vmem:[%s3 + $0x378] sm:$0xff]
  %v2673 = vld [vmem:[%s3 + $0x380] sm:$0xff]
  %v2674 = vld [vmem:[%s3 + $0x388] sm:$0xff]
  %v2675 = vld [vmem:[%s3 + $0x390] sm:$0xff]
  %v2676 = vld [vmem:[%s3 + $0x398] sm:$0xff]
  %v2677 = vld [vmem:[%s3 + $0x3a0] sm:$0xff]
  %v2678 = vld [vmem:[%s3 + $0x3a8] sm:$0xff]
  %v2679 = vld [vmem:[%s3 + $0x3b0] sm:$0xff]
  %v2680 = vld [vmem:[%s3 + $0x3b8] sm:$0xff]
  %v2681 = vld [vmem:[%s3 + $0x3c0] sm:$0xff]
  %v2682 = vld [vmem:[%s3 + $0x3c8] sm:$0xff]
  %v2683 = vld [vmem:[%s3 + $0x3d0] sm:$0xff]
  %v2684 = vld [vmem:[%s3 + $0x3d8] sm:$0xff]
  %v2685 = vld [vmem:[%s3 + $0x3e0] sm:$0xff]
  %v2686 = vld [vmem:[%s3 + $0x3e8] sm:$0xff]
  %v2687 = vld [vmem:[%s3 + $0x3f0] sm:$0xff]
  %v2688 = vld [vmem:[%s3 + $0x3f8] sm:$0xff]
  %v2689 = vld [vmem:[%s3 + $0x400] sm:$0xff]
  %v2690 = vld [vmem:[%s3 + $0x408] sm:$0xff]
  %v2691 = vld [vmem:[%s3 + $0x410] sm:$0xff]
  %v2692 = vld [vmem:[%s3 + $0x418] sm:$0xff]
  %v2693 = vld [vmem:[%s3 + $0x420] sm:$0xff]
  %v2694 = vld [vmem:[%s3 + $0x428] sm:$0xff]
  %v2695 = vld [vmem:[%s3 + $0x430] sm:$0xff]
  %v2696 = vld [vmem:[%s3 + $0x438] sm:$0xff]
  %v2697 = vld [vmem:[%s3 + $0x440] sm:$0xff]
  %v2698 = vld [vmem:[%s3 + $0x448] sm:$0xff]
  %v2699 = vld [vmem:[%s3 + $0x450] sm:$0xff]
  %v2700 = vld [vmem:[%s3 + $0x458] sm:$0xff]
  %v2701 = vld [vmem:[%s3 + $0x460] sm:$0xff]
  %v2702 = vld [vmem:[%s3 + $0x468] sm:$0xff]
  %v2703 = vld [vmem:[%s3 + $0x470] sm:$0xff]
  %v2704 = vld [vmem:[%s3 + $0x478] sm:$0xff]
  %v2705 = vld [vmem:[%s3 + $0x480] sm:$0xff]
  %v2706 = vld [vmem:[%s3 + $0x488] sm:$0xff]
  %v2707 = vld [vmem:[%s3 + $0x490] sm:$0xff]
  %v2708 = vld [vmem:[%s3 + $0x498] sm:$0xff]
  %v2709 = vld [vmem:[%s3 + $0x4a0] sm:$0xff]
  %v2710 = vld [vmem:[%s3 + $0x4a8] sm:$0xff]
  %v2711 = vld [vmem:[%s3 + $0x4b0] sm:$0xff]
  %v2712 = vld [vmem:[%s3 + $0x4b8] sm:$0xff]
  %v2713 = vld [vmem:[%s3 + $0x4c0] sm:$0xff]
  %v2714 = vld [vmem:[%s3 + $0x4c8] sm:$0xff]
  %v2715 = vld [vmem:[%s3 + $0x4d0] sm:$0xff]
  %v2716 = vld [vmem:[%s3 + $0x4d8] sm:$0xff]
  %v2717 = vld [vmem:[%s3 + $0x4e0] sm:$0xff]
  %v2718 = vld [vmem:[%s3 + $0x4e8] sm:$0xff]
  %v2719 = vld [vmem:[%s3 + $0x4f0] sm:$0xff]
  %v2720 = vld [vmem:[%s3 + $0x4f8] sm:$0xff]
  %v2721 = vld [vmem:[%s3 + $0x500] sm:$0xff]
  %v2722 = vld [vmem:[%s3 + $0x508] sm:$0xff]
  %v2723 = vld [vmem:[%s3 + $0x510] sm:$0xff]
  %v2724 = vld [vmem:[%s3 + $0x518] sm:$0xff]
  %v2725 = vld [vmem:[%s3 + $0x520] sm:$0xff]
  %v2726 = vld [vmem:[%s3 + $0x528] sm:$0xff]
  %v2727 = vld [vmem:[%s3 + $0x530] sm:$0xff]
  %v2728 = vld [vmem:[%s3 + $0x538] sm:$0xff]
  %v2729 = vld [vmem:[%s3 + $0x540] sm:$0xff]
  %v2730 = vld [vmem:[%s3 + $0x548] sm:$0xff]
  %v2731 = vld [vmem:[%s3 + $0x550] sm:$0xff]
  %v2732 = vld [vmem:[%s3 + $0x558] sm:$0xff]
  %v2733 = vld [vmem:[%s3 + $0x560] sm:$0xff]
  %v2734 = vld [vmem:[%s3 + $0x568] sm:$0xff]
  %v2735 = vld [vmem:[%s3 + $0x570] sm:$0xff]
  %v2736 = vld [vmem:[%s3 + $0x578] sm:$0xff]
  %v2737 = vld [vmem:[%s3 + $0x580] sm:$0xff]
  %v2738 = vld [vmem:[%s3 + $0x588] sm:$0xff]
  %v2739 = vld [vmem:[%s3 + $0x590] sm:$0xff]
  %v2740 = vld [vmem:[%s3 + $0x598] sm:$0xff]
  %v2741 = vld [vmem:[%s3 + $0x5a0] sm:$0xff]
  %v2742 = vld [vmem:[%s3 + $0x5a8] sm:$0xff]
  %v2743 = vld [vmem:[%s3 + $0x5b0] sm:$0xff]
  %v2744 = vld [vmem:[%s3 + $0x5b8] sm:$0xff]
  %v2745 = vld [vmem:[%s3 + $0x5c0] sm:$0xff]
  %v2746 = vld [vmem:[%s3 + $0x5c8] sm:$0xff]
  %v2747 = vld [vmem:[%s3 + $0x5d0] sm:$0xff]
  %v2748 = vld [vmem:[%s3 + $0x5d8] sm:$0xff]
  %v2749 = vld [vmem:[%s3 + $0x5e0] sm:$0xff]
  %v2750 = vld [vmem:[%s3 + $0x5e8] sm:$0xff]
  %v2751 = vld [vmem:[%s3 + $0x5f0] sm:$0xff]
  %v2752 = vld [vmem:[%s3 + $0x5f8] sm:$0xff]
  %v2753 = vld [vmem:[%s3 + $0x600] sm:$0xff]
  %v2754 = vld [vmem:[%s3 + $0x608] sm:$0xff]
  %v2755 = vld [vmem:[%s3 + $0x610] sm:$0xff]
  %v2756 = vld [vmem:[%s3 + $0x618] sm:$0xff]
  %v2757 = vld [vmem:[%s3 + $0x620] sm:$0xff]
  %v2758 = vld [vmem:[%s3 + $0x628] sm:$0xff]
  %v2759 = vld [vmem:[%s3 + $0x630] sm:$0xff]
  %v2760 = vld [vmem:[%s3 + $0x638] sm:$0xff]
  %v2761 = vld [vmem:[%s3 + $0x640] sm:$0xff]
  %v2762 = vld [vmem:[%s3 + $0x648] sm:$0xff]
  %v2763 = vld [vmem:[%s3 + $0x650] sm:$0xff]
  %v2764 = vld [vmem:[%s3 + $0x658] sm:$0xff]
  %v2765 = vld [vmem:[%s3 + $0x660] sm:$0xff]
  %v2766 = vld [vmem:[%s3 + $0x668] sm:$0xff]
  %v2767 = vld [vmem:[%s3 + $0x670] sm:$0xff]
  %v2768 = vld [vmem:[%s3 + $0x678] sm:$0xff]
  %v2769 = vld [vmem:[%s3 + $0x680] sm:$0xff]
  %v2770 = vld [vmem:[%s3 + $0x688] sm:$0xff]
  %v2771 = vld [vmem:[%s3 + $0x690] sm:$0xff]
  %v2772 = vld [vmem:[%s3 + $0x698] sm:$0xff]
  %v2773 = vld [vmem:[%s3 + $0x6a0] sm:$0xff]
  %v2774 = vld [vmem:[%s3 + $0x6a8] sm:$0xff]
  %v2775 = vld [vmem:[%s3 + $0x6b0] sm:$0xff]
  %v2776 = vld [vmem:[%s3 + $0x6b8] sm:$0xff]
  %v2777 = vld [vmem:[%s3 + $0x6c0] sm:$0xff]
  %v2778 = vld [vmem:[%s3 + $0x6c8] sm:$0xff]
  %v2779 = vld [vmem:[%s3 + $0x6d0] sm:$0xff]
  %v2780 = vld [vmem:[%s3 + $0x6d8] sm:$0xff]
  %v2781 = vld [vmem:[%s3 + $0x6e0] sm:$0xff]
  %v2782 = vld [vmem:[%s3 + $0x6e8] sm:$0xff]
  %v2783 = vld [vmem:[%s3 + $0x6f0] sm:$0xff]
  %v2784 = vld [vmem:[%s3 + $0x6f8] sm:$0xff]
  %v2785 = vld [vmem:[%s3 + $0x700] sm:$0xff]
  %v2786 = vld [vmem:[%s3 + $0x708] sm:$0xff]
  %v2787 = vld [vmem:[%s3 + $0x710] sm:$0xff]
  %v2788 = vld [vmem:[%s3 + $0x718] sm:$0xff]
  %v2789 = vld [vmem:[%s3 + $0x720] sm:$0xff]
  %v2790 = vld [vmem:[%s3 + $0x728] sm:$0xff]
  %v2791 = vld [vmem:[%s3 + $0x730] sm:$0xff]
  %v2792 = vld [vmem:[%s3 + $0x738] sm:$0xff]
  %v2793 = vld [vmem:[%s3 + $0x740] sm:$0xff]
  %v2794 = vld [vmem:[%s3 + $0x748] sm:$0xff]
  %v2795 = vld [vmem:[%s3 + $0x750] sm:$0xff]
  %v2796 = vld [vmem:[%s3 + $0x758] sm:$0xff]
  %v2797 = vld [vmem:[%s3 + $0x760] sm:$0xff]
  %v2798 = vld [vmem:[%s3 + $0x768] sm:$0xff]
  %v2799 = vld [vmem:[%s3 + $0x770] sm:$0xff]
  %v2800 = vld [vmem:[%s3 + $0x778] sm:$0xff]
  %v2801 = vld [vmem:[%s3 + $0x780] sm:$0xff]
  %v2802 = vld [vmem:[%s3 + $0x788] sm:$0xff]
  %v2803 = vld [vmem:[%s3 + $0x790] sm:$0xff]
  %v2804 = vld [vmem:[%s3 + $0x798] sm:$0xff]
  %v2805 = vld [vmem:[%s3 + $0x7a0] sm:$0xff]
  %v2806 = vld [vmem:[%s3 + $0x7a8] sm:$0xff]
  %v2807 = vld [vmem:[%s3 + $0x7b0] sm:$0xff]
  %v2808 = vld [vmem:[%s3 + $0x7b8] sm:$0xff]
  %v2809 = vld [vmem:[%s3 + $0x7c0] sm:$0xff]
  %v2810 = vld [vmem:[%s3 + $0x7c8] sm:$0xff]
  %v2811 = vld [vmem:[%s3 + $0x7d0] sm:$0xff]
  %v2812 = vld [vmem:[%s3 + $0x7d8] sm:$0xff]
  %v2813 = vld [vmem:[%s3 + $0x7e0] sm:$0xff]
  %v2814 = vld [vmem:[%s3 + $0x7e8] sm:$0xff]
  %v2815 = vld [vmem:[%s3 + $0x7f0] sm:$0xff]
  %v2816 = vld [vmem:[%s3 + $0x7f8] sm:$0xff]
  %2817 = vmatpush.msra.mxu0 %v2681
  %2818 = vmatpush.msra.mxu0 %v2673
  %2819 = vmatpush.msra.mxu0 %v2665
  %2820 = vmatpush.msra.mxu0 %v2657
  %2821 = vmatpush.msra.mxu0 %v2649
  %2822 = vmatpush.msra.mxu0 %v2641
  %2823 = vmatpush.msra.mxu0 %v2633
  %2824 = vmatpush.msra.mxu0 %v2625
  %2825 = vmatpush.msra.mxu0 %v2617
  %2826 = vmatpush.msra.mxu0 %v2609
  %2827 = vmatpush.msra.mxu0 %v2601
  %2828 = vmatpush.msra.mxu0 %v2593
  %2829 = vmatpush.msra.mxu0 %v2585
  %2830 = vmatpush.msra.mxu0 %v2577
  %2831 = vmatpush.msra.mxu0 %v2569
  %2832 = vmatpush.msra.mxu0 %v2561
  %2833 = vmatmul.f32.gmra.mxu0 %v2549
  %v2834 = vpop.f32.mrf.mxu0
  %v2835 = vadd.f32 0.0, %v2834
  %2836 = vdwg.mxu0
  %2837 = vmatpush.msra.mxu0 %v2809
  %2838 = vmatpush.msra.mxu0 %v2801
  %2839 = vmatpush.msra.mxu0 %v2793
  %2840 = vmatpush.msra.mxu0 %v2785
  %2841 = vmatpush.msra.mxu0 %v2777
  %2842 = vmatpush.msra.mxu0 %v2769
  %2843 = vmatpush.msra.mxu0 %v2761
  %2844 = vmatpush.msra.mxu0 %v2753
  %2845 = vmatpush.msra.mxu0 %v2745
  %2846 = vmatpush.msra.mxu0 %v2737
  %2847 = vmatpush.msra.mxu0 %v2729
  %2848 = vmatpush.msra.mxu0 %v2721
  %2849 = vmatpush.msra.mxu0 %v2713
  %2850 = vmatpush.msra.mxu0 %v2705
  %2851 = vmatpush.msra.mxu0 %v2697
  %2852 = vmatpush.msra.mxu0 %v2689
  %2853 = vmatmul.f32.gmra.mxu0 %v2550
  %v2854 = vpop.f32.mrf.mxu0
  %v2855 = vadd.f32 %v2835, %v2854
  %2856 = vdwg.mxu0
  %2857 = vmatpush.msra.mxu0 %v2682
  %2858 = vmatpush.msra.mxu0 %v2674
  %2859 = vmatpush.msra.mxu0 %v2666
  %2860 = vmatpush.msra.mxu0 %v2658
  %2861 = vmatpush.msra.mxu0 %v2650
  %2862 = vmatpush.msra.mxu0 %v2642
  %2863 = vmatpush.msra.mxu0 %v2634
  %2864 = vmatpush.msra.mxu0 %v2626
  %2865 = vmatpush.msra.mxu0 %v2618
  %2866 = vmatpush.msra.mxu0 %v2610
  %2867 = vmatpush.msra.mxu0 %v2602
  %2868 = vmatpush.msra.mxu0 %v2594
  %2869 = vmatpush.msra.mxu0 %v2586
  %2870 = vmatpush.msra.mxu0 %v2578
  %2871 = vmatpush.msra.mxu0 %v2570
  %2872 = vmatpush.msra.mxu0 %v2562
  %2873 = vmatmul.f32.gmra.mxu0 %v2549
  %v2874 = vpop.f32.mrf.mxu0
  %v2875 = vadd.f32 0.0, %v2874
  %2876 = vdwg.mxu0
  %2877 = vmatpush.msra.mxu0 %v2810
  %2878 = vmatpush.msra.mxu0 %v2802
  %2879 = vmatpush.msra.mxu0 %v2794
  %2880 = vmatpush.msra.mxu0 %v2786
  %2881 = vmatpush.msra.mxu0 %v2778
  %2882 = vmatpush.msra.mxu0 %v2770
  %2883 = vmatpush.msra.mxu0 %v2762
  %2884 = vmatpush.msra.mxu0 %v2754
  %2885 = vmatpush.msra.mxu0 %v2746
  %2886 = vmatpush.msra.mxu0 %v2738
  %2887 = vmatpush.msra.mxu0 %v2730
  %2888 = vmatpush.msra.mxu0 %v2722
  %2889 = vmatpush.msra.mxu0 %v2714
  %2890 = vmatpush.msra.mxu0 %v2706
  %2891 = vmatpush.msra.mxu0 %v2698
  %2892 = vmatpush.msra.mxu0 %v2690
  %2893 = vmatmul.f32.gmra.mxu0 %v2550
  %v2894 = vpop.f32.mrf.mxu0
  %v2895 = vadd.f32 %v2875, %v2894
  %2896 = vdwg.mxu0
  %2897 = vmatpush.msra.mxu0 %v2683
  %2898 = vmatpush.msra.mxu0 %v2675
  %2899 = vmatpush.msra.mxu0 %v2667
  %2900 = vmatpush.msra.mxu0 %v2659
  %2901 = vmatpush.msra.mxu0 %v2651
  %2902 = vmatpush.msra.mxu0 %v2643
  %2903 = vmatpush.msra.mxu0 %v2635
  %2904 = vmatpush.msra.mxu0 %v2627
  %2905 = vmatpush.msra.mxu0 %v2619
  %2906 = vmatpush.msra.mxu0 %v2611
  %2907 = vmatpush.msra.mxu0 %v2603
  %2908 = vmatpush.msra.mxu0 %v2595
  %2909 = vmatpush.msra.mxu0 %v2587
  %2910 = vmatpush.msra.mxu0 %v2579
  %2911 = vmatpush.msra.mxu0 %v2571
  %2912 = vmatpush.msra.mxu0 %v2563
  %2913 = vmatmul.f32.gmra.mxu0 %v2549
  %v2914 = vpop.f32.mrf.mxu0
  %v2915 = vadd.f32 0.0, %v2914
  %2916 = vdwg.mxu0
  %2917 = vmatpush.msra.mxu0 %v2811
  %2918 = vmatpush.msra.mxu0 %v2803
  %2919 = vmatpush.msra.mxu0 %v2795
  %2920 = vmatpush.msra.mxu0 %v2787
  %2921 = vmatpush.msra.mxu0 %v2779
  %2922 = vmatpush.msra.mxu0 %v2771
  %2923 = vmatpush.msra.mxu0 %v2763
  %2924 = vmatpush.msra.mxu0 %v2755
  %2925 = vmatpush.msra.mxu0 %v2747
  %2926 = vmatpush.msra.mxu0 %v2739
  %2927 = vmatpush.msra.mxu0 %v2731
  %2928 = vmatpush.msra.mxu0 %v2723
  %2929 = vmatpush.msra.mxu0 %v2715
  %2930 = vmatpush.msra.mxu0 %v2707
  %2931 = vmatpush.msra.mxu0 %v2699
  %2932 = vmatpush.msra.mxu0 %v2691
  %2933 = vmatmul.f32.gmra.mxu0 %v2550
  %v2934 = vpop.f32.mrf.mxu0
  %v2935 = vadd.f32 %v2915, %v2934
  %2936 = vdwg.mxu0
  %2937 = vmatpush.msra.mxu0 %v2684
  %2938 = vmatpush.msra.mxu0 %v2676
  %2939 = vmatpush.msra.mxu0 %v2668
  %2940 = vmatpush.msra.mxu0 %v2660
  %2941 = vmatpush.msra.mxu0 %v2652
  %2942 = vmatpush.msra.mxu0 %v2644
  %2943 = vmatpush.msra.mxu0 %v2636
  %2944 = vmatpush.msra.mxu0 %v2628
  %2945 = vmatpush.msra.mxu0 %v2620
  %2946 = vmatpush.msra.mxu0 %v2612
  %2947 = vmatpush.msra.mxu0 %v2604
  %2948 = vmatpush.msra.mxu0 %v2596
  %2949 = vmatpush.msra.mxu0 %v2588
  %2950 = vmatpush.msra.mxu0 %v2580
  %2951 = vmatpush.msra.mxu0 %v2572
  %2952 = vmatpush.msra.mxu0 %v2564
  %2953 = vmatmul.f32.gmra.mxu0 %v2549
  %v2954 = vpop.f32.mrf.mxu0
  %v2955 = vadd.f32 0.0, %v2954
  %2956 = vdwg.mxu0
  %2957 = vmatpush.msra.mxu0 %v2812
  %2958 = vmatpush.msra.mxu0 %v2804
  %2959 = vmatpush.msra.mxu0 %v2796
  %2960 = vmatpush.msra.mxu0 %v2788
  %2961 = vmatpush.msra.mxu0 %v2780
  %2962 = vmatpush.msra.mxu0 %v2772
  %2963 = vmatpush.msra.mxu0 %v2764
  %2964 = vmatpush.msra.mxu0 %v2756
  %2965 = vmatpush.msra.mxu0 %v2748
  %2966 = vmatpush.msra.mxu0 %v2740
  %2967 = vmatpush.msra.mxu0 %v2732
  %2968 = vmatpush.msra.mxu0 %v2724
  %2969 = vmatpush.msra.mxu0 %v2716
  %2970 = vmatpush.msra.mxu0 %v2708
  %2971 = vmatpush.msra.mxu0 %v2700
  %2972 = vmatpush.msra.mxu0 %v2692
  %2973 = vmatmul.f32.gmra.mxu0 %v2550
  %v2974 = vpop.f32.mrf.mxu0
  %v2975 = vadd.f32 %v2955, %v2974
  %2976 = vdwg.mxu0
  %2977 = vmatpush.msra.mxu0 %v2685
  %2978 = vmatpush.msra.mxu0 %v2677
  %2979 = vmatpush.msra.mxu0 %v2669
  %2980 = vmatpush.msra.mxu0 %v2661
  %2981 = vmatpush.msra.mxu0 %v2653
  %2982 = vmatpush.msra.mxu0 %v2645
  %2983 = vmatpush.msra.mxu0 %v2637
  %2984 = vmatpush.msra.mxu0 %v2629
  %2985 = vmatpush.msra.mxu0 %v2621
  %2986 = vmatpush.msra.mxu0 %v2613
  %2987 = vmatpush.msra.mxu0 %v2605
  %2988 = vmatpush.msra.mxu0 %v2597
  %2989 = vmatpush.msra.mxu0 %v2589
  %2990 = vmatpush.msra.mxu0 %v2581
  %2991 = vmatpush.msra.mxu0 %v2573
  %2992 = vmatpush.msra.mxu0 %v2565
  %2993 = vmatmul.f32.gmra.mxu0 %v2549
  %v2994 = vpop.f32.mrf.mxu0
  %v2995 = vadd.f32 0.0, %v2994
  %2996 = vdwg.mxu0
  %2997 = vmatpush.msra.mxu0 %v2813
  %2998 = vmatpush.msra.mxu0 %v2805
  %2999 = vmatpush.msra.mxu0 %v2797
  %3000 = vmatpush.msra.mxu0 %v2789
  %3001 = vmatpush.msra.mxu0 %v2781
  %3002 = vmatpush.msra.mxu0 %v2773
  %3003 = vmatpush.msra.mxu0 %v2765
  %3004 = vmatpush.msra.mxu0 %v2757
  %3005 = vmatpush.msra.mxu0 %v2749
  %3006 = vmatpush.msra.mxu0 %v2741
  %3007 = vmatpush.msra.mxu0 %v2733
  %3008 = vmatpush.msra.mxu0 %v2725
  %3009 = vmatpush.msra.mxu0 %v2717
  %3010 = vmatpush.msra.mxu0 %v2709
  %3011 = vmatpush.msra.mxu0 %v2701
  %3012 = vmatpush.msra.mxu0 %v2693
  %3013 = vmatmul.f32.gmra.mxu0 %v2550
  %v3014 = vpop.f32.mrf.mxu0
  %v3015 = vadd.f32 %v2995, %v3014
  %3016 = vdwg.mxu0
  %3017 = vmatpush.msra.mxu0 %v2686
  %3018 = vmatpush.msra.mxu0 %v2678
  %3019 = vmatpush.msra.mxu0 %v2670
  %3020 = vmatpush.msra.mxu0 %v2662
  %3021 = vmatpush.msra.mxu0 %v2654
  %3022 = vmatpush.msra.mxu0 %v2646
  %3023 = vmatpush.msra.mxu0 %v2638
  %3024 = vmatpush.msra.mxu0 %v2630
  %3025 = vmatpush.msra.mxu0 %v2622
  %3026 = vmatpush.msra.mxu0 %v2614
  %3027 = vmatpush.msra.mxu0 %v2606
  %3028 = vmatpush.msra.mxu0 %v2598
  %3029 = vmatpush.msra.mxu0 %v2590
  %3030 = vmatpush.msra.mxu0 %v2582
  %3031 = vmatpush.msra.mxu0 %v2574
  %3032 = vmatpush.msra.mxu0 %v2566
  %3033 = vmatmul.f32.gmra.mxu0 %v2549
  %v3034 = vpop.f32.mrf.mxu0
  %v3035 = vadd.f32 0.0, %v3034
  %3036 = vdwg.mxu0
  %3037 = vmatpush.msra.mxu0 %v2814
  %3038 = vmatpush.msra.mxu0 %v2806
  %3039 = vmatpush.msra.mxu0 %v2798
  %3040 = vmatpush.msra.mxu0 %v2790
  %3041 = vmatpush.msra.mxu0 %v2782
  %3042 = vmatpush.msra.mxu0 %v2774
  %3043 = vmatpush.msra.mxu0 %v2766
  %3044 = vmatpush.msra.mxu0 %v2758
  %3045 = vmatpush.msra.mxu0 %v2750
  %3046 = vmatpush.msra.mxu0 %v2742
  %3047 = vmatpush.msra.mxu0 %v2734
  %3048 = vmatpush.msra.mxu0 %v2726
  %3049 = vmatpush.msra.mxu0 %v2718
  %3050 = vmatpush.msra.mxu0 %v2710
  %3051 = vmatpush.msra.mxu0 %v2702
  %3052 = vmatpush.msra.mxu0 %v2694
  %3053 = vmatmul.f32.gmra.mxu0 %v2550
  %v3054 = vpop.f32.mrf.mxu0
  %v3055 = vadd.f32 %v3035, %v3054
  %3056 = vdwg.mxu0
  %3057 = vmatpush.msra.mxu0 %v2687
  %3058 = vmatpush.msra.mxu0 %v2679
  %3059 = vmatpush.msra.mxu0 %v2671
  %3060 = vmatpush.msra.mxu0 %v2663
  %3061 = vmatpush.msra.mxu0 %v2655
  %3062 = vmatpush.msra.mxu0 %v2647
  %3063 = vmatpush.msra.mxu0 %v2639
  %3064 = vmatpush.msra.mxu0 %v2631
  %3065 = vmatpush.msra.mxu0 %v2623
  %3066 = vmatpush.msra.mxu0 %v2615
  %3067 = vmatpush.msra.mxu0 %v2607
  %3068 = vmatpush.msra.mxu0 %v2599
  %3069 = vmatpush.msra.mxu0 %v2591
  %3070 = vmatpush.msra.mxu0 %v2583
  %3071 = vmatpush.msra.mxu0 %v2575
  %3072 = vmatpush.msra.mxu0 %v2567
  %3073 = vmatmul.f32.gmra.mxu0 %v2549
  %v3074 = vpop.f32.mrf.mxu0
  %v3075 = vadd.f32 0.0, %v3074
  %3076 = vdwg.mxu0
  %3077 = vmatpush.msra.mxu0 %v2815
  %3078 = vmatpush.msra.mxu0 %v2807
  %3079 = vmatpush.msra.mxu0 %v2799
  %3080 = vmatpush.msra.mxu0 %v2791
  %3081 = vmatpush.msra.mxu0 %v2783
  %3082 = vmatpush.msra.mxu0 %v2775
  %3083 = vmatpush.msra.mxu0 %v2767
  %3084 = vmatpush.msra.mxu0 %v2759
  %3085 = vmatpush.msra.mxu0 %v2751
  %3086 = vmatpush.msra.mxu0 %v2743
  %3087 = vmatpush.msra.mxu0 %v2735
  %3088 = vmatpush.msra.mxu0 %v2727
  %3089 = vmatpush.msra.mxu0 %v2719
  %3090 = vmatpush.msra.mxu0 %v2711
  %3091 = vmatpush.msra.mxu0 %v2703
  %3092 = vmatpush.msra.mxu0 %v2695
  %3093 = vmatmul.f32.gmra.mxu0 %v2550
  %v3094 = vpop.f32.mrf.mxu0
  %v3095 = vadd.f32 %v3075, %v3094
  %3096 = vdwg.mxu0
  %3097 = vmatpush.msra.mxu0 %v2688
  %3098 = vmatpush.msra.mxu0 %v2680
  %3099 = vmatpush.msra.mxu0 %v2672
  %3100 = vmatpush.msra.mxu0 %v2664
  %3101 = vmatpush.msra.mxu0 %v2656
  %3102 = vmatpush.msra.mxu0 %v2648
  %3103 = vmatpush.msra.mxu0 %v2640
  %3104 = vmatpush.msra.mxu0 %v2632
  %3105 = vmatpush.msra.mxu0 %v2624
  %3106 = vmatpush.msra.mxu0 %v2616
  %3107 = vmatpush.msra.mxu0 %v2608
  %3108 = vmatpush.msra.mxu0 %v2600
  %3109 = vmatpush.msra.mxu0 %v2592
  %3110 = vmatpush.msra.mxu0 %v2584
  %3111 = vmatpush.msra.mxu0 %v2576
  %3112 = vmatpush.msra.mxu0 %v2568
  %3113 = vmatmul.f32.gmra.mxu0 %v2549
  %v3114 = vpop.f32.mrf.mxu0
  %v3115 = vadd.f32 0.0, %v3114
  %3116 = vdwg.mxu0
  %3117 = vmatpush.msra.mxu0 %v2816
  %3118 = vmatpush.msra.mxu0 %v2808
  %3119 = vmatpush.msra.mxu0 %v2800
  %3120 = vmatpush.msra.mxu0 %v2792
  %3121 = vmatpush.msra.mxu0 %v2784
  %3122 = vmatpush.msra.mxu0 %v2776
  %3123 = vmatpush.msra.mxu0 %v2768
  %3124 = vmatpush.msra.mxu0 %v2760
  %3125 = vmatpush.msra.mxu0 %v2752
  %3126 = vmatpush.msra.mxu0 %v2744
  %3127 = vmatpush.msra.mxu0 %v2736
  %3128 = vmatpush.msra.mxu0 %v2728
  %3129 = vmatpush.msra.mxu0 %v2720
  %3130 = vmatpush.msra.mxu0 %v2712
  %3131 = vmatpush.msra.mxu0 %v2704
  %3132 = vmatpush.msra.mxu0 %v2696
  %3133 = vmatmul.f32.gmra.mxu0 %v2550
  %v3134 = vpop.f32.mrf.mxu0
  %v3135 = vadd.f32 %v3115, %v3134
  %3136 = vdwg.mxu0
  %v3137 = vadd.f32 %v2553, %v2855
  %v3138 = vadd.f32 %v2554, %v2895
  %v3139 = vadd.f32 %v2555, %v2935
  %v3140 = vadd.f32 %v2556, %v2975
  %v3141 = vadd.f32 %v2557, %v3015
  %v3142 = vadd.f32 %v2558, %v3055
  %v3143 = vadd.f32 %v2559, %v3095
  %v3144 = vadd.f32 %v2560, %v3135
  %v3145 = vxor.u32 %v3137, 2147483648
  %v3146 = vxor.u32 %v3138, 2147483648
  %v3147 = vxor.u32 %v3139, 2147483648
  %v3148 = vxor.u32 %v3140, 2147483648
  %v3149 = vxor.u32 %v3141, 2147483648
  %v3150 = vxor.u32 %v3142, 2147483648
  %v3151 = vmul.f32 %v3145, 1.442695
  %v3152 = vpow.pop %v3151
  %v3153 = vmul.f32 %v3146, 1.442695
  %v3154 = vpow.pop %v3153
  %v3155 = vmul.f32 %v3147, 1.442695
  %v3156 = vpow.pop %v3155
  %v3157 = vmul.f32 %v3148, 1.442695
  %v3158 = vpow.pop %v3157
  %v3159 = vmul.f32 %v3149, 1.442695
  %v3160 = vpow.pop %v3159
  %v3161 = vmul.f32 %v3150, 1.442695
  %v3162 = vpow.pop %v3161
  %v3163 = vadd.f32 %v3152, 1.0
  %v3164 = vadd.f32 %v3154, 1.0
  %v3165 = vadd.f32 %v3156, 1.0
  %v3166 = vadd.f32 %v3158, 1.0
  %v3167 = vadd.f32 %v3160, 1.0
  %v3168 = vadd.f32 %v3162, 1.0
  %v3169 = vrcp.pop %v3163
  %v3170 = vmul.f32 %v3163, %v3169
  %v3171 = vsub.f32 1.0, %v3170
  %v3172 = vmul.f32 %v3169, %v3171
  %v3173 = vadd.f32 %v3169, %v3172
  %vm3174 = vweird.f32 %v3163
  %vm3175 = vweird.f32 %v3169
  %vm3176 = vmor %vm3174, %vm3175
  %v3177 = vsel %vm3176, %v3169, %v3173
  %v3178 = vand.u32 2147483647, %v3163
  %vm3179 = vcmp.eq.f32.partialorder %v3178, 8.507059e+37
  %v3180 = vand.u32 %v3163, 2147483648
  %v3181 = vor.u32 1.1754944e-38, %v3180
  %v3182 = vsel %vm3179, %v3181, %v3177
  %v3183 = vmul.f32 1.0, %v3182
  %v3184 = vrcp.pop %v3164
  %v3185 = vmul.f32 %v3164, %v3184
  %v3186 = vsub.f32 1.0, %v3185
  %v3187 = vmul.f32 %v3184, %v3186
  %v3188 = vadd.f32 %v3184, %v3187
  %vm3189 = vweird.f32 %v3164
  %vm3190 = vweird.f32 %v3184
  %vm3191 = vmor %vm3189, %vm3190
  %v3192 = vsel %vm3191, %v3184, %v3188
  %v3193 = vand.u32 2147483647, %v3164
  %vm3194 = vcmp.eq.f32.partialorder %v3193, 8.507059e+37
  %v3195 = vand.u32 %v3164, 2147483648
  %v3196 = vor.u32 1.1754944e-38, %v3195
  %v3197 = vsel %vm3194, %v3196, %v3192
  %v3198 = vmul.f32 1.0, %v3197
  %v3199 = vrcp.pop %v3165
  %v3200 = vmul.f32 %v3165, %v3199
  %v3201 = vsub.f32 1.0, %v3200
  %v3202 = vmul.f32 %v3199, %v3201
  %v3203 = vadd.f32 %v3199, %v3202
  %vm3204 = vweird.f32 %v3165
  %vm3205 = vweird.f32 %v3199
  %vm3206 = vmor %vm3204, %vm3205
  %v3207 = vsel %vm3206, %v3199, %v3203
  %v3208 = vand.u32 2147483647, %v3165
  %vm3209 = vcmp.eq.f32.partialorder %v3208, 8.507059e+37
  %v3210 = vand.u32 %v3165, 2147483648
  %v3211 = vor.u32 1.1754944e-38, %v3210
  %v3212 = vsel %vm3209, %v3211, %v3207
  %v3213 = vmul.f32 1.0, %v3212
  %v3214 = vrcp.pop %v3166
  %v3215 = vmul.f32 %v3166, %v3214
  %v3216 = vsub.f32 1.0, %v3215
  %v3217 = vmul.f32 %v3214, %v3216
  %v3218 = vadd.f32 %v3214, %v3217
  %vm3219 = vweird.f32 %v3166
  %vm3220 = vweird.f32 %v3214
  %vm3221 = vmor %vm3219, %vm3220
  %v3222 = vsel %vm3221, %v3214, %v3218
  %v3223 = vand.u32 2147483647, %v3166
  %vm3224 = vcmp.eq.f32.partialorder %v3223, 8.507059e+37
  %v3225 = vand.u32 %v3166, 2147483648
  %v3226 = vor.u32 1.1754944e-38, %v3225
  %v3227 = vsel %vm3224, %v3226, %v3222
  %v3228 = vmul.f32 1.0, %v3227
  %v3229 = vrcp.pop %v3167
  %v3230 = vmul.f32 %v3167, %v3229
  %v3231 = vsub.f32 1.0, %v3230
  %v3232 = vmul.f32 %v3229, %v3231
  %v3233 = vadd.f32 %v3229, %v3232
  %vm3234 = vweird.f32 %v3167
  %vm3235 = vweird.f32 %v3229
  %vm3236 = vmor %vm3234, %vm3235
  %v3237 = vsel %vm3236, %v3229, %v3233
  %v3238 = vand.u32 2147483647, %v3167
  %vm3239 = vcmp.eq.f32.partialorder %v3238, 8.507059e+37
  %v3240 = vand.u32 %v3167, 2147483648
  %v3241 = vor.u32 1.1754944e-38, %v3240
  %v3242 = vsel %vm3239, %v3241, %v3237
  %v3243 = vmul.f32 1.0, %v3242
  %v3244 = vrcp.pop %v3168
  %v3245 = vmul.f32 %v3168, %v3244
  %v3246 = vsub.f32 1.0, %v3245
  %v3247 = vmul.f32 %v3244, %v3246
  %v3248 = vadd.f32 %v3244, %v3247
  %vm3249 = vweird.f32 %v3168
  %vm3250 = vweird.f32 %v3244
  %vm3251 = vmor %vm3249, %vm3250
  %v3252 = vsel %vm3251, %v3244, %v3248
  %v3253 = vand.u32 2147483647, %v3168
  %vm3254 = vcmp.eq.f32.partialorder %v3253, 8.507059e+37
  %v3255 = vand.u32 %v3168, 2147483648
  %v3256 = vor.u32 1.1754944e-38, %v3255
  %v3257 = vsel %vm3254, %v3256, %v3252
  %v3258 = vmul.f32 1.0, %v3257
  %v3259 = vtanh.pop %v3143
  %v3260 = vtanh.pop %v3144
  %v3261 = vmul.f32 %v3213, %v2545
  %v3262 = vmul.f32 %v3228, %v2546
  %v3263 = vmul.f32 %v3183, %v3259
  %v3264 = vmul.f32 %v3198, %v3260
  %v3265 = vadd.f32 %v3261, %v3263
  %v3266 = vadd.f32 %v3262, %v3264
  %v3267 = vtanh.pop %v3265
  %v3268 = vtanh.pop %v3266
  %v3269 = vmul.f32 %v3243, %v3267
  %v3270 = vmul.f32 %v3258, %v3268
  %3271 = vst [vmem:[#allocation3 + $0x20] sm:$0xff] %v3269
  %3272 = vst [vmem:[#allocation3 + $0x58] sm:$0xff] %v3270
  %v3273 = vld [vmem:[#allocation2 + $0xc0] sm:$0xff]
  %v3274 = vld [vmem:[#allocation2 + $0xc8] sm:$0xff]
  %v3275 = vld [vmem:[#allocation2 + $0xd0] sm:$0xff]
  %v3276 = vld [vmem:[#allocation2 + $0xd8] sm:$0xff]
  %v3277 = vld [vmem:[#allocation2 + $0xe0] sm:$0xff]
  %v3278 = vld [vmem:[#allocation2 + $0xe8] sm:$0xff]
  %v3279 = vld [vmem:[#allocation2 + $0xf0] sm:$0xff]
  %v3280 = vld [vmem:[#allocation2 + $0xf8] sm:$0xff]
  %v3281 = vld [vmem:[%s3] sm:$0xff]
  %v3282 = vld [vmem:[%s3 + $0x8] sm:$0xff]
  %v3283 = vld [vmem:[%s3 + $0x10] sm:$0xff]
  %v3284 = vld [vmem:[%s3 + $0x18] sm:$0xff]
  %v3285 = vld [vmem:[%s3 + $0x20] sm:$0xff]
  %v3286 = vld [vmem:[%s3 + $0x28] sm:$0xff]
  %v3287 = vld [vmem:[%s3 + $0x30] sm:$0xff]
  %v3288 = vld [vmem:[%s3 + $0x38] sm:$0xff]
  %v3289 = vld [vmem:[%s3 + $0x40] sm:$0xff]
  %v3290 = vld [vmem:[%s3 + $0x48] sm:$0xff]
  %v3291 = vld [vmem:[%s3 + $0x50] sm:$0xff]
  %v3292 = vld [vmem:[%s3 + $0x58] sm:$0xff]
  %v3293 = vld [vmem:[%s3 + $0x60] sm:$0xff]
  %v3294 = vld [vmem:[%s3 + $0x68] sm:$0xff]
  %v3295 = vld [vmem:[%s3 + $0x70] sm:$0xff]
  %v3296 = vld [vmem:[%s3 + $0x78] sm:$0xff]
  %v3297 = vld [vmem:[%s3 + $0x80] sm:$0xff]
  %v3298 = vld [vmem:[%s3 + $0x88] sm:$0xff]
  %v3299 = vld [vmem:[%s3 + $0x90] sm:$0xff]
  %v3300 = vld [vmem:[%s3 + $0x98] sm:$0xff]
  %v3301 = vld [vmem:[%s3 + $0xa0] sm:$0xff]
  %v3302 = vld [vmem:[%s3 + $0xa8] sm:$0xff]
  %v3303 = vld [vmem:[%s3 + $0xb0] sm:$0xff]
  %v3304 = vld [vmem:[%s3 + $0xb8] sm:$0xff]
  %v3305 = vld [vmem:[%s3 + $0xc0] sm:$0xff]
  %v3306 = vld [vmem:[%s3 + $0xc8] sm:$0xff]
  %v3307 = vld [vmem:[%s3 + $0xd0] sm:$0xff]
  %v3308 = vld [vmem:[%s3 + $0xd8] sm:$0xff]
  %v3309 = vld [vmem:[%s3 + $0xe0] sm:$0xff]
  %v3310 = vld [vmem:[%s3 + $0xe8] sm:$0xff]
  %v3311 = vld [vmem:[%s3 + $0xf0] sm:$0xff]
  %v3312 = vld [vmem:[%s3 + $0xf8] sm:$0xff]
  %v3313 = vld [vmem:[%s3 + $0x100] sm:$0xff]
  %v3314 = vld [vmem:[%s3 + $0x108] sm:$0xff]
  %v3315 = vld [vmem:[%s3 + $0x110] sm:$0xff]
  %v3316 = vld [vmem:[%s3 + $0x118] sm:$0xff]
  %v3317 = vld [vmem:[%s3 + $0x120] sm:$0xff]
  %v3318 = vld [vmem:[%s3 + $0x128] sm:$0xff]
  %v3319 = vld [vmem:[%s3 + $0x130] sm:$0xff]
  %v3320 = vld [vmem:[%s3 + $0x138] sm:$0xff]
  %v3321 = vld [vmem:[%s3 + $0x140] sm:$0xff]
  %v3322 = vld [vmem:[%s3 + $0x148] sm:$0xff]
  %v3323 = vld [vmem:[%s3 + $0x150] sm:$0xff]
  %v3324 = vld [vmem:[%s3 + $0x158] sm:$0xff]
  %v3325 = vld [vmem:[%s3 + $0x160] sm:$0xff]
  %v3326 = vld [vmem:[%s3 + $0x168] sm:$0xff]
  %v3327 = vld [vmem:[%s3 + $0x170] sm:$0xff]
  %v3328 = vld [vmem:[%s3 + $0x178] sm:$0xff]
  %v3329 = vld [vmem:[%s3 + $0x180] sm:$0xff]
  %v3330 = vld [vmem:[%s3 + $0x188] sm:$0xff]
  %v3331 = vld [vmem:[%s3 + $0x190] sm:$0xff]
  %v3332 = vld [vmem:[%s3 + $0x198] sm:$0xff]
  %v3333 = vld [vmem:[%s3 + $0x1a0] sm:$0xff]
  %v3334 = vld [vmem:[%s3 + $0x1a8] sm:$0xff]
  %v3335 = vld [vmem:[%s3 + $0x1b0] sm:$0xff]
  %v3336 = vld [vmem:[%s3 + $0x1b8] sm:$0xff]
  %v3337 = vld [vmem:[%s3 + $0x1c0] sm:$0xff]
  %v3338 = vld [vmem:[%s3 + $0x1c8] sm:$0xff]
  %v3339 = vld [vmem:[%s3 + $0x1d0] sm:$0xff]
  %v3340 = vld [vmem:[%s3 + $0x1d8] sm:$0xff]
  %v3341 = vld [vmem:[%s3 + $0x1e0] sm:$0xff]
  %v3342 = vld [vmem:[%s3 + $0x1e8] sm:$0xff]
  %v3343 = vld [vmem:[%s3 + $0x1f0] sm:$0xff]
  %v3344 = vld [vmem:[%s3 + $0x1f8] sm:$0xff]
  %v3345 = vld [vmem:[%s3 + $0x200] sm:$0xff]
  %v3346 = vld [vmem:[%s3 + $0x208] sm:$0xff]
  %v3347 = vld [vmem:[%s3 + $0x210] sm:$0xff]
  %v3348 = vld [vmem:[%s3 + $0x218] sm:$0xff]
  %v3349 = vld [vmem:[%s3 + $0x220] sm:$0xff]
  %v3350 = vld [vmem:[%s3 + $0x228] sm:$0xff]
  %v3351 = vld [vmem:[%s3 + $0x230] sm:$0xff]
  %v3352 = vld [vmem:[%s3 + $0x238] sm:$0xff]
  %v3353 = vld [vmem:[%s3 + $0x240] sm:$0xff]
  %v3354 = vld [vmem:[%s3 + $0x248] sm:$0xff]
  %v3355 = vld [vmem:[%s3 + $0x250] sm:$0xff]
  %v3356 = vld [vmem:[%s3 + $0x258] sm:$0xff]
  %v3357 = vld [vmem:[%s3 + $0x260] sm:$0xff]
  %v3358 = vld [vmem:[%s3 + $0x268] sm:$0xff]
  %v3359 = vld [vmem:[%s3 + $0x270] sm:$0xff]
  %v3360 = vld [vmem:[%s3 + $0x278] sm:$0xff]
  %v3361 = vld [vmem:[%s3 + $0x280] sm:$0xff]
  %v3362 = vld [vmem:[%s3 + $0x288] sm:$0xff]
  %v3363 = vld [vmem:[%s3 + $0x290] sm:$0xff]
  %v3364 = vld [vmem:[%s3 + $0x298] sm:$0xff]
  %v3365 = vld [vmem:[%s3 + $0x2a0] sm:$0xff]
  %v3366 = vld [vmem:[%s3 + $0x2a8] sm:$0xff]
  %v3367 = vld [vmem:[%s3 + $0x2b0] sm:$0xff]
  %v3368 = vld [vmem:[%s3 + $0x2b8] sm:$0xff]
  %v3369 = vld [vmem:[%s3 + $0x2c0] sm:$0xff]
  %v3370 = vld [vmem:[%s3 + $0x2c8] sm:$0xff]
  %v3371 = vld [vmem:[%s3 + $0x2d0] sm:$0xff]
  %v3372 = vld [vmem:[%s3 + $0x2d8] sm:$0xff]
  %v3373 = vld [vmem:[%s3 + $0x2e0] sm:$0xff]
  %v3374 = vld [vmem:[%s3 + $0x2e8] sm:$0xff]
  %v3375 = vld [vmem:[%s3 + $0x2f0] sm:$0xff]
  %v3376 = vld [vmem:[%s3 + $0x2f8] sm:$0xff]
  %v3377 = vld [vmem:[%s3 + $0x300] sm:$0xff]
  %v3378 = vld [vmem:[%s3 + $0x308] sm:$0xff]
  %v3379 = vld [vmem:[%s3 + $0x310] sm:$0xff]
  %v3380 = vld [vmem:[%s3 + $0x318] sm:$0xff]
  %v3381 = vld [vmem:[%s3 + $0x320] sm:$0xff]
  %v3382 = vld [vmem:[%s3 + $0x328] sm:$0xff]
  %v3383 = vld [vmem:[%s3 + $0x330] sm:$0xff]
  %v3384 = vld [vmem:[%s3 + $0x338] sm:$0xff]
  %v3385 = vld [vmem:[%s3 + $0x340] sm:$0xff]
  %v3386 = vld [vmem:[%s3 + $0x348] sm:$0xff]
  %v3387 = vld [vmem:[%s3 + $0x350] sm:$0xff]
  %v3388 = vld [vmem:[%s3 + $0x358] sm:$0xff]
  %v3389 = vld [vmem:[%s3 + $0x360] sm:$0xff]
  %v3390 = vld [vmem:[%s3 + $0x368] sm:$0xff]
  %v3391 = vld [vmem:[%s3 + $0x370] sm:$0xff]
  %v3392 = vld [vmem:[%s3 + $0x378] sm:$0xff]
  %v3393 = vld [vmem:[%s3 + $0x380] sm:$0xff]
  %v3394 = vld [vmem:[%s3 + $0x388] sm:$0xff]
  %v3395 = vld [vmem:[%s3 + $0x390] sm:$0xff]
  %v3396 = vld [vmem:[%s3 + $0x398] sm:$0xff]
  %v3397 = vld [vmem:[%s3 + $0x3a0] sm:$0xff]
  %v3398 = vld [vmem:[%s3 + $0x3a8] sm:$0xff]
  %v3399 = vld [vmem:[%s3 + $0x3b0] sm:$0xff]
  %v3400 = vld [vmem:[%s3 + $0x3b8] sm:$0xff]
  %v3401 = vld [vmem:[%s3 + $0x3c0] sm:$0xff]
  %v3402 = vld [vmem:[%s3 + $0x3c8] sm:$0xff]
  %v3403 = vld [vmem:[%s3 + $0x3d0] sm:$0xff]
  %v3404 = vld [vmem:[%s3 + $0x3d8] sm:$0xff]
  %v3405 = vld [vmem:[%s3 + $0x3e0] sm:$0xff]
  %v3406 = vld [vmem:[%s3 + $0x3e8] sm:$0xff]
  %v3407 = vld [vmem:[%s3 + $0x3f0] sm:$0xff]
  %v3408 = vld [vmem:[%s3 + $0x3f8] sm:$0xff]
  %v3409 = vld [vmem:[%s3 + $0x400] sm:$0xff]
  %v3410 = vld [vmem:[%s3 + $0x408] sm:$0xff]
  %v3411 = vld [vmem:[%s3 + $0x410] sm:$0xff]
  %v3412 = vld [vmem:[%s3 + $0x418] sm:$0xff]
  %v3413 = vld [vmem:[%s3 + $0x420] sm:$0xff]
  %v3414 = vld [vmem:[%s3 + $0x428] sm:$0xff]
  %v3415 = vld [vmem:[%s3 + $0x430] sm:$0xff]
  %v3416 = vld [vmem:[%s3 + $0x438] sm:$0xff]
  %v3417 = vld [vmem:[%s3 + $0x440] sm:$0xff]
  %v3418 = vld [vmem:[%s3 + $0x448] sm:$0xff]
  %v3419 = vld [vmem:[%s3 + $0x450] sm:$0xff]
  %v3420 = vld [vmem:[%s3 + $0x458] sm:$0xff]
  %v3421 = vld [vmem:[%s3 + $0x460] sm:$0xff]
  %v3422 = vld [vmem:[%s3 + $0x468] sm:$0xff]
  %v3423 = vld [vmem:[%s3 + $0x470] sm:$0xff]
  %v3424 = vld [vmem:[%s3 + $0x478] sm:$0xff]
  %v3425 = vld [vmem:[%s3 + $0x480] sm:$0xff]
  %v3426 = vld [vmem:[%s3 + $0x488] sm:$0xff]
  %v3427 = vld [vmem:[%s3 + $0x490] sm:$0xff]
  %v3428 = vld [vmem:[%s3 + $0x498] sm:$0xff]
  %v3429 = vld [vmem:[%s3 + $0x4a0] sm:$0xff]
  %v3430 = vld [vmem:[%s3 + $0x4a8] sm:$0xff]
  %v3431 = vld [vmem:[%s3 + $0x4b0] sm:$0xff]
  %v3432 = vld [vmem:[%s3 + $0x4b8] sm:$0xff]
  %v3433 = vld [vmem:[%s3 + $0x4c0] sm:$0xff]
  %v3434 = vld [vmem:[%s3 + $0x4c8] sm:$0xff]
  %v3435 = vld [vmem:[%s3 + $0x4d0] sm:$0xff]
  %v3436 = vld [vmem:[%s3 + $0x4d8] sm:$0xff]
  %v3437 = vld [vmem:[%s3 + $0x4e0] sm:$0xff]
  %v3438 = vld [vmem:[%s3 + $0x4e8] sm:$0xff]
  %v3439 = vld [vmem:[%s3 + $0x4f0] sm:$0xff]
  %v3440 = vld [vmem:[%s3 + $0x4f8] sm:$0xff]
  %v3441 = vld [vmem:[%s3 + $0x500] sm:$0xff]
  %v3442 = vld [vmem:[%s3 + $0x508] sm:$0xff]
  %v3443 = vld [vmem:[%s3 + $0x510] sm:$0xff]
  %v3444 = vld [vmem:[%s3 + $0x518] sm:$0xff]
  %v3445 = vld [vmem:[%s3 + $0x520] sm:$0xff]
  %v3446 = vld [vmem:[%s3 + $0x528] sm:$0xff]
  %v3447 = vld [vmem:[%s3 + $0x530] sm:$0xff]
  %v3448 = vld [vmem:[%s3 + $0x538] sm:$0xff]
  %v3449 = vld [vmem:[%s3 + $0x540] sm:$0xff]
  %v3450 = vld [vmem:[%s3 + $0x548] sm:$0xff]
  %v3451 = vld [vmem:[%s3 + $0x550] sm:$0xff]
  %v3452 = vld [vmem:[%s3 + $0x558] sm:$0xff]
  %v3453 = vld [vmem:[%s3 + $0x560] sm:$0xff]
  %v3454 = vld [vmem:[%s3 + $0x568] sm:$0xff]
  %v3455 = vld [vmem:[%s3 + $0x570] sm:$0xff]
  %v3456 = vld [vmem:[%s3 + $0x578] sm:$0xff]
  %v3457 = vld [vmem:[%s3 + $0x580] sm:$0xff]
  %v3458 = vld [vmem:[%s3 + $0x588] sm:$0xff]
  %v3459 = vld [vmem:[%s3 + $0x590] sm:$0xff]
  %v3460 = vld [vmem:[%s3 + $0x598] sm:$0xff]
  %v3461 = vld [vmem:[%s3 + $0x5a0] sm:$0xff]
  %v3462 = vld [vmem:[%s3 + $0x5a8] sm:$0xff]
  %v3463 = vld [vmem:[%s3 + $0x5b0] sm:$0xff]
  %v3464 = vld [vmem:[%s3 + $0x5b8] sm:$0xff]
  %v3465 = vld [vmem:[%s3 + $0x5c0] sm:$0xff]
  %v3466 = vld [vmem:[%s3 + $0x5c8] sm:$0xff]
  %v3467 = vld [vmem:[%s3 + $0x5d0] sm:$0xff]
  %v3468 = vld [vmem:[%s3 + $0x5d8] sm:$0xff]
  %v3469 = vld [vmem:[%s3 + $0x5e0] sm:$0xff]
  %v3470 = vld [vmem:[%s3 + $0x5e8] sm:$0xff]
  %v3471 = vld [vmem:[%s3 + $0x5f0] sm:$0xff]
  %v3472 = vld [vmem:[%s3 + $0x5f8] sm:$0xff]
  %v3473 = vld [vmem:[%s3 + $0x600] sm:$0xff]
  %v3474 = vld [vmem:[%s3 + $0x608] sm:$0xff]
  %v3475 = vld [vmem:[%s3 + $0x610] sm:$0xff]
  %v3476 = vld [vmem:[%s3 + $0x618] sm:$0xff]
  %v3477 = vld [vmem:[%s3 + $0x620] sm:$0xff]
  %v3478 = vld [vmem:[%s3 + $0x628] sm:$0xff]
  %v3479 = vld [vmem:[%s3 + $0x630] sm:$0xff]
  %v3480 = vld [vmem:[%s3 + $0x638] sm:$0xff]
  %v3481 = vld [vmem:[%s3 + $0x640] sm:$0xff]
  %v3482 = vld [vmem:[%s3 + $0x648] sm:$0xff]
  %v3483 = vld [vmem:[%s3 + $0x650] sm:$0xff]
  %v3484 = vld [vmem:[%s3 + $0x658] sm:$0xff]
  %v3485 = vld [vmem:[%s3 + $0x660] sm:$0xff]
  %v3486 = vld [vmem:[%s3 + $0x668] sm:$0xff]
  %v3487 = vld [vmem:[%s3 + $0x670] sm:$0xff]
  %v3488 = vld [vmem:[%s3 + $0x678] sm:$0xff]
  %v3489 = vld [vmem:[%s3 + $0x680] sm:$0xff]
  %v3490 = vld [vmem:[%s3 + $0x688] sm:$0xff]
  %v3491 = vld [vmem:[%s3 + $0x690] sm:$0xff]
  %v3492 = vld [vmem:[%s3 + $0x698] sm:$0xff]
  %v3493 = vld [vmem:[%s3 + $0x6a0] sm:$0xff]
  %v3494 = vld [vmem:[%s3 + $0x6a8] sm:$0xff]
  %v3495 = vld [vmem:[%s3 + $0x6b0] sm:$0xff]
  %v3496 = vld [vmem:[%s3 + $0x6b8] sm:$0xff]
  %v3497 = vld [vmem:[%s3 + $0x6c0] sm:$0xff]
  %v3498 = vld [vmem:[%s3 + $0x6c8] sm:$0xff]
  %v3499 = vld [vmem:[%s3 + $0x6d0] sm:$0xff]
  %v3500 = vld [vmem:[%s3 + $0x6d8] sm:$0xff]
  %v3501 = vld [vmem:[%s3 + $0x6e0] sm:$0xff]
  %v3502 = vld [vmem:[%s3 + $0x6e8] sm:$0xff]
  %v3503 = vld [vmem:[%s3 + $0x6f0] sm:$0xff]
  %v3504 = vld [vmem:[%s3 + $0x6f8] sm:$0xff]
  %v3505 = vld [vmem:[%s3 + $0x700] sm:$0xff]
  %v3506 = vld [vmem:[%s3 + $0x708] sm:$0xff]
  %v3507 = vld [vmem:[%s3 + $0x710] sm:$0xff]
  %v3508 = vld [vmem:[%s3 + $0x718] sm:$0xff]
  %v3509 = vld [vmem:[%s3 + $0x720] sm:$0xff]
  %v3510 = vld [vmem:[%s3 + $0x728] sm:$0xff]
  %v3511 = vld [vmem:[%s3 + $0x730] sm:$0xff]
  %v3512 = vld [vmem:[%s3 + $0x738] sm:$0xff]
  %v3513 = vld [vmem:[%s3 + $0x740] sm:$0xff]
  %v3514 = vld [vmem:[%s3 + $0x748] sm:$0xff]
  %v3515 = vld [vmem:[%s3 + $0x750] sm:$0xff]
  %v3516 = vld [vmem:[%s3 + $0x758] sm:$0xff]
  %v3517 = vld [vmem:[%s3 + $0x760] sm:$0xff]
  %v3518 = vld [vmem:[%s3 + $0x768] sm:$0xff]
  %v3519 = vld [vmem:[%s3 + $0x770] sm:$0xff]
  %v3520 = vld [vmem:[%s3 + $0x778] sm:$0xff]
  %v3521 = vld [vmem:[%s3 + $0x780] sm:$0xff]
  %v3522 = vld [vmem:[%s3 + $0x788] sm:$0xff]
  %v3523 = vld [vmem:[%s3 + $0x790] sm:$0xff]
  %v3524 = vld [vmem:[%s3 + $0x798] sm:$0xff]
  %v3525 = vld [vmem:[%s3 + $0x7a0] sm:$0xff]
  %v3526 = vld [vmem:[%s3 + $0x7a8] sm:$0xff]
  %v3527 = vld [vmem:[%s3 + $0x7b0] sm:$0xff]
  %v3528 = vld [vmem:[%s3 + $0x7b8] sm:$0xff]
  %v3529 = vld [vmem:[%s3 + $0x7c0] sm:$0xff]
  %v3530 = vld [vmem:[%s3 + $0x7c8] sm:$0xff]
  %v3531 = vld [vmem:[%s3 + $0x7d0] sm:$0xff]
  %v3532 = vld [vmem:[%s3 + $0x7d8] sm:$0xff]
  %v3533 = vld [vmem:[%s3 + $0x7e0] sm:$0xff]
  %v3534 = vld [vmem:[%s3 + $0x7e8] sm:$0xff]
  %v3535 = vld [vmem:[%s3 + $0x7f0] sm:$0xff]
  %v3536 = vld [vmem:[%s3 + $0x7f8] sm:$0xff]
  %3537 = vmatpush.msra.mxu0 %v3401
  %3538 = vmatpush.msra.mxu0 %v3393
  %3539 = vmatpush.msra.mxu0 %v3385
  %3540 = vmatpush.msra.mxu0 %v3377
  %3541 = vmatpush.msra.mxu0 %v3369
  %3542 = vmatpush.msra.mxu0 %v3361
  %3543 = vmatpush.msra.mxu0 %v3353
  %3544 = vmatpush.msra.mxu0 %v3345
  %3545 = vmatpush.msra.mxu0 %v3337
  %3546 = vmatpush.msra.mxu0 %v3329
  %3547 = vmatpush.msra.mxu0 %v3321
  %3548 = vmatpush.msra.mxu0 %v3313
  %3549 = vmatpush.msra.mxu0 %v3305
  %3550 = vmatpush.msra.mxu0 %v3297
  %3551 = vmatpush.msra.mxu0 %v3289
  %3552 = vmatpush.msra.mxu0 %v3281
  %3553 = vmatmul.f32.gmra.mxu0 %v3269
  %v3554 = vpop.f32.mrf.mxu0
  %v3555 = vadd.f32 0.0, %v3554
  %3556 = vdwg.mxu0
  %3557 = vmatpush.msra.mxu0 %v3529
  %3558 = vmatpush.msra.mxu0 %v3521
  %3559 = vmatpush.msra.mxu0 %v3513
  %3560 = vmatpush.msra.mxu0 %v3505
  %3561 = vmatpush.msra.mxu0 %v3497
  %3562 = vmatpush.msra.mxu0 %v3489
  %3563 = vmatpush.msra.mxu0 %v3481
  %3564 = vmatpush.msra.mxu0 %v3473
  %3565 = vmatpush.msra.mxu0 %v3465
  %3566 = vmatpush.msra.mxu0 %v3457
  %3567 = vmatpush.msra.mxu0 %v3449
  %3568 = vmatpush.msra.mxu0 %v3441
  %3569 = vmatpush.msra.mxu0 %v3433
  %3570 = vmatpush.msra.mxu0 %v3425
  %3571 = vmatpush.msra.mxu0 %v3417
  %3572 = vmatpush.msra.mxu0 %v3409
  %3573 = vmatmul.f32.gmra.mxu0 %v3270
  %v3574 = vpop.f32.mrf.mxu0
  %v3575 = vadd.f32 %v3555, %v3574
  %3576 = vdwg.mxu0
  %3577 = vmatpush.msra.mxu0 %v3402
  %3578 = vmatpush.msra.mxu0 %v3394
  %3579 = vmatpush.msra.mxu0 %v3386
  %3580 = vmatpush.msra.mxu0 %v3378
  %3581 = vmatpush.msra.mxu0 %v3370
  %3582 = vmatpush.msra.mxu0 %v3362
  %3583 = vmatpush.msra.mxu0 %v3354
  %3584 = vmatpush.msra.mxu0 %v3346
  %3585 = vmatpush.msra.mxu0 %v3338
  %3586 = vmatpush.msra.mxu0 %v3330
  %3587 = vmatpush.msra.mxu0 %v3322
  %3588 = vmatpush.msra.mxu0 %v3314
  %3589 = vmatpush.msra.mxu0 %v3306
  %3590 = vmatpush.msra.mxu0 %v3298
  %3591 = vmatpush.msra.mxu0 %v3290
  %3592 = vmatpush.msra.mxu0 %v3282
  %3593 = vmatmul.f32.gmra.mxu0 %v3269
  %v3594 = vpop.f32.mrf.mxu0
  %v3595 = vadd.f32 0.0, %v3594
  %3596 = vdwg.mxu0
  %3597 = vmatpush.msra.mxu0 %v3530
  %3598 = vmatpush.msra.mxu0 %v3522
  %3599 = vmatpush.msra.mxu0 %v3514
  %3600 = vmatpush.msra.mxu0 %v3506
  %3601 = vmatpush.msra.mxu0 %v3498
  %3602 = vmatpush.msra.mxu0 %v3490
  %3603 = vmatpush.msra.mxu0 %v3482
  %3604 = vmatpush.msra.mxu0 %v3474
  %3605 = vmatpush.msra.mxu0 %v3466
  %3606 = vmatpush.msra.mxu0 %v3458
  %3607 = vmatpush.msra.mxu0 %v3450
  %3608 = vmatpush.msra.mxu0 %v3442
  %3609 = vmatpush.msra.mxu0 %v3434
  %3610 = vmatpush.msra.mxu0 %v3426
  %3611 = vmatpush.msra.mxu0 %v3418
  %3612 = vmatpush.msra.mxu0 %v3410
  %3613 = vmatmul.f32.gmra.mxu0 %v3270
  %v3614 = vpop.f32.mrf.mxu0
  %v3615 = vadd.f32 %v3595, %v3614
  %3616 = vdwg.mxu0
  %3617 = vmatpush.msra.mxu0 %v3403
  %3618 = vmatpush.msra.mxu0 %v3395
  %3619 = vmatpush.msra.mxu0 %v3387
  %3620 = vmatpush.msra.mxu0 %v3379
  %3621 = vmatpush.msra.mxu0 %v3371
  %3622 = vmatpush.msra.mxu0 %v3363
  %3623 = vmatpush.msra.mxu0 %v3355
  %3624 = vmatpush.msra.mxu0 %v3347
  %3625 = vmatpush.msra.mxu0 %v3339
  %3626 = vmatpush.msra.mxu0 %v3331
  %3627 = vmatpush.msra.mxu0 %v3323
  %3628 = vmatpush.msra.mxu0 %v3315
  %3629 = vmatpush.msra.mxu0 %v3307
  %3630 = vmatpush.msra.mxu0 %v3299
  %3631 = vmatpush.msra.mxu0 %v3291
  %3632 = vmatpush.msra.mxu0 %v3283
  %3633 = vmatmul.f32.gmra.mxu0 %v3269
  %v3634 = vpop.f32.mrf.mxu0
  %v3635 = vadd.f32 0.0, %v3634
  %3636 = vdwg.mxu0
  %3637 = vmatpush.msra.mxu0 %v3531
  %3638 = vmatpush.msra.mxu0 %v3523
  %3639 = vmatpush.msra.mxu0 %v3515
  %3640 = vmatpush.msra.mxu0 %v3507
  %3641 = vmatpush.msra.mxu0 %v3499
  %3642 = vmatpush.msra.mxu0 %v3491
  %3643 = vmatpush.msra.mxu0 %v3483
  %3644 = vmatpush.msra.mxu0 %v3475
  %3645 = vmatpush.msra.mxu0 %v3467
  %3646 = vmatpush.msra.mxu0 %v3459
  %3647 = vmatpush.msra.mxu0 %v3451
  %3648 = vmatpush.msra.mxu0 %v3443
  %3649 = vmatpush.msra.mxu0 %v3435
  %3650 = vmatpush.msra.mxu0 %v3427
  %3651 = vmatpush.msra.mxu0 %v3419
  %3652 = vmatpush.msra.mxu0 %v3411
  %3653 = vmatmul.f32.gmra.mxu0 %v3270
  %v3654 = vpop.f32.mrf.mxu0
  %v3655 = vadd.f32 %v3635, %v3654
  %3656 = vdwg.mxu0
  %3657 = vmatpush.msra.mxu0 %v3404
  %3658 = vmatpush.msra.mxu0 %v3396
  %3659 = vmatpush.msra.mxu0 %v3388
  %3660 = vmatpush.msra.mxu0 %v3380
  %3661 = vmatpush.msra.mxu0 %v3372
  %3662 = vmatpush.msra.mxu0 %v3364
  %3663 = vmatpush.msra.mxu0 %v3356
  %3664 = vmatpush.msra.mxu0 %v3348
  %3665 = vmatpush.msra.mxu0 %v3340
  %3666 = vmatpush.msra.mxu0 %v3332
  %3667 = vmatpush.msra.mxu0 %v3324
  %3668 = vmatpush.msra.mxu0 %v3316
  %3669 = vmatpush.msra.mxu0 %v3308
  %3670 = vmatpush.msra.mxu0 %v3300
  %3671 = vmatpush.msra.mxu0 %v3292
  %3672 = vmatpush.msra.mxu0 %v3284
  %3673 = vmatmul.f32.gmra.mxu0 %v3269
  %v3674 = vpop.f32.mrf.mxu0
  %v3675 = vadd.f32 0.0, %v3674
  %3676 = vdwg.mxu0
  %3677 = vmatpush.msra.mxu0 %v3532
  %3678 = vmatpush.msra.mxu0 %v3524
  %3679 = vmatpush.msra.mxu0 %v3516
  %3680 = vmatpush.msra.mxu0 %v3508
  %3681 = vmatpush.msra.mxu0 %v3500
  %3682 = vmatpush.msra.mxu0 %v3492
  %3683 = vmatpush.msra.mxu0 %v3484
  %3684 = vmatpush.msra.mxu0 %v3476
  %3685 = vmatpush.msra.mxu0 %v3468
  %3686 = vmatpush.msra.mxu0 %v3460
  %3687 = vmatpush.msra.mxu0 %v3452
  %3688 = vmatpush.msra.mxu0 %v3444
  %3689 = vmatpush.msra.mxu0 %v3436
  %3690 = vmatpush.msra.mxu0 %v3428
  %3691 = vmatpush.msra.mxu0 %v3420
  %3692 = vmatpush.msra.mxu0 %v3412
  %3693 = vmatmul.f32.gmra.mxu0 %v3270
  %v3694 = vpop.f32.mrf.mxu0
  %v3695 = vadd.f32 %v3675, %v3694
  %3696 = vdwg.mxu0
  %3697 = vmatpush.msra.mxu0 %v3405
  %3698 = vmatpush.msra.mxu0 %v3397
  %3699 = vmatpush.msra.mxu0 %v3389
  %3700 = vmatpush.msra.mxu0 %v3381
  %3701 = vmatpush.msra.mxu0 %v3373
  %3702 = vmatpush.msra.mxu0 %v3365
  %3703 = vmatpush.msra.mxu0 %v3357
  %3704 = vmatpush.msra.mxu0 %v3349
  %3705 = vmatpush.msra.mxu0 %v3341
  %3706 = vmatpush.msra.mxu0 %v3333
  %3707 = vmatpush.msra.mxu0 %v3325
  %3708 = vmatpush.msra.mxu0 %v3317
  %3709 = vmatpush.msra.mxu0 %v3309
  %3710 = vmatpush.msra.mxu0 %v3301
  %3711 = vmatpush.msra.mxu0 %v3293
  %3712 = vmatpush.msra.mxu0 %v3285
  %3713 = vmatmul.f32.gmra.mxu0 %v3269
  %v3714 = vpop.f32.mrf.mxu0
  %v3715 = vadd.f32 0.0, %v3714
  %3716 = vdwg.mxu0
  %3717 = vmatpush.msra.mxu0 %v3533
  %3718 = vmatpush.msra.mxu0 %v3525
  %3719 = vmatpush.msra.mxu0 %v3517
  %3720 = vmatpush.msra.mxu0 %v3509
  %3721 = vmatpush.msra.mxu0 %v3501
  %3722 = vmatpush.msra.mxu0 %v3493
  %3723 = vmatpush.msra.mxu0 %v3485
  %3724 = vmatpush.msra.mxu0 %v3477
  %3725 = vmatpush.msra.mxu0 %v3469
  %3726 = vmatpush.msra.mxu0 %v3461
  %3727 = vmatpush.msra.mxu0 %v3453
  %3728 = vmatpush.msra.mxu0 %v3445
  %3729 = vmatpush.msra.mxu0 %v3437
  %3730 = vmatpush.msra.mxu0 %v3429
  %3731 = vmatpush.msra.mxu0 %v3421
  %3732 = vmatpush.msra.mxu0 %v3413
  %3733 = vmatmul.f32.gmra.mxu0 %v3270
  %v3734 = vpop.f32.mrf.mxu0
  %v3735 = vadd.f32 %v3715, %v3734
  %3736 = vdwg.mxu0
  %3737 = vmatpush.msra.mxu0 %v3406
  %3738 = vmatpush.msra.mxu0 %v3398
  %3739 = vmatpush.msra.mxu0 %v3390
  %3740 = vmatpush.msra.mxu0 %v3382
  %3741 = vmatpush.msra.mxu0 %v3374
  %3742 = vmatpush.msra.mxu0 %v3366
  %3743 = vmatpush.msra.mxu0 %v3358
  %3744 = vmatpush.msra.mxu0 %v3350
  %3745 = vmatpush.msra.mxu0 %v3342
  %3746 = vmatpush.msra.mxu0 %v3334
  %3747 = vmatpush.msra.mxu0 %v3326
  %3748 = vmatpush.msra.mxu0 %v3318
  %3749 = vmatpush.msra.mxu0 %v3310
  %3750 = vmatpush.msra.mxu0 %v3302
  %3751 = vmatpush.msra.mxu0 %v3294
  %3752 = vmatpush.msra.mxu0 %v3286
  %3753 = vmatmul.f32.gmra.mxu0 %v3269
  %v3754 = vpop.f32.mrf.mxu0
  %v3755 = vadd.f32 0.0, %v3754
  %3756 = vdwg.mxu0
  %3757 = vmatpush.msra.mxu0 %v3534
  %3758 = vmatpush.msra.mxu0 %v3526
  %3759 = vmatpush.msra.mxu0 %v3518
  %3760 = vmatpush.msra.mxu0 %v3510
  %3761 = vmatpush.msra.mxu0 %v3502
  %3762 = vmatpush.msra.mxu0 %v3494
  %3763 = vmatpush.msra.mxu0 %v3486
  %3764 = vmatpush.msra.mxu0 %v3478
  %3765 = vmatpush.msra.mxu0 %v3470
  %3766 = vmatpush.msra.mxu0 %v3462
  %3767 = vmatpush.msra.mxu0 %v3454
  %3768 = vmatpush.msra.mxu0 %v3446
  %3769 = vmatpush.msra.mxu0 %v3438
  %3770 = vmatpush.msra.mxu0 %v3430
  %3771 = vmatpush.msra.mxu0 %v3422
  %3772 = vmatpush.msra.mxu0 %v3414
  %3773 = vmatmul.f32.gmra.mxu0 %v3270
  %v3774 = vpop.f32.mrf.mxu0
  %v3775 = vadd.f32 %v3755, %v3774
  %3776 = vdwg.mxu0
  %3777 = vmatpush.msra.mxu0 %v3407
  %3778 = vmatpush.msra.mxu0 %v3399
  %3779 = vmatpush.msra.mxu0 %v3391
  %3780 = vmatpush.msra.mxu0 %v3383
  %3781 = vmatpush.msra.mxu0 %v3375
  %3782 = vmatpush.msra.mxu0 %v3367
  %3783 = vmatpush.msra.mxu0 %v3359
  %3784 = vmatpush.msra.mxu0 %v3351
  %3785 = vmatpush.msra.mxu0 %v3343
  %3786 = vmatpush.msra.mxu0 %v3335
  %3787 = vmatpush.msra.mxu0 %v3327
  %3788 = vmatpush.msra.mxu0 %v3319
  %3789 = vmatpush.msra.mxu0 %v3311
  %3790 = vmatpush.msra.mxu0 %v3303
  %3791 = vmatpush.msra.mxu0 %v3295
  %3792 = vmatpush.msra.mxu0 %v3287
  %3793 = vmatmul.f32.gmra.mxu0 %v3269
  %v3794 = vpop.f32.mrf.mxu0
  %v3795 = vadd.f32 0.0, %v3794
  %3796 = vdwg.mxu0
  %3797 = vmatpush.msra.mxu0 %v3535
  %3798 = vmatpush.msra.mxu0 %v3527
  %3799 = vmatpush.msra.mxu0 %v3519
  %3800 = vmatpush.msra.mxu0 %v3511
  %3801 = vmatpush.msra.mxu0 %v3503
  %3802 = vmatpush.msra.mxu0 %v3495
  %3803 = vmatpush.msra.mxu0 %v3487
  %3804 = vmatpush.msra.mxu0 %v3479
  %3805 = vmatpush.msra.mxu0 %v3471
  %3806 = vmatpush.msra.mxu0 %v3463
  %3807 = vmatpush.msra.mxu0 %v3455
  %3808 = vmatpush.msra.mxu0 %v3447
  %3809 = vmatpush.msra.mxu0 %v3439
  %3810 = vmatpush.msra.mxu0 %v3431
  %3811 = vmatpush.msra.mxu0 %v3423
  %3812 = vmatpush.msra.mxu0 %v3415
  %3813 = vmatmul.f32.gmra.mxu0 %v3270
  %v3814 = vpop.f32.mrf.mxu0
  %v3815 = vadd.f32 %v3795, %v3814
  %3816 = vdwg.mxu0
  %3817 = vmatpush.msra.mxu0 %v3408
  %3818 = vmatpush.msra.mxu0 %v3400
  %3819 = vmatpush.msra.mxu0 %v3392
  %3820 = vmatpush.msra.mxu0 %v3384
  %3821 = vmatpush.msra.mxu0 %v3376
  %3822 = vmatpush.msra.mxu0 %v3368
  %3823 = vmatpush.msra.mxu0 %v3360
  %3824 = vmatpush.msra.mxu0 %v3352
  %3825 = vmatpush.msra.mxu0 %v3344
  %3826 = vmatpush.msra.mxu0 %v3336
  %3827 = vmatpush.msra.mxu0 %v3328
  %3828 = vmatpush.msra.mxu0 %v3320
  %3829 = vmatpush.msra.mxu0 %v3312
  %3830 = vmatpush.msra.mxu0 %v3304
  %3831 = vmatpush.msra.mxu0 %v3296
  %3832 = vmatpush.msra.mxu0 %v3288
  %3833 = vmatmul.f32.gmra.mxu0 %v3269
  %v3834 = vpop.f32.mrf.mxu0
  %v3835 = vadd.f32 0.0, %v3834
  %3836 = vdwg.mxu0
  %3837 = vmatpush.msra.mxu0 %v3536
  %3838 = vmatpush.msra.mxu0 %v3528
  %3839 = vmatpush.msra.mxu0 %v3520
  %3840 = vmatpush.msra.mxu0 %v3512
  %3841 = vmatpush.msra.mxu0 %v3504
  %3842 = vmatpush.msra.mxu0 %v3496
  %3843 = vmatpush.msra.mxu0 %v3488
  %3844 = vmatpush.msra.mxu0 %v3480
  %3845 = vmatpush.msra.mxu0 %v3472
  %3846 = vmatpush.msra.mxu0 %v3464
  %3847 = vmatpush.msra.mxu0 %v3456
  %3848 = vmatpush.msra.mxu0 %v3448
  %3849 = vmatpush.msra.mxu0 %v3440
  %3850 = vmatpush.msra.mxu0 %v3432
  %3851 = vmatpush.msra.mxu0 %v3424
  %3852 = vmatpush.msra.mxu0 %v3416
  %3853 = vmatmul.f32.gmra.mxu0 %v3270
  %v3854 = vpop.f32.mrf.mxu0
  %v3855 = vadd.f32 %v3835, %v3854
  %3856 = vdwg.mxu0
  %v3857 = vadd.f32 %v3273, %v3575
  %v3858 = vadd.f32 %v3274, %v3615
  %v3859 = vadd.f32 %v3275, %v3655
  %v3860 = vadd.f32 %v3276, %v3695
  %v3861 = vadd.f32 %v3277, %v3735
  %v3862 = vadd.f32 %v3278, %v3775
  %v3863 = vadd.f32 %v3279, %v3815
  %v3864 = vadd.f32 %v3280, %v3855
  %v3865 = vxor.u32 %v3857, 2147483648
  %v3866 = vxor.u32 %v3858, 2147483648
  %v3867 = vxor.u32 %v3859, 2147483648
  %v3868 = vxor.u32 %v3860, 2147483648
  %v3869 = vxor.u32 %v3861, 2147483648
  %v3870 = vxor.u32 %v3862, 2147483648
  %v3871 = vmul.f32 %v3865, 1.442695
  %v3872 = vpow.pop %v3871
  %v3873 = vmul.f32 %v3866, 1.442695
  %v3874 = vpow.pop %v3873
  %v3875 = vmul.f32 %v3867, 1.442695
  %v3876 = vpow.pop %v3875
  %v3877 = vmul.f32 %v3868, 1.442695
  %v3878 = vpow.pop %v3877
  %v3879 = vmul.f32 %v3869, 1.442695
  %v3880 = vpow.pop %v3879
  %v3881 = vmul.f32 %v3870, 1.442695
  %v3882 = vpow.pop %v3881
  %v3883 = vadd.f32 %v3872, 1.0
  %v3884 = vadd.f32 %v3874, 1.0
  %v3885 = vadd.f32 %v3876, 1.0
  %v3886 = vadd.f32 %v3878, 1.0
  %v3887 = vadd.f32 %v3880, 1.0
  %v3888 = vadd.f32 %v3882, 1.0
  %v3889 = vrcp.pop %v3883
  %v3890 = vmul.f32 %v3883, %v3889
  %v3891 = vsub.f32 1.0, %v3890
  %v3892 = vmul.f32 %v3889, %v3891
  %v3893 = vadd.f32 %v3889, %v3892
  %vm3894 = vweird.f32 %v3883
  %vm3895 = vweird.f32 %v3889
  %vm3896 = vmor %vm3894, %vm3895
  %v3897 = vsel %vm3896, %v3889, %v3893
  %v3898 = vand.u32 2147483647, %v3883
  %vm3899 = vcmp.eq.f32.partialorder %v3898, 8.507059e+37
  %v3900 = vand.u32 %v3883, 2147483648
  %v3901 = vor.u32 1.1754944e-38, %v3900
  %v3902 = vsel %vm3899, %v3901, %v3897
  %v3903 = vmul.f32 1.0, %v3902
  %v3904 = vrcp.pop %v3884
  %v3905 = vmul.f32 %v3884, %v3904
  %v3906 = vsub.f32 1.0, %v3905
  %v3907 = vmul.f32 %v3904, %v3906
  %v3908 = vadd.f32 %v3904, %v3907
  %vm3909 = vweird.f32 %v3884
  %vm3910 = vweird.f32 %v3904
  %vm3911 = vmor %vm3909, %vm3910
  %v3912 = vsel %vm3911, %v3904, %v3908
  %v3913 = vand.u32 2147483647, %v3884
  %vm3914 = vcmp.eq.f32.partialorder %v3913, 8.507059e+37
  %v3915 = vand.u32 %v3884, 2147483648
  %v3916 = vor.u32 1.1754944e-38, %v3915
  %v3917 = vsel %vm3914, %v3916, %v3912
  %v3918 = vmul.f32 1.0, %v3917
  %v3919 = vrcp.pop %v3885
  %v3920 = vmul.f32 %v3885, %v3919
  %v3921 = vsub.f32 1.0, %v3920
  %v3922 = vmul.f32 %v3919, %v3921
  %v3923 = vadd.f32 %v3919, %v3922
  %vm3924 = vweird.f32 %v3885
  %vm3925 = vweird.f32 %v3919
  %vm3926 = vmor %vm3924, %vm3925
  %v3927 = vsel %vm3926, %v3919, %v3923
  %v3928 = vand.u32 2147483647, %v3885
  %vm3929 = vcmp.eq.f32.partialorder %v3928, 8.507059e+37
  %v3930 = vand.u32 %v3885, 2147483648
  %v3931 = vor.u32 1.1754944e-38, %v3930
  %v3932 = vsel %vm3929, %v3931, %v3927
  %v3933 = vmul.f32 1.0, %v3932
  %v3934 = vrcp.pop %v3886
  %v3935 = vmul.f32 %v3886, %v3934
  %v3936 = vsub.f32 1.0, %v3935
  %v3937 = vmul.f32 %v3934, %v3936
  %v3938 = vadd.f32 %v3934, %v3937
  %vm3939 = vweird.f32 %v3886
  %vm3940 = vweird.f32 %v3934
  %vm3941 = vmor %vm3939, %vm3940
  %v3942 = vsel %vm3941, %v3934, %v3938
  %v3943 = vand.u32 2147483647, %v3886
  %vm3944 = vcmp.eq.f32.partialorder %v3943, 8.507059e+37
  %v3945 = vand.u32 %v3886, 2147483648
  %v3946 = vor.u32 1.1754944e-38, %v3945
  %v3947 = vsel %vm3944, %v3946, %v3942
  %v3948 = vmul.f32 1.0, %v3947
  %v3949 = vrcp.pop %v3887
  %v3950 = vmul.f32 %v3887, %v3949
  %v3951 = vsub.f32 1.0, %v3950
  %v3952 = vmul.f32 %v3949, %v3951
  %v3953 = vadd.f32 %v3949, %v3952
  %vm3954 = vweird.f32 %v3887
  %vm3955 = vweird.f32 %v3949
  %vm3956 = vmor %vm3954, %vm3955
  %v3957 = vsel %vm3956, %v3949, %v3953
  %v3958 = vand.u32 2147483647, %v3887
  %vm3959 = vcmp.eq.f32.partialorder %v3958, 8.507059e+37
  %v3960 = vand.u32 %v3887, 2147483648
  %v3961 = vor.u32 1.1754944e-38, %v3960
  %v3962 = vsel %vm3959, %v3961, %v3957
  %v3963 = vmul.f32 1.0, %v3962
  %v3964 = vrcp.pop %v3888
  %v3965 = vmul.f32 %v3888, %v3964
  %v3966 = vsub.f32 1.0, %v3965
  %v3967 = vmul.f32 %v3964, %v3966
  %v3968 = vadd.f32 %v3964, %v3967
  %vm3969 = vweird.f32 %v3888
  %vm3970 = vweird.f32 %v3964
  %vm3971 = vmor %vm3969, %vm3970
  %v3972 = vsel %vm3971, %v3964, %v3968
  %v3973 = vand.u32 2147483647, %v3888
  %vm3974 = vcmp.eq.f32.partialorder %v3973, 8.507059e+37
  %v3975 = vand.u32 %v3888, 2147483648
  %v3976 = vor.u32 1.1754944e-38, %v3975
  %v3977 = vsel %vm3974, %v3976, %v3972
  %v3978 = vmul.f32 1.0, %v3977
  %v3979 = vtanh.pop %v3863
  %v3980 = vtanh.pop %v3864
  %v3981 = vmul.f32 %v3933, %v3265
  %v3982 = vmul.f32 %v3948, %v3266
  %v3983 = vmul.f32 %v3903, %v3979
  %v3984 = vmul.f32 %v3918, %v3980
  %v3985 = vadd.f32 %v3981, %v3983
  %v3986 = vadd.f32 %v3982, %v3984
  %v3987 = vtanh.pop %v3985
  %v3988 = vtanh.pop %v3986
  %v3989 = vmul.f32 %v3963, %v3987
  %v3990 = vmul.f32 %v3978, %v3988
  %3991 = vst [vmem:[#allocation3 + $0x30] sm:$0xff] %v3989
  %3992 = vst [vmem:[#allocation3 + $0x48] sm:$0xff] %v3990
  %v3993 = vld [vmem:[#allocation2 + $0x100] sm:$0xff]
  %v3994 = vld [vmem:[#allocation2 + $0x108] sm:$0xff]
  %v3995 = vld [vmem:[#allocation2 + $0x110] sm:$0xff]
  %v3996 = vld [vmem:[#allocation2 + $0x118] sm:$0xff]
  %v3997 = vld [vmem:[#allocation2 + $0x120] sm:$0xff]
  %v3998 = vld [vmem:[#allocation2 + $0x128] sm:$0xff]
  %v3999 = vld [vmem:[#allocation2 + $0x130] sm:$0xff]
  %v4000 = vld [vmem:[#allocation2 + $0x138] sm:$0xff]
  %v4001 = vld [vmem:[%s3] sm:$0xff]
  %v4002 = vld [vmem:[%s3 + $0x8] sm:$0xff]
  %v4003 = vld [vmem:[%s3 + $0x10] sm:$0xff]
  %v4004 = vld [vmem:[%s3 + $0x18] sm:$0xff]
  %v4005 = vld [vmem:[%s3 + $0x20] sm:$0xff]
  %v4006 = vld [vmem:[%s3 + $0x28] sm:$0xff]
  %v4007 = vld [vmem:[%s3 + $0x30] sm:$0xff]
  %v4008 = vld [vmem:[%s3 + $0x38] sm:$0xff]
  %v4009 = vld [vmem:[%s3 + $0x40] sm:$0xff]
  %v4010 = vld [vmem:[%s3 + $0x48] sm:$0xff]
  %v4011 = vld [vmem:[%s3 + $0x50] sm:$0xff]
  %v4012 = vld [vmem:[%s3 + $0x58] sm:$0xff]
  %v4013 = vld [vmem:[%s3 + $0x60] sm:$0xff]
  %v4014 = vld [vmem:[%s3 + $0x68] sm:$0xff]
  %v4015 = vld [vmem:[%s3 + $0x70] sm:$0xff]
  %v4016 = vld [vmem:[%s3 + $0x78] sm:$0xff]
  %v4017 = vld [vmem:[%s3 + $0x80] sm:$0xff]
  %v4018 = vld [vmem:[%s3 + $0x88] sm:$0xff]
  %v4019 = vld [vmem:[%s3 + $0x90] sm:$0xff]
  %v4020 = vld [vmem:[%s3 + $0x98] sm:$0xff]
  %v4021 = vld [vmem:[%s3 + $0xa0] sm:$0xff]
  %v4022 = vld [vmem:[%s3 + $0xa8] sm:$0xff]
  %v4023 = vld [vmem:[%s3 + $0xb0] sm:$0xff]
  %v4024 = vld [vmem:[%s3 + $0xb8] sm:$0xff]
  %v4025 = vld [vmem:[%s3 + $0xc0] sm:$0xff]
  %v4026 = vld [vmem:[%s3 + $0xc8] sm:$0xff]
  %v4027 = vld [vmem:[%s3 + $0xd0] sm:$0xff]
  %v4028 = vld [vmem:[%s3 + $0xd8] sm:$0xff]
  %v4029 = vld [vmem:[%s3 + $0xe0] sm:$0xff]
  %v4030 = vld [vmem:[%s3 + $0xe8] sm:$0xff]
  %v4031 = vld [vmem:[%s3 + $0xf0] sm:$0xff]
  %v4032 = vld [vmem:[%s3 + $0xf8] sm:$0xff]
  %v4033 = vld [vmem:[%s3 + $0x100] sm:$0xff]
  %v4034 = vld [vmem:[%s3 + $0x108] sm:$0xff]
  %v4035 = vld [vmem:[%s3 + $0x110] sm:$0xff]
  %v4036 = vld [vmem:[%s3 + $0x118] sm:$0xff]
  %v4037 = vld [vmem:[%s3 + $0x120] sm:$0xff]
  %v4038 = vld [vmem:[%s3 + $0x128] sm:$0xff]
  %v4039 = vld [vmem:[%s3 + $0x130] sm:$0xff]
  %v4040 = vld [vmem:[%s3 + $0x138] sm:$0xff]
  %v4041 = vld [vmem:[%s3 + $0x140] sm:$0xff]
  %v4042 = vld [vmem:[%s3 + $0x148] sm:$0xff]
  %v4043 = vld [vmem:[%s3 + $0x150] sm:$0xff]
  %v4044 = vld [vmem:[%s3 + $0x158] sm:$0xff]
  %v4045 = vld [vmem:[%s3 + $0x160] sm:$0xff]
  %v4046 = vld [vmem:[%s3 + $0x168] sm:$0xff]
  %v4047 = vld [vmem:[%s3 + $0x170] sm:$0xff]
  %v4048 = vld [vmem:[%s3 + $0x178] sm:$0xff]
  %v4049 = vld [vmem:[%s3 + $0x180] sm:$0xff]
  %v4050 = vld [vmem:[%s3 + $0x188] sm:$0xff]
  %v4051 = vld [vmem:[%s3 + $0x190] sm:$0xff]
  %v4052 = vld [vmem:[%s3 + $0x198] sm:$0xff]
  %v4053 = vld [vmem:[%s3 + $0x1a0] sm:$0xff]
  %v4054 = vld [vmem:[%s3 + $0x1a8] sm:$0xff]
  %v4055 = vld [vmem:[%s3 + $0x1b0] sm:$0xff]
  %v4056 = vld [vmem:[%s3 + $0x1b8] sm:$0xff]
  %v4057 = vld [vmem:[%s3 + $0x1c0] sm:$0xff]
  %v4058 = vld [vmem:[%s3 + $0x1c8] sm:$0xff]
  %v4059 = vld [vmem:[%s3 + $0x1d0] sm:$0xff]
  %v4060 = vld [vmem:[%s3 + $0x1d8] sm:$0xff]
  %v4061 = vld [vmem:[%s3 + $0x1e0] sm:$0xff]
  %v4062 = vld [vmem:[%s3 + $0x1e8] sm:$0xff]
  %v4063 = vld [vmem:[%s3 + $0x1f0] sm:$0xff]
  %v4064 = vld [vmem:[%s3 + $0x1f8] sm:$0xff]
  %v4065 = vld [vmem:[%s3 + $0x200] sm:$0xff]
  %v4066 = vld [vmem:[%s3 + $0x208] sm:$0xff]
  %v4067 = vld [vmem:[%s3 + $0x210] sm:$0xff]
  %v4068 = vld [vmem:[%s3 + $0x218] sm:$0xff]
  %v4069 = vld [vmem:[%s3 + $0x220] sm:$0xff]
  %v4070 = vld [vmem:[%s3 + $0x228] sm:$0xff]
  %v4071 = vld [vmem:[%s3 + $0x230] sm:$0xff]
  %v4072 = vld [vmem:[%s3 + $0x238] sm:$0xff]
  %v4073 = vld [vmem:[%s3 + $0x240] sm:$0xff]
  %v4074 = vld [vmem:[%s3 + $0x248] sm:$0xff]
  %v4075 = vld [vmem:[%s3 + $0x250] sm:$0xff]
  %v4076 = vld [vmem:[%s3 + $0x258] sm:$0xff]
  %v4077 = vld [vmem:[%s3 + $0x260] sm:$0xff]
  %v4078 = vld [vmem:[%s3 + $0x268] sm:$0xff]
  %v4079 = vld [vmem:[%s3 + $0x270] sm:$0xff]
  %v4080 = vld [vmem:[%s3 + $0x278] sm:$0xff]
  %v4081 = vld [vmem:[%s3 + $0x280] sm:$0xff]
  %v4082 = vld [vmem:[%s3 + $0x288] sm:$0xff]
  %v4083 = vld [vmem:[%s3 + $0x290] sm:$0xff]
  %v4084 = vld [vmem:[%s3 + $0x298] sm:$0xff]
  %v4085 = vld [vmem:[%s3 + $0x2a0] sm:$0xff]
  %v4086 = vld [vmem:[%s3 + $0x2a8] sm:$0xff]
  %v4087 = vld [vmem:[%s3 + $0x2b0] sm:$0xff]
  %v4088 = vld [vmem:[%s3 + $0x2b8] sm:$0xff]
  %v4089 = vld [vmem:[%s3 + $0x2c0] sm:$0xff]
  %v4090 = vld [vmem:[%s3 + $0x2c8] sm:$0xff]
  %v4091 = vld [vmem:[%s3 + $0x2d0] sm:$0xff]
  %v4092 = vld [vmem:[%s3 + $0x2d8] sm:$0xff]
  %v4093 = vld [vmem:[%s3 + $0x2e0] sm:$0xff]
  %v4094 = vld [vmem:[%s3 + $0x2e8] sm:$0xff]
  %v4095 = vld [vmem:[%s3 + $0x2f0] sm:$0xff]
  %v4096 = vld [vmem:[%s3 + $0x2f8] sm:$0xff]
  %v4097 = vld [vmem:[%s3 + $0x300] sm:$0xff]
  %v4098 = vld [vmem:[%s3 + $0x308] sm:$0xff]
  %v4099 = vld [vmem:[%s3 + $0x310] sm:$0xff]
  %v4100 = vld [vmem:[%s3 + $0x318] sm:$0xff]
  %v4101 = vld [vmem:[%s3 + $0x320] sm:$0xff]
  %v4102 = vld [vmem:[%s3 + $0x328] sm:$0xff]
  %v4103 = vld [vmem:[%s3 + $0x330] sm:$0xff]
  %v4104 = vld [vmem:[%s3 + $0x338] sm:$0xff]
  %v4105 = vld [vmem:[%s3 + $0x340] sm:$0xff]
  %v4106 = vld [vmem:[%s3 + $0x348] sm:$0xff]
  %v4107 = vld [vmem:[%s3 + $0x350] sm:$0xff]
  %v4108 = vld [vmem:[%s3 + $0x358] sm:$0xff]
  %v4109 = vld [vmem:[%s3 + $0x360] sm:$0xff]
  %v4110 = vld [vmem:[%s3 + $0x368] sm:$0xff]
  %v4111 = vld [vmem:[%s3 + $0x370] sm:$0xff]
  %v4112 = vld [vmem:[%s3 + $0x378] sm:$0xff]
  %v4113 = vld [vmem:[%s3 + $0x380] sm:$0xff]
  %v4114 = vld [vmem:[%s3 + $0x388] sm:$0xff]
  %v4115 = vld [vmem:[%s3 + $0x390] sm:$0xff]
  %v4116 = vld [vmem:[%s3 + $0x398] sm:$0xff]
  %v4117 = vld [vmem:[%s3 + $0x3a0] sm:$0xff]
  %v4118 = vld [vmem:[%s3 + $0x3a8] sm:$0xff]
  %v4119 = vld [vmem:[%s3 + $0x3b0] sm:$0xff]
  %v4120 = vld [vmem:[%s3 + $0x3b8] sm:$0xff]
  %v4121 = vld [vmem:[%s3 + $0x3c0] sm:$0xff]
  %v4122 = vld [vmem:[%s3 + $0x3c8] sm:$0xff]
  %v4123 = vld [vmem:[%s3 + $0x3d0] sm:$0xff]
  %v4124 = vld [vmem:[%s3 + $0x3d8] sm:$0xff]
  %v4125 = vld [vmem:[%s3 + $0x3e0] sm:$0xff]
  %v4126 = vld [vmem:[%s3 + $0x3e8] sm:$0xff]
  %v4127 = vld [vmem:[%s3 + $0x3f0] sm:$0xff]
  %v4128 = vld [vmem:[%s3 + $0x3f8] sm:$0xff]
  %v4129 = vld [vmem:[%s3 + $0x400] sm:$0xff]
  %v4130 = vld [vmem:[%s3 + $0x408] sm:$0xff]
  %v4131 = vld [vmem:[%s3 + $0x410] sm:$0xff]
  %v4132 = vld [vmem:[%s3 + $0x418] sm:$0xff]
  %v4133 = vld [vmem:[%s3 + $0x420] sm:$0xff]
  %v4134 = vld [vmem:[%s3 + $0x428] sm:$0xff]
  %v4135 = vld [vmem:[%s3 + $0x430] sm:$0xff]
  %v4136 = vld [vmem:[%s3 + $0x438] sm:$0xff]
  %v4137 = vld [vmem:[%s3 + $0x440] sm:$0xff]
  %v4138 = vld [vmem:[%s3 + $0x448] sm:$0xff]
  %v4139 = vld [vmem:[%s3 + $0x450] sm:$0xff]
  %v4140 = vld [vmem:[%s3 + $0x458] sm:$0xff]
  %v4141 = vld [vmem:[%s3 + $0x460] sm:$0xff]
  %v4142 = vld [vmem:[%s3 + $0x468] sm:$0xff]
  %v4143 = vld [vmem:[%s3 + $0x470] sm:$0xff]
  %v4144 = vld [vmem:[%s3 + $0x478] sm:$0xff]
  %v4145 = vld [vmem:[%s3 + $0x480] sm:$0xff]
  %v4146 = vld [vmem:[%s3 + $0x488] sm:$0xff]
  %v4147 = vld [vmem:[%s3 + $0x490] sm:$0xff]
  %v4148 = vld [vmem:[%s3 + $0x498] sm:$0xff]
  %v4149 = vld [vmem:[%s3 + $0x4a0] sm:$0xff]
  %v4150 = vld [vmem:[%s3 + $0x4a8] sm:$0xff]
  %v4151 = vld [vmem:[%s3 + $0x4b0] sm:$0xff]
  %v4152 = vld [vmem:[%s3 + $0x4b8] sm:$0xff]
  %v4153 = vld [vmem:[%s3 + $0x4c0] sm:$0xff]
  %v4154 = vld [vmem:[%s3 + $0x4c8] sm:$0xff]
  %v4155 = vld [vmem:[%s3 + $0x4d0] sm:$0xff]
  %v4156 = vld [vmem:[%s3 + $0x4d8] sm:$0xff]
  %v4157 = vld [vmem:[%s3 + $0x4e0] sm:$0xff]
  %v4158 = vld [vmem:[%s3 + $0x4e8] sm:$0xff]
  %v4159 = vld [vmem:[%s3 + $0x4f0] sm:$0xff]
  %v4160 = vld [vmem:[%s3 + $0x4f8] sm:$0xff]
  %v4161 = vld [vmem:[%s3 + $0x500] sm:$0xff]
  %v4162 = vld [vmem:[%s3 + $0x508] sm:$0xff]
  %v4163 = vld [vmem:[%s3 + $0x510] sm:$0xff]
  %v4164 = vld [vmem:[%s3 + $0x518] sm:$0xff]
  %v4165 = vld [vmem:[%s3 + $0x520] sm:$0xff]
  %v4166 = vld [vmem:[%s3 + $0x528] sm:$0xff]
  %v4167 = vld [vmem:[%s3 + $0x530] sm:$0xff]
  %v4168 = vld [vmem:[%s3 + $0x538] sm:$0xff]
  %v4169 = vld [vmem:[%s3 + $0x540] sm:$0xff]
  %v4170 = vld [vmem:[%s3 + $0x548] sm:$0xff]
  %v4171 = vld [vmem:[%s3 + $0x550] sm:$0xff]
  %v4172 = vld [vmem:[%s3 + $0x558] sm:$0xff]
  %v4173 = vld [vmem:[%s3 + $0x560] sm:$0xff]
  %v4174 = vld [vmem:[%s3 + $0x568] sm:$0xff]
  %v4175 = vld [vmem:[%s3 + $0x570] sm:$0xff]
  %v4176 = vld [vmem:[%s3 + $0x578] sm:$0xff]
  %v4177 = vld [vmem:[%s3 + $0x580] sm:$0xff]
  %v4178 = vld [vmem:[%s3 + $0x588] sm:$0xff]
  %v4179 = vld [vmem:[%s3 + $0x590] sm:$0xff]
  %v4180 = vld [vmem:[%s3 + $0x598] sm:$0xff]
  %v4181 = vld [vmem:[%s3 + $0x5a0] sm:$0xff]
  %v4182 = vld [vmem:[%s3 + $0x5a8] sm:$0xff]
  %v4183 = vld [vmem:[%s3 + $0x5b0] sm:$0xff]
  %v4184 = vld [vmem:[%s3 + $0x5b8] sm:$0xff]
  %v4185 = vld [vmem:[%s3 + $0x5c0] sm:$0xff]
  %v4186 = vld [vmem:[%s3 + $0x5c8] sm:$0xff]
  %v4187 = vld [vmem:[%s3 + $0x5d0] sm:$0xff]
  %v4188 = vld [vmem:[%s3 + $0x5d8] sm:$0xff]
  %v4189 = vld [vmem:[%s3 + $0x5e0] sm:$0xff]
  %v4190 = vld [vmem:[%s3 + $0x5e8] sm:$0xff]
  %v4191 = vld [vmem:[%s3 + $0x5f0] sm:$0xff]
  %v4192 = vld [vmem:[%s3 + $0x5f8] sm:$0xff]
  %v4193 = vld [vmem:[%s3 + $0x600] sm:$0xff]
  %v4194 = vld [vmem:[%s3 + $0x608] sm:$0xff]
  %v4195 = vld [vmem:[%s3 + $0x610] sm:$0xff]
  %v4196 = vld [vmem:[%s3 + $0x618] sm:$0xff]
  %v4197 = vld [vmem:[%s3 + $0x620] sm:$0xff]
  %v4198 = vld [vmem:[%s3 + $0x628] sm:$0xff]
  %v4199 = vld [vmem:[%s3 + $0x630] sm:$0xff]
  %v4200 = vld [vmem:[%s3 + $0x638] sm:$0xff]
  %v4201 = vld [vmem:[%s3 + $0x640] sm:$0xff]
  %v4202 = vld [vmem:[%s3 + $0x648] sm:$0xff]
  %v4203 = vld [vmem:[%s3 + $0x650] sm:$0xff]
  %v4204 = vld [vmem:[%s3 + $0x658] sm:$0xff]
  %v4205 = vld [vmem:[%s3 + $0x660] sm:$0xff]
  %v4206 = vld [vmem:[%s3 + $0x668] sm:$0xff]
  %v4207 = vld [vmem:[%s3 + $0x670] sm:$0xff]
  %v4208 = vld [vmem:[%s3 + $0x678] sm:$0xff]
  %v4209 = vld [vmem:[%s3 + $0x680] sm:$0xff]
  %v4210 = vld [vmem:[%s3 + $0x688] sm:$0xff]
  %v4211 = vld [vmem:[%s3 + $0x690] sm:$0xff]
  %v4212 = vld [vmem:[%s3 + $0x698] sm:$0xff]
  %v4213 = vld [vmem:[%s3 + $0x6a0] sm:$0xff]
  %v4214 = vld [vmem:[%s3 + $0x6a8] sm:$0xff]
  %v4215 = vld [vmem:[%s3 + $0x6b0] sm:$0xff]
  %v4216 = vld [vmem:[%s3 + $0x6b8] sm:$0xff]
  %v4217 = vld [vmem:[%s3 + $0x6c0] sm:$0xff]
  %v4218 = vld [vmem:[%s3 + $0x6c8] sm:$0xff]
  %v4219 = vld [vmem:[%s3 + $0x6d0] sm:$0xff]
  %v4220 = vld [vmem:[%s3 + $0x6d8] sm:$0xff]
  %v4221 = vld [vmem:[%s3 + $0x6e0] sm:$0xff]
  %v4222 = vld [vmem:[%s3 + $0x6e8] sm:$0xff]
  %v4223 = vld [vmem:[%s3 + $0x6f0] sm:$0xff]
  %v4224 = vld [vmem:[%s3 + $0x6f8] sm:$0xff]
  %v4225 = vld [vmem:[%s3 + $0x700] sm:$0xff]
  %v4226 = vld [vmem:[%s3 + $0x708] sm:$0xff]
  %v4227 = vld [vmem:[%s3 + $0x710] sm:$0xff]
  %v4228 = vld [vmem:[%s3 + $0x718] sm:$0xff]
  %v4229 = vld [vmem:[%s3 + $0x720] sm:$0xff]
  %v4230 = vld [vmem:[%s3 + $0x728] sm:$0xff]
  %v4231 = vld [vmem:[%s3 + $0x730] sm:$0xff]
  %v4232 = vld [vmem:[%s3 + $0x738] sm:$0xff]
  %v4233 = vld [vmem:[%s3 + $0x740] sm:$0xff]
  %v4234 = vld [vmem:[%s3 + $0x748] sm:$0xff]
  %v4235 = vld [vmem:[%s3 + $0x750] sm:$0xff]
  %v4236 = vld [vmem:[%s3 + $0x758] sm:$0xff]
  %v4237 = vld [vmem:[%s3 + $0x760] sm:$0xff]
  %v4238 = vld [vmem:[%s3 + $0x768] sm:$0xff]
  %v4239 = vld [vmem:[%s3 + $0x770] sm:$0xff]
  %v4240 = vld [vmem:[%s3 + $0x778] sm:$0xff]
  %v4241 = vld [vmem:[%s3 + $0x780] sm:$0xff]
  %v4242 = vld [vmem:[%s3 + $0x788] sm:$0xff]
  %v4243 = vld [vmem:[%s3 + $0x790] sm:$0xff]
  %v4244 = vld [vmem:[%s3 + $0x798] sm:$0xff]
  %v4245 = vld [vmem:[%s3 + $0x7a0] sm:$0xff]
  %v4246 = vld [vmem:[%s3 + $0x7a8] sm:$0xff]
  %v4247 = vld [vmem:[%s3 + $0x7b0] sm:$0xff]
  %v4248 = vld [vmem:[%s3 + $0x7b8] sm:$0xff]
  %v4249 = vld [vmem:[%s3 + $0x7c0] sm:$0xff]
  %v4250 = vld [vmem:[%s3 + $0x7c8] sm:$0xff]
  %v4251 = vld [vmem:[%s3 + $0x7d0] sm:$0xff]
  %v4252 = vld [vmem:[%s3 + $0x7d8] sm:$0xff]
  %v4253 = vld [vmem:[%s3 + $0x7e0] sm:$0xff]
  %v4254 = vld [vmem:[%s3 + $0x7e8] sm:$0xff]
  %v4255 = vld [vmem:[%s3 + $0x7f0] sm:$0xff]
  %v4256 = vld [vmem:[%s3 + $0x7f8] sm:$0xff]
  %4257 = vmatpush.msra.mxu0 %v4121
  %4258 = vmatpush.msra.mxu0 %v4113
  %4259 = vmatpush.msra.mxu0 %v4105
  %4260 = vmatpush.msra.mxu0 %v4097
  %4261 = vmatpush.msra.mxu0 %v4089
  %4262 = vmatpush.msra.mxu0 %v4081
  %4263 = vmatpush.msra.mxu0 %v4073
  %4264 = vmatpush.msra.mxu0 %v4065
  %4265 = vmatpush.msra.mxu0 %v4057
  %4266 = vmatpush.msra.mxu0 %v4049
  %4267 = vmatpush.msra.mxu0 %v4041
  %4268 = vmatpush.msra.mxu0 %v4033
  %4269 = vmatpush.msra.mxu0 %v4025
  %4270 = vmatpush.msra.mxu0 %v4017
  %4271 = vmatpush.msra.mxu0 %v4009
  %4272 = vmatpush.msra.mxu0 %v4001
  %4273 = vmatmul.f32.gmra.mxu0 %v3989
  %v4274 = vpop.f32.mrf.mxu0
  %v4275 = vadd.f32 0.0, %v4274
  %4276 = vdwg.mxu0
  %4277 = vmatpush.msra.mxu0 %v4249
  %4278 = vmatpush.msra.mxu0 %v4241
  %4279 = vmatpush.msra.mxu0 %v4233
  %4280 = vmatpush.msra.mxu0 %v4225
  %4281 = vmatpush.msra.mxu0 %v4217
  %4282 = vmatpush.msra.mxu0 %v4209
  %4283 = vmatpush.msra.mxu0 %v4201
  %4284 = vmatpush.msra.mxu0 %v4193
  %4285 = vmatpush.msra.mxu0 %v4185
  %4286 = vmatpush.msra.mxu0 %v4177
  %4287 = vmatpush.msra.mxu0 %v4169
  %4288 = vmatpush.msra.mxu0 %v4161
  %4289 = vmatpush.msra.mxu0 %v4153
  %4290 = vmatpush.msra.mxu0 %v4145
  %4291 = vmatpush.msra.mxu0 %v4137
  %4292 = vmatpush.msra.mxu0 %v4129
  %4293 = vmatmul.f32.gmra.mxu0 %v3990
  %v4294 = vpop.f32.mrf.mxu0
  %v4295 = vadd.f32 %v4275, %v4294
  %4296 = vdwg.mxu0
  %4297 = vmatpush.msra.mxu0 %v4122
  %4298 = vmatpush.msra.mxu0 %v4114
  %4299 = vmatpush.msra.mxu0 %v4106
  %4300 = vmatpush.msra.mxu0 %v4098
  %4301 = vmatpush.msra.mxu0 %v4090
  %4302 = vmatpush.msra.mxu0 %v4082
  %4303 = vmatpush.msra.mxu0 %v4074
  %4304 = vmatpush.msra.mxu0 %v4066
  %4305 = vmatpush.msra.mxu0 %v4058
  %4306 = vmatpush.msra.mxu0 %v4050
  %4307 = vmatpush.msra.mxu0 %v4042
  %4308 = vmatpush.msra.mxu0 %v4034
  %4309 = vmatpush.msra.mxu0 %v4026
  %4310 = vmatpush.msra.mxu0 %v4018
  %4311 = vmatpush.msra.mxu0 %v4010
  %4312 = vmatpush.msra.mxu0 %v4002
  %4313 = vmatmul.f32.gmra.mxu0 %v3989
  %v4314 = vpop.f32.mrf.mxu0
  %v4315 = vadd.f32 0.0, %v4314
  %4316 = vdwg.mxu0
  %4317 = vmatpush.msra.mxu0 %v4250
  %4318 = vmatpush.msra.mxu0 %v4242
  %4319 = vmatpush.msra.mxu0 %v4234
  %4320 = vmatpush.msra.mxu0 %v4226
  %4321 = vmatpush.msra.mxu0 %v4218
  %4322 = vmatpush.msra.mxu0 %v4210
  %4323 = vmatpush.msra.mxu0 %v4202
  %4324 = vmatpush.msra.mxu0 %v4194
  %4325 = vmatpush.msra.mxu0 %v4186
  %4326 = vmatpush.msra.mxu0 %v4178
  %4327 = vmatpush.msra.mxu0 %v4170
  %4328 = vmatpush.msra.mxu0 %v4162
  %4329 = vmatpush.msra.mxu0 %v4154
  %4330 = vmatpush.msra.mxu0 %v4146
  %4331 = vmatpush.msra.mxu0 %v4138
  %4332 = vmatpush.msra.mxu0 %v4130
  %4333 = vmatmul.f32.gmra.mxu0 %v3990
  %v4334 = vpop.f32.mrf.mxu0
  %v4335 = vadd.f32 %v4315, %v4334
  %4336 = vdwg.mxu0
  %4337 = vmatpush.msra.mxu0 %v4123
  %4338 = vmatpush.msra.mxu0 %v4115
  %4339 = vmatpush.msra.mxu0 %v4107
  %4340 = vmatpush.msra.mxu0 %v4099
  %4341 = vmatpush.msra.mxu0 %v4091
  %4342 = vmatpush.msra.mxu0 %v4083
  %4343 = vmatpush.msra.mxu0 %v4075
  %4344 = vmatpush.msra.mxu0 %v4067
  %4345 = vmatpush.msra.mxu0 %v4059
  %4346 = vmatpush.msra.mxu0 %v4051
  %4347 = vmatpush.msra.mxu0 %v4043
  %4348 = vmatpush.msra.mxu0 %v4035
  %4349 = vmatpush.msra.mxu0 %v4027
  %4350 = vmatpush.msra.mxu0 %v4019
  %4351 = vmatpush.msra.mxu0 %v4011
  %4352 = vmatpush.msra.mxu0 %v4003
  %4353 = vmatmul.f32.gmra.mxu0 %v3989
  %v4354 = vpop.f32.mrf.mxu0
  %v4355 = vadd.f32 0.0, %v4354
  %4356 = vdwg.mxu0
  %4357 = vmatpush.msra.mxu0 %v4251
  %4358 = vmatpush.msra.mxu0 %v4243
  %4359 = vmatpush.msra.mxu0 %v4235
  %4360 = vmatpush.msra.mxu0 %v4227
  %4361 = vmatpush.msra.mxu0 %v4219
  %4362 = vmatpush.msra.mxu0 %v4211
  %4363 = vmatpush.msra.mxu0 %v4203
  %4364 = vmatpush.msra.mxu0 %v4195
  %4365 = vmatpush.msra.mxu0 %v4187
  %4366 = vmatpush.msra.mxu0 %v4179
  %4367 = vmatpush.msra.mxu0 %v4171
  %4368 = vmatpush.msra.mxu0 %v4163
  %4369 = vmatpush.msra.mxu0 %v4155
  %4370 = vmatpush.msra.mxu0 %v4147
  %4371 = vmatpush.msra.mxu0 %v4139
  %4372 = vmatpush.msra.mxu0 %v4131
  %4373 = vmatmul.f32.gmra.mxu0 %v3990
  %v4374 = vpop.f32.mrf.mxu0
  %v4375 = vadd.f32 %v4355, %v4374
  %4376 = vdwg.mxu0
  %4377 = vmatpush.msra.mxu0 %v4124
  %4378 = vmatpush.msra.mxu0 %v4116
  %4379 = vmatpush.msra.mxu0 %v4108
  %4380 = vmatpush.msra.mxu0 %v4100
  %4381 = vmatpush.msra.mxu0 %v4092
  %4382 = vmatpush.msra.mxu0 %v4084
  %4383 = vmatpush.msra.mxu0 %v4076
  %4384 = vmatpush.msra.mxu0 %v4068
  %4385 = vmatpush.msra.mxu0 %v4060
  %4386 = vmatpush.msra.mxu0 %v4052
  %4387 = vmatpush.msra.mxu0 %v4044
  %4388 = vmatpush.msra.mxu0 %v4036
  %4389 = vmatpush.msra.mxu0 %v4028
  %4390 = vmatpush.msra.mxu0 %v4020
  %4391 = vmatpush.msra.mxu0 %v4012
  %4392 = vmatpush.msra.mxu0 %v4004
  %4393 = vmatmul.f32.gmra.mxu0 %v3989
  %v4394 = vpop.f32.mrf.mxu0
  %v4395 = vadd.f32 0.0, %v4394
  %4396 = vdwg.mxu0
  %4397 = vmatpush.msra.mxu0 %v4252
  %4398 = vmatpush.msra.mxu0 %v4244
  %4399 = vmatpush.msra.mxu0 %v4236
  %4400 = vmatpush.msra.mxu0 %v4228
  %4401 = vmatpush.msra.mxu0 %v4220
  %4402 = vmatpush.msra.mxu0 %v4212
  %4403 = vmatpush.msra.mxu0 %v4204
  %4404 = vmatpush.msra.mxu0 %v4196
  %4405 = vmatpush.msra.mxu0 %v4188
  %4406 = vmatpush.msra.mxu0 %v4180
  %4407 = vmatpush.msra.mxu0 %v4172
  %4408 = vmatpush.msra.mxu0 %v4164
  %4409 = vmatpush.msra.mxu0 %v4156
  %4410 = vmatpush.msra.mxu0 %v4148
  %4411 = vmatpush.msra.mxu0 %v4140
  %4412 = vmatpush.msra.mxu0 %v4132
  %4413 = vmatmul.f32.gmra.mxu0 %v3990
  %v4414 = vpop.f32.mrf.mxu0
  %v4415 = vadd.f32 %v4395, %v4414
  %4416 = vdwg.mxu0
  %4417 = vmatpush.msra.mxu0 %v4125
  %4418 = vmatpush.msra.mxu0 %v4117
  %4419 = vmatpush.msra.mxu0 %v4109
  %4420 = vmatpush.msra.mxu0 %v4101
  %4421 = vmatpush.msra.mxu0 %v4093
  %4422 = vmatpush.msra.mxu0 %v4085
  %4423 = vmatpush.msra.mxu0 %v4077
  %4424 = vmatpush.msra.mxu0 %v4069
  %4425 = vmatpush.msra.mxu0 %v4061
  %4426 = vmatpush.msra.mxu0 %v4053
  %4427 = vmatpush.msra.mxu0 %v4045
  %4428 = vmatpush.msra.mxu0 %v4037
  %4429 = vmatpush.msra.mxu0 %v4029
  %4430 = vmatpush.msra.mxu0 %v4021
  %4431 = vmatpush.msra.mxu0 %v4013
  %4432 = vmatpush.msra.mxu0 %v4005
  %4433 = vmatmul.f32.gmra.mxu0 %v3989
  %v4434 = vpop.f32.mrf.mxu0
  %v4435 = vadd.f32 0.0, %v4434
  %4436 = vdwg.mxu0
  %4437 = vmatpush.msra.mxu0 %v4253
  %4438 = vmatpush.msra.mxu0 %v4245
  %4439 = vmatpush.msra.mxu0 %v4237
  %4440 = vmatpush.msra.mxu0 %v4229
  %4441 = vmatpush.msra.mxu0 %v4221
  %4442 = vmatpush.msra.mxu0 %v4213
  %4443 = vmatpush.msra.mxu0 %v4205
  %4444 = vmatpush.msra.mxu0 %v4197
  %4445 = vmatpush.msra.mxu0 %v4189
  %4446 = vmatpush.msra.mxu0 %v4181
  %4447 = vmatpush.msra.mxu0 %v4173
  %4448 = vmatpush.msra.mxu0 %v4165
  %4449 = vmatpush.msra.mxu0 %v4157
  %4450 = vmatpush.msra.mxu0 %v4149
  %4451 = vmatpush.msra.mxu0 %v4141
  %4452 = vmatpush.msra.mxu0 %v4133
  %4453 = vmatmul.f32.gmra.mxu0 %v3990
  %v4454 = vpop.f32.mrf.mxu0
  %v4455 = vadd.f32 %v4435, %v4454
  %4456 = vdwg.mxu0
  %4457 = vmatpush.msra.mxu0 %v4126
  %4458 = vmatpush.msra.mxu0 %v4118
  %4459 = vmatpush.msra.mxu0 %v4110
  %4460 = vmatpush.msra.mxu0 %v4102
  %4461 = vmatpush.msra.mxu0 %v4094
  %4462 = vmatpush.msra.mxu0 %v4086
  %4463 = vmatpush.msra.mxu0 %v4078
  %4464 = vmatpush.msra.mxu0 %v4070
  %4465 = vmatpush.msra.mxu0 %v4062
  %4466 = vmatpush.msra.mxu0 %v4054
  %4467 = vmatpush.msra.mxu0 %v4046
  %4468 = vmatpush.msra.mxu0 %v4038
  %4469 = vmatpush.msra.mxu0 %v4030
  %4470 = vmatpush.msra.mxu0 %v4022
  %4471 = vmatpush.msra.mxu0 %v4014
  %4472 = vmatpush.msra.mxu0 %v4006
  %4473 = vmatmul.f32.gmra.mxu0 %v3989
  %v4474 = vpop.f32.mrf.mxu0
  %v4475 = vadd.f32 0.0, %v4474
  %4476 = vdwg.mxu0
  %4477 = vmatpush.msra.mxu0 %v4254
  %4478 = vmatpush.msra.mxu0 %v4246
  %4479 = vmatpush.msra.mxu0 %v4238
  %4480 = vmatpush.msra.mxu0 %v4230
  %4481 = vmatpush.msra.mxu0 %v4222
  %4482 = vmatpush.msra.mxu0 %v4214
  %4483 = vmatpush.msra.mxu0 %v4206
  %4484 = vmatpush.msra.mxu0 %v4198
  %4485 = vmatpush.msra.mxu0 %v4190
  %4486 = vmatpush.msra.mxu0 %v4182
  %4487 = vmatpush.msra.mxu0 %v4174
  %4488 = vmatpush.msra.mxu0 %v4166
  %4489 = vmatpush.msra.mxu0 %v4158
  %4490 = vmatpush.msra.mxu0 %v4150
  %4491 = vmatpush.msra.mxu0 %v4142
  %4492 = vmatpush.msra.mxu0 %v4134
  %4493 = vmatmul.f32.gmra.mxu0 %v3990
  %v4494 = vpop.f32.mrf.mxu0
  %v4495 = vadd.f32 %v4475, %v4494
  %4496 = vdwg.mxu0
  %4497 = vmatpush.msra.mxu0 %v4127
  %4498 = vmatpush.msra.mxu0 %v4119
  %4499 = vmatpush.msra.mxu0 %v4111
  %4500 = vmatpush.msra.mxu0 %v4103
  %4501 = vmatpush.msra.mxu0 %v4095
  %4502 = vmatpush.msra.mxu0 %v4087
  %4503 = vmatpush.msra.mxu0 %v4079
  %4504 = vmatpush.msra.mxu0 %v4071
  %4505 = vmatpush.msra.mxu0 %v4063
  %4506 = vmatpush.msra.mxu0 %v4055
  %4507 = vmatpush.msra.mxu0 %v4047
  %4508 = vmatpush.msra.mxu0 %v4039
  %4509 = vmatpush.msra.mxu0 %v4031
  %4510 = vmatpush.msra.mxu0 %v4023
  %4511 = vmatpush.msra.mxu0 %v4015
  %4512 = vmatpush.msra.mxu0 %v4007
  %4513 = vmatmul.f32.gmra.mxu0 %v3989
  %v4514 = vpop.f32.mrf.mxu0
  %v4515 = vadd.f32 0.0, %v4514
  %4516 = vdwg.mxu0
  %4517 = vmatpush.msra.mxu0 %v4255
  %4518 = vmatpush.msra.mxu0 %v4247
  %4519 = vmatpush.msra.mxu0 %v4239
  %4520 = vmatpush.msra.mxu0 %v4231
  %4521 = vmatpush.msra.mxu0 %v4223
  %4522 = vmatpush.msra.mxu0 %v4215
  %4523 = vmatpush.msra.mxu0 %v4207
  %4524 = vmatpush.msra.mxu0 %v4199
  %4525 = vmatpush.msra.mxu0 %v4191
  %4526 = vmatpush.msra.mxu0 %v4183
  %4527 = vmatpush.msra.mxu0 %v4175
  %4528 = vmatpush.msra.mxu0 %v4167
  %4529 = vmatpush.msra.mxu0 %v4159
  %4530 = vmatpush.msra.mxu0 %v4151
  %4531 = vmatpush.msra.mxu0 %v4143
  %4532 = vmatpush.msra.mxu0 %v4135
  %4533 = vmatmul.f32.gmra.mxu0 %v3990
  %v4534 = vpop.f32.mrf.mxu0
  %v4535 = vadd.f32 %v4515, %v4534
  %4536 = vdwg.mxu0
  %4537 = vmatpush.msra.mxu0 %v4128
  %4538 = vmatpush.msra.mxu0 %v4120
  %4539 = vmatpush.msra.mxu0 %v4112
  %4540 = vmatpush.msra.mxu0 %v4104
  %4541 = vmatpush.msra.mxu0 %v4096
  %4542 = vmatpush.msra.mxu0 %v4088
  %4543 = vmatpush.msra.mxu0 %v4080
  %4544 = vmatpush.msra.mxu0 %v4072
  %4545 = vmatpush.msra.mxu0 %v4064
  %4546 = vmatpush.msra.mxu0 %v4056
  %4547 = vmatpush.msra.mxu0 %v4048
  %4548 = vmatpush.msra.mxu0 %v4040
  %4549 = vmatpush.msra.mxu0 %v4032
  %4550 = vmatpush.msra.mxu0 %v4024
  %4551 = vmatpush.msra.mxu0 %v4016
  %4552 = vmatpush.msra.mxu0 %v4008
  %4553 = vmatmul.f32.gmra.mxu0 %v3989
  %v4554 = vpop.f32.mrf.mxu0
  %v4555 = vadd.f32 0.0, %v4554
  %4556 = vdwg.mxu0
  %4557 = vmatpush.msra.mxu0 %v4256
  %4558 = vmatpush.msra.mxu0 %v4248
  %4559 = vmatpush.msra.mxu0 %v4240
  %4560 = vmatpush.msra.mxu0 %v4232
  %4561 = vmatpush.msra.mxu0 %v4224
  %4562 = vmatpush.msra.mxu0 %v4216
  %4563 = vmatpush.msra.mxu0 %v4208
  %4564 = vmatpush.msra.mxu0 %v4200
  %4565 = vmatpush.msra.mxu0 %v4192
  %4566 = vmatpush.msra.mxu0 %v4184
  %4567 = vmatpush.msra.mxu0 %v4176
  %4568 = vmatpush.msra.mxu0 %v4168
  %4569 = vmatpush.msra.mxu0 %v4160
  %4570 = vmatpush.msra.mxu0 %v4152
  %4571 = vmatpush.msra.mxu0 %v4144
  %4572 = vmatpush.msra.mxu0 %v4136
  %4573 = vmatmul.f32.gmra.mxu0 %v3990
  %v4574 = vpop.f32.mrf.mxu0
  %v4575 = vadd.f32 %v4555, %v4574
  %4576 = vdwg.mxu0
  %v4577 = vadd.f32 %v3993, %v4295
  %v4578 = vadd.f32 %v3994, %v4335
  %v4579 = vadd.f32 %v3995, %v4375
  %v4580 = vadd.f32 %v3996, %v4415
  %v4581 = vadd.f32 %v3997, %v4455
  %v4582 = vadd.f32 %v3998, %v4495
  %v4583 = vadd.f32 %v3999, %v4535
  %v4584 = vadd.f32 %v4000, %v4575
  %v4585 = vxor.u32 %v4577, 2147483648
  %v4586 = vxor.u32 %v4578, 2147483648
  %v4587 = vxor.u32 %v4579, 2147483648
  %v4588 = vxor.u32 %v4580, 2147483648
  %v4589 = vxor.u32 %v4581, 2147483648
  %v4590 = vxor.u32 %v4582, 2147483648
  %v4591 = vmul.f32 %v4585, 1.442695
  %v4592 = vpow.pop %v4591
  %v4593 = vmul.f32 %v4586, 1.442695
  %v4594 = vpow.pop %v4593
  %v4595 = vmul.f32 %v4587, 1.442695
  %v4596 = vpow.pop %v4595
  %v4597 = vmul.f32 %v4588, 1.442695
  %v4598 = vpow.pop %v4597
  %v4599 = vmul.f32 %v4589, 1.442695
  %v4600 = vpow.pop %v4599
  %v4601 = vmul.f32 %v4590, 1.442695
  %v4602 = vpow.pop %v4601
  %v4603 = vadd.f32 %v4592, 1.0
  %v4604 = vadd.f32 %v4594, 1.0
  %v4605 = vadd.f32 %v4596, 1.0
  %v4606 = vadd.f32 %v4598, 1.0
  %v4607 = vadd.f32 %v4600, 1.0
  %v4608 = vadd.f32 %v4602, 1.0
  %v4609 = vrcp.pop %v4603
  %v4610 = vmul.f32 %v4603, %v4609
  %v4611 = vsub.f32 1.0, %v4610
  %v4612 = vmul.f32 %v4609, %v4611
  %v4613 = vadd.f32 %v4609, %v4612
  %vm4614 = vweird.f32 %v4603
  %vm4615 = vweird.f32 %v4609
  %vm4616 = vmor %vm4614, %vm4615
  %v4617 = vsel %vm4616, %v4609, %v4613
  %v4618 = vand.u32 2147483647, %v4603
  %vm4619 = vcmp.eq.f32.partialorder %v4618, 8.507059e+37
  %v4620 = vand.u32 %v4603, 2147483648
  %v4621 = vor.u32 1.1754944e-38, %v4620
  %v4622 = vsel %vm4619, %v4621, %v4617
  %v4623 = vmul.f32 1.0, %v4622
  %v4624 = vrcp.pop %v4604
  %v4625 = vmul.f32 %v4604, %v4624
  %v4626 = vsub.f32 1.0, %v4625
  %v4627 = vmul.f32 %v4624, %v4626
  %v4628 = vadd.f32 %v4624, %v4627
  %vm4629 = vweird.f32 %v4604
  %vm4630 = vweird.f32 %v4624
  %vm4631 = vmor %vm4629, %vm4630
  %v4632 = vsel %vm4631, %v4624, %v4628
  %v4633 = vand.u32 2147483647, %v4604
  %vm4634 = vcmp.eq.f32.partialorder %v4633, 8.507059e+37
  %v4635 = vand.u32 %v4604, 2147483648
  %v4636 = vor.u32 1.1754944e-38, %v4635
  %v4637 = vsel %vm4634, %v4636, %v4632
  %v4638 = vmul.f32 1.0, %v4637
  %v4639 = vrcp.pop %v4605
  %v4640 = vmul.f32 %v4605, %v4639
  %v4641 = vsub.f32 1.0, %v4640
  %v4642 = vmul.f32 %v4639, %v4641
  %v4643 = vadd.f32 %v4639, %v4642
  %vm4644 = vweird.f32 %v4605
  %vm4645 = vweird.f32 %v4639
  %vm4646 = vmor %vm4644, %vm4645
  %v4647 = vsel %vm4646, %v4639, %v4643
  %v4648 = vand.u32 2147483647, %v4605
  %vm4649 = vcmp.eq.f32.partialorder %v4648, 8.507059e+37
  %v4650 = vand.u32 %v4605, 2147483648
  %v4651 = vor.u32 1.1754944e-38, %v4650
  %v4652 = vsel %vm4649, %v4651, %v4647
  %v4653 = vmul.f32 1.0, %v4652
  %v4654 = vrcp.pop %v4606
  %v4655 = vmul.f32 %v4606, %v4654
  %v4656 = vsub.f32 1.0, %v4655
  %v4657 = vmul.f32 %v4654, %v4656
  %v4658 = vadd.f32 %v4654, %v4657
  %vm4659 = vweird.f32 %v4606
  %vm4660 = vweird.f32 %v4654
  %vm4661 = vmor %vm4659, %vm4660
  %v4662 = vsel %vm4661, %v4654, %v4658
  %v4663 = vand.u32 2147483647, %v4606
  %vm4664 = vcmp.eq.f32.partialorder %v4663, 8.507059e+37
  %v4665 = vand.u32 %v4606, 2147483648
  %v4666 = vor.u32 1.1754944e-38, %v4665
  %v4667 = vsel %vm4664, %v4666, %v4662
  %v4668 = vmul.f32 1.0, %v4667
  %v4669 = vrcp.pop %v4607
  %v4670 = vmul.f32 %v4607, %v4669
  %v4671 = vsub.f32 1.0, %v4670
  %v4672 = vmul.f32 %v4669, %v4671
  %v4673 = vadd.f32 %v4669, %v4672
  %vm4674 = vweird.f32 %v4607
  %vm4675 = vweird.f32 %v4669
  %vm4676 = vmor %vm4674, %vm4675
  %v4677 = vsel %vm4676, %v4669, %v4673
  %v4678 = vand.u32 2147483647, %v4607
  %vm4679 = vcmp.eq.f32.partialorder %v4678, 8.507059e+37
  %v4680 = vand.u32 %v4607, 2147483648
  %v4681 = vor.u32 1.1754944e-38, %v4680
  %v4682 = vsel %vm4679, %v4681, %v4677
  %v4683 = vmul.f32 1.0, %v4682
  %v4684 = vrcp.pop %v4608
  %v4685 = vmul.f32 %v4608, %v4684
  %v4686 = vsub.f32 1.0, %v4685
  %v4687 = vmul.f32 %v4684, %v4686
  %v4688 = vadd.f32 %v4684, %v4687
  %vm4689 = vweird.f32 %v4608
  %vm4690 = vweird.f32 %v4684
  %vm4691 = vmor %vm4689, %vm4690
  %v4692 = vsel %vm4691, %v4684, %v4688
  %v4693 = vand.u32 2147483647, %v4608
  %vm4694 = vcmp.eq.f32.partialorder %v4693, 8.507059e+37
  %v4695 = vand.u32 %v4608, 2147483648
  %v4696 = vor.u32 1.1754944e-38, %v4695
  %v4697 = vsel %vm4694, %v4696, %v4692
  %v4698 = vmul.f32 1.0, %v4697
  %v4699 = vtanh.pop %v4583
  %v4700 = vtanh.pop %v4584
  %v4701 = vmul.f32 %v4653, %v3985
  %v4702 = vmul.f32 %v4668, %v3986
  %v4703 = vmul.f32 %v4623, %v4699
  %v4704 = vmul.f32 %v4638, %v4700
  %v4705 = vadd.f32 %v4701, %v4703
  %v4706 = vadd.f32 %v4702, %v4704
  %v4707 = vtanh.pop %v4705
  %v4708 = vtanh.pop %v4706
  %v4709 = vmul.f32 %v4683, %v4707
  %v4710 = vmul.f32 %v4698, %v4708
  %4711 = vst [vmem:[#allocation3 + $0x40] sm:$0xff] %v4709
  %4712 = vst [vmem:[#allocation3 + $0x38] sm:$0xff] %v4710
  %v4713 = vld [vmem:[#allocation2 + $0x140] sm:$0xff]
  %v4714 = vld [vmem:[#allocation2 + $0x148] sm:$0xff]
  %v4715 = vld [vmem:[#allocation2 + $0x150] sm:$0xff]
  %v4716 = vld [vmem:[#allocation2 + $0x158] sm:$0xff]
  %v4717 = vld [vmem:[#allocation2 + $0x160] sm:$0xff]
  %v4718 = vld [vmem:[#allocation2 + $0x168] sm:$0xff]
  %v4719 = vld [vmem:[#allocation2 + $0x170] sm:$0xff]
  %v4720 = vld [vmem:[#allocation2 + $0x178] sm:$0xff]
  %v4721 = vld [vmem:[%s3] sm:$0xff]
  %v4722 = vld [vmem:[%s3 + $0x8] sm:$0xff]
  %v4723 = vld [vmem:[%s3 + $0x10] sm:$0xff]
  %v4724 = vld [vmem:[%s3 + $0x18] sm:$0xff]
  %v4725 = vld [vmem:[%s3 + $0x20] sm:$0xff]
  %v4726 = vld [vmem:[%s3 + $0x28] sm:$0xff]
  %v4727 = vld [vmem:[%s3 + $0x30] sm:$0xff]
  %v4728 = vld [vmem:[%s3 + $0x38] sm:$0xff]
  %v4729 = vld [vmem:[%s3 + $0x40] sm:$0xff]
  %v4730 = vld [vmem:[%s3 + $0x48] sm:$0xff]
  %v4731 = vld [vmem:[%s3 + $0x50] sm:$0xff]
  %v4732 = vld [vmem:[%s3 + $0x58] sm:$0xff]
  %v4733 = vld [vmem:[%s3 + $0x60] sm:$0xff]
  %v4734 = vld [vmem:[%s3 + $0x68] sm:$0xff]
  %v4735 = vld [vmem:[%s3 + $0x70] sm:$0xff]
  %v4736 = vld [vmem:[%s3 + $0x78] sm:$0xff]
  %v4737 = vld [vmem:[%s3 + $0x80] sm:$0xff]
  %v4738 = vld [vmem:[%s3 + $0x88] sm:$0xff]
  %v4739 = vld [vmem:[%s3 + $0x90] sm:$0xff]
  %v4740 = vld [vmem:[%s3 + $0x98] sm:$0xff]
  %v4741 = vld [vmem:[%s3 + $0xa0] sm:$0xff]
  %v4742 = vld [vmem:[%s3 + $0xa8] sm:$0xff]
  %v4743 = vld [vmem:[%s3 + $0xb0] sm:$0xff]
  %v4744 = vld [vmem:[%s3 + $0xb8] sm:$0xff]
  %v4745 = vld [vmem:[%s3 + $0xc0] sm:$0xff]
  %v4746 = vld [vmem:[%s3 + $0xc8] sm:$0xff]
  %v4747 = vld [vmem:[%s3 + $0xd0] sm:$0xff]
  %v4748 = vld [vmem:[%s3 + $0xd8] sm:$0xff]
  %v4749 = vld [vmem:[%s3 + $0xe0] sm:$0xff]
  %v4750 = vld [vmem:[%s3 + $0xe8] sm:$0xff]
  %v4751 = vld [vmem:[%s3 + $0xf0] sm:$0xff]
  %v4752 = vld [vmem:[%s3 + $0xf8] sm:$0xff]
  %v4753 = vld [vmem:[%s3 + $0x100] sm:$0xff]
  %v4754 = vld [vmem:[%s3 + $0x108] sm:$0xff]
  %v4755 = vld [vmem:[%s3 + $0x110] sm:$0xff]
  %v4756 = vld [vmem:[%s3 + $0x118] sm:$0xff]
  %v4757 = vld [vmem:[%s3 + $0x120] sm:$0xff]
  %v4758 = vld [vmem:[%s3 + $0x128] sm:$0xff]
  %v4759 = vld [vmem:[%s3 + $0x130] sm:$0xff]
  %v4760 = vld [vmem:[%s3 + $0x138] sm:$0xff]
  %v4761 = vld [vmem:[%s3 + $0x140] sm:$0xff]
  %v4762 = vld [vmem:[%s3 + $0x148] sm:$0xff]
  %v4763 = vld [vmem:[%s3 + $0x150] sm:$0xff]
  %v4764 = vld [vmem:[%s3 + $0x158] sm:$0xff]
  %v4765 = vld [vmem:[%s3 + $0x160] sm:$0xff]
  %v4766 = vld [vmem:[%s3 + $0x168] sm:$0xff]
  %v4767 = vld [vmem:[%s3 + $0x170] sm:$0xff]
  %v4768 = vld [vmem:[%s3 + $0x178] sm:$0xff]
  %v4769 = vld [vmem:[%s3 + $0x180] sm:$0xff]
  %v4770 = vld [vmem:[%s3 + $0x188] sm:$0xff]
  %v4771 = vld [vmem:[%s3 + $0x190] sm:$0xff]
  %v4772 = vld [vmem:[%s3 + $0x198] sm:$0xff]
  %v4773 = vld [vmem:[%s3 + $0x1a0] sm:$0xff]
  %v4774 = vld [vmem:[%s3 + $0x1a8] sm:$0xff]
  %v4775 = vld [vmem:[%s3 + $0x1b0] sm:$0xff]
  %v4776 = vld [vmem:[%s3 + $0x1b8] sm:$0xff]
  %v4777 = vld [vmem:[%s3 + $0x1c0] sm:$0xff]
  %v4778 = vld [vmem:[%s3 + $0x1c8] sm:$0xff]
  %v4779 = vld [vmem:[%s3 + $0x1d0] sm:$0xff]
  %v4780 = vld [vmem:[%s3 + $0x1d8] sm:$0xff]
  %v4781 = vld [vmem:[%s3 + $0x1e0] sm:$0xff]
  %v4782 = vld [vmem:[%s3 + $0x1e8] sm:$0xff]
  %v4783 = vld [vmem:[%s3 + $0x1f0] sm:$0xff]
  %v4784 = vld [vmem:[%s3 + $0x1f8] sm:$0xff]
  %v4785 = vld [vmem:[%s3 + $0x200] sm:$0xff]
  %v4786 = vld [vmem:[%s3 + $0x208] sm:$0xff]
  %v4787 = vld [vmem:[%s3 + $0x210] sm:$0xff]
  %v4788 = vld [vmem:[%s3 + $0x218] sm:$0xff]
  %v4789 = vld [vmem:[%s3 + $0x220] sm:$0xff]
  %v4790 = vld [vmem:[%s3 + $0x228] sm:$0xff]
  %v4791 = vld [vmem:[%s3 + $0x230] sm:$0xff]
  %v4792 = vld [vmem:[%s3 + $0x238] sm:$0xff]
  %v4793 = vld [vmem:[%s3 + $0x240] sm:$0xff]
  %v4794 = vld [vmem:[%s3 + $0x248] sm:$0xff]
  %v4795 = vld [vmem:[%s3 + $0x250] sm:$0xff]
  %v4796 = vld [vmem:[%s3 + $0x258] sm:$0xff]
  %v4797 = vld [vmem:[%s3 + $0x260] sm:$0xff]
  %v4798 = vld [vmem:[%s3 + $0x268] sm:$0xff]
  %v4799 = vld [vmem:[%s3 + $0x270] sm:$0xff]
  %v4800 = vld [vmem:[%s3 + $0x278] sm:$0xff]
  %v4801 = vld [vmem:[%s3 + $0x280] sm:$0xff]
  %v4802 = vld [vmem:[%s3 + $0x288] sm:$0xff]
  %v4803 = vld [vmem:[%s3 + $0x290] sm:$0xff]
  %v4804 = vld [vmem:[%s3 + $0x298] sm:$0xff]
  %v4805 = vld [vmem:[%s3 + $0x2a0] sm:$0xff]
  %v4806 = vld [vmem:[%s3 + $0x2a8] sm:$0xff]
  %v4807 = vld [vmem:[%s3 + $0x2b0] sm:$0xff]
  %v4808 = vld [vmem:[%s3 + $0x2b8] sm:$0xff]
  %v4809 = vld [vmem:[%s3 + $0x2c0] sm:$0xff]
  %v4810 = vld [vmem:[%s3 + $0x2c8] sm:$0xff]
  %v4811 = vld [vmem:[%s3 + $0x2d0] sm:$0xff]
  %v4812 = vld [vmem:[%s3 + $0x2d8] sm:$0xff]
  %v4813 = vld [vmem:[%s3 + $0x2e0] sm:$0xff]
  %v4814 = vld [vmem:[%s3 + $0x2e8] sm:$0xff]
  %v4815 = vld [vmem:[%s3 + $0x2f0] sm:$0xff]
  %v4816 = vld [vmem:[%s3 + $0x2f8] sm:$0xff]
  %v4817 = vld [vmem:[%s3 + $0x300] sm:$0xff]
  %v4818 = vld [vmem:[%s3 + $0x308] sm:$0xff]
  %v4819 = vld [vmem:[%s3 + $0x310] sm:$0xff]
  %v4820 = vld [vmem:[%s3 + $0x318] sm:$0xff]
  %v4821 = vld [vmem:[%s3 + $0x320] sm:$0xff]
  %v4822 = vld [vmem:[%s3 + $0x328] sm:$0xff]
  %v4823 = vld [vmem:[%s3 + $0x330] sm:$0xff]
  %v4824 = vld [vmem:[%s3 + $0x338] sm:$0xff]
  %v4825 = vld [vmem:[%s3 + $0x340] sm:$0xff]
  %v4826 = vld [vmem:[%s3 + $0x348] sm:$0xff]
  %v4827 = vld [vmem:[%s3 + $0x350] sm:$0xff]
  %v4828 = vld [vmem:[%s3 + $0x358] sm:$0xff]
  %v4829 = vld [vmem:[%s3 + $0x360] sm:$0xff]
  %v4830 = vld [vmem:[%s3 + $0x368] sm:$0xff]
  %v4831 = vld [vmem:[%s3 + $0x370] sm:$0xff]
  %v4832 = vld [vmem:[%s3 + $0x378] sm:$0xff]
  %v4833 = vld [vmem:[%s3 + $0x380] sm:$0xff]
  %v4834 = vld [vmem:[%s3 + $0x388] sm:$0xff]
  %v4835 = vld [vmem:[%s3 + $0x390] sm:$0xff]
  %v4836 = vld [vmem:[%s3 + $0x398] sm:$0xff]
  %v4837 = vld [vmem:[%s3 + $0x3a0] sm:$0xff]
  %v4838 = vld [vmem:[%s3 + $0x3a8] sm:$0xff]
  %v4839 = vld [vmem:[%s3 + $0x3b0] sm:$0xff]
  %v4840 = vld [vmem:[%s3 + $0x3b8] sm:$0xff]
  %v4841 = vld [vmem:[%s3 + $0x3c0] sm:$0xff]
  %v4842 = vld [vmem:[%s3 + $0x3c8] sm:$0xff]
  %v4843 = vld [vmem:[%s3 + $0x3d0] sm:$0xff]
  %v4844 = vld [vmem:[%s3 + $0x3d8] sm:$0xff]
  %v4845 = vld [vmem:[%s3 + $0x3e0] sm:$0xff]
  %v4846 = vld [vmem:[%s3 + $0x3e8] sm:$0xff]
  %v4847 = vld [vmem:[%s3 + $0x3f0] sm:$0xff]
  %v4848 = vld [vmem:[%s3 + $0x3f8] sm:$0xff]
  %v4849 = vld [vmem:[%s3 + $0x400] sm:$0xff]
  %v4850 = vld [vmem:[%s3 + $0x408] sm:$0xff]
  %v4851 = vld [vmem:[%s3 + $0x410] sm:$0xff]
  %v4852 = vld [vmem:[%s3 + $0x418] sm:$0xff]
  %v4853 = vld [vmem:[%s3 + $0x420] sm:$0xff]
  %v4854 = vld [vmem:[%s3 + $0x428] sm:$0xff]
  %v4855 = vld [vmem:[%s3 + $0x430] sm:$0xff]
  %v4856 = vld [vmem:[%s3 + $0x438] sm:$0xff]
  %v4857 = vld [vmem:[%s3 + $0x440] sm:$0xff]
  %v4858 = vld [vmem:[%s3 + $0x448] sm:$0xff]
  %v4859 = vld [vmem:[%s3 + $0x450] sm:$0xff]
  %v4860 = vld [vmem:[%s3 + $0x458] sm:$0xff]
  %v4861 = vld [vmem:[%s3 + $0x460] sm:$0xff]
  %v4862 = vld [vmem:[%s3 + $0x468] sm:$0xff]
  %v4863 = vld [vmem:[%s3 + $0x470] sm:$0xff]
  %v4864 = vld [vmem:[%s3 + $0x478] sm:$0xff]
  %v4865 = vld [vmem:[%s3 + $0x480] sm:$0xff]
  %v4866 = vld [vmem:[%s3 + $0x488] sm:$0xff]
  %v4867 = vld [vmem:[%s3 + $0x490] sm:$0xff]
  %v4868 = vld [vmem:[%s3 + $0x498] sm:$0xff]
  %v4869 = vld [vmem:[%s3 + $0x4a0] sm:$0xff]
  %v4870 = vld [vmem:[%s3 + $0x4a8] sm:$0xff]
  %v4871 = vld [vmem:[%s3 + $0x4b0] sm:$0xff]
  %v4872 = vld [vmem:[%s3 + $0x4b8] sm:$0xff]
  %v4873 = vld [vmem:[%s3 + $0x4c0] sm:$0xff]
  %v4874 = vld [vmem:[%s3 + $0x4c8] sm:$0xff]
  %v4875 = vld [vmem:[%s3 + $0x4d0] sm:$0xff]
  %v4876 = vld [vmem:[%s3 + $0x4d8] sm:$0xff]
  %v4877 = vld [vmem:[%s3 + $0x4e0] sm:$0xff]
  %v4878 = vld [vmem:[%s3 + $0x4e8] sm:$0xff]
  %v4879 = vld [vmem:[%s3 + $0x4f0] sm:$0xff]
  %v4880 = vld [vmem:[%s3 + $0x4f8] sm:$0xff]
  %v4881 = vld [vmem:[%s3 + $0x500] sm:$0xff]
  %v4882 = vld [vmem:[%s3 + $0x508] sm:$0xff]
  %v4883 = vld [vmem:[%s3 + $0x510] sm:$0xff]
  %v4884 = vld [vmem:[%s3 + $0x518] sm:$0xff]
  %v4885 = vld [vmem:[%s3 + $0x520] sm:$0xff]
  %v4886 = vld [vmem:[%s3 + $0x528] sm:$0xff]
  %v4887 = vld [vmem:[%s3 + $0x530] sm:$0xff]
  %v4888 = vld [vmem:[%s3 + $0x538] sm:$0xff]
  %v4889 = vld [vmem:[%s3 + $0x540] sm:$0xff]
  %v4890 = vld [vmem:[%s3 + $0x548] sm:$0xff]
  %v4891 = vld [vmem:[%s3 + $0x550] sm:$0xff]
  %v4892 = vld [vmem:[%s3 + $0x558] sm:$0xff]
  %v4893 = vld [vmem:[%s3 + $0x560] sm:$0xff]
  %v4894 = vld [vmem:[%s3 + $0x568] sm:$0xff]
  %v4895 = vld [vmem:[%s3 + $0x570] sm:$0xff]
  %v4896 = vld [vmem:[%s3 + $0x578] sm:$0xff]
  %v4897 = vld [vmem:[%s3 + $0x580] sm:$0xff]
  %v4898 = vld [vmem:[%s3 + $0x588] sm:$0xff]
  %v4899 = vld [vmem:[%s3 + $0x590] sm:$0xff]
  %v4900 = vld [vmem:[%s3 + $0x598] sm:$0xff]
  %v4901 = vld [vmem:[%s3 + $0x5a0] sm:$0xff]
  %v4902 = vld [vmem:[%s3 + $0x5a8] sm:$0xff]
  %v4903 = vld [vmem:[%s3 + $0x5b0] sm:$0xff]
  %v4904 = vld [vmem:[%s3 + $0x5b8] sm:$0xff]
  %v4905 = vld [vmem:[%s3 + $0x5c0] sm:$0xff]
  %v4906 = vld [vmem:[%s3 + $0x5c8] sm:$0xff]
  %v4907 = vld [vmem:[%s3 + $0x5d0] sm:$0xff]
  %v4908 = vld [vmem:[%s3 + $0x5d8] sm:$0xff]
  %v4909 = vld [vmem:[%s3 + $0x5e0] sm:$0xff]
  %v4910 = vld [vmem:[%s3 + $0x5e8] sm:$0xff]
  %v4911 = vld [vmem:[%s3 + $0x5f0] sm:$0xff]
  %v4912 = vld [vmem:[%s3 + $0x5f8] sm:$0xff]
  %v4913 = vld [vmem:[%s3 + $0x600] sm:$0xff]
  %v4914 = vld [vmem:[%s3 + $0x608] sm:$0xff]
  %v4915 = vld [vmem:[%s3 + $0x610] sm:$0xff]
  %v4916 = vld [vmem:[%s3 + $0x618] sm:$0xff]
  %v4917 = vld [vmem:[%s3 + $0x620] sm:$0xff]
  %v4918 = vld [vmem:[%s3 + $0x628] sm:$0xff]
  %v4919 = vld [vmem:[%s3 + $0x630] sm:$0xff]
  %v4920 = vld [vmem:[%s3 + $0x638] sm:$0xff]
  %v4921 = vld [vmem:[%s3 + $0x640] sm:$0xff]
  %v4922 = vld [vmem:[%s3 + $0x648] sm:$0xff]
  %v4923 = vld [vmem:[%s3 + $0x650] sm:$0xff]
  %v4924 = vld [vmem:[%s3 + $0x658] sm:$0xff]
  %v4925 = vld [vmem:[%s3 + $0x660] sm:$0xff]
  %v4926 = vld [vmem:[%s3 + $0x668] sm:$0xff]
  %v4927 = vld [vmem:[%s3 + $0x670] sm:$0xff]
  %v4928 = vld [vmem:[%s3 + $0x678] sm:$0xff]
  %v4929 = vld [vmem:[%s3 + $0x680] sm:$0xff]
  %v4930 = vld [vmem:[%s3 + $0x688] sm:$0xff]
  %v4931 = vld [vmem:[%s3 + $0x690] sm:$0xff]
  %v4932 = vld [vmem:[%s3 + $0x698] sm:$0xff]
  %v4933 = vld [vmem:[%s3 + $0x6a0] sm:$0xff]
  %v4934 = vld [vmem:[%s3 + $0x6a8] sm:$0xff]
  %v4935 = vld [vmem:[%s3 + $0x6b0] sm:$0xff]
  %v4936 = vld [vmem:[%s3 + $0x6b8] sm:$0xff]
  %v4937 = vld [vmem:[%s3 + $0x6c0] sm:$0xff]
  %v4938 = vld [vmem:[%s3 + $0x6c8] sm:$0xff]
  %v4939 = vld [vmem:[%s3 + $0x6d0] sm:$0xff]
  %v4940 = vld [vmem:[%s3 + $0x6d8] sm:$0xff]
  %v4941 = vld [vmem:[%s3 + $0x6e0] sm:$0xff]
  %v4942 = vld [vmem:[%s3 + $0x6e8] sm:$0xff]
  %v4943 = vld [vmem:[%s3 + $0x6f0] sm:$0xff]
  %v4944 = vld [vmem:[%s3 + $0x6f8] sm:$0xff]
  %v4945 = vld [vmem:[%s3 + $0x700] sm:$0xff]
  %v4946 = vld [vmem:[%s3 + $0x708] sm:$0xff]
  %v4947 = vld [vmem:[%s3 + $0x710] sm:$0xff]
  %v4948 = vld [vmem:[%s3 + $0x718] sm:$0xff]
  %v4949 = vld [vmem:[%s3 + $0x720] sm:$0xff]
  %v4950 = vld [vmem:[%s3 + $0x728] sm:$0xff]
  %v4951 = vld [vmem:[%s3 + $0x730] sm:$0xff]
  %v4952 = vld [vmem:[%s3 + $0x738] sm:$0xff]
  %v4953 = vld [vmem:[%s3 + $0x740] sm:$0xff]
  %v4954 = vld [vmem:[%s3 + $0x748] sm:$0xff]
  %v4955 = vld [vmem:[%s3 + $0x750] sm:$0xff]
  %v4956 = vld [vmem:[%s3 + $0x758] sm:$0xff]
  %v4957 = vld [vmem:[%s3 + $0x760] sm:$0xff]
  %v4958 = vld [vmem:[%s3 + $0x768] sm:$0xff]
  %v4959 = vld [vmem:[%s3 + $0x770] sm:$0xff]
  %v4960 = vld [vmem:[%s3 + $0x778] sm:$0xff]
  %v4961 = vld [vmem:[%s3 + $0x780] sm:$0xff]
  %v4962 = vld [vmem:[%s3 + $0x788] sm:$0xff]
  %v4963 = vld [vmem:[%s3 + $0x790] sm:$0xff]
  %v4964 = vld [vmem:[%s3 + $0x798] sm:$0xff]
  %v4965 = vld [vmem:[%s3 + $0x7a0] sm:$0xff]
  %v4966 = vld [vmem:[%s3 + $0x7a8] sm:$0xff]
  %v4967 = vld [vmem:[%s3 + $0x7b0] sm:$0xff]
  %v4968 = vld [vmem:[%s3 + $0x7b8] sm:$0xff]
  %v4969 = vld [vmem:[%s3 + $0x7c0] sm:$0xff]
  %v4970 = vld [vmem:[%s3 + $0x7c8] sm:$0xff]
  %v4971 = vld [vmem:[%s3 + $0x7d0] sm:$0xff]
  %v4972 = vld [vmem:[%s3 + $0x7d8] sm:$0xff]
  %v4973 = vld [vmem:[%s3 + $0x7e0] sm:$0xff]
  %v4974 = vld [vmem:[%s3 + $0x7e8] sm:$0xff]
  %v4975 = vld [vmem:[%s3 + $0x7f0] sm:$0xff]
  %v4976 = vld [vmem:[%s3 + $0x7f8] sm:$0xff]
  %4977 = vmatpush.msra.mxu0 %v4841
  %4978 = vmatpush.msra.mxu0 %v4833
  %4979 = vmatpush.msra.mxu0 %v4825
  %4980 = vmatpush.msra.mxu0 %v4817
  %4981 = vmatpush.msra.mxu0 %v4809
  %4982 = vmatpush.msra.mxu0 %v4801
  %4983 = vmatpush.msra.mxu0 %v4793
  %4984 = vmatpush.msra.mxu0 %v4785
  %4985 = vmatpush.msra.mxu0 %v4777
  %4986 = vmatpush.msra.mxu0 %v4769
  %4987 = vmatpush.msra.mxu0 %v4761
  %4988 = vmatpush.msra.mxu0 %v4753
  %4989 = vmatpush.msra.mxu0 %v4745
  %4990 = vmatpush.msra.mxu0 %v4737
  %4991 = vmatpush.msra.mxu0 %v4729
  %4992 = vmatpush.msra.mxu0 %v4721
  %4993 = vmatmul.f32.gmra.mxu0 %v4709
  %v4994 = vpop.f32.mrf.mxu0
  %v4995 = vadd.f32 0.0, %v4994
  %4996 = vdwg.mxu0
  %4997 = vmatpush.msra.mxu0 %v4969
  %4998 = vmatpush.msra.mxu0 %v4961
  %4999 = vmatpush.msra.mxu0 %v4953
  %5000 = vmatpush.msra.mxu0 %v4945
  %5001 = vmatpush.msra.mxu0 %v4937
  %5002 = vmatpush.msra.mxu0 %v4929
  %5003 = vmatpush.msra.mxu0 %v4921
  %5004 = vmatpush.msra.mxu0 %v4913
  %5005 = vmatpush.msra.mxu0 %v4905
  %5006 = vmatpush.msra.mxu0 %v4897
  %5007 = vmatpush.msra.mxu0 %v4889
  %5008 = vmatpush.msra.mxu0 %v4881
  %5009 = vmatpush.msra.mxu0 %v4873
  %5010 = vmatpush.msra.mxu0 %v4865
  %5011 = vmatpush.msra.mxu0 %v4857
  %5012 = vmatpush.msra.mxu0 %v4849
  %5013 = vmatmul.f32.gmra.mxu0 %v4710
  %v5014 = vpop.f32.mrf.mxu0
  %v5015 = vadd.f32 %v4995, %v5014
  %5016 = vdwg.mxu0
  %5017 = vmatpush.msra.mxu0 %v4842
  %5018 = vmatpush.msra.mxu0 %v4834
  %5019 = vmatpush.msra.mxu0 %v4826
  %5020 = vmatpush.msra.mxu0 %v4818
  %5021 = vmatpush.msra.mxu0 %v4810
  %5022 = vmatpush.msra.mxu0 %v4802
  %5023 = vmatpush.msra.mxu0 %v4794
  %5024 = vmatpush.msra.mxu0 %v4786
  %5025 = vmatpush.msra.mxu0 %v4778
  %5026 = vmatpush.msra.mxu0 %v4770
  %5027 = vmatpush.msra.mxu0 %v4762
  %5028 = vmatpush.msra.mxu0 %v4754
  %5029 = vmatpush.msra.mxu0 %v4746
  %5030 = vmatpush.msra.mxu0 %v4738
  %5031 = vmatpush.msra.mxu0 %v4730
  %5032 = vmatpush.msra.mxu0 %v4722
  %5033 = vmatmul.f32.gmra.mxu0 %v4709
  %v5034 = vpop.f32.mrf.mxu0
  %v5035 = vadd.f32 0.0, %v5034
  %5036 = vdwg.mxu0
  %5037 = vmatpush.msra.mxu0 %v4970
  %5038 = vmatpush.msra.mxu0 %v4962
  %5039 = vmatpush.msra.mxu0 %v4954
  %5040 = vmatpush.msra.mxu0 %v4946
  %5041 = vmatpush.msra.mxu0 %v4938
  %5042 = vmatpush.msra.mxu0 %v4930
  %5043 = vmatpush.msra.mxu0 %v4922
  %5044 = vmatpush.msra.mxu0 %v4914
  %5045 = vmatpush.msra.mxu0 %v4906
  %5046 = vmatpush.msra.mxu0 %v4898
  %5047 = vmatpush.msra.mxu0 %v4890
  %5048 = vmatpush.msra.mxu0 %v4882
  %5049 = vmatpush.msra.mxu0 %v4874
  %5050 = vmatpush.msra.mxu0 %v4866
  %5051 = vmatpush.msra.mxu0 %v4858
  %5052 = vmatpush.msra.mxu0 %v4850
  %5053 = vmatmul.f32.gmra.mxu0 %v4710
  %v5054 = vpop.f32.mrf.mxu0
  %v5055 = vadd.f32 %v5035, %v5054
  %5056 = vdwg.mxu0
  %5057 = vmatpush.msra.mxu0 %v4843
  %5058 = vmatpush.msra.mxu0 %v4835
  %5059 = vmatpush.msra.mxu0 %v4827
  %5060 = vmatpush.msra.mxu0 %v4819
  %5061 = vmatpush.msra.mxu0 %v4811
  %5062 = vmatpush.msra.mxu0 %v4803
  %5063 = vmatpush.msra.mxu0 %v4795
  %5064 = vmatpush.msra.mxu0 %v4787
  %5065 = vmatpush.msra.mxu0 %v4779
  %5066 = vmatpush.msra.mxu0 %v4771
  %5067 = vmatpush.msra.mxu0 %v4763
  %5068 = vmatpush.msra.mxu0 %v4755
  %5069 = vmatpush.msra.mxu0 %v4747
  %5070 = vmatpush.msra.mxu0 %v4739
  %5071 = vmatpush.msra.mxu0 %v4731
  %5072 = vmatpush.msra.mxu0 %v4723
  %5073 = vmatmul.f32.gmra.mxu0 %v4709
  %v5074 = vpop.f32.mrf.mxu0
  %v5075 = vadd.f32 0.0, %v5074
  %5076 = vdwg.mxu0
  %5077 = vmatpush.msra.mxu0 %v4971
  %5078 = vmatpush.msra.mxu0 %v4963
  %5079 = vmatpush.msra.mxu0 %v4955
  %5080 = vmatpush.msra.mxu0 %v4947
  %5081 = vmatpush.msra.mxu0 %v4939
  %5082 = vmatpush.msra.mxu0 %v4931
  %5083 = vmatpush.msra.mxu0 %v4923
  %5084 = vmatpush.msra.mxu0 %v4915
  %5085 = vmatpush.msra.mxu0 %v4907
  %5086 = vmatpush.msra.mxu0 %v4899
  %5087 = vmatpush.msra.mxu0 %v4891
  %5088 = vmatpush.msra.mxu0 %v4883
  %5089 = vmatpush.msra.mxu0 %v4875
  %5090 = vmatpush.msra.mxu0 %v4867
  %5091 = vmatpush.msra.mxu0 %v4859
  %5092 = vmatpush.msra.mxu0 %v4851
  %5093 = vmatmul.f32.gmra.mxu0 %v4710
  %v5094 = vpop.f32.mrf.mxu0
  %v5095 = vadd.f32 %v5075, %v5094
  %5096 = vdwg.mxu0
  %5097 = vmatpush.msra.mxu0 %v4844
  %5098 = vmatpush.msra.mxu0 %v4836
  %5099 = vmatpush.msra.mxu0 %v4828
  %5100 = vmatpush.msra.mxu0 %v4820
  %5101 = vmatpush.msra.mxu0 %v4812
  %5102 = vmatpush.msra.mxu0 %v4804
  %5103 = vmatpush.msra.mxu0 %v4796
  %5104 = vmatpush.msra.mxu0 %v4788
  %5105 = vmatpush.msra.mxu0 %v4780
  %5106 = vmatpush.msra.mxu0 %v4772
  %5107 = vmatpush.msra.mxu0 %v4764
  %5108 = vmatpush.msra.mxu0 %v4756
  %5109 = vmatpush.msra.mxu0 %v4748
  %5110 = vmatpush.msra.mxu0 %v4740
  %5111 = vmatpush.msra.mxu0 %v4732
  %5112 = vmatpush.msra.mxu0 %v4724
  %5113 = vmatmul.f32.gmra.mxu0 %v4709
  %v5114 = vpop.f32.mrf.mxu0
  %v5115 = vadd.f32 0.0, %v5114
  %5116 = vdwg.mxu0
  %5117 = vmatpush.msra.mxu0 %v4972
  %5118 = vmatpush.msra.mxu0 %v4964
  %5119 = vmatpush.msra.mxu0 %v4956
  %5120 = vmatpush.msra.mxu0 %v4948
  %5121 = vmatpush.msra.mxu0 %v4940
  %5122 = vmatpush.msra.mxu0 %v4932
  %5123 = vmatpush.msra.mxu0 %v4924
  %5124 = vmatpush.msra.mxu0 %v4916
  %5125 = vmatpush.msra.mxu0 %v4908
  %5126 = vmatpush.msra.mxu0 %v4900
  %5127 = vmatpush.msra.mxu0 %v4892
  %5128 = vmatpush.msra.mxu0 %v4884
  %5129 = vmatpush.msra.mxu0 %v4876
  %5130 = vmatpush.msra.mxu0 %v4868
  %5131 = vmatpush.msra.mxu0 %v4860
  %5132 = vmatpush.msra.mxu0 %v4852
  %5133 = vmatmul.f32.gmra.mxu0 %v4710
  %v5134 = vpop.f32.mrf.mxu0
  %v5135 = vadd.f32 %v5115, %v5134
  %5136 = vdwg.mxu0
  %5137 = vmatpush.msra.mxu0 %v4845
  %5138 = vmatpush.msra.mxu0 %v4837
  %5139 = vmatpush.msra.mxu0 %v4829
  %5140 = vmatpush.msra.mxu0 %v4821
  %5141 = vmatpush.msra.mxu0 %v4813
  %5142 = vmatpush.msra.mxu0 %v4805
  %5143 = vmatpush.msra.mxu0 %v4797
  %5144 = vmatpush.msra.mxu0 %v4789
  %5145 = vmatpush.msra.mxu0 %v4781
  %5146 = vmatpush.msra.mxu0 %v4773
  %5147 = vmatpush.msra.mxu0 %v4765
  %5148 = vmatpush.msra.mxu0 %v4757
  %5149 = vmatpush.msra.mxu0 %v4749
  %5150 = vmatpush.msra.mxu0 %v4741
  %5151 = vmatpush.msra.mxu0 %v4733
  %5152 = vmatpush.msra.mxu0 %v4725
  %5153 = vmatmul.f32.gmra.mxu0 %v4709
  %v5154 = vpop.f32.mrf.mxu0
  %v5155 = vadd.f32 0.0, %v5154
  %5156 = vdwg.mxu0
  %5157 = vmatpush.msra.mxu0 %v4973
  %5158 = vmatpush.msra.mxu0 %v4965
  %5159 = vmatpush.msra.mxu0 %v4957
  %5160 = vmatpush.msra.mxu0 %v4949
  %5161 = vmatpush.msra.mxu0 %v4941
  %5162 = vmatpush.msra.mxu0 %v4933
  %5163 = vmatpush.msra.mxu0 %v4925
  %5164 = vmatpush.msra.mxu0 %v4917
  %5165 = vmatpush.msra.mxu0 %v4909
  %5166 = vmatpush.msra.mxu0 %v4901
  %5167 = vmatpush.msra.mxu0 %v4893
  %5168 = vmatpush.msra.mxu0 %v4885
  %5169 = vmatpush.msra.mxu0 %v4877
  %5170 = vmatpush.msra.mxu0 %v4869
  %5171 = vmatpush.msra.mxu0 %v4861
  %5172 = vmatpush.msra.mxu0 %v4853
  %5173 = vmatmul.f32.gmra.mxu0 %v4710
  %v5174 = vpop.f32.mrf.mxu0
  %v5175 = vadd.f32 %v5155, %v5174
  %5176 = vdwg.mxu0
  %5177 = vmatpush.msra.mxu0 %v4846
  %5178 = vmatpush.msra.mxu0 %v4838
  %5179 = vmatpush.msra.mxu0 %v4830
  %5180 = vmatpush.msra.mxu0 %v4822
  %5181 = vmatpush.msra.mxu0 %v4814
  %5182 = vmatpush.msra.mxu0 %v4806
  %5183 = vmatpush.msra.mxu0 %v4798
  %5184 = vmatpush.msra.mxu0 %v4790
  %5185 = vmatpush.msra.mxu0 %v4782
  %5186 = vmatpush.msra.mxu0 %v4774
  %5187 = vmatpush.msra.mxu0 %v4766
  %5188 = vmatpush.msra.mxu0 %v4758
  %5189 = vmatpush.msra.mxu0 %v4750
  %5190 = vmatpush.msra.mxu0 %v4742
  %5191 = vmatpush.msra.mxu0 %v4734
  %5192 = vmatpush.msra.mxu0 %v4726
  %5193 = vmatmul.f32.gmra.mxu0 %v4709
  %v5194 = vpop.f32.mrf.mxu0
  %v5195 = vadd.f32 0.0, %v5194
  %5196 = vdwg.mxu0
  %5197 = vmatpush.msra.mxu0 %v4974
  %5198 = vmatpush.msra.mxu0 %v4966
  %5199 = vmatpush.msra.mxu0 %v4958
  %5200 = vmatpush.msra.mxu0 %v4950
  %5201 = vmatpush.msra.mxu0 %v4942
  %5202 = vmatpush.msra.mxu0 %v4934
  %5203 = vmatpush.msra.mxu0 %v4926
  %5204 = vmatpush.msra.mxu0 %v4918
  %5205 = vmatpush.msra.mxu0 %v4910
  %5206 = vmatpush.msra.mxu0 %v4902
  %5207 = vmatpush.msra.mxu0 %v4894
  %5208 = vmatpush.msra.mxu0 %v4886
  %5209 = vmatpush.msra.mxu0 %v4878
  %5210 = vmatpush.msra.mxu0 %v4870
  %5211 = vmatpush.msra.mxu0 %v4862
  %5212 = vmatpush.msra.mxu0 %v4854
  %5213 = vmatmul.f32.gmra.mxu0 %v4710
  %v5214 = vpop.f32.mrf.mxu0
  %v5215 = vadd.f32 %v5195, %v5214
  %5216 = vdwg.mxu0
  %5217 = vmatpush.msra.mxu0 %v4847
  %5218 = vmatpush.msra.mxu0 %v4839
  %5219 = vmatpush.msra.mxu0 %v4831
  %5220 = vmatpush.msra.mxu0 %v4823
  %5221 = vmatpush.msra.mxu0 %v4815
  %5222 = vmatpush.msra.mxu0 %v4807
  %5223 = vmatpush.msra.mxu0 %v4799
  %5224 = vmatpush.msra.mxu0 %v4791
  %5225 = vmatpush.msra.mxu0 %v4783
  %5226 = vmatpush.msra.mxu0 %v4775
  %5227 = vmatpush.msra.mxu0 %v4767
  %5228 = vmatpush.msra.mxu0 %v4759
  %5229 = vmatpush.msra.mxu0 %v4751
  %5230 = vmatpush.msra.mxu0 %v4743
  %5231 = vmatpush.msra.mxu0 %v4735
  %5232 = vmatpush.msra.mxu0 %v4727
  %5233 = vmatmul.f32.gmra.mxu0 %v4709
  %v5234 = vpop.f32.mrf.mxu0
  %v5235 = vadd.f32 0.0, %v5234
  %5236 = vdwg.mxu0
  %5237 = vmatpush.msra.mxu0 %v4975
  %5238 = vmatpush.msra.mxu0 %v4967
  %5239 = vmatpush.msra.mxu0 %v4959
  %5240 = vmatpush.msra.mxu0 %v4951
  %5241 = vmatpush.msra.mxu0 %v4943
  %5242 = vmatpush.msra.mxu0 %v4935
  %5243 = vmatpush.msra.mxu0 %v4927
  %5244 = vmatpush.msra.mxu0 %v4919
  %5245 = vmatpush.msra.mxu0 %v4911
  %5246 = vmatpush.msra.mxu0 %v4903
  %5247 = vmatpush.msra.mxu0 %v4895
  %5248 = vmatpush.msra.mxu0 %v4887
  %5249 = vmatpush.msra.mxu0 %v4879
  %5250 = vmatpush.msra.mxu0 %v4871
  %5251 = vmatpush.msra.mxu0 %v4863
  %5252 = vmatpush.msra.mxu0 %v4855
  %5253 = vmatmul.f32.gmra.mxu0 %v4710
  %v5254 = vpop.f32.mrf.mxu0
  %v5255 = vadd.f32 %v5235, %v5254
  %5256 = vdwg.mxu0
  %5257 = vmatpush.msra.mxu0 %v4848
  %5258 = vmatpush.msra.mxu0 %v4840
  %5259 = vmatpush.msra.mxu0 %v4832
  %5260 = vmatpush.msra.mxu0 %v4824
  %5261 = vmatpush.msra.mxu0 %v4816
  %5262 = vmatpush.msra.mxu0 %v4808
  %5263 = vmatpush.msra.mxu0 %v4800
  %5264 = vmatpush.msra.mxu0 %v4792
  %5265 = vmatpush.msra.mxu0 %v4784
  %5266 = vmatpush.msra.mxu0 %v4776
  %5267 = vmatpush.msra.mxu0 %v4768
  %5268 = vmatpush.msra.mxu0 %v4760
  %5269 = vmatpush.msra.mxu0 %v4752
  %5270 = vmatpush.msra.mxu0 %v4744
  %5271 = vmatpush.msra.mxu0 %v4736
  %5272 = vmatpush.msra.mxu0 %v4728
  %5273 = vmatmul.f32.gmra.mxu0 %v4709
  %v5274 = vpop.f32.mrf.mxu0
  %v5275 = vadd.f32 0.0, %v5274
  %5276 = vdwg.mxu0
  %5277 = vmatpush.msra.mxu0 %v4976
  %5278 = vmatpush.msra.mxu0 %v4968
  %5279 = vmatpush.msra.mxu0 %v4960
  %5280 = vmatpush.msra.mxu0 %v4952
  %5281 = vmatpush.msra.mxu0 %v4944
  %5282 = vmatpush.msra.mxu0 %v4936
  %5283 = vmatpush.msra.mxu0 %v4928
  %5284 = vmatpush.msra.mxu0 %v4920
  %5285 = vmatpush.msra.mxu0 %v4912
  %5286 = vmatpush.msra.mxu0 %v4904
  %5287 = vmatpush.msra.mxu0 %v4896
  %5288 = vmatpush.msra.mxu0 %v4888
  %5289 = vmatpush.msra.mxu0 %v4880
  %5290 = vmatpush.msra.mxu0 %v4872
  %5291 = vmatpush.msra.mxu0 %v4864
  %5292 = vmatpush.msra.mxu0 %v4856
  %5293 = vmatmul.f32.gmra.mxu0 %v4710
  %v5294 = vpop.f32.mrf.mxu0
  %v5295 = vadd.f32 %v5275, %v5294
  %5296 = vdwg.mxu0
  %v5297 = vadd.f32 %v4713, %v5015
  %v5298 = vadd.f32 %v4714, %v5055
  %v5299 = vadd.f32 %v4715, %v5095
  %v5300 = vadd.f32 %v4716, %v5135
  %v5301 = vadd.f32 %v4717, %v5175
  %v5302 = vadd.f32 %v4718, %v5215
  %v5303 = vadd.f32 %v4719, %v5255
  %v5304 = vadd.f32 %v4720, %v5295
  %v5305 = vxor.u32 %v5297, 2147483648
  %v5306 = vxor.u32 %v5298, 2147483648
  %v5307 = vxor.u32 %v5299, 2147483648
  %v5308 = vxor.u32 %v5300, 2147483648
  %v5309 = vxor.u32 %v5301, 2147483648
  %v5310 = vxor.u32 %v5302, 2147483648
  %v5311 = vmul.f32 %v5305, 1.442695
  %v5312 = vpow.pop %v5311
  %v5313 = vmul.f32 %v5306, 1.442695
  %v5314 = vpow.pop %v5313
  %v5315 = vmul.f32 %v5307, 1.442695
  %v5316 = vpow.pop %v5315
  %v5317 = vmul.f32 %v5308, 1.442695
  %v5318 = vpow.pop %v5317
  %v5319 = vmul.f32 %v5309, 1.442695
  %v5320 = vpow.pop %v5319
  %v5321 = vmul.f32 %v5310, 1.442695
  %v5322 = vpow.pop %v5321
  %v5323 = vadd.f32 %v5312, 1.0
  %v5324 = vadd.f32 %v5314, 1.0
  %v5325 = vadd.f32 %v5316, 1.0
  %v5326 = vadd.f32 %v5318, 1.0
  %v5327 = vadd.f32 %v5320, 1.0
  %v5328 = vadd.f32 %v5322, 1.0
  %v5329 = vrcp.pop %v5323
  %v5330 = vmul.f32 %v5323, %v5329
  %v5331 = vsub.f32 1.0, %v5330
  %v5332 = vmul.f32 %v5329, %v5331
  %v5333 = vadd.f32 %v5329, %v5332
  %vm5334 = vweird.f32 %v5323
  %vm5335 = vweird.f32 %v5329
  %vm5336 = vmor %vm5334, %vm5335
  %v5337 = vsel %vm5336, %v5329, %v5333
  %v5338 = vand.u32 2147483647, %v5323
  %vm5339 = vcmp.eq.f32.partialorder %v5338, 8.507059e+37
  %v5340 = vand.u32 %v5323, 2147483648
  %v5341 = vor.u32 1.1754944e-38, %v5340
  %v5342 = vsel %vm5339, %v5341, %v5337
  %v5343 = vmul.f32 1.0, %v5342
  %v5344 = vrcp.pop %v5324
  %v5345 = vmul.f32 %v5324, %v5344
  %v5346 = vsub.f32 1.0, %v5345
  %v5347 = vmul.f32 %v5344, %v5346
  %v5348 = vadd.f32 %v5344, %v5347
  %vm5349 = vweird.f32 %v5324
  %vm5350 = vweird.f32 %v5344
  %vm5351 = vmor %vm5349, %vm5350
  %v5352 = vsel %vm5351, %v5344, %v5348
  %v5353 = vand.u32 2147483647, %v5324
  %vm5354 = vcmp.eq.f32.partialorder %v5353, 8.507059e+37
  %v5355 = vand.u32 %v5324, 2147483648
  %v5356 = vor.u32 1.1754944e-38, %v5355
  %v5357 = vsel %vm5354, %v5356, %v5352
  %v5358 = vmul.f32 1.0, %v5357
  %v5359 = vrcp.pop %v5325
  %v5360 = vmul.f32 %v5325, %v5359
  %v5361 = vsub.f32 1.0, %v5360
  %v5362 = vmul.f32 %v5359, %v5361
  %v5363 = vadd.f32 %v5359, %v5362
  %vm5364 = vweird.f32 %v5325
  %vm5365 = vweird.f32 %v5359
  %vm5366 = vmor %vm5364, %vm5365
  %v5367 = vsel %vm5366, %v5359, %v5363
  %v5368 = vand.u32 2147483647, %v5325
  %vm5369 = vcmp.eq.f32.partialorder %v5368, 8.507059e+37
  %v5370 = vand.u32 %v5325, 2147483648
  %v5371 = vor.u32 1.1754944e-38, %v5370
  %v5372 = vsel %vm5369, %v5371, %v5367
  %v5373 = vmul.f32 1.0, %v5372
  %v5374 = vrcp.pop %v5326
  %v5375 = vmul.f32 %v5326, %v5374
  %v5376 = vsub.f32 1.0, %v5375
  %v5377 = vmul.f32 %v5374, %v5376
  %v5378 = vadd.f32 %v5374, %v5377
  %vm5379 = vweird.f32 %v5326
  %vm5380 = vweird.f32 %v5374
  %vm5381 = vmor %vm5379, %vm5380
  %v5382 = vsel %vm5381, %v5374, %v5378
  %v5383 = vand.u32 2147483647, %v5326
  %vm5384 = vcmp.eq.f32.partialorder %v5383, 8.507059e+37
  %v5385 = vand.u32 %v5326, 2147483648
  %v5386 = vor.u32 1.1754944e-38, %v5385
  %v5387 = vsel %vm5384, %v5386, %v5382
  %v5388 = vmul.f32 1.0, %v5387
  %v5389 = vrcp.pop %v5327
  %v5390 = vmul.f32 %v5327, %v5389
  %v5391 = vsub.f32 1.0, %v5390
  %v5392 = vmul.f32 %v5389, %v5391
  %v5393 = vadd.f32 %v5389, %v5392
  %vm5394 = vweird.f32 %v5327
  %vm5395 = vweird.f32 %v5389
  %vm5396 = vmor %vm5394, %vm5395
  %v5397 = vsel %vm5396, %v5389, %v5393
  %v5398 = vand.u32 2147483647, %v5327
  %vm5399 = vcmp.eq.f32.partialorder %v5398, 8.507059e+37
  %v5400 = vand.u32 %v5327, 2147483648
  %v5401 = vor.u32 1.1754944e-38, %v5400
  %v5402 = vsel %vm5399, %v5401, %v5397
  %v5403 = vmul.f32 1.0, %v5402
  %v5404 = vrcp.pop %v5328
  %v5405 = vmul.f32 %v5328, %v5404
  %v5406 = vsub.f32 1.0, %v5405
  %v5407 = vmul.f32 %v5404, %v5406
  %v5408 = vadd.f32 %v5404, %v5407
  %vm5409 = vweird.f32 %v5328
  %vm5410 = vweird.f32 %v5404
  %vm5411 = vmor %vm5409, %vm5410
  %v5412 = vsel %vm5411, %v5404, %v5408
  %v5413 = vand.u32 2147483647, %v5328
  %vm5414 = vcmp.eq.f32.partialorder %v5413, 8.507059e+37
  %v5415 = vand.u32 %v5328, 2147483648
  %v5416 = vor.u32 1.1754944e-38, %v5415
  %v5417 = vsel %vm5414, %v5416, %v5412
  %v5418 = vmul.f32 1.0, %v5417
  %v5419 = vtanh.pop %v5303
  %v5420 = vtanh.pop %v5304
  %v5421 = vmul.f32 %v5373, %v4705
  %v5422 = vmul.f32 %v5388, %v4706
  %v5423 = vmul.f32 %v5343, %v5419
  %v5424 = vmul.f32 %v5358, %v5420
  %v5425 = vadd.f32 %v5421, %v5423
  %v5426 = vadd.f32 %v5422, %v5424
  %v5427 = vtanh.pop %v5425
  %v5428 = vtanh.pop %v5426
  %v5429 = vmul.f32 %v5403, %v5427
  %v5430 = vmul.f32 %v5418, %v5428
  %5431 = vst [vmem:[#allocation3 + $0x50] sm:$0xff] %v5429
  %5432 = vst [vmem:[#allocation3 + $0x28] sm:$0xff] %v5430
  %v5433 = vld [vmem:[#allocation2 + $0x180] sm:$0xff]
  %v5434 = vld [vmem:[#allocation2 + $0x188] sm:$0xff]
  %v5435 = vld [vmem:[#allocation2 + $0x190] sm:$0xff]
  %v5436 = vld [vmem:[#allocation2 + $0x198] sm:$0xff]
  %v5437 = vld [vmem:[#allocation2 + $0x1a0] sm:$0xff]
  %v5438 = vld [vmem:[#allocation2 + $0x1a8] sm:$0xff]
  %v5439 = vld [vmem:[#allocation2 + $0x1b0] sm:$0xff]
  %v5440 = vld [vmem:[#allocation2 + $0x1b8] sm:$0xff]
  %v5441 = vld [vmem:[%s3] sm:$0xff]
  %v5442 = vld [vmem:[%s3 + $0x8] sm:$0xff]
  %v5443 = vld [vmem:[%s3 + $0x10] sm:$0xff]
  %v5444 = vld [vmem:[%s3 + $0x18] sm:$0xff]
  %v5445 = vld [vmem:[%s3 + $0x20] sm:$0xff]
  %v5446 = vld [vmem:[%s3 + $0x28] sm:$0xff]
  %v5447 = vld [vmem:[%s3 + $0x30] sm:$0xff]
  %v5448 = vld [vmem:[%s3 + $0x38] sm:$0xff]
  %v5449 = vld [vmem:[%s3 + $0x40] sm:$0xff]
  %v5450 = vld [vmem:[%s3 + $0x48] sm:$0xff]
  %v5451 = vld [vmem:[%s3 + $0x50] sm:$0xff]
  %v5452 = vld [vmem:[%s3 + $0x58] sm:$0xff]
  %v5453 = vld [vmem:[%s3 + $0x60] sm:$0xff]
  %v5454 = vld [vmem:[%s3 + $0x68] sm:$0xff]
  %v5455 = vld [vmem:[%s3 + $0x70] sm:$0xff]
  %v5456 = vld [vmem:[%s3 + $0x78] sm:$0xff]
  %v5457 = vld [vmem:[%s3 + $0x80] sm:$0xff]
  %v5458 = vld [vmem:[%s3 + $0x88] sm:$0xff]
  %v5459 = vld [vmem:[%s3 + $0x90] sm:$0xff]
  %v5460 = vld [vmem:[%s3 + $0x98] sm:$0xff]
  %v5461 = vld [vmem:[%s3 + $0xa0] sm:$0xff]
  %v5462 = vld [vmem:[%s3 + $0xa8] sm:$0xff]
  %v5463 = vld [vmem:[%s3 + $0xb0] sm:$0xff]
  %v5464 = vld [vmem:[%s3 + $0xb8] sm:$0xff]
  %v5465 = vld [vmem:[%s3 + $0xc0] sm:$0xff]
  %v5466 = vld [vmem:[%s3 + $0xc8] sm:$0xff]
  %v5467 = vld [vmem:[%s3 + $0xd0] sm:$0xff]
  %v5468 = vld [vmem:[%s3 + $0xd8] sm:$0xff]
  %v5469 = vld [vmem:[%s3 + $0xe0] sm:$0xff]
  %v5470 = vld [vmem:[%s3 + $0xe8] sm:$0xff]
  %v5471 = vld [vmem:[%s3 + $0xf0] sm:$0xff]
  %v5472 = vld [vmem:[%s3 + $0xf8] sm:$0xff]
  %v5473 = vld [vmem:[%s3 + $0x100] sm:$0xff]
  %v5474 = vld [vmem:[%s3 + $0x108] sm:$0xff]
  %v5475 = vld [vmem:[%s3 + $0x110] sm:$0xff]
  %v5476 = vld [vmem:[%s3 + $0x118] sm:$0xff]
  %v5477 = vld [vmem:[%s3 + $0x120] sm:$0xff]
  %v5478 = vld [vmem:[%s3 + $0x128] sm:$0xff]
  %v5479 = vld [vmem:[%s3 + $0x130] sm:$0xff]
  %v5480 = vld [vmem:[%s3 + $0x138] sm:$0xff]
  %v5481 = vld [vmem:[%s3 + $0x140] sm:$0xff]
  %v5482 = vld [vmem:[%s3 + $0x148] sm:$0xff]
  %v5483 = vld [vmem:[%s3 + $0x150] sm:$0xff]
  %v5484 = vld [vmem:[%s3 + $0x158] sm:$0xff]
  %v5485 = vld [vmem:[%s3 + $0x160] sm:$0xff]
  %v5486 = vld [vmem:[%s3 + $0x168] sm:$0xff]
  %v5487 = vld [vmem:[%s3 + $0x170] sm:$0xff]
  %v5488 = vld [vmem:[%s3 + $0x178] sm:$0xff]
  %v5489 = vld [vmem:[%s3 + $0x180] sm:$0xff]
  %v5490 = vld [vmem:[%s3 + $0x188] sm:$0xff]
  %v5491 = vld [vmem:[%s3 + $0x190] sm:$0xff]
  %v5492 = vld [vmem:[%s3 + $0x198] sm:$0xff]
  %v5493 = vld [vmem:[%s3 + $0x1a0] sm:$0xff]
  %v5494 = vld [vmem:[%s3 + $0x1a8] sm:$0xff]
  %v5495 = vld [vmem:[%s3 + $0x1b0] sm:$0xff]
  %v5496 = vld [vmem:[%s3 + $0x1b8] sm:$0xff]
  %v5497 = vld [vmem:[%s3 + $0x1c0] sm:$0xff]
  %v5498 = vld [vmem:[%s3 + $0x1c8] sm:$0xff]
  %v5499 = vld [vmem:[%s3 + $0x1d0] sm:$0xff]
  %v5500 = vld [vmem:[%s3 + $0x1d8] sm:$0xff]
  %v5501 = vld [vmem:[%s3 + $0x1e0] sm:$0xff]
  %v5502 = vld [vmem:[%s3 + $0x1e8] sm:$0xff]
  %v5503 = vld [vmem:[%s3 + $0x1f0] sm:$0xff]
  %v5504 = vld [vmem:[%s3 + $0x1f8] sm:$0xff]
  %v5505 = vld [vmem:[%s3 + $0x200] sm:$0xff]
  %v5506 = vld [vmem:[%s3 + $0x208] sm:$0xff]
  %v5507 = vld [vmem:[%s3 + $0x210] sm:$0xff]
  %v5508 = vld [vmem:[%s3 + $0x218] sm:$0xff]
  %v5509 = vld [vmem:[%s3 + $0x220] sm:$0xff]
  %v5510 = vld [vmem:[%s3 + $0x228] sm:$0xff]
  %v5511 = vld [vmem:[%s3 + $0x230] sm:$0xff]
  %v5512 = vld [vmem:[%s3 + $0x238] sm:$0xff]
  %v5513 = vld [vmem:[%s3 + $0x240] sm:$0xff]
  %v5514 = vld [vmem:[%s3 + $0x248] sm:$0xff]
  %v5515 = vld [vmem:[%s3 + $0x250] sm:$0xff]
  %v5516 = vld [vmem:[%s3 + $0x258] sm:$0xff]
  %v5517 = vld [vmem:[%s3 + $0x260] sm:$0xff]
  %v5518 = vld [vmem:[%s3 + $0x268] sm:$0xff]
  %v5519 = vld [vmem:[%s3 + $0x270] sm:$0xff]
  %v5520 = vld [vmem:[%s3 + $0x278] sm:$0xff]
  %v5521 = vld [vmem:[%s3 + $0x280] sm:$0xff]
  %v5522 = vld [vmem:[%s3 + $0x288] sm:$0xff]
  %v5523 = vld [vmem:[%s3 + $0x290] sm:$0xff]
  %v5524 = vld [vmem:[%s3 + $0x298] sm:$0xff]
  %v5525 = vld [vmem:[%s3 + $0x2a0] sm:$0xff]
  %v5526 = vld [vmem:[%s3 + $0x2a8] sm:$0xff]
  %v5527 = vld [vmem:[%s3 + $0x2b0] sm:$0xff]
  %v5528 = vld [vmem:[%s3 + $0x2b8] sm:$0xff]
  %v5529 = vld [vmem:[%s3 + $0x2c0] sm:$0xff]
  %v5530 = vld [vmem:[%s3 + $0x2c8] sm:$0xff]
  %v5531 = vld [vmem:[%s3 + $0x2d0] sm:$0xff]
  %v5532 = vld [vmem:[%s3 + $0x2d8] sm:$0xff]
  %v5533 = vld [vmem:[%s3 + $0x2e0] sm:$0xff]
  %v5534 = vld [vmem:[%s3 + $0x2e8] sm:$0xff]
  %v5535 = vld [vmem:[%s3 + $0x2f0] sm:$0xff]
  %v5536 = vld [vmem:[%s3 + $0x2f8] sm:$0xff]
  %v5537 = vld [vmem:[%s3 + $0x300] sm:$0xff]
  %v5538 = vld [vmem:[%s3 + $0x308] sm:$0xff]
  %v5539 = vld [vmem:[%s3 + $0x310] sm:$0xff]
  %v5540 = vld [vmem:[%s3 + $0x318] sm:$0xff]
  %v5541 = vld [vmem:[%s3 + $0x320] sm:$0xff]
  %v5542 = vld [vmem:[%s3 + $0x328] sm:$0xff]
  %v5543 = vld [vmem:[%s3 + $0x330] sm:$0xff]
  %v5544 = vld [vmem:[%s3 + $0x338] sm:$0xff]
  %v5545 = vld [vmem:[%s3 + $0x340] sm:$0xff]
  %v5546 = vld [vmem:[%s3 + $0x348] sm:$0xff]
  %v5547 = vld [vmem:[%s3 + $0x350] sm:$0xff]
  %v5548 = vld [vmem:[%s3 + $0x358] sm:$0xff]
  %v5549 = vld [vmem:[%s3 + $0x360] sm:$0xff]
  %v5550 = vld [vmem:[%s3 + $0x368] sm:$0xff]
  %v5551 = vld [vmem:[%s3 + $0x370] sm:$0xff]
  %v5552 = vld [vmem:[%s3 + $0x378] sm:$0xff]
  %v5553 = vld [vmem:[%s3 + $0x380] sm:$0xff]
  %v5554 = vld [vmem:[%s3 + $0x388] sm:$0xff]
  %v5555 = vld [vmem:[%s3 + $0x390] sm:$0xff]
  %v5556 = vld [vmem:[%s3 + $0x398] sm:$0xff]
  %v5557 = vld [vmem:[%s3 + $0x3a0] sm:$0xff]
  %v5558 = vld [vmem:[%s3 + $0x3a8] sm:$0xff]
  %v5559 = vld [vmem:[%s3 + $0x3b0] sm:$0xff]
  %v5560 = vld [vmem:[%s3 + $0x3b8] sm:$0xff]
  %v5561 = vld [vmem:[%s3 + $0x3c0] sm:$0xff]
  %v5562 = vld [vmem:[%s3 + $0x3c8] sm:$0xff]
  %v5563 = vld [vmem:[%s3 + $0x3d0] sm:$0xff]
  %v5564 = vld [vmem:[%s3 + $0x3d8] sm:$0xff]
  %v5565 = vld [vmem:[%s3 + $0x3e0] sm:$0xff]
  %v5566 = vld [vmem:[%s3 + $0x3e8] sm:$0xff]
  %v5567 = vld [vmem:[%s3 + $0x3f0] sm:$0xff]
  %v5568 = vld [vmem:[%s3 + $0x3f8] sm:$0xff]
  %v5569 = vld [vmem:[%s3 + $0x400] sm:$0xff]
  %v5570 = vld [vmem:[%s3 + $0x408] sm:$0xff]
  %v5571 = vld [vmem:[%s3 + $0x410] sm:$0xff]
  %v5572 = vld [vmem:[%s3 + $0x418] sm:$0xff]
  %v5573 = vld [vmem:[%s3 + $0x420] sm:$0xff]
  %v5574 = vld [vmem:[%s3 + $0x428] sm:$0xff]
  %v5575 = vld [vmem:[%s3 + $0x430] sm:$0xff]
  %v5576 = vld [vmem:[%s3 + $0x438] sm:$0xff]
  %v5577 = vld [vmem:[%s3 + $0x440] sm:$0xff]
  %v5578 = vld [vmem:[%s3 + $0x448] sm:$0xff]
  %v5579 = vld [vmem:[%s3 + $0x450] sm:$0xff]
  %v5580 = vld [vmem:[%s3 + $0x458] sm:$0xff]
  %v5581 = vld [vmem:[%s3 + $0x460] sm:$0xff]
  %v5582 = vld [vmem:[%s3 + $0x468] sm:$0xff]
  %v5583 = vld [vmem:[%s3 + $0x470] sm:$0xff]
  %v5584 = vld [vmem:[%s3 + $0x478] sm:$0xff]
  %v5585 = vld [vmem:[%s3 + $0x480] sm:$0xff]
  %v5586 = vld [vmem:[%s3 + $0x488] sm:$0xff]
  %v5587 = vld [vmem:[%s3 + $0x490] sm:$0xff]
  %v5588 = vld [vmem:[%s3 + $0x498] sm:$0xff]
  %v5589 = vld [vmem:[%s3 + $0x4a0] sm:$0xff]
  %v5590 = vld [vmem:[%s3 + $0x4a8] sm:$0xff]
  %v5591 = vld [vmem:[%s3 + $0x4b0] sm:$0xff]
  %v5592 = vld [vmem:[%s3 + $0x4b8] sm:$0xff]
  %v5593 = vld [vmem:[%s3 + $0x4c0] sm:$0xff]
  %v5594 = vld [vmem:[%s3 + $0x4c8] sm:$0xff]
  %v5595 = vld [vmem:[%s3 + $0x4d0] sm:$0xff]
  %v5596 = vld [vmem:[%s3 + $0x4d8] sm:$0xff]
  %v5597 = vld [vmem:[%s3 + $0x4e0] sm:$0xff]
  %v5598 = vld [vmem:[%s3 + $0x4e8] sm:$0xff]
  %v5599 = vld [vmem:[%s3 + $0x4f0] sm:$0xff]
  %v5600 = vld [vmem:[%s3 + $0x4f8] sm:$0xff]
  %v5601 = vld [vmem:[%s3 + $0x500] sm:$0xff]
  %v5602 = vld [vmem:[%s3 + $0x508] sm:$0xff]
  %v5603 = vld [vmem:[%s3 + $0x510] sm:$0xff]
  %v5604 = vld [vmem:[%s3 + $0x518] sm:$0xff]
  %v5605 = vld [vmem:[%s3 + $0x520] sm:$0xff]
  %v5606 = vld [vmem:[%s3 + $0x528] sm:$0xff]
  %v5607 = vld [vmem:[%s3 + $0x530] sm:$0xff]
  %v5608 = vld [vmem:[%s3 + $0x538] sm:$0xff]
  %v5609 = vld [vmem:[%s3 + $0x540] sm:$0xff]
  %v5610 = vld [vmem:[%s3 + $0x548] sm:$0xff]
  %v5611 = vld [vmem:[%s3 + $0x550] sm:$0xff]
  %v5612 = vld [vmem:[%s3 + $0x558] sm:$0xff]
  %v5613 = vld [vmem:[%s3 + $0x560] sm:$0xff]
  %v5614 = vld [vmem:[%s3 + $0x568] sm:$0xff]
  %v5615 = vld [vmem:[%s3 + $0x570] sm:$0xff]
  %v5616 = vld [vmem:[%s3 + $0x578] sm:$0xff]
  %v5617 = vld [vmem:[%s3 + $0x580] sm:$0xff]
  %v5618 = vld [vmem:[%s3 + $0x588] sm:$0xff]
  %v5619 = vld [vmem:[%s3 + $0x590] sm:$0xff]
  %v5620 = vld [vmem:[%s3 + $0x598] sm:$0xff]
  %v5621 = vld [vmem:[%s3 + $0x5a0] sm:$0xff]
  %v5622 = vld [vmem:[%s3 + $0x5a8] sm:$0xff]
  %v5623 = vld [vmem:[%s3 + $0x5b0] sm:$0xff]
  %v5624 = vld [vmem:[%s3 + $0x5b8] sm:$0xff]
  %v5625 = vld [vmem:[%s3 + $0x5c0] sm:$0xff]
  %v5626 = vld [vmem:[%s3 + $0x5c8] sm:$0xff]
  %v5627 = vld [vmem:[%s3 + $0x5d0] sm:$0xff]
  %v5628 = vld [vmem:[%s3 + $0x5d8] sm:$0xff]
  %v5629 = vld [vmem:[%s3 + $0x5e0] sm:$0xff]
  %v5630 = vld [vmem:[%s3 + $0x5e8] sm:$0xff]
  %v5631 = vld [vmem:[%s3 + $0x5f0] sm:$0xff]
  %v5632 = vld [vmem:[%s3 + $0x5f8] sm:$0xff]
  %v5633 = vld [vmem:[%s3 + $0x600] sm:$0xff]
  %v5634 = vld [vmem:[%s3 + $0x608] sm:$0xff]
  %v5635 = vld [vmem:[%s3 + $0x610] sm:$0xff]
  %v5636 = vld [vmem:[%s3 + $0x618] sm:$0xff]
  %v5637 = vld [vmem:[%s3 + $0x620] sm:$0xff]
  %v5638 = vld [vmem:[%s3 + $0x628] sm:$0xff]
  %v5639 = vld [vmem:[%s3 + $0x630] sm:$0xff]
  %v5640 = vld [vmem:[%s3 + $0x638] sm:$0xff]
  %v5641 = vld [vmem:[%s3 + $0x640] sm:$0xff]
  %v5642 = vld [vmem:[%s3 + $0x648] sm:$0xff]
  %v5643 = vld [vmem:[%s3 + $0x650] sm:$0xff]
  %v5644 = vld [vmem:[%s3 + $0x658] sm:$0xff]
  %v5645 = vld [vmem:[%s3 + $0x660] sm:$0xff]
  %v5646 = vld [vmem:[%s3 + $0x668] sm:$0xff]
  %v5647 = vld [vmem:[%s3 + $0x670] sm:$0xff]
  %v5648 = vld [vmem:[%s3 + $0x678] sm:$0xff]
  %v5649 = vld [vmem:[%s3 + $0x680] sm:$0xff]
  %v5650 = vld [vmem:[%s3 + $0x688] sm:$0xff]
  %v5651 = vld [vmem:[%s3 + $0x690] sm:$0xff]
  %v5652 = vld [vmem:[%s3 + $0x698] sm:$0xff]
  %v5653 = vld [vmem:[%s3 + $0x6a0] sm:$0xff]
  %v5654 = vld [vmem:[%s3 + $0x6a8] sm:$0xff]
  %v5655 = vld [vmem:[%s3 + $0x6b0] sm:$0xff]
  %v5656 = vld [vmem:[%s3 + $0x6b8] sm:$0xff]
  %v5657 = vld [vmem:[%s3 + $0x6c0] sm:$0xff]
  %v5658 = vld [vmem:[%s3 + $0x6c8] sm:$0xff]
  %v5659 = vld [vmem:[%s3 + $0x6d0] sm:$0xff]
  %v5660 = vld [vmem:[%s3 + $0x6d8] sm:$0xff]
  %v5661 = vld [vmem:[%s3 + $0x6e0] sm:$0xff]
  %v5662 = vld [vmem:[%s3 + $0x6e8] sm:$0xff]
  %v5663 = vld [vmem:[%s3 + $0x6f0] sm:$0xff]
  %v5664 = vld [vmem:[%s3 + $0x6f8] sm:$0xff]
  %v5665 = vld [vmem:[%s3 + $0x700] sm:$0xff]
  %v5666 = vld [vmem:[%s3 + $0x708] sm:$0xff]
  %v5667 = vld [vmem:[%s3 + $0x710] sm:$0xff]
  %v5668 = vld [vmem:[%s3 + $0x718] sm:$0xff]
  %v5669 = vld [vmem:[%s3 + $0x720] sm:$0xff]
  %v5670 = vld [vmem:[%s3 + $0x728] sm:$0xff]
  %v5671 = vld [vmem:[%s3 + $0x730] sm:$0xff]
  %v5672 = vld [vmem:[%s3 + $0x738] sm:$0xff]
  %v5673 = vld [vmem:[%s3 + $0x740] sm:$0xff]
  %v5674 = vld [vmem:[%s3 + $0x748] sm:$0xff]
  %v5675 = vld [vmem:[%s3 + $0x750] sm:$0xff]
  %v5676 = vld [vmem:[%s3 + $0x758] sm:$0xff]
  %v5677 = vld [vmem:[%s3 + $0x760] sm:$0xff]
  %v5678 = vld [vmem:[%s3 + $0x768] sm:$0xff]
  %v5679 = vld [vmem:[%s3 + $0x770] sm:$0xff]
  %v5680 = vld [vmem:[%s3 + $0x778] sm:$0xff]
  %v5681 = vld [vmem:[%s3 + $0x780] sm:$0xff]
  %v5682 = vld [vmem:[%s3 + $0x788] sm:$0xff]
  %v5683 = vld [vmem:[%s3 + $0x790] sm:$0xff]
  %v5684 = vld [vmem:[%s3 + $0x798] sm:$0xff]
  %v5685 = vld [vmem:[%s3 + $0x7a0] sm:$0xff]
  %v5686 = vld [vmem:[%s3 + $0x7a8] sm:$0xff]
  %v5687 = vld [vmem:[%s3 + $0x7b0] sm:$0xff]
  %v5688 = vld [vmem:[%s3 + $0x7b8] sm:$0xff]
  %v5689 = vld [vmem:[%s3 + $0x7c0] sm:$0xff]
  %v5690 = vld [vmem:[%s3 + $0x7c8] sm:$0xff]
  %v5691 = vld [vmem:[%s3 + $0x7d0] sm:$0xff]
  %v5692 = vld [vmem:[%s3 + $0x7d8] sm:$0xff]
  %v5693 = vld [vmem:[%s3 + $0x7e0] sm:$0xff]
  %v5694 = vld [vmem:[%s3 + $0x7e8] sm:$0xff]
  %v5695 = vld [vmem:[%s3 + $0x7f0] sm:$0xff]
  %v5696 = vld [vmem:[%s3 + $0x7f8] sm:$0xff]
  %5697 = vmatpush.msra.mxu0 %v5561
  %5698 = vmatpush.msra.mxu0 %v5553
  %5699 = vmatpush.msra.mxu0 %v5545
  %5700 = vmatpush.msra.mxu0 %v5537
  %5701 = vmatpush.msra.mxu0 %v5529
  %5702 = vmatpush.msra.mxu0 %v5521
  %5703 = vmatpush.msra.mxu0 %v5513
  %5704 = vmatpush.msra.mxu0 %v5505
  %5705 = vmatpush.msra.mxu0 %v5497
  %5706 = vmatpush.msra.mxu0 %v5489
  %5707 = vmatpush.msra.mxu0 %v5481
  %5708 = vmatpush.msra.mxu0 %v5473
  %5709 = vmatpush.msra.mxu0 %v5465
  %5710 = vmatpush.msra.mxu0 %v5457
  %5711 = vmatpush.msra.mxu0 %v5449
  %5712 = vmatpush.msra.mxu0 %v5441
  %5713 = vmatmul.f32.gmra.mxu0 %v5429
  %v5714 = vpop.f32.mrf.mxu0
  %v5715 = vadd.f32 0.0, %v5714
  %5716 = vdwg.mxu0
  %5717 = vmatpush.msra.mxu0 %v5689
  %5718 = vmatpush.msra.mxu0 %v5681
  %5719 = vmatpush.msra.mxu0 %v5673
  %5720 = vmatpush.msra.mxu0 %v5665
  %5721 = vmatpush.msra.mxu0 %v5657
  %5722 = vmatpush.msra.mxu0 %v5649
  %5723 = vmatpush.msra.mxu0 %v5641
  %5724 = vmatpush.msra.mxu0 %v5633
  %5725 = vmatpush.msra.mxu0 %v5625
  %5726 = vmatpush.msra.mxu0 %v5617
  %5727 = vmatpush.msra.mxu0 %v5609
  %5728 = vmatpush.msra.mxu0 %v5601
  %5729 = vmatpush.msra.mxu0 %v5593
  %5730 = vmatpush.msra.mxu0 %v5585
  %5731 = vmatpush.msra.mxu0 %v5577
  %5732 = vmatpush.msra.mxu0 %v5569
  %5733 = vmatmul.f32.gmra.mxu0 %v5430
  %v5734 = vpop.f32.mrf.mxu0
  %v5735 = vadd.f32 %v5715, %v5734
  %5736 = vdwg.mxu0
  %5737 = vmatpush.msra.mxu0 %v5562
  %5738 = vmatpush.msra.mxu0 %v5554
  %5739 = vmatpush.msra.mxu0 %v5546
  %5740 = vmatpush.msra.mxu0 %v5538
  %5741 = vmatpush.msra.mxu0 %v5530
  %5742 = vmatpush.msra.mxu0 %v5522
  %5743 = vmatpush.msra.mxu0 %v5514
  %5744 = vmatpush.msra.mxu0 %v5506
  %5745 = vmatpush.msra.mxu0 %v5498
  %5746 = vmatpush.msra.mxu0 %v5490
  %5747 = vmatpush.msra.mxu0 %v5482
  %5748 = vmatpush.msra.mxu0 %v5474
  %5749 = vmatpush.msra.mxu0 %v5466
  %5750 = vmatpush.msra.mxu0 %v5458
  %5751 = vmatpush.msra.mxu0 %v5450
  %5752 = vmatpush.msra.mxu0 %v5442
  %5753 = vmatmul.f32.gmra.mxu0 %v5429
  %v5754 = vpop.f32.mrf.mxu0
  %v5755 = vadd.f32 0.0, %v5754
  %5756 = vdwg.mxu0
  %5757 = vmatpush.msra.mxu0 %v5690
  %5758 = vmatpush.msra.mxu0 %v5682
  %5759 = vmatpush.msra.mxu0 %v5674
  %5760 = vmatpush.msra.mxu0 %v5666
  %5761 = vmatpush.msra.mxu0 %v5658
  %5762 = vmatpush.msra.mxu0 %v5650
  %5763 = vmatpush.msra.mxu0 %v5642
  %5764 = vmatpush.msra.mxu0 %v5634
  %5765 = vmatpush.msra.mxu0 %v5626
  %5766 = vmatpush.msra.mxu0 %v5618
  %5767 = vmatpush.msra.mxu0 %v5610
  %5768 = vmatpush.msra.mxu0 %v5602
  %5769 = vmatpush.msra.mxu0 %v5594
  %5770 = vmatpush.msra.mxu0 %v5586
  %5771 = vmatpush.msra.mxu0 %v5578
  %5772 = vmatpush.msra.mxu0 %v5570
  %5773 = vmatmul.f32.gmra.mxu0 %v5430
  %v5774 = vpop.f32.mrf.mxu0
  %v5775 = vadd.f32 %v5755, %v5774
  %5776 = vdwg.mxu0
  %5777 = vmatpush.msra.mxu0 %v5563
  %5778 = vmatpush.msra.mxu0 %v5555
  %5779 = vmatpush.msra.mxu0 %v5547
  %5780 = vmatpush.msra.mxu0 %v5539
  %5781 = vmatpush.msra.mxu0 %v5531
  %5782 = vmatpush.msra.mxu0 %v5523
  %5783 = vmatpush.msra.mxu0 %v5515
  %5784 = vmatpush.msra.mxu0 %v5507
  %5785 = vmatpush.msra.mxu0 %v5499
  %5786 = vmatpush.msra.mxu0 %v5491
  %5787 = vmatpush.msra.mxu0 %v5483
  %5788 = vmatpush.msra.mxu0 %v5475
  %5789 = vmatpush.msra.mxu0 %v5467
  %5790 = vmatpush.msra.mxu0 %v5459
  %5791 = vmatpush.msra.mxu0 %v5451
  %5792 = vmatpush.msra.mxu0 %v5443
  %5793 = vmatmul.f32.gmra.mxu0 %v5429
  %v5794 = vpop.f32.mrf.mxu0
  %v5795 = vadd.f32 0.0, %v5794
  %5796 = vdwg.mxu0
  %5797 = vmatpush.msra.mxu0 %v5691
  %5798 = vmatpush.msra.mxu0 %v5683
  %5799 = vmatpush.msra.mxu0 %v5675
  %5800 = vmatpush.msra.mxu0 %v5667
  %5801 = vmatpush.msra.mxu0 %v5659
  %5802 = vmatpush.msra.mxu0 %v5651
  %5803 = vmatpush.msra.mxu0 %v5643
  %5804 = vmatpush.msra.mxu0 %v5635
  %5805 = vmatpush.msra.mxu0 %v5627
  %5806 = vmatpush.msra.mxu0 %v5619
  %5807 = vmatpush.msra.mxu0 %v5611
  %5808 = vmatpush.msra.mxu0 %v5603
  %5809 = vmatpush.msra.mxu0 %v5595
  %5810 = vmatpush.msra.mxu0 %v5587
  %5811 = vmatpush.msra.mxu0 %v5579
  %5812 = vmatpush.msra.mxu0 %v5571
  %5813 = vmatmul.f32.gmra.mxu0 %v5430
  %v5814 = vpop.f32.mrf.mxu0
  %v5815 = vadd.f32 %v5795, %v5814
  %5816 = vdwg.mxu0
  %5817 = vmatpush.msra.mxu0 %v5564
  %5818 = vmatpush.msra.mxu0 %v5556
  %5819 = vmatpush.msra.mxu0 %v5548
  %5820 = vmatpush.msra.mxu0 %v5540
  %5821 = vmatpush.msra.mxu0 %v5532
  %5822 = vmatpush.msra.mxu0 %v5524
  %5823 = vmatpush.msra.mxu0 %v5516
  %5824 = vmatpush.msra.mxu0 %v5508
  %5825 = vmatpush.msra.mxu0 %v5500
  %5826 = vmatpush.msra.mxu0 %v5492
  %5827 = vmatpush.msra.mxu0 %v5484
  %5828 = vmatpush.msra.mxu0 %v5476
  %5829 = vmatpush.msra.mxu0 %v5468
  %5830 = vmatpush.msra.mxu0 %v5460
  %5831 = vmatpush.msra.mxu0 %v5452
  %5832 = vmatpush.msra.mxu0 %v5444
  %5833 = vmatmul.f32.gmra.mxu0 %v5429
  %v5834 = vpop.f32.mrf.mxu0
  %v5835 = vadd.f32 0.0, %v5834
  %5836 = vdwg.mxu0
  %5837 = vmatpush.msra.mxu0 %v5692
  %5838 = vmatpush.msra.mxu0 %v5684
  %5839 = vmatpush.msra.mxu0 %v5676
  %5840 = vmatpush.msra.mxu0 %v5668
  %5841 = vmatpush.msra.mxu0 %v5660
  %5842 = vmatpush.msra.mxu0 %v5652
  %5843 = vmatpush.msra.mxu0 %v5644
  %5844 = vmatpush.msra.mxu0 %v5636
  %5845 = vmatpush.msra.mxu0 %v5628
  %5846 = vmatpush.msra.mxu0 %v5620
  %5847 = vmatpush.msra.mxu0 %v5612
  %5848 = vmatpush.msra.mxu0 %v5604
  %5849 = vmatpush.msra.mxu0 %v5596
  %5850 = vmatpush.msra.mxu0 %v5588
  %5851 = vmatpush.msra.mxu0 %v5580
  %5852 = vmatpush.msra.mxu0 %v5572
  %5853 = vmatmul.f32.gmra.mxu0 %v5430
  %v5854 = vpop.f32.mrf.mxu0
  %v5855 = vadd.f32 %v5835, %v5854
  %5856 = vdwg.mxu0
  %5857 = vmatpush.msra.mxu0 %v5565
  %5858 = vmatpush.msra.mxu0 %v5557
  %5859 = vmatpush.msra.mxu0 %v5549
  %5860 = vmatpush.msra.mxu0 %v5541
  %5861 = vmatpush.msra.mxu0 %v5533
  %5862 = vmatpush.msra.mxu0 %v5525
  %5863 = vmatpush.msra.mxu0 %v5517
  %5864 = vmatpush.msra.mxu0 %v5509
  %5865 = vmatpush.msra.mxu0 %v5501
  %5866 = vmatpush.msra.mxu0 %v5493
  %5867 = vmatpush.msra.mxu0 %v5485
  %5868 = vmatpush.msra.mxu0 %v5477
  %5869 = vmatpush.msra.mxu0 %v5469
  %5870 = vmatpush.msra.mxu0 %v5461
  %5871 = vmatpush.msra.mxu0 %v5453
  %5872 = vmatpush.msra.mxu0 %v5445
  %5873 = vmatmul.f32.gmra.mxu0 %v5429
  %v5874 = vpop.f32.mrf.mxu0
  %v5875 = vadd.f32 0.0, %v5874
  %5876 = vdwg.mxu0
  %5877 = vmatpush.msra.mxu0 %v5693
  %5878 = vmatpush.msra.mxu0 %v5685
  %5879 = vmatpush.msra.mxu0 %v5677
  %5880 = vmatpush.msra.mxu0 %v5669
  %5881 = vmatpush.msra.mxu0 %v5661
  %5882 = vmatpush.msra.mxu0 %v5653
  %5883 = vmatpush.msra.mxu0 %v5645
  %5884 = vmatpush.msra.mxu0 %v5637
  %5885 = vmatpush.msra.mxu0 %v5629
  %5886 = vmatpush.msra.mxu0 %v5621
  %5887 = vmatpush.msra.mxu0 %v5613
  %5888 = vmatpush.msra.mxu0 %v5605
  %5889 = vmatpush.msra.mxu0 %v5597
  %5890 = vmatpush.msra.mxu0 %v5589
  %5891 = vmatpush.msra.mxu0 %v5581
  %5892 = vmatpush.msra.mxu0 %v5573
  %5893 = vmatmul.f32.gmra.mxu0 %v5430
  %v5894 = vpop.f32.mrf.mxu0
  %v5895 = vadd.f32 %v5875, %v5894
  %5896 = vdwg.mxu0
  %5897 = vmatpush.msra.mxu0 %v5566
  %5898 = vmatpush.msra.mxu0 %v5558
  %5899 = vmatpush.msra.mxu0 %v5550
  %5900 = vmatpush.msra.mxu0 %v5542
  %5901 = vmatpush.msra.mxu0 %v5534
  %5902 = vmatpush.msra.mxu0 %v5526
  %5903 = vmatpush.msra.mxu0 %v5518
  %5904 = vmatpush.msra.mxu0 %v5510
  %5905 = vmatpush.msra.mxu0 %v5502
  %5906 = vmatpush.msra.mxu0 %v5494
  %5907 = vmatpush.msra.mxu0 %v5486
  %5908 = vmatpush.msra.mxu0 %v5478
  %5909 = vmatpush.msra.mxu0 %v5470
  %5910 = vmatpush.msra.mxu0 %v5462
  %5911 = vmatpush.msra.mxu0 %v5454
  %5912 = vmatpush.msra.mxu0 %v5446
  %5913 = vmatmul.f32.gmra.mxu0 %v5429
  %v5914 = vpop.f32.mrf.mxu0
  %v5915 = vadd.f32 0.0, %v5914
  %5916 = vdwg.mxu0
  %5917 = vmatpush.msra.mxu0 %v5694
  %5918 = vmatpush.msra.mxu0 %v5686
  %5919 = vmatpush.msra.mxu0 %v5678
  %5920 = vmatpush.msra.mxu0 %v5670
  %5921 = vmatpush.msra.mxu0 %v5662
  %5922 = vmatpush.msra.mxu0 %v5654
  %5923 = vmatpush.msra.mxu0 %v5646
  %5924 = vmatpush.msra.mxu0 %v5638
  %5925 = vmatpush.msra.mxu0 %v5630
  %5926 = vmatpush.msra.mxu0 %v5622
  %5927 = vmatpush.msra.mxu0 %v5614
  %5928 = vmatpush.msra.mxu0 %v5606
  %5929 = vmatpush.msra.mxu0 %v5598
  %5930 = vmatpush.msra.mxu0 %v5590
  %5931 = vmatpush.msra.mxu0 %v5582
  %5932 = vmatpush.msra.mxu0 %v5574
  %5933 = vmatmul.f32.gmra.mxu0 %v5430
  %v5934 = vpop.f32.mrf.mxu0
  %v5935 = vadd.f32 %v5915, %v5934
  %5936 = vdwg.mxu0
  %5937 = vmatpush.msra.mxu0 %v5567
  %5938 = vmatpush.msra.mxu0 %v5559
  %5939 = vmatpush.msra.mxu0 %v5551
  %5940 = vmatpush.msra.mxu0 %v5543
  %5941 = vmatpush.msra.mxu0 %v5535
  %5942 = vmatpush.msra.mxu0 %v5527
  %5943 = vmatpush.msra.mxu0 %v5519
  %5944 = vmatpush.msra.mxu0 %v5511
  %5945 = vmatpush.msra.mxu0 %v5503
  %5946 = vmatpush.msra.mxu0 %v5495
  %5947 = vmatpush.msra.mxu0 %v5487
  %5948 = vmatpush.msra.mxu0 %v5479
  %5949 = vmatpush.msra.mxu0 %v5471
  %5950 = vmatpush.msra.mxu0 %v5463
  %5951 = vmatpush.msra.mxu0 %v5455
  %5952 = vmatpush.msra.mxu0 %v5447
  %5953 = vmatmul.f32.gmra.mxu0 %v5429
  %v5954 = vpop.f32.mrf.mxu0
  %v5955 = vadd.f32 0.0, %v5954
  %5956 = vdwg.mxu0
  %5957 = vmatpush.msra.mxu0 %v5695
  %5958 = vmatpush.msra.mxu0 %v5687
  %5959 = vmatpush.msra.mxu0 %v5679
  %5960 = vmatpush.msra.mxu0 %v5671
  %5961 = vmatpush.msra.mxu0 %v5663
  %5962 = vmatpush.msra.mxu0 %v5655
  %5963 = vmatpush.msra.mxu0 %v5647
  %5964 = vmatpush.msra.mxu0 %v5639
  %5965 = vmatpush.msra.mxu0 %v5631
  %5966 = vmatpush.msra.mxu0 %v5623
  %5967 = vmatpush.msra.mxu0 %v5615
  %5968 = vmatpush.msra.mxu0 %v5607
  %5969 = vmatpush.msra.mxu0 %v5599
  %5970 = vmatpush.msra.mxu0 %v5591
  %5971 = vmatpush.msra.mxu0 %v5583
  %5972 = vmatpush.msra.mxu0 %v5575
  %5973 = vmatmul.f32.gmra.mxu0 %v5430
  %v5974 = vpop.f32.mrf.mxu0
  %v5975 = vadd.f32 %v5955, %v5974
  %5976 = vdwg.mxu0
  %5977 = vmatpush.msra.mxu0 %v5568
  %5978 = vmatpush.msra.mxu0 %v5560
  %5979 = vmatpush.msra.mxu0 %v5552
  %5980 = vmatpush.msra.mxu0 %v5544
  %5981 = vmatpush.msra.mxu0 %v5536
  %5982 = vmatpush.msra.mxu0 %v5528
  %5983 = vmatpush.msra.mxu0 %v5520
  %5984 = vmatpush.msra.mxu0 %v5512
  %5985 = vmatpush.msra.mxu0 %v5504
  %5986 = vmatpush.msra.mxu0 %v5496
  %5987 = vmatpush.msra.mxu0 %v5488
  %5988 = vmatpush.msra.mxu0 %v5480
  %5989 = vmatpush.msra.mxu0 %v5472
  %5990 = vmatpush.msra.mxu0 %v5464
  %5991 = vmatpush.msra.mxu0 %v5456
  %5992 = vmatpush.msra.mxu0 %v5448
  %5993 = vmatmul.f32.gmra.mxu0 %v5429
  %v5994 = vpop.f32.mrf.mxu0
  %v5995 = vadd.f32 0.0, %v5994
  %5996 = vdwg.mxu0
  %5997 = vmatpush.msra.mxu0 %v5696
  %5998 = vmatpush.msra.mxu0 %v5688
  %5999 = vmatpush.msra.mxu0 %v5680
  %6000 = vmatpush.msra.mxu0 %v5672
  %6001 = vmatpush.msra.mxu0 %v5664
  %6002 = vmatpush.msra.mxu0 %v5656
  %6003 = vmatpush.msra.mxu0 %v5648
  %6004 = vmatpush.msra.mxu0 %v5640
  %6005 = vmatpush.msra.mxu0 %v5632
  %6006 = vmatpush.msra.mxu0 %v5624
  %6007 = vmatpush.msra.mxu0 %v5616
  %6008 = vmatpush.msra.mxu0 %v5608
  %6009 = vmatpush.msra.mxu0 %v5600
  %6010 = vmatpush.msra.mxu0 %v5592
  %6011 = vmatpush.msra.mxu0 %v5584
  %6012 = vmatpush.msra.mxu0 %v5576
  %6013 = vmatmul.f32.gmra.mxu0 %v5430
  %v6014 = vpop.f32.mrf.mxu0
  %v6015 = vadd.f32 %v5995, %v6014
  %6016 = vdwg.mxu0
  %v6017 = vadd.f32 %v5433, %v5735
  %v6018 = vadd.f32 %v5434, %v5775
  %v6019 = vadd.f32 %v5435, %v5815
  %v6020 = vadd.f32 %v5436, %v5855
  %v6021 = vadd.f32 %v5437, %v5895
  %v6022 = vadd.f32 %v5438, %v5935
  %v6023 = vadd.f32 %v5439, %v5975
  %v6024 = vadd.f32 %v5440, %v6015
  %v6025 = vxor.u32 %v6017, 2147483648
  %v6026 = vxor.u32 %v6018, 2147483648
  %v6027 = vxor.u32 %v6019, 2147483648
  %v6028 = vxor.u32 %v6020, 2147483648
  %v6029 = vxor.u32 %v6021, 2147483648
  %v6030 = vxor.u32 %v6022, 2147483648
  %v6031 = vmul.f32 %v6025, 1.442695
  %v6032 = vpow.pop %v6031
  %v6033 = vmul.f32 %v6026, 1.442695
  %v6034 = vpow.pop %v6033
  %v6035 = vmul.f32 %v6027, 1.442695
  %v6036 = vpow.pop %v6035
  %v6037 = vmul.f32 %v6028, 1.442695
  %v6038 = vpow.pop %v6037
  %v6039 = vmul.f32 %v6029, 1.442695
  %v6040 = vpow.pop %v6039
  %v6041 = vmul.f32 %v6030, 1.442695
  %v6042 = vpow.pop %v6041
  %v6043 = vadd.f32 %v6032, 1.0
  %v6044 = vadd.f32 %v6034, 1.0
  %v6045 = vadd.f32 %v6036, 1.0
  %v6046 = vadd.f32 %v6038, 1.0
  %v6047 = vadd.f32 %v6040, 1.0
  %v6048 = vadd.f32 %v6042, 1.0
  %v6049 = vrcp.pop %v6043
  %v6050 = vmul.f32 %v6043, %v6049
  %v6051 = vsub.f32 1.0, %v6050
  %v6052 = vmul.f32 %v6049, %v6051
  %v6053 = vadd.f32 %v6049, %v6052
  %vm6054 = vweird.f32 %v6043
  %vm6055 = vweird.f32 %v6049
  %vm6056 = vmor %vm6054, %vm6055
  %v6057 = vsel %vm6056, %v6049, %v6053
  %v6058 = vand.u32 2147483647, %v6043
  %vm6059 = vcmp.eq.f32.partialorder %v6058, 8.507059e+37
  %v6060 = vand.u32 %v6043, 2147483648
  %v6061 = vor.u32 1.1754944e-38, %v6060
  %v6062 = vsel %vm6059, %v6061, %v6057
  %v6063 = vmul.f32 1.0, %v6062
  %v6064 = vrcp.pop %v6044
  %v6065 = vmul.f32 %v6044, %v6064
  %v6066 = vsub.f32 1.0, %v6065
  %v6067 = vmul.f32 %v6064, %v6066
  %v6068 = vadd.f32 %v6064, %v6067
  %vm6069 = vweird.f32 %v6044
  %vm6070 = vweird.f32 %v6064
  %vm6071 = vmor %vm6069, %vm6070
  %v6072 = vsel %vm6071, %v6064, %v6068
  %v6073 = vand.u32 2147483647, %v6044
  %vm6074 = vcmp.eq.f32.partialorder %v6073, 8.507059e+37
  %v6075 = vand.u32 %v6044, 2147483648
  %v6076 = vor.u32 1.1754944e-38, %v6075
  %v6077 = vsel %vm6074, %v6076, %v6072
  %v6078 = vmul.f32 1.0, %v6077
  %v6079 = vrcp.pop %v6045
  %v6080 = vmul.f32 %v6045, %v6079
  %v6081 = vsub.f32 1.0, %v6080
  %v6082 = vmul.f32 %v6079, %v6081
  %v6083 = vadd.f32 %v6079, %v6082
  %vm6084 = vweird.f32 %v6045
  %vm6085 = vweird.f32 %v6079
  %vm6086 = vmor %vm6084, %vm6085
  %v6087 = vsel %vm6086, %v6079, %v6083
  %v6088 = vand.u32 2147483647, %v6045
  %vm6089 = vcmp.eq.f32.partialorder %v6088, 8.507059e+37
  %v6090 = vand.u32 %v6045, 2147483648
  %v6091 = vor.u32 1.1754944e-38, %v6090
  %v6092 = vsel %vm6089, %v6091, %v6087
  %v6093 = vmul.f32 1.0, %v6092
  %v6094 = vrcp.pop %v6046
  %v6095 = vmul.f32 %v6046, %v6094
  %v6096 = vsub.f32 1.0, %v6095
  %v6097 = vmul.f32 %v6094, %v6096
  %v6098 = vadd.f32 %v6094, %v6097
  %vm6099 = vweird.f32 %v6046
  %vm6100 = vweird.f32 %v6094
  %vm6101 = vmor %vm6099, %vm6100
  %v6102 = vsel %vm6101, %v6094, %v6098
  %v6103 = vand.u32 2147483647, %v6046
  %vm6104 = vcmp.eq.f32.partialorder %v6103, 8.507059e+37
  %v6105 = vand.u32 %v6046, 2147483648
  %v6106 = vor.u32 1.1754944e-38, %v6105
  %v6107 = vsel %vm6104, %v6106, %v6102
  %v6108 = vmul.f32 1.0, %v6107
  %v6109 = vrcp.pop %v6047
  %v6110 = vmul.f32 %v6047, %v6109
  %v6111 = vsub.f32 1.0, %v6110
  %v6112 = vmul.f32 %v6109, %v6111
  %v6113 = vadd.f32 %v6109, %v6112
  %vm6114 = vweird.f32 %v6047
  %vm6115 = vweird.f32 %v6109
  %vm6116 = vmor %vm6114, %vm6115
  %v6117 = vsel %vm6116, %v6109, %v6113
  %v6118 = vand.u32 2147483647, %v6047
  %vm6119 = vcmp.eq.f32.partialorder %v6118, 8.507059e+37
  %v6120 = vand.u32 %v6047, 2147483648
  %v6121 = vor.u32 1.1754944e-38, %v6120
  %v6122 = vsel %vm6119, %v6121, %v6117
  %v6123 = vmul.f32 1.0, %v6122
  %v6124 = vrcp.pop %v6048
  %v6125 = vmul.f32 %v6048, %v6124
  %v6126 = vsub.f32 1.0, %v6125
  %v6127 = vmul.f32 %v6124, %v6126
  %v6128 = vadd.f32 %v6124, %v6127
  %vm6129 = vweird.f32 %v6048
  %vm6130 = vweird.f32 %v6124
  %vm6131 = vmor %vm6129, %vm6130
  %v6132 = vsel %vm6131, %v6124, %v6128
  %v6133 = vand.u32 2147483647, %v6048
  %vm6134 = vcmp.eq.f32.partialorder %v6133, 8.507059e+37
  %v6135 = vand.u32 %v6048, 2147483648
  %v6136 = vor.u32 1.1754944e-38, %v6135
  %v6137 = vsel %vm6134, %v6136, %v6132
  %v6138 = vmul.f32 1.0, %v6137
  %v6139 = vtanh.pop %v6023
  %v6140 = vtanh.pop %v6024
  %v6141 = vmul.f32 %v6093, %v5425
  %v6142 = vmul.f32 %v6108, %v5426
  %v6143 = vmul.f32 %v6063, %v6139
  %v6144 = vmul.f32 %v6078, %v6140
  %v6145 = vadd.f32 %v6141, %v6143
  %v6146 = vadd.f32 %v6142, %v6144
  %v6147 = vtanh.pop %v6145
  %v6148 = vtanh.pop %v6146
  %v6149 = vmul.f32 %v6123, %v6147
  %v6150 = vmul.f32 %v6138, %v6148
  %6151 = vst [vmem:[#allocation3 + $0x60] sm:$0xff] %v6149
  %6152 = vst [vmem:[#allocation3 + $0x18] sm:$0xff] %v6150
  %v6153 = vld [vmem:[#allocation2 + $0x1c0] sm:$0xff]
  %v6154 = vld [vmem:[#allocation2 + $0x1c8] sm:$0xff]
  %v6155 = vld [vmem:[#allocation2 + $0x1d0] sm:$0xff]
  %v6156 = vld [vmem:[#allocation2 + $0x1d8] sm:$0xff]
  %v6157 = vld [vmem:[#allocation2 + $0x1e0] sm:$0xff]
  %v6158 = vld [vmem:[#allocation2 + $0x1e8] sm:$0xff]
  %v6159 = vld [vmem:[#allocation2 + $0x1f0] sm:$0xff]
  %v6160 = vld [vmem:[#allocation2 + $0x1f8] sm:$0xff]
  %v6161 = vld [vmem:[%s3] sm:$0xff]
  %v6162 = vld [vmem:[%s3 + $0x8] sm:$0xff]
  %v6163 = vld [vmem:[%s3 + $0x10] sm:$0xff]
  %v6164 = vld [vmem:[%s3 + $0x18] sm:$0xff]
  %v6165 = vld [vmem:[%s3 + $0x20] sm:$0xff]
  %v6166 = vld [vmem:[%s3 + $0x28] sm:$0xff]
  %v6167 = vld [vmem:[%s3 + $0x30] sm:$0xff]
  %v6168 = vld [vmem:[%s3 + $0x38] sm:$0xff]
  %v6169 = vld [vmem:[%s3 + $0x40] sm:$0xff]
  %v6170 = vld [vmem:[%s3 + $0x48] sm:$0xff]
  %v6171 = vld [vmem:[%s3 + $0x50] sm:$0xff]
  %v6172 = vld [vmem:[%s3 + $0x58] sm:$0xff]
  %v6173 = vld [vmem:[%s3 + $0x60] sm:$0xff]
  %v6174 = vld [vmem:[%s3 + $0x68] sm:$0xff]
  %v6175 = vld [vmem:[%s3 + $0x70] sm:$0xff]
  %v6176 = vld [vmem:[%s3 + $0x78] sm:$0xff]
  %v6177 = vld [vmem:[%s3 + $0x80] sm:$0xff]
  %v6178 = vld [vmem:[%s3 + $0x88] sm:$0xff]
  %v6179 = vld [vmem:[%s3 + $0x90] sm:$0xff]
  %v6180 = vld [vmem:[%s3 + $0x98] sm:$0xff]
  %v6181 = vld [vmem:[%s3 + $0xa0] sm:$0xff]
  %v6182 = vld [vmem:[%s3 + $0xa8] sm:$0xff]
  %v6183 = vld [vmem:[%s3 + $0xb0] sm:$0xff]
  %v6184 = vld [vmem:[%s3 + $0xb8] sm:$0xff]
  %v6185 = vld [vmem:[%s3 + $0xc0] sm:$0xff]
  %v6186 = vld [vmem:[%s3 + $0xc8] sm:$0xff]
  %v6187 = vld [vmem:[%s3 + $0xd0] sm:$0xff]
  %v6188 = vld [vmem:[%s3 + $0xd8] sm:$0xff]
  %v6189 = vld [vmem:[%s3 + $0xe0] sm:$0xff]
  %v6190 = vld [vmem:[%s3 + $0xe8] sm:$0xff]
  %v6191 = vld [vmem:[%s3 + $0xf0] sm:$0xff]
  %v6192 = vld [vmem:[%s3 + $0xf8] sm:$0xff]
  %v6193 = vld [vmem:[%s3 + $0x100] sm:$0xff]
  %v6194 = vld [vmem:[%s3 + $0x108] sm:$0xff]
  %v6195 = vld [vmem:[%s3 + $0x110] sm:$0xff]
  %v6196 = vld [vmem:[%s3 + $0x118] sm:$0xff]
  %v6197 = vld [vmem:[%s3 + $0x120] sm:$0xff]
  %v6198 = vld [vmem:[%s3 + $0x128] sm:$0xff]
  %v6199 = vld [vmem:[%s3 + $0x130] sm:$0xff]
  %v6200 = vld [vmem:[%s3 + $0x138] sm:$0xff]
  %v6201 = vld [vmem:[%s3 + $0x140] sm:$0xff]
  %v6202 = vld [vmem:[%s3 + $0x148] sm:$0xff]
  %v6203 = vld [vmem:[%s3 + $0x150] sm:$0xff]
  %v6204 = vld [vmem:[%s3 + $0x158] sm:$0xff]
  %v6205 = vld [vmem:[%s3 + $0x160] sm:$0xff]
  %v6206 = vld [vmem:[%s3 + $0x168] sm:$0xff]
  %v6207 = vld [vmem:[%s3 + $0x170] sm:$0xff]
  %v6208 = vld [vmem:[%s3 + $0x178] sm:$0xff]
  %v6209 = vld [vmem:[%s3 + $0x180] sm:$0xff]
  %v6210 = vld [vmem:[%s3 + $0x188] sm:$0xff]
  %v6211 = vld [vmem:[%s3 + $0x190] sm:$0xff]
  %v6212 = vld [vmem:[%s3 + $0x198] sm:$0xff]
  %v6213 = vld [vmem:[%s3 + $0x1a0] sm:$0xff]
  %v6214 = vld [vmem:[%s3 + $0x1a8] sm:$0xff]
  %v6215 = vld [vmem:[%s3 + $0x1b0] sm:$0xff]
  %v6216 = vld [vmem:[%s3 + $0x1b8] sm:$0xff]
  %v6217 = vld [vmem:[%s3 + $0x1c0] sm:$0xff]
  %v6218 = vld [vmem:[%s3 + $0x1c8] sm:$0xff]
  %v6219 = vld [vmem:[%s3 + $0x1d0] sm:$0xff]
  %v6220 = vld [vmem:[%s3 + $0x1d8] sm:$0xff]
  %v6221 = vld [vmem:[%s3 + $0x1e0] sm:$0xff]
  %v6222 = vld [vmem:[%s3 + $0x1e8] sm:$0xff]
  %v6223 = vld [vmem:[%s3 + $0x1f0] sm:$0xff]
  %v6224 = vld [vmem:[%s3 + $0x1f8] sm:$0xff]
  %v6225 = vld [vmem:[%s3 + $0x200] sm:$0xff]
  %v6226 = vld [vmem:[%s3 + $0x208] sm:$0xff]
  %v6227 = vld [vmem:[%s3 + $0x210] sm:$0xff]
  %v6228 = vld [vmem:[%s3 + $0x218] sm:$0xff]
  %v6229 = vld [vmem:[%s3 + $0x220] sm:$0xff]
  %v6230 = vld [vmem:[%s3 + $0x228] sm:$0xff]
  %v6231 = vld [vmem:[%s3 + $0x230] sm:$0xff]
  %v6232 = vld [vmem:[%s3 + $0x238] sm:$0xff]
  %v6233 = vld [vmem:[%s3 + $0x240] sm:$0xff]
  %v6234 = vld [vmem:[%s3 + $0x248] sm:$0xff]
  %v6235 = vld [vmem:[%s3 + $0x250] sm:$0xff]
  %v6236 = vld [vmem:[%s3 + $0x258] sm:$0xff]
  %v6237 = vld [vmem:[%s3 + $0x260] sm:$0xff]
  %v6238 = vld [vmem:[%s3 + $0x268] sm:$0xff]
  %v6239 = vld [vmem:[%s3 + $0x270] sm:$0xff]
  %v6240 = vld [vmem:[%s3 + $0x278] sm:$0xff]
  %v6241 = vld [vmem:[%s3 + $0x280] sm:$0xff]
  %v6242 = vld [vmem:[%s3 + $0x288] sm:$0xff]
  %v6243 = vld [vmem:[%s3 + $0x290] sm:$0xff]
  %v6244 = vld [vmem:[%s3 + $0x298] sm:$0xff]
  %v6245 = vld [vmem:[%s3 + $0x2a0] sm:$0xff]
  %v6246 = vld [vmem:[%s3 + $0x2a8] sm:$0xff]
  %v6247 = vld [vmem:[%s3 + $0x2b0] sm:$0xff]
  %v6248 = vld [vmem:[%s3 + $0x2b8] sm:$0xff]
  %v6249 = vld [vmem:[%s3 + $0x2c0] sm:$0xff]
  %v6250 = vld [vmem:[%s3 + $0x2c8] sm:$0xff]
  %v6251 = vld [vmem:[%s3 + $0x2d0] sm:$0xff]
  %v6252 = vld [vmem:[%s3 + $0x2d8] sm:$0xff]
  %v6253 = vld [vmem:[%s3 + $0x2e0] sm:$0xff]
  %v6254 = vld [vmem:[%s3 + $0x2e8] sm:$0xff]
  %v6255 = vld [vmem:[%s3 + $0x2f0] sm:$0xff]
  %v6256 = vld [vmem:[%s3 + $0x2f8] sm:$0xff]
  %v6257 = vld [vmem:[%s3 + $0x300] sm:$0xff]
  %v6258 = vld [vmem:[%s3 + $0x308] sm:$0xff]
  %v6259 = vld [vmem:[%s3 + $0x310] sm:$0xff]
  %v6260 = vld [vmem:[%s3 + $0x318] sm:$0xff]
  %v6261 = vld [vmem:[%s3 + $0x320] sm:$0xff]
  %v6262 = vld [vmem:[%s3 + $0x328] sm:$0xff]
  %v6263 = vld [vmem:[%s3 + $0x330] sm:$0xff]
  %v6264 = vld [vmem:[%s3 + $0x338] sm:$0xff]
  %v6265 = vld [vmem:[%s3 + $0x340] sm:$0xff]
  %v6266 = vld [vmem:[%s3 + $0x348] sm:$0xff]
  %v6267 = vld [vmem:[%s3 + $0x350] sm:$0xff]
  %v6268 = vld [vmem:[%s3 + $0x358] sm:$0xff]
  %v6269 = vld [vmem:[%s3 + $0x360] sm:$0xff]
  %v6270 = vld [vmem:[%s3 + $0x368] sm:$0xff]
  %v6271 = vld [vmem:[%s3 + $0x370] sm:$0xff]
  %v6272 = vld [vmem:[%s3 + $0x378] sm:$0xff]
  %v6273 = vld [vmem:[%s3 + $0x380] sm:$0xff]
  %v6274 = vld [vmem:[%s3 + $0x388] sm:$0xff]
  %v6275 = vld [vmem:[%s3 + $0x390] sm:$0xff]
  %v6276 = vld [vmem:[%s3 + $0x398] sm:$0xff]
  %v6277 = vld [vmem:[%s3 + $0x3a0] sm:$0xff]
  %v6278 = vld [vmem:[%s3 + $0x3a8] sm:$0xff]
  %v6279 = vld [vmem:[%s3 + $0x3b0] sm:$0xff]
  %v6280 = vld [vmem:[%s3 + $0x3b8] sm:$0xff]
  %v6281 = vld [vmem:[%s3 + $0x3c0] sm:$0xff]
  %v6282 = vld [vmem:[%s3 + $0x3c8] sm:$0xff]
  %v6283 = vld [vmem:[%s3 + $0x3d0] sm:$0xff]
  %v6284 = vld [vmem:[%s3 + $0x3d8] sm:$0xff]
  %v6285 = vld [vmem:[%s3 + $0x3e0] sm:$0xff]
  %v6286 = vld [vmem:[%s3 + $0x3e8] sm:$0xff]
  %v6287 = vld [vmem:[%s3 + $0x3f0] sm:$0xff]
  %v6288 = vld [vmem:[%s3 + $0x3f8] sm:$0xff]
  %v6289 = vld [vmem:[%s3 + $0x400] sm:$0xff]
  %v6290 = vld [vmem:[%s3 + $0x408] sm:$0xff]
  %v6291 = vld [vmem:[%s3 + $0x410] sm:$0xff]
  %v6292 = vld [vmem:[%s3 + $0x418] sm:$0xff]
  %v6293 = vld [vmem:[%s3 + $0x420] sm:$0xff]
  %v6294 = vld [vmem:[%s3 + $0x428] sm:$0xff]
  %v6295 = vld [vmem:[%s3 + $0x430] sm:$0xff]
  %v6296 = vld [vmem:[%s3 + $0x438] sm:$0xff]
  %v6297 = vld [vmem:[%s3 + $0x440] sm:$0xff]
  %v6298 = vld [vmem:[%s3 + $0x448] sm:$0xff]
  %v6299 = vld [vmem:[%s3 + $0x450] sm:$0xff]
  %v6300 = vld [vmem:[%s3 + $0x458] sm:$0xff]
  %v6301 = vld [vmem:[%s3 + $0x460] sm:$0xff]
  %v6302 = vld [vmem:[%s3 + $0x468] sm:$0xff]
  %v6303 = vld [vmem:[%s3 + $0x470] sm:$0xff]
  %v6304 = vld [vmem:[%s3 + $0x478] sm:$0xff]
  %v6305 = vld [vmem:[%s3 + $0x480] sm:$0xff]
  %v6306 = vld [vmem:[%s3 + $0x488] sm:$0xff]
  %v6307 = vld [vmem:[%s3 + $0x490] sm:$0xff]
  %v6308 = vld [vmem:[%s3 + $0x498] sm:$0xff]
  %v6309 = vld [vmem:[%s3 + $0x4a0] sm:$0xff]
  %v6310 = vld [vmem:[%s3 + $0x4a8] sm:$0xff]
  %v6311 = vld [vmem:[%s3 + $0x4b0] sm:$0xff]
  %v6312 = vld [vmem:[%s3 + $0x4b8] sm:$0xff]
  %v6313 = vld [vmem:[%s3 + $0x4c0] sm:$0xff]
  %v6314 = vld [vmem:[%s3 + $0x4c8] sm:$0xff]
  %v6315 = vld [vmem:[%s3 + $0x4d0] sm:$0xff]
  %v6316 = vld [vmem:[%s3 + $0x4d8] sm:$0xff]
  %v6317 = vld [vmem:[%s3 + $0x4e0] sm:$0xff]
  %v6318 = vld [vmem:[%s3 + $0x4e8] sm:$0xff]
  %v6319 = vld [vmem:[%s3 + $0x4f0] sm:$0xff]
  %v6320 = vld [vmem:[%s3 + $0x4f8] sm:$0xff]
  %v6321 = vld [vmem:[%s3 + $0x500] sm:$0xff]
  %v6322 = vld [vmem:[%s3 + $0x508] sm:$0xff]
  %v6323 = vld [vmem:[%s3 + $0x510] sm:$0xff]
  %v6324 = vld [vmem:[%s3 + $0x518] sm:$0xff]
  %v6325 = vld [vmem:[%s3 + $0x520] sm:$0xff]
  %v6326 = vld [vmem:[%s3 + $0x528] sm:$0xff]
  %v6327 = vld [vmem:[%s3 + $0x530] sm:$0xff]
  %v6328 = vld [vmem:[%s3 + $0x538] sm:$0xff]
  %v6329 = vld [vmem:[%s3 + $0x540] sm:$0xff]
  %v6330 = vld [vmem:[%s3 + $0x548] sm:$0xff]
  %v6331 = vld [vmem:[%s3 + $0x550] sm:$0xff]
  %v6332 = vld [vmem:[%s3 + $0x558] sm:$0xff]
  %v6333 = vld [vmem:[%s3 + $0x560] sm:$0xff]
  %v6334 = vld [vmem:[%s3 + $0x568] sm:$0xff]
  %v6335 = vld [vmem:[%s3 + $0x570] sm:$0xff]
  %v6336 = vld [vmem:[%s3 + $0x578] sm:$0xff]
  %v6337 = vld [vmem:[%s3 + $0x580] sm:$0xff]
  %v6338 = vld [vmem:[%s3 + $0x588] sm:$0xff]
  %v6339 = vld [vmem:[%s3 + $0x590] sm:$0xff]
  %v6340 = vld [vmem:[%s3 + $0x598] sm:$0xff]
  %v6341 = vld [vmem:[%s3 + $0x5a0] sm:$0xff]
  %v6342 = vld [vmem:[%s3 + $0x5a8] sm:$0xff]
  %v6343 = vld [vmem:[%s3 + $0x5b0] sm:$0xff]
  %v6344 = vld [vmem:[%s3 + $0x5b8] sm:$0xff]
  %v6345 = vld [vmem:[%s3 + $0x5c0] sm:$0xff]
  %v6346 = vld [vmem:[%s3 + $0x5c8] sm:$0xff]
  %v6347 = vld [vmem:[%s3 + $0x5d0] sm:$0xff]
  %v6348 = vld [vmem:[%s3 + $0x5d8] sm:$0xff]
  %v6349 = vld [vmem:[%s3 + $0x5e0] sm:$0xff]
  %v6350 = vld [vmem:[%s3 + $0x5e8] sm:$0xff]
  %v6351 = vld [vmem:[%s3 + $0x5f0] sm:$0xff]
  %v6352 = vld [vmem:[%s3 + $0x5f8] sm:$0xff]
  %v6353 = vld [vmem:[%s3 + $0x600] sm:$0xff]
  %v6354 = vld [vmem:[%s3 + $0x608] sm:$0xff]
  %v6355 = vld [vmem:[%s3 + $0x610] sm:$0xff]
  %v6356 = vld [vmem:[%s3 + $0x618] sm:$0xff]
  %v6357 = vld [vmem:[%s3 + $0x620] sm:$0xff]
  %v6358 = vld [vmem:[%s3 + $0x628] sm:$0xff]
  %v6359 = vld [vmem:[%s3 + $0x630] sm:$0xff]
  %v6360 = vld [vmem:[%s3 + $0x638] sm:$0xff]
  %v6361 = vld [vmem:[%s3 + $0x640] sm:$0xff]
  %v6362 = vld [vmem:[%s3 + $0x648] sm:$0xff]
  %v6363 = vld [vmem:[%s3 + $0x650] sm:$0xff]
  %v6364 = vld [vmem:[%s3 + $0x658] sm:$0xff]
  %v6365 = vld [vmem:[%s3 + $0x660] sm:$0xff]
  %v6366 = vld [vmem:[%s3 + $0x668] sm:$0xff]
  %v6367 = vld [vmem:[%s3 + $0x670] sm:$0xff]
  %v6368 = vld [vmem:[%s3 + $0x678] sm:$0xff]
  %v6369 = vld [vmem:[%s3 + $0x680] sm:$0xff]
  %v6370 = vld [vmem:[%s3 + $0x688] sm:$0xff]
  %v6371 = vld [vmem:[%s3 + $0x690] sm:$0xff]
  %v6372 = vld [vmem:[%s3 + $0x698] sm:$0xff]
  %v6373 = vld [vmem:[%s3 + $0x6a0] sm:$0xff]
  %v6374 = vld [vmem:[%s3 + $0x6a8] sm:$0xff]
  %v6375 = vld [vmem:[%s3 + $0x6b0] sm:$0xff]
  %v6376 = vld [vmem:[%s3 + $0x6b8] sm:$0xff]
  %v6377 = vld [vmem:[%s3 + $0x6c0] sm:$0xff]
  %v6378 = vld [vmem:[%s3 + $0x6c8] sm:$0xff]
  %v6379 = vld [vmem:[%s3 + $0x6d0] sm:$0xff]
  %v6380 = vld [vmem:[%s3 + $0x6d8] sm:$0xff]
  %v6381 = vld [vmem:[%s3 + $0x6e0] sm:$0xff]
  %v6382 = vld [vmem:[%s3 + $0x6e8] sm:$0xff]
  %v6383 = vld [vmem:[%s3 + $0x6f0] sm:$0xff]
  %v6384 = vld [vmem:[%s3 + $0x6f8] sm:$0xff]
  %v6385 = vld [vmem:[%s3 + $0x700] sm:$0xff]
  %v6386 = vld [vmem:[%s3 + $0x708] sm:$0xff]
  %v6387 = vld [vmem:[%s3 + $0x710] sm:$0xff]
  %v6388 = vld [vmem:[%s3 + $0x718] sm:$0xff]
  %v6389 = vld [vmem:[%s3 + $0x720] sm:$0xff]
  %v6390 = vld [vmem:[%s3 + $0x728] sm:$0xff]
  %v6391 = vld [vmem:[%s3 + $0x730] sm:$0xff]
  %v6392 = vld [vmem:[%s3 + $0x738] sm:$0xff]
  %v6393 = vld [vmem:[%s3 + $0x740] sm:$0xff]
  %v6394 = vld [vmem:[%s3 + $0x748] sm:$0xff]
  %v6395 = vld [vmem:[%s3 + $0x750] sm:$0xff]
  %v6396 = vld [vmem:[%s3 + $0x758] sm:$0xff]
  %v6397 = vld [vmem:[%s3 + $0x760] sm:$0xff]
  %v6398 = vld [vmem:[%s3 + $0x768] sm:$0xff]
  %v6399 = vld [vmem:[%s3 + $0x770] sm:$0xff]
  %v6400 = vld [vmem:[%s3 + $0x778] sm:$0xff]
  %v6401 = vld [vmem:[%s3 + $0x780] sm:$0xff]
  %v6402 = vld [vmem:[%s3 + $0x788] sm:$0xff]
  %v6403 = vld [vmem:[%s3 + $0x790] sm:$0xff]
  %v6404 = vld [vmem:[%s3 + $0x798] sm:$0xff]
  %v6405 = vld [vmem:[%s3 + $0x7a0] sm:$0xff]
  %v6406 = vld [vmem:[%s3 + $0x7a8] sm:$0xff]
  %v6407 = vld [vmem:[%s3 + $0x7b0] sm:$0xff]
  %v6408 = vld [vmem:[%s3 + $0x7b8] sm:$0xff]
  %v6409 = vld [vmem:[%s3 + $0x7c0] sm:$0xff]
  %v6410 = vld [vmem:[%s3 + $0x7c8] sm:$0xff]
  %v6411 = vld [vmem:[%s3 + $0x7d0] sm:$0xff]
  %v6412 = vld [vmem:[%s3 + $0x7d8] sm:$0xff]
  %v6413 = vld [vmem:[%s3 + $0x7e0] sm:$0xff]
  %v6414 = vld [vmem:[%s3 + $0x7e8] sm:$0xff]
  %v6415 = vld [vmem:[%s3 + $0x7f0] sm:$0xff]
  %v6416 = vld [vmem:[%s3 + $0x7f8] sm:$0xff]
  %6417 = vmatpush.msra.mxu0 %v6281
  %6418 = vmatpush.msra.mxu0 %v6273
  %6419 = vmatpush.msra.mxu0 %v6265
  %6420 = vmatpush.msra.mxu0 %v6257
  %6421 = vmatpush.msra.mxu0 %v6249
  %6422 = vmatpush.msra.mxu0 %v6241
  %6423 = vmatpush.msra.mxu0 %v6233
  %6424 = vmatpush.msra.mxu0 %v6225
  %6425 = vmatpush.msra.mxu0 %v6217
  %6426 = vmatpush.msra.mxu0 %v6209
  %6427 = vmatpush.msra.mxu0 %v6201
  %6428 = vmatpush.msra.mxu0 %v6193
  %6429 = vmatpush.msra.mxu0 %v6185
  %6430 = vmatpush.msra.mxu0 %v6177
  %6431 = vmatpush.msra.mxu0 %v6169
  %6432 = vmatpush.msra.mxu0 %v6161
  %6433 = vmatmul.f32.gmra.mxu0 %v6149
  %v6434 = vpop.f32.mrf.mxu0
  %v6435 = vadd.f32 0.0, %v6434
  %6436 = vdwg.mxu0
  %6437 = vmatpush.msra.mxu0 %v6409
  %6438 = vmatpush.msra.mxu0 %v6401
  %6439 = vmatpush.msra.mxu0 %v6393
  %6440 = vmatpush.msra.mxu0 %v6385
  %6441 = vmatpush.msra.mxu0 %v6377
  %6442 = vmatpush.msra.mxu0 %v6369
  %6443 = vmatpush.msra.mxu0 %v6361
  %6444 = vmatpush.msra.mxu0 %v6353
  %6445 = vmatpush.msra.mxu0 %v6345
  %6446 = vmatpush.msra.mxu0 %v6337
  %6447 = vmatpush.msra.mxu0 %v6329
  %6448 = vmatpush.msra.mxu0 %v6321
  %6449 = vmatpush.msra.mxu0 %v6313
  %6450 = vmatpush.msra.mxu0 %v6305
  %6451 = vmatpush.msra.mxu0 %v6297
  %6452 = vmatpush.msra.mxu0 %v6289
  %6453 = vmatmul.f32.gmra.mxu0 %v6150
  %v6454 = vpop.f32.mrf.mxu0
  %v6455 = vadd.f32 %v6435, %v6454
  %6456 = vdwg.mxu0
  %6457 = vmatpush.msra.mxu0 %v6282
  %6458 = vmatpush.msra.mxu0 %v6274
  %6459 = vmatpush.msra.mxu0 %v6266
  %6460 = vmatpush.msra.mxu0 %v6258
  %6461 = vmatpush.msra.mxu0 %v6250
  %6462 = vmatpush.msra.mxu0 %v6242
  %6463 = vmatpush.msra.mxu0 %v6234
  %6464 = vmatpush.msra.mxu0 %v6226
  %6465 = vmatpush.msra.mxu0 %v6218
  %6466 = vmatpush.msra.mxu0 %v6210
  %6467 = vmatpush.msra.mxu0 %v6202
  %6468 = vmatpush.msra.mxu0 %v6194
  %6469 = vmatpush.msra.mxu0 %v6186
  %6470 = vmatpush.msra.mxu0 %v6178
  %6471 = vmatpush.msra.mxu0 %v6170
  %6472 = vmatpush.msra.mxu0 %v6162
  %6473 = vmatmul.f32.gmra.mxu0 %v6149
  %v6474 = vpop.f32.mrf.mxu0
  %v6475 = vadd.f32 0.0, %v6474
  %6476 = vdwg.mxu0
  %6477 = vmatpush.msra.mxu0 %v6410
  %6478 = vmatpush.msra.mxu0 %v6402
  %6479 = vmatpush.msra.mxu0 %v6394
  %6480 = vmatpush.msra.mxu0 %v6386
  %6481 = vmatpush.msra.mxu0 %v6378
  %6482 = vmatpush.msra.mxu0 %v6370
  %6483 = vmatpush.msra.mxu0 %v6362
  %6484 = vmatpush.msra.mxu0 %v6354
  %6485 = vmatpush.msra.mxu0 %v6346
  %6486 = vmatpush.msra.mxu0 %v6338
  %6487 = vmatpush.msra.mxu0 %v6330
  %6488 = vmatpush.msra.mxu0 %v6322
  %6489 = vmatpush.msra.mxu0 %v6314
  %6490 = vmatpush.msra.mxu0 %v6306
  %6491 = vmatpush.msra.mxu0 %v6298
  %6492 = vmatpush.msra.mxu0 %v6290
  %6493 = vmatmul.f32.gmra.mxu0 %v6150
  %v6494 = vpop.f32.mrf.mxu0
  %v6495 = vadd.f32 %v6475, %v6494
  %6496 = vdwg.mxu0
  %6497 = vmatpush.msra.mxu0 %v6283
  %6498 = vmatpush.msra.mxu0 %v6275
  %6499 = vmatpush.msra.mxu0 %v6267
  %6500 = vmatpush.msra.mxu0 %v6259
  %6501 = vmatpush.msra.mxu0 %v6251
  %6502 = vmatpush.msra.mxu0 %v6243
  %6503 = vmatpush.msra.mxu0 %v6235
  %6504 = vmatpush.msra.mxu0 %v6227
  %6505 = vmatpush.msra.mxu0 %v6219
  %6506 = vmatpush.msra.mxu0 %v6211
  %6507 = vmatpush.msra.mxu0 %v6203
  %6508 = vmatpush.msra.mxu0 %v6195
  %6509 = vmatpush.msra.mxu0 %v6187
  %6510 = vmatpush.msra.mxu0 %v6179
  %6511 = vmatpush.msra.mxu0 %v6171
  %6512 = vmatpush.msra.mxu0 %v6163
  %6513 = vmatmul.f32.gmra.mxu0 %v6149
  %v6514 = vpop.f32.mrf.mxu0
  %v6515 = vadd.f32 0.0, %v6514
  %6516 = vdwg.mxu0
  %6517 = vmatpush.msra.mxu0 %v6411
  %6518 = vmatpush.msra.mxu0 %v6403
  %6519 = vmatpush.msra.mxu0 %v6395
  %6520 = vmatpush.msra.mxu0 %v6387
  %6521 = vmatpush.msra.mxu0 %v6379
  %6522 = vmatpush.msra.mxu0 %v6371
  %6523 = vmatpush.msra.mxu0 %v6363
  %6524 = vmatpush.msra.mxu0 %v6355
  %6525 = vmatpush.msra.mxu0 %v6347
  %6526 = vmatpush.msra.mxu0 %v6339
  %6527 = vmatpush.msra.mxu0 %v6331
  %6528 = vmatpush.msra.mxu0 %v6323
  %6529 = vmatpush.msra.mxu0 %v6315
  %6530 = vmatpush.msra.mxu0 %v6307
  %6531 = vmatpush.msra.mxu0 %v6299
  %6532 = vmatpush.msra.mxu0 %v6291
  %6533 = vmatmul.f32.gmra.mxu0 %v6150
  %v6534 = vpop.f32.mrf.mxu0
  %v6535 = vadd.f32 %v6515, %v6534
  %6536 = vdwg.mxu0
  %6537 = vmatpush.msra.mxu0 %v6284
  %6538 = vmatpush.msra.mxu0 %v6276
  %6539 = vmatpush.msra.mxu0 %v6268
  %6540 = vmatpush.msra.mxu0 %v6260
  %6541 = vmatpush.msra.mxu0 %v6252
  %6542 = vmatpush.msra.mxu0 %v6244
  %6543 = vmatpush.msra.mxu0 %v6236
  %6544 = vmatpush.msra.mxu0 %v6228
  %6545 = vmatpush.msra.mxu0 %v6220
  %6546 = vmatpush.msra.mxu0 %v6212
  %6547 = vmatpush.msra.mxu0 %v6204
  %6548 = vmatpush.msra.mxu0 %v6196
  %6549 = vmatpush.msra.mxu0 %v6188
  %6550 = vmatpush.msra.mxu0 %v6180
  %6551 = vmatpush.msra.mxu0 %v6172
  %6552 = vmatpush.msra.mxu0 %v6164
  %6553 = vmatmul.f32.gmra.mxu0 %v6149
  %v6554 = vpop.f32.mrf.mxu0
  %v6555 = vadd.f32 0.0, %v6554
  %6556 = vdwg.mxu0
  %6557 = vmatpush.msra.mxu0 %v6412
  %6558 = vmatpush.msra.mxu0 %v6404
  %6559 = vmatpush.msra.mxu0 %v6396
  %6560 = vmatpush.msra.mxu0 %v6388
  %6561 = vmatpush.msra.mxu0 %v6380
  %6562 = vmatpush.msra.mxu0 %v6372
  %6563 = vmatpush.msra.mxu0 %v6364
  %6564 = vmatpush.msra.mxu0 %v6356
  %6565 = vmatpush.msra.mxu0 %v6348
  %6566 = vmatpush.msra.mxu0 %v6340
  %6567 = vmatpush.msra.mxu0 %v6332
  %6568 = vmatpush.msra.mxu0 %v6324
  %6569 = vmatpush.msra.mxu0 %v6316
  %6570 = vmatpush.msra.mxu0 %v6308
  %6571 = vmatpush.msra.mxu0 %v6300
  %6572 = vmatpush.msra.mxu0 %v6292
  %6573 = vmatmul.f32.gmra.mxu0 %v6150
  %v6574 = vpop.f32.mrf.mxu0
  %v6575 = vadd.f32 %v6555, %v6574
  %6576 = vdwg.mxu0
  %6577 = vmatpush.msra.mxu0 %v6285
  %6578 = vmatpush.msra.mxu0 %v6277
  %6579 = vmatpush.msra.mxu0 %v6269
  %6580 = vmatpush.msra.mxu0 %v6261
  %6581 = vmatpush.msra.mxu0 %v6253
  %6582 = vmatpush.msra.mxu0 %v6245
  %6583 = vmatpush.msra.mxu0 %v6237
  %6584 = vmatpush.msra.mxu0 %v6229
  %6585 = vmatpush.msra.mxu0 %v6221
  %6586 = vmatpush.msra.mxu0 %v6213
  %6587 = vmatpush.msra.mxu0 %v6205
  %6588 = vmatpush.msra.mxu0 %v6197
  %6589 = vmatpush.msra.mxu0 %v6189
  %6590 = vmatpush.msra.mxu0 %v6181
  %6591 = vmatpush.msra.mxu0 %v6173
  %6592 = vmatpush.msra.mxu0 %v6165
  %6593 = vmatmul.f32.gmra.mxu0 %v6149
  %v6594 = vpop.f32.mrf.mxu0
  %v6595 = vadd.f32 0.0, %v6594
  %6596 = vdwg.mxu0
  %6597 = vmatpush.msra.mxu0 %v6413
  %6598 = vmatpush.msra.mxu0 %v6405
  %6599 = vmatpush.msra.mxu0 %v6397
  %6600 = vmatpush.msra.mxu0 %v6389
  %6601 = vmatpush.msra.mxu0 %v6381
  %6602 = vmatpush.msra.mxu0 %v6373
  %6603 = vmatpush.msra.mxu0 %v6365
  %6604 = vmatpush.msra.mxu0 %v6357
  %6605 = vmatpush.msra.mxu0 %v6349
  %6606 = vmatpush.msra.mxu0 %v6341
  %6607 = vmatpush.msra.mxu0 %v6333
  %6608 = vmatpush.msra.mxu0 %v6325
  %6609 = vmatpush.msra.mxu0 %v6317
  %6610 = vmatpush.msra.mxu0 %v6309
  %6611 = vmatpush.msra.mxu0 %v6301
  %6612 = vmatpush.msra.mxu0 %v6293
  %6613 = vmatmul.f32.gmra.mxu0 %v6150
  %v6614 = vpop.f32.mrf.mxu0
  %v6615 = vadd.f32 %v6595, %v6614
  %6616 = vdwg.mxu0
  %6617 = vmatpush.msra.mxu0 %v6286
  %6618 = vmatpush.msra.mxu0 %v6278
  %6619 = vmatpush.msra.mxu0 %v6270
  %6620 = vmatpush.msra.mxu0 %v6262
  %6621 = vmatpush.msra.mxu0 %v6254
  %6622 = vmatpush.msra.mxu0 %v6246
  %6623 = vmatpush.msra.mxu0 %v6238
  %6624 = vmatpush.msra.mxu0 %v6230
  %6625 = vmatpush.msra.mxu0 %v6222
  %6626 = vmatpush.msra.mxu0 %v6214
  %6627 = vmatpush.msra.mxu0 %v6206
  %6628 = vmatpush.msra.mxu0 %v6198
  %6629 = vmatpush.msra.mxu0 %v6190
  %6630 = vmatpush.msra.mxu0 %v6182
  %6631 = vmatpush.msra.mxu0 %v6174
  %6632 = vmatpush.msra.mxu0 %v6166
  %6633 = vmatmul.f32.gmra.mxu0 %v6149
  %v6634 = vpop.f32.mrf.mxu0
  %v6635 = vadd.f32 0.0, %v6634
  %6636 = vdwg.mxu0
  %6637 = vmatpush.msra.mxu0 %v6414
  %6638 = vmatpush.msra.mxu0 %v6406
  %6639 = vmatpush.msra.mxu0 %v6398
  %6640 = vmatpush.msra.mxu0 %v6390
  %6641 = vmatpush.msra.mxu0 %v6382
  %6642 = vmatpush.msra.mxu0 %v6374
  %6643 = vmatpush.msra.mxu0 %v6366
  %6644 = vmatpush.msra.mxu0 %v6358
  %6645 = vmatpush.msra.mxu0 %v6350
  %6646 = vmatpush.msra.mxu0 %v6342
  %6647 = vmatpush.msra.mxu0 %v6334
  %6648 = vmatpush.msra.mxu0 %v6326
  %6649 = vmatpush.msra.mxu0 %v6318
  %6650 = vmatpush.msra.mxu0 %v6310
  %6651 = vmatpush.msra.mxu0 %v6302
  %6652 = vmatpush.msra.mxu0 %v6294
  %6653 = vmatmul.f32.gmra.mxu0 %v6150
  %v6654 = vpop.f32.mrf.mxu0
  %v6655 = vadd.f32 %v6635, %v6654
  %6656 = vdwg.mxu0
  %6657 = vmatpush.msra.mxu0 %v6287
  %6658 = vmatpush.msra.mxu0 %v6279
  %6659 = vmatpush.msra.mxu0 %v6271
  %6660 = vmatpush.msra.mxu0 %v6263
  %6661 = vmatpush.msra.mxu0 %v6255
  %6662 = vmatpush.msra.mxu0 %v6247
  %6663 = vmatpush.msra.mxu0 %v6239
  %6664 = vmatpush.msra.mxu0 %v6231
  %6665 = vmatpush.msra.mxu0 %v6223
  %6666 = vmatpush.msra.mxu0 %v6215
  %6667 = vmatpush.msra.mxu0 %v6207
  %6668 = vmatpush.msra.mxu0 %v6199
  %6669 = vmatpush.msra.mxu0 %v6191
  %6670 = vmatpush.msra.mxu0 %v6183
  %6671 = vmatpush.msra.mxu0 %v6175
  %6672 = vmatpush.msra.mxu0 %v6167
  %6673 = vmatmul.f32.gmra.mxu0 %v6149
  %v6674 = vpop.f32.mrf.mxu0
  %v6675 = vadd.f32 0.0, %v6674
  %6676 = vdwg.mxu0
  %6677 = vmatpush.msra.mxu0 %v6415
  %6678 = vmatpush.msra.mxu0 %v6407
  %6679 = vmatpush.msra.mxu0 %v6399
  %6680 = vmatpush.msra.mxu0 %v6391
  %6681 = vmatpush.msra.mxu0 %v6383
  %6682 = vmatpush.msra.mxu0 %v6375
  %6683 = vmatpush.msra.mxu0 %v6367
  %6684 = vmatpush.msra.mxu0 %v6359
  %6685 = vmatpush.msra.mxu0 %v6351
  %6686 = vmatpush.msra.mxu0 %v6343
  %6687 = vmatpush.msra.mxu0 %v6335
  %6688 = vmatpush.msra.mxu0 %v6327
  %6689 = vmatpush.msra.mxu0 %v6319
  %6690 = vmatpush.msra.mxu0 %v6311
  %6691 = vmatpush.msra.mxu0 %v6303
  %6692 = vmatpush.msra.mxu0 %v6295
  %6693 = vmatmul.f32.gmra.mxu0 %v6150
  %v6694 = vpop.f32.mrf.mxu0
  %v6695 = vadd.f32 %v6675, %v6694
  %6696 = vdwg.mxu0
  %6697 = vmatpush.msra.mxu0 %v6288
  %6698 = vmatpush.msra.mxu0 %v6280
  %6699 = vmatpush.msra.mxu0 %v6272
  %6700 = vmatpush.msra.mxu0 %v6264
  %6701 = vmatpush.msra.mxu0 %v6256
  %6702 = vmatpush.msra.mxu0 %v6248
  %6703 = vmatpush.msra.mxu0 %v6240
  %6704 = vmatpush.msra.mxu0 %v6232
  %6705 = vmatpush.msra.mxu0 %v6224
  %6706 = vmatpush.msra.mxu0 %v6216
  %6707 = vmatpush.msra.mxu0 %v6208
  %6708 = vmatpush.msra.mxu0 %v6200
  %6709 = vmatpush.msra.mxu0 %v6192
  %6710 = vmatpush.msra.mxu0 %v6184
  %6711 = vmatpush.msra.mxu0 %v6176
  %6712 = vmatpush.msra.mxu0 %v6168
  %6713 = vmatmul.f32.gmra.mxu0 %v6149
  %v6714 = vpop.f32.mrf.mxu0
  %v6715 = vadd.f32 0.0, %v6714
  %6716 = vdwg.mxu0
  %6717 = vmatpush.msra.mxu0 %v6416
  %6718 = vmatpush.msra.mxu0 %v6408
  %6719 = vmatpush.msra.mxu0 %v6400
  %6720 = vmatpush.msra.mxu0 %v6392
  %6721 = vmatpush.msra.mxu0 %v6384
  %6722 = vmatpush.msra.mxu0 %v6376
  %6723 = vmatpush.msra.mxu0 %v6368
  %6724 = vmatpush.msra.mxu0 %v6360
  %6725 = vmatpush.msra.mxu0 %v6352
  %6726 = vmatpush.msra.mxu0 %v6344
  %6727 = vmatpush.msra.mxu0 %v6336
  %6728 = vmatpush.msra.mxu0 %v6328
  %6729 = vmatpush.msra.mxu0 %v6320
  %6730 = vmatpush.msra.mxu0 %v6312
  %6731 = vmatpush.msra.mxu0 %v6304
  %6732 = vmatpush.msra.mxu0 %v6296
  %6733 = vmatmul.f32.gmra.mxu0 %v6150
  %v6734 = vpop.f32.mrf.mxu0
  %v6735 = vadd.f32 %v6715, %v6734
  %6736 = vdwg.mxu0
  %v6737 = vadd.f32 %v6153, %v6455
  %v6738 = vadd.f32 %v6154, %v6495
  %v6739 = vadd.f32 %v6155, %v6535
  %v6740 = vadd.f32 %v6156, %v6575
  %v6741 = vadd.f32 %v6157, %v6615
  %v6742 = vadd.f32 %v6158, %v6655
  %v6743 = vadd.f32 %v6159, %v6695
  %v6744 = vadd.f32 %v6160, %v6735
  %v6745 = vxor.u32 %v6737, 2147483648
  %v6746 = vxor.u32 %v6738, 2147483648
  %v6747 = vxor.u32 %v6739, 2147483648
  %v6748 = vxor.u32 %v6740, 2147483648
  %v6749 = vxor.u32 %v6741, 2147483648
  %v6750 = vxor.u32 %v6742, 2147483648
  %v6751 = vmul.f32 %v6745, 1.442695
  %v6752 = vpow.pop %v6751
  %v6753 = vmul.f32 %v6746, 1.442695
  %v6754 = vpow.pop %v6753
  %v6755 = vmul.f32 %v6747, 1.442695
  %v6756 = vpow.pop %v6755
  %v6757 = vmul.f32 %v6748, 1.442695
  %v6758 = vpow.pop %v6757
  %v6759 = vmul.f32 %v6749, 1.442695
  %v6760 = vpow.pop %v6759
  %v6761 = vmul.f32 %v6750, 1.442695
  %v6762 = vpow.pop %v6761
  %v6763 = vadd.f32 %v6752, 1.0
  %v6764 = vadd.f32 %v6754, 1.0
  %v6765 = vadd.f32 %v6756, 1.0
  %v6766 = vadd.f32 %v6758, 1.0
  %v6767 = vadd.f32 %v6760, 1.0
  %v6768 = vadd.f32 %v6762, 1.0
  %v6769 = vrcp.pop %v6763
  %v6770 = vmul.f32 %v6763, %v6769
  %v6771 = vsub.f32 1.0, %v6770
  %v6772 = vmul.f32 %v6769, %v6771
  %v6773 = vadd.f32 %v6769, %v6772
  %vm6774 = vweird.f32 %v6763
  %vm6775 = vweird.f32 %v6769
  %vm6776 = vmor %vm6774, %vm6775
  %v6777 = vsel %vm6776, %v6769, %v6773
  %v6778 = vand.u32 2147483647, %v6763
  %vm6779 = vcmp.eq.f32.partialorder %v6778, 8.507059e+37
  %v6780 = vand.u32 %v6763, 2147483648
  %v6781 = vor.u32 1.1754944e-38, %v6780
  %v6782 = vsel %vm6779, %v6781, %v6777
  %v6783 = vmul.f32 1.0, %v6782
  %v6784 = vrcp.pop %v6764
  %v6785 = vmul.f32 %v6764, %v6784
  %v6786 = vsub.f32 1.0, %v6785
  %v6787 = vmul.f32 %v6784, %v6786
  %v6788 = vadd.f32 %v6784, %v6787
  %vm6789 = vweird.f32 %v6764
  %vm6790 = vweird.f32 %v6784
  %vm6791 = vmor %vm6789, %vm6790
  %v6792 = vsel %vm6791, %v6784, %v6788
  %v6793 = vand.u32 2147483647, %v6764
  %vm6794 = vcmp.eq.f32.partialorder %v6793, 8.507059e+37
  %v6795 = vand.u32 %v6764, 2147483648
  %v6796 = vor.u32 1.1754944e-38, %v6795
  %v6797 = vsel %vm6794, %v6796, %v6792
  %v6798 = vmul.f32 1.0, %v6797
  %v6799 = vrcp.pop %v6765
  %v6800 = vmul.f32 %v6765, %v6799
  %v6801 = vsub.f32 1.0, %v6800
  %v6802 = vmul.f32 %v6799, %v6801
  %v6803 = vadd.f32 %v6799, %v6802
  %vm6804 = vweird.f32 %v6765
  %vm6805 = vweird.f32 %v6799
  %vm6806 = vmor %vm6804, %vm6805
  %v6807 = vsel %vm6806, %v6799, %v6803
  %v6808 = vand.u32 2147483647, %v6765
  %vm6809 = vcmp.eq.f32.partialorder %v6808, 8.507059e+37
  %v6810 = vand.u32 %v6765, 2147483648
  %v6811 = vor.u32 1.1754944e-38, %v6810
  %v6812 = vsel %vm6809, %v6811, %v6807
  %v6813 = vmul.f32 1.0, %v6812
  %v6814 = vrcp.pop %v6766
  %v6815 = vmul.f32 %v6766, %v6814
  %v6816 = vsub.f32 1.0, %v6815
  %v6817 = vmul.f32 %v6814, %v6816
  %v6818 = vadd.f32 %v6814, %v6817
  %vm6819 = vweird.f32 %v6766
  %vm6820 = vweird.f32 %v6814
  %vm6821 = vmor %vm6819, %vm6820
  %v6822 = vsel %vm6821, %v6814, %v6818
  %v6823 = vand.u32 2147483647, %v6766
  %vm6824 = vcmp.eq.f32.partialorder %v6823, 8.507059e+37
  %v6825 = vand.u32 %v6766, 2147483648
  %v6826 = vor.u32 1.1754944e-38, %v6825
  %v6827 = vsel %vm6824, %v6826, %v6822
  %v6828 = vmul.f32 1.0, %v6827
  %v6829 = vrcp.pop %v6767
  %v6830 = vmul.f32 %v6767, %v6829
  %v6831 = vsub.f32 1.0, %v6830
  %v6832 = vmul.f32 %v6829, %v6831
  %v6833 = vadd.f32 %v6829, %v6832
  %vm6834 = vweird.f32 %v6767
  %vm6835 = vweird.f32 %v6829
  %vm6836 = vmor %vm6834, %vm6835
  %v6837 = vsel %vm6836, %v6829, %v6833
  %v6838 = vand.u32 2147483647, %v6767
  %vm6839 = vcmp.eq.f32.partialorder %v6838, 8.507059e+37
  %v6840 = vand.u32 %v6767, 2147483648
  %v6841 = vor.u32 1.1754944e-38, %v6840
  %v6842 = vsel %vm6839, %v6841, %v6837
  %v6843 = vmul.f32 1.0, %v6842
  %v6844 = vrcp.pop %v6768
  %v6845 = vmul.f32 %v6768, %v6844
  %v6846 = vsub.f32 1.0, %v6845
  %v6847 = vmul.f32 %v6844, %v6846
  %v6848 = vadd.f32 %v6844, %v6847
  %vm6849 = vweird.f32 %v6768
  %vm6850 = vweird.f32 %v6844
  %vm6851 = vmor %vm6849, %vm6850
  %v6852 = vsel %vm6851, %v6844, %v6848
  %v6853 = vand.u32 2147483647, %v6768
  %vm6854 = vcmp.eq.f32.partialorder %v6853, 8.507059e+37
  %v6855 = vand.u32 %v6768, 2147483648
  %v6856 = vor.u32 1.1754944e-38, %v6855
  %v6857 = vsel %vm6854, %v6856, %v6852
  %v6858 = vmul.f32 1.0, %v6857
  %v6859 = vtanh.pop %v6743
  %v6860 = vtanh.pop %v6744
  %v6861 = vmul.f32 %v6813, %v6145
  %v6862 = vmul.f32 %v6828, %v6146
  %v6863 = vmul.f32 %v6783, %v6859
  %v6864 = vmul.f32 %v6798, %v6860
  %v6865 = vadd.f32 %v6861, %v6863
  %v6866 = vadd.f32 %v6862, %v6864
  %v6867 = vtanh.pop %v6865
  %v6868 = vtanh.pop %v6866
  %v6869 = vmul.f32 %v6843, %v6867
  %v6870 = vmul.f32 %v6858, %v6868
  %6871 = vst [vmem:[#allocation3 + $0x70] sm:$0xff] %v6869
  %6872 = vst [vmem:[#allocation3 + $0x8] sm:$0xff] %v6870
  %v6873 = vld [vmem:[#allocation3] sm:$0xff]
  %v6874 = vld [vmem:[#allocation3 + $0x8] sm:$0xff]
  %v6875 = vld [vmem:[#allocation3 + $0x10] sm:$0xff]
  %v6876 = vld [vmem:[#allocation3 + $0x18] sm:$0xff]
  %v6877 = vld [vmem:[#allocation3 + $0x20] sm:$0xff]
  %v6878 = vld [vmem:[#allocation3 + $0x28] sm:$0xff]
  %v6879 = vld [vmem:[#allocation3 + $0x30] sm:$0xff]
  %v6880 = vld [vmem:[#allocation3 + $0x38] sm:$0xff]
  %v6881 = vld [vmem:[#allocation3 + $0x40] sm:$0xff]
  %v6882 = vld [vmem:[#allocation3 + $0x48] sm:$0xff]
  %v6883 = vld [vmem:[#allocation3 + $0x50] sm:$0xff]
  %v6884 = vld [vmem:[#allocation3 + $0x58] sm:$0xff]
  %v6885 = vld [vmem:[#allocation3 + $0x60] sm:$0xff]
  %v6886 = vld [vmem:[#allocation3 + $0x68] sm:$0xff]
  %v6887 = vld [vmem:[#allocation3 + $0x70] sm:$0xff]
  %v6888 = vld [vmem:[#allocation3 + $0x78] sm:$0xff]
  %v6889 = vld [vmem:[%s4] sm:$0xff]
  %v6890 = vld [vmem:[%s4 + $0x8] sm:$0xff]
  %v6891 = vld [vmem:[%s4 + $0x10] sm:$0xff]
  %v6892 = vld [vmem:[%s4 + $0x18] sm:$0xff]
  %v6893 = vld [vmem:[%s4 + $0x20] sm:$0xff]
  %v6894 = vld [vmem:[%s4 + $0x28] sm:$0xff]
  %v6895 = vld [vmem:[%s4 + $0x30] sm:$0xff]
  %v6896 = vld [vmem:[%s4 + $0x38] sm:$0xff]
  %v6897 = vld [vmem:[%s4 + $0x40] sm:$0xff]
  %v6898 = vld [vmem:[%s4 + $0x48] sm:$0xff]
  %v6899 = vld [vmem:[%s4 + $0x50] sm:$0xff]
  %v6900 = vld [vmem:[%s4 + $0x58] sm:$0xff]
  %v6901 = vld [vmem:[%s4 + $0x60] sm:$0xff]
  %v6902 = vld [vmem:[%s4 + $0x68] sm:$0xff]
  %v6903 = vld [vmem:[%s4 + $0x70] sm:$0xff]
  %v6904 = vld [vmem:[%s4 + $0x78] sm:$0xff]
  %v6905 = vld [vmem:[%s4 + $0x80] sm:$0xff]
  %v6906 = vld [vmem:[%s4 + $0x88] sm:$0xff]
  %v6907 = vld [vmem:[%s4 + $0x90] sm:$0xff]
  %v6908 = vld [vmem:[%s4 + $0x98] sm:$0xff]
  %v6909 = vld [vmem:[%s4 + $0xa0] sm:$0xff]
  %v6910 = vld [vmem:[%s4 + $0xa8] sm:$0xff]
  %v6911 = vld [vmem:[%s4 + $0xb0] sm:$0xff]
  %v6912 = vld [vmem:[%s4 + $0xb8] sm:$0xff]
  %v6913 = vld [vmem:[%s4 + $0xc0] sm:$0xff]
  %v6914 = vld [vmem:[%s4 + $0xc8] sm:$0xff]
  %v6915 = vld [vmem:[%s4 + $0xd0] sm:$0xff]
  %v6916 = vld [vmem:[%s4 + $0xd8] sm:$0xff]
  %v6917 = vld [vmem:[%s4 + $0xe0] sm:$0xff]
  %v6918 = vld [vmem:[%s4 + $0xe8] sm:$0xff]
  %v6919 = vld [vmem:[%s4 + $0xf0] sm:$0xff]
  %v6920 = vld [vmem:[%s4 + $0xf8] sm:$0xff]
  %v6921 = vld [vmem:[%s5] sm:$0x1]
  %v6923 = vperm.slane %v6921, 0
  %6925 = vmatpush.msra.mxu0 %v6904
  %6926 = vmatpush.msra.mxu0 %v6903
  %6927 = vmatpush.msra.mxu0 %v6902
  %6928 = vmatpush.msra.mxu0 %v6901
  %6929 = vmatpush.msra.mxu0 %v6900
  %6930 = vmatpush.msra.mxu0 %v6899
  %6931 = vmatpush.msra.mxu0 %v6898
  %6932 = vmatpush.msra.mxu0 %v6897
  %6933 = vmatpush.msra.mxu0 %v6896
  %6934 = vmatpush.msra.mxu0 %v6895
  %6935 = vmatpush.msra.mxu0 %v6894
  %6936 = vmatpush.msra.mxu0 %v6893
  %6937 = vmatpush.msra.mxu0 %v6892
  %6938 = vmatpush.msra.mxu0 %v6891
  %6939 = vmatpush.msra.mxu0 %v6890
  %6940 = vmatpush.msra.mxu0 %v6889
  %6941 = vmatmul.f32.gmra.mxu0 %v6873
  %v6942 = vpop.f32.mrf.mxu0
  %v6943 = vadd.f32 %v6923, %v6942
  %6944 = vmatmul.f32.gmra.mxu0 %v6875
  %v6945 = vpop.f32.mrf.mxu0
  %v6946 = vadd.f32 %v6923, %v6945
  %6947 = vmatmul.f32.gmra.mxu0 %v6877
  %v6948 = vpop.f32.mrf.mxu0
  %v6949 = vadd.f32 %v6923, %v6948
  %6950 = vmatmul.f32.gmra.mxu0 %v6879
  %v6951 = vpop.f32.mrf.mxu0
  %v6952 = vadd.f32 %v6923, %v6951
  %6953 = vmatmul.f32.gmra.mxu0 %v6881
  %v6954 = vpop.f32.mrf.mxu0
  %v6955 = vadd.f32 %v6923, %v6954
  %6956 = vmatmul.f32.gmra.mxu0 %v6883
  %v6957 = vpop.f32.mrf.mxu0
  %v6958 = vadd.f32 %v6923, %v6957
  %6959 = vmatmul.f32.gmra.mxu0 %v6885
  %v6960 = vpop.f32.mrf.mxu0
  %v6961 = vadd.f32 %v6923, %v6960
  %6962 = vmatmul.f32.gmra.mxu0 %v6887
  %v6963 = vpop.f32.mrf.mxu0
  %v6964 = vadd.f32 %v6923, %v6963
  %6965 = vdwg.mxu0
  %6966 = vmatpush.msra.mxu0 %v6920
  %6967 = vmatpush.msra.mxu0 %v6919
  %6968 = vmatpush.msra.mxu0 %v6918
  %6969 = vmatpush.msra.mxu0 %v6917
  %6970 = vmatpush.msra.mxu0 %v6916
  %6971 = vmatpush.msra.mxu0 %v6915
  %6972 = vmatpush.msra.mxu0 %v6914
  %6973 = vmatpush.msra.mxu0 %v6913
  %6974 = vmatpush.msra.mxu0 %v6912
  %6975 = vmatpush.msra.mxu0 %v6911
  %6976 = vmatpush.msra.mxu0 %v6910
  %6977 = vmatpush.msra.mxu0 %v6909
  %6978 = vmatpush.msra.mxu0 %v6908
  %6979 = vmatpush.msra.mxu0 %v6907
  %6980 = vmatpush.msra.mxu0 %v6906
  %6981 = vmatpush.msra.mxu0 %v6905
  %6982 = vmatmul.f32.gmra.mxu0 %v6874
  %v6983 = vpop.f32.mrf.mxu0
  %v6984 = vadd.f32 %v6943, %v6983
  %6985 = vmatmul.f32.gmra.mxu0 %v6876
  %v6986 = vpop.f32.mrf.mxu0
  %v6987 = vadd.f32 %v6946, %v6986
  %6988 = vmatmul.f32.gmra.mxu0 %v6878
  %v6989 = vpop.f32.mrf.mxu0
  %v6990 = vadd.f32 %v6949, %v6989
  %6991 = vmatmul.f32.gmra.mxu0 %v6880
  %v6992 = vpop.f32.mrf.mxu0
  %v6993 = vadd.f32 %v6952, %v6992
  %6994 = vmatmul.f32.gmra.mxu0 %v6882
  %v6995 = vpop.f32.mrf.mxu0
  %v6996 = vadd.f32 %v6955, %v6995
  %6997 = vmatmul.f32.gmra.mxu0 %v6884
  %v6998 = vpop.f32.mrf.mxu0
  %v6999 = vadd.f32 %v6958, %v6998
  %7000 = vmatmul.f32.gmra.mxu0 %v6886
  %v7001 = vpop.f32.mrf.mxu0
  %v7002 = vadd.f32 %v6961, %v7001
  %7003 = vmatmul.f32.gmra.mxu0 %v6888
  %v7004 = vpop.f32.mrf.mxu0
  %v7005 = vadd.f32 %v6964, %v7004
  %7006 = vdwg.mxu0
  %7007 = vst [vmem:[%s6] sm:$0xff] %v6984
  %7008 = vst [vmem:[%s6 + $0x8] sm:$0xff] %v6987
  %7009 = vst [vmem:[%s6 + $0x10] sm:$0xff] %v6990
  %7010 = vst [vmem:[%s6 + $0x18] sm:$0xff] %v6993
  %7011 = vst [vmem:[%s6 + $0x20] sm:$0xff] %v6996
  %7012 = vst [vmem:[%s6 + $0x28] sm:$0xff] %v6999
  %7013 = vst [vmem:[%s6 + $0x30] sm:$0xff] %v7002
  %7014 = vst [vmem:[%s6 + $0x38] sm:$0xff] %v7005
  // Predicated region
  $region26: #{char_ner_forward_pallas.1} parent=0 // pred_check
    _
  $region27: #{char_ner_forward_pallas.1} parent=0 // pred_check_branch
    %7016 = sbr.rel (0) target = $region29
  $region28: #{char_ner_forward_pallas.1} parent=0 // pred_region
    _
  $region29: #{char_ner_forward_pallas.1} parent=0 // pred_fallthru
    _
  // Predicated region
  $region30: #{char_ner_forward_pallas.1} parent=0 // pred_check
    _
  $region31: #{char_ner_forward_pallas.1} parent=0 // pred_check_branch
    %7018 = sbr.rel (0) target = $region33
  $region32: #{char_ner_forward_pallas.1} parent=0 // pred_region
    _
  $region33: #{char_ner_forward_pallas.1} parent=0 // pred_fallthru
    _

</llo_original>
